<compile_context>
chip_gen: v6e
topology: v6e:2x2x1
jax: 0.10.0
libtpu: 0.0.40
codegen_flags: <defaults>
</compile_context>

<pallas_src>
import functools

import numpy as np

import jax
import jax.numpy as jnp
from jax.experimental import pallas as pl
from jax.experimental.pallas import tpu as pltpu


def _round_up(x: int, m: int) -> int:
    return (x + m - 1) // m * m


@functools.lru_cache(maxsize=None)
def _windowed_dft_basis_np(n_fft: int, win_length: int, nfp: int) -> np.ndarray:
    """[win*cos | -win*sin] real-DFT basis, (n_fft, 2*nfp), float32 (numpy, cached)."""
    # torch.hann_window(win_length) (periodic): 0.5 * (1 - cos(2*pi*n/N))
    n = np.arange(win_length, dtype=np.float64)
    w = 0.5 - 0.5 * np.cos(2.0 * np.pi * n / win_length)
    # torch.stft centers the window inside the n_fft frame.
    lpad = (n_fft - win_length) // 2
    w_full = np.zeros(n_fft, dtype=np.float64)
    w_full[lpad:lpad + win_length] = w

    n_freq = n_fft // 2 + 1
    t = np.arange(n_fft, dtype=np.float64)[:, None]
    k = np.arange(n_freq, dtype=np.float64)[None, :]
    ang = 2.0 * np.pi * t * k / n_fft

    basis = np.zeros((n_fft, 2 * nfp), dtype=np.float64)
    basis[:, :n_freq] = np.cos(ang)
    basis[:, nfp:nfp + n_freq] = -np.sin(ang)
    basis *= w_full[:, None]
    return basis.astype(np.float32)


def _tpu_tuning(matmul_dtype):
    """Per-generation (tf, num_parallel, vmem_cap_bytes)."""
    vmem_cap = 128 << 20
    kind = ""
    try:
        vmem_cap = int(pltpu.get_tpu_info().vmem_capacity_bytes)
    except Exception:  # CPU/interpret or older API -- conservative defaults
        pass
    try:
        kind = jax.devices()[0].device_kind.lower()
    except Exception:
        pass
    small_vmem = (vmem_cap <= (64 << 20)) or ("v7" in kind)   # v7x-class
    is_v5 = "v5" in kind
    low_prec = jnp.dtype(matmul_dtype).itemsize <= 2
    tf = 256 if (low_prec and not is_v5) else 128             # v6e/v7x MXU is 2x256^2
    num_parallel = 2 if small_vmem else 1                     # 2 TCs only on v7x
    cap = (52 << 20) if small_vmem else (100 << 20)           # leave scratch headroom
    return tf, num_parallel, cap


def _stft_loss_kernel(frames_ref, basis_ref, out_ref):
    """Per frame-tile STFT-loss partial sums.

    frames_ref : (2, tf, n_fft)        stacked [y_hat ; y] frame tiles
    basis_ref  : (n_fft, 2*nfp)        windowed real-DFT basis [cos | -sin]
    out_ref    : (3, 8, nfp)           resident sublane-folded accumulator:
                   [0] sum |log S_y - log S_hat|
                   [1] sum (S_y - S_hat)^2
                   [2] sum S_y^2
    """
    t = pl.program_id(1)

    @pl.when(t == 0)
    def _init():
        out_ref[...] = jnp.zeros_like(out_ref)

    _, tf, n_fft = frames_ref.shape
    nfp = out_ref.shape[-1]

    # One wide MXU matmul: both waveforms, Re|Im in one shot (window pre-folded).
    f = frames_ref[...].reshape(2 * tf, n_fft)
    res = jnp.dot(f, basis_ref[...], preferred_element_type=jnp.float32)

    re_h = res[:tf, :nfp]
    im_h = res[:tf, nfp:]
    re_y = res[tf:, :nfp]
    im_y = res[tf:, nfp:]

    # Clamped power spectra (S^2), matching sqrt(clamp(M^2 + P^2, 1e-8))^2.
    p_h = jnp.maximum(re_h * re_h + im_h * im_h, 1e-8)
    p_y = jnp.maximum(re_y * re_y + im_y * im_y, 1e-8)

    # |log S_y - log S_hat| = 0.5 * |log(p_y / p_h)|   (1 log + 1 div, exact div)
    log_l1 = 0.5 * jnp.abs(jnp.log(p_y / p_h))
    # (S_y - S_hat)^2 = p_y + p_h - 2*sqrt(p_y*p_h)    (1 sqrt instead of 2)
    d2 = (p_y + p_h) - 2.0 * jnp.sqrt(p_y * p_h)

    def _fold(x):  # (tf, nfp) -> (8, nfp): pure VPU adds over sublane groups
        return x.reshape(tf // 8, 8, nfp).sum(axis=0)

    out_ref[0] += _fold(log_l1)
    out_ref[1] += _fold(d2)
    out_ref[2] += _fold(p_y)


def _stacked_frames(y_hat, y, n_fft, hop, n_frames, F, F_pad, matmul_dtype):
    """Fused framing: reflect-pad, gather overlapping frames, pad rows, cast.

    Returns (2, F_pad, n_fft) in matmul_dtype; rows >= F are exactly zero.
    """
    # TODO(synk): move framing into the kernel (memory_space=pl.ANY waveform +
    # make_async_copy of contiguous windows, rows via ref[pl.ds(r*hop, n_fft)])
    # to remove the ~n_fft/hop HBM blow-up of this gather (biggest win on v5e/v6e).
    B, T = y.shape
    pad = n_fft // 2
    Lp = T + 2 * pad
    x = jnp.stack([y_hat, y], axis=0)                                  # (2, B, T)
    xp = jnp.pad(x, ((0, 0), (0, 0), (pad, pad)), mode="reflect")      # (2, B, Lp)
    flat = jnp.pad(xp.reshape(2, B * Lp).astype(matmul_dtype),
                   ((0, 0), (0, n_fft)))                               # zero tail region

    r = jnp.arange(F_pad, dtype=jnp.int32)
    b = r // n_frames
    f = r % n_frames
    base = jnp.where(r < F, b * Lp + f * hop, B * Lp)                  # pad rows -> zeros
    idx = base[:, None] + jnp.arange(n_fft, dtype=jnp.int32)[None, :]  # (F_pad, n_fft)
    return flat[:, idx]                                                # (2, F_pad, n_fft)


def _stft_loss_scale(y_hat, y, n_fft: int, hop: int, win_length: int, *,
                     matmul_dtype=jnp.bfloat16, tf=None, num_parallel=None,
                     vmem_cap=None):
    """Single-scale STFTLoss.forward -> (loss_mag, loss_sc)."""
    B, T = y.shape
    auto_tf, auto_c, auto_cap = _tpu_tuning(matmul_dtype)
    tf = auto_tf if tf is None else tf
    num_parallel = auto_c if num_parallel is None else num_parallel
    vmem_cap = auto_cap if vmem_cap is None else vmem_cap
    assert tf % 8 == 0

    n_freq = n_fft // 2 + 1
    nfp = _round_up(n_freq, 128)

    # center=True framing geometry (matches torch.stft reflect padding).
    pad = n_fft // 2
    Lp = T + 2 * pad
    n_frames = (Lp - n_fft) // hop + 1
    F = B * n_frames

    tiles = pl.cdiv(F, tf)
    C = max(1, min(num_parallel, tiles))          # megacore split (v7x: 2 TCs)
    tiles_per_c = pl.cdiv(tiles, C)
    F_pad = C * tiles_per_c * tf

    frames = _stacked_frames(y_hat, y, n_fft, hop, n_frames, F, F_pad, matmul_dtype)
    basis = jnp.asarray(_windowed_dft_basis_np(n_fft, win_length, nfp),
                        dtype=matmul_dtype)

    # Explicit VMEM budget: double-buffered frames, single-buffered basis,
    # tiny resident accumulator, in-kernel f32 temporaries.
    itemsize = jnp.dtype(matmul_dtype).itemsize
    vmem_bytes = (2 * (2 * tf * n_fft) * itemsize        # frame blocks (x2 buffers)
                  + 1 * n_fft * 2 * nfp * itemsize       # basis (single buffer)
                  + 2 * 3 * 8 * nfp * 4                  # accumulator block
                  + 12 * tf * nfp * 4)                   # matmul result + temporaries
    vmem_limit = int(min(max(int(1.5 * vmem_bytes), 32 << 20), vmem_cap))

    def _run(basis_pipeline_mode):
        basis_kwargs = ({} if basis_pipeline_mode is None
                        else {"pipeline_mode": basis_pipeline_mode})
        return pl.pallas_call(
            _stft_loss_kernel,
            out_shape=jax.ShapeDtypeStruct((C * 3, 8, nfp), jnp.float32),
            grid=(C, tiles_per_c),
            in_specs=[
                pl.BlockSpec((2, tf, n_fft),
                             lambda c, t: (0, c * tiles_per_c + t, 0)),
                pl.BlockSpec((n_fft, 2 * nfp), lambda c, t: (0, 0),
                             **basis_kwargs),
            ],
            out_specs=pl.BlockSpec((3, 8, nfp), lambda c, t: (c, 0, 0)),
            compiler_params=pltpu.CompilerParams(
                dimension_semantics=("parallel", "arbitrary"),
                vmem_limit_bytes=vmem_limit),
        )(frames, basis)

    # Constant-index basis only needs one buffer; fall back gracefully if the
    # running JAX version rejects single-buffering.
    if hasattr(pl, "Buffered"):
        try:
            partial = _run(pl.Buffered(1))
        except Exception:
            partial = _run(None)
    else:
        partial = _run(None)

    sums = partial.reshape(C, 3, 8, nfp).sum(axis=(0, 2, 3))

    # Padded rows (zero frames) and padded basis columns yield exactly
    # p_h == p_y == 1e-8: 0 contribution to sums[0]/sums[1], 1e-8 per element
    # to sums[2] -- subtract the closed form instead of masking in-kernel.
    n_pad_elems = F_pad * nfp - F * n_freq
    y2 = jnp.maximum(sums[2] - jnp.float32(1e-8) * n_pad_elems, 0.0)

    loss_mag = sums[0] / jnp.float32(F * n_freq)                 # L1(log y_M, log y_hat_M)
    loss_sc = jnp.sqrt(jnp.maximum(sums[1], 0.0)) / jnp.sqrt(y2)  # ||y_M-y_hat_M||_F/||y_M||_F
    return loss_mag, loss_sc


def multi_scale_stft_loss(y_hat, y, n_ffts=(1024, 2048, 512),
                          hop_lengths=(120, 240, 50), win_lengths=(600, 1200, 240), *,
                          matmul_dtype=jnp.bfloat16):
    """MultiScaleSTFTLoss.forward -> (loss_mag, loss_sc), averaged over scales.

    matmul_dtype=jnp.bfloat16 (default) halves basis/frame VMEM+HBM and runs the
    MXU at its native rate (f32 accumulate, f32 elementwise math kept).
    Pass matmul_dtype=jnp.float32 for closest match to the torch reference.
    """
    N = len(n_ffts)
    loss_mag = jnp.float32(0.0)
    loss_sc = jnp.float32(0.0)
    for n_fft, hop, win in zip(n_ffts, hop_lengths, win_lengths):
        lm, lsc = _stft_loss_scale(y_hat, y, n_fft, hop, win,
                                   matmul_dtype=matmul_dtype)
        loss_mag = loss_mag + lm
        loss_sc = loss_sc + lsc
    return loss_mag / N, loss_sc / N


if __name__ == "__main__":
    # Small shapes consistent with the module (waveforms [B, T]); scaled-down
    # n_fft / hop / win tuples vs. the (1024, 2048, 512) defaults to keep it tiny.
    B, T = 2, 1024
    n_ffts = (256, 512, 128)
    hop_lengths = (64, 128, 32)
    win_lengths = (160, 400, 96)

    key = jax.random.PRNGKey(0)
    k1, k2 = jax.random.split(key)
    y_hat = jax.random.normal(k1, (B, T), dtype=jnp.float32)
    y = jax.random.normal(k2, (B, T), dtype=jnp.float32)

    # Default fast path (bf16 matmul inputs, f32 accumulate/elementwise).
    loss_mag, loss_sc = multi_scale_stft_loss(y_hat, y, n_ffts, hop_lengths, win_lengths)
    # Reference-precision path (f32 matmul inputs).
    loss_mag32, loss_sc32 = multi_scale_stft_loss(
        y_hat, y, n_ffts, hop_lengths, win_lengths, matmul_dtype=jnp.float32)

    jax.block_until_ready((loss_mag, loss_sc, loss_mag32, loss_sc32))
    assert jnp.isfinite(loss_mag) and jnp.isfinite(loss_sc)
    assert jnp.isfinite(loss_mag32) and jnp.isfinite(loss_sc32)
    print("KERNEL_OK")
</pallas_src>

<mosaic_0001>
module attributes {stable_mosaic.version = 11 : i64} {
  func.func @_stft_loss_kernel(%arg0: i32, %arg1: i32, %arg2: memref<2x256x256xbf16, #tpu.memory_space<vmem>>, %arg3: memref<256x512xbf16, #tpu.memory_space<vmem>>, %arg4: memref<3x8x256xf32, #tpu.memory_space<vmem>>) attributes {dimension_semantics = [#tpu.dimension_semantics<parallel>, #tpu.dimension_semantics<arbitrary>], iteration_bounds = array<i64: 1, 1>, scalar_prefetch = 0 : i64, scratch_operands = 0 : i64, tpu.core_type = #tpu.core_type<tc>, window_params = [{transform_indices = @transform_0, window_bounds = array<i64: 2, 256, 256>}, {pipeline_mode = #tpu.pipeline_mode<synchronous>, transform_indices = @transform_1, window_bounds = array<i64: 256, 512>}, {transform_indices = @transform_2, window_bounds = array<i64: 3, 8, 256>}]} {
    %c0_i32 = arith.constant 0 : i32
    %0 = arith.cmpi eq, %arg1, %c0_i32 : i32
    %1 = arith.extui %0 : i1 to i32
    %c0_i32_0 = arith.constant 0 : i32
    %2 = arith.cmpi ne, %1, %c0_i32_0 : i32
    scf.if %2 {
      %cst_28 = arith.constant 0.000000e+00 : f32
      %56 = vector.broadcast %cst_28 : f32 to vector<3x8x256xf32>
      %c0_29 = arith.constant 0 : index
      %c0_30 = arith.constant 0 : index
      %c0_31 = arith.constant 0 : index
      %57 = vector.load %arg4[%c0_29, %c0_30, %c0_31] : memref<3x8x256xf32, #tpu.memory_space<vmem>>, vector<3x8x256xf32>
      tpu.vector_store %arg4[%c0_29, %c0_30, %c0_31], %56 {strides = array<i32>} : memref<3x8x256xf32, #tpu.memory_space<vmem>>, vector<3x8x256xf32>,
    } else {
    }
    %c0 = arith.constant 0 : index
    %c0_1 = arith.constant 0 : index
    %c0_2 = arith.constant 0 : index
    %3 = vector.load %arg2[%c0, %c0_1, %c0_2] : memref<2x256x256xbf16, #tpu.memory_space<vmem>>, vector<2x256x256xbf16>
    %4 = vector.shape_cast %3 : vector<2x256x256xbf16> to vector<512x256xbf16>
    %c0_3 = arith.constant 0 : index
    %c0_4 = arith.constant 0 : index
    %5 = vector.load %arg3[%c0_3, %c0_4] : memref<256x512xbf16, #tpu.memory_space<vmem>>, vector<256x512xbf16>
    %cst = arith.constant dense<0.000000e+00> : vector<512x512xf32>
    %6 = tpu.matmul %4, %5, %cst {dimension_numbers = #tpu.dot_dimension_numbers<[1], [0], [0], [1], [0, 0, 1, 1], [], []>} : vector<512x256xbf16>, vector<256x512xbf16>, vector<512x512xf32> -> vector<512x512xf32>
    %7 = vector.extract_strided_slice %6 {offsets = [0, 0], sizes = [256, 256], strides = [1, 1]} : vector<512x512xf32> to vector<256x256xf32>
    %8 = vector.extract_strided_slice %6 {offsets = [0, 256], sizes = [256, 256], strides = [1, 1]} : vector<512x512xf32> to vector<256x256xf32>
    %9 = vector.extract_strided_slice %6 {offsets = [256, 0], sizes = [256, 256], strides = [1, 1]} : vector<512x512xf32> to vector<256x256xf32>
    %10 = vector.extract_strided_slice %6 {offsets = [256, 256], sizes = [256, 256], strides = [1, 1]} : vector<512x512xf32> to vector<256x256xf32>
    %11 = arith.mulf %7, %7 : vector<256x256xf32>
    %12 = arith.mulf %8, %8 : vector<256x256xf32>
    %13 = arith.addf %11, %12 : vector<256x256xf32>
    %cst_5 = arith.constant 9.99999993E-9 : f32
    %14 = vector.broadcast %cst_5 : f32 to vector<256x256xf32>
    %15 = arith.maximumf %13, %14 : vector<256x256xf32>
    %16 = arith.mulf %9, %9 : vector<256x256xf32>
    %17 = arith.mulf %10, %10 : vector<256x256xf32>
    %18 = arith.addf %16, %17 : vector<256x256xf32>
    %cst_6 = arith.constant 9.99999993E-9 : f32
    %19 = vector.broadcast %cst_6 : f32 to vector<256x256xf32>
    %20 = arith.maximumf %18, %19 : vector<256x256xf32>
    %21 = arith.divf %20, %15 : vector<256x256xf32>
    %22 = math.log %21 : vector<256x256xf32>
    %23 = math.absf %22 : vector<256x256xf32>
    %cst_7 = arith.constant 5.000000e-01 : f32
    %24 = vector.broadcast %cst_7 : f32 to vector<256x256xf32>
    %25 = arith.mulf %24, %23 : vector<256x256xf32>
    %26 = arith.addf %20, %15 : vector<256x256xf32>
    %27 = arith.mulf %20, %15 : vector<256x256xf32>
    %28 = math.sqrt %27 : vector<256x256xf32>
    %cst_8 = arith.constant 2.000000e+00 : f32
    %29 = vector.broadcast %cst_8 : f32 to vector<256x256xf32>
    %30 = arith.mulf %29, %28 : vector<256x256xf32>
    %31 = arith.subf %26, %30 : vector<256x256xf32>
    %c0_9 = arith.constant 0 : index
    %c0_10 = arith.constant 0 : index
    %c0_11 = arith.constant 0 : index
    %32 = vector.load %arg4[%c0_9, %c0_10, %c0_11] : memref<3x8x256xf32, #tpu.memory_space<vmem>>, vector<1x8x256xf32>
    %33 = vector.shape_cast %32 : vector<1x8x256xf32> to vector<8x256xf32>
    %34 = vector.shape_cast %25 : vector<256x256xf32> to vector<32x8x256xf32>
    %cst_12 = arith.constant dense<0.000000e+00> : vector<8x256xf32>
    %35 = vector.multi_reduction <add>, %34, %cst_12 [0] : vector<32x8x256xf32> to vector<8x256xf32>
    %36 = arith.addf %33, %35 : vector<8x256xf32>
    %c0_13 = arith.constant 0 : index
    %c0_14 = arith.constant 0 : index
    %c0_15 = arith.constant 0 : index
    %37 = vector.load %arg4[%c0_13, %c0_14, %c0_15] : memref<3x8x256xf32, #tpu.memory_space<vmem>>, vector<1x8x256xf32>
    %38 = vector.shape_cast %37 : vector<1x8x256xf32> to vector<8x256xf32>
    %39 = vector.shape_cast %36 : vector<8x256xf32> to vector<1x8x256xf32>
    tpu.vector_store %arg4[%c0_13, %c0_14, %c0_15], %39 {strides = array<i32>} : memref<3x8x256xf32, #tpu.memory_space<vmem>>, vector<1x8x256xf32>,
    %c1 = arith.constant 1 : index
    %c0_16 = arith.constant 0 : index
    %c0_17 = arith.constant 0 : index
    %40 = vector.load %arg4[%c1, %c0_16, %c0_17] : memref<3x8x256xf32, #tpu.memory_space<vmem>>, vector<1x8x256xf32>
    %41 = vector.shape_cast %40 : vector<1x8x256xf32> to vector<8x256xf32>
    %42 = vector.shape_cast %31 : vector<256x256xf32> to vector<32x8x256xf32>
    %cst_18 = arith.constant dense<0.000000e+00> : vector<8x256xf32>
    %43 = vector.multi_reduction <add>, %42, %cst_18 [0] : vector<32x8x256xf32> to vector<8x256xf32>
    %44 = arith.addf %41, %43 : vector<8x256xf32>
    %c1_19 = arith.constant 1 : index
    %c0_20 = arith.constant 0 : index
    %c0_21 = arith.constant 0 : index
    %45 = vector.load %arg4[%c1_19, %c0_20, %c0_21] : memref<3x8x256xf32, #tpu.memory_space<vmem>>, vector<1x8x256xf32>
    %46 = vector.shape_cast %45 : vector<1x8x256xf32> to vector<8x256xf32>
    %47 = vector.shape_cast %44 : vector<8x256xf32> to vector<1x8x256xf32>
    tpu.vector_store %arg4[%c1_19, %c0_20, %c0_21], %47 {strides = array<i32>} : memref<3x8x256xf32, #tpu.memory_space<vmem>>, vector<1x8x256xf32>,
    %c2 = arith.constant 2 : index
    %c0_22 = arith.constant 0 : index
    %c0_23 = arith.constant 0 : index
    %48 = vector.load %arg4[%c2, %c0_22, %c0_23] : memref<3x8x256xf32, #tpu.memory_space<vmem>>, vector<1x8x256xf32>
    %49 = vector.shape_cast %48 : vector<1x8x256xf32> to vector<8x256xf32>
    %50 = vector.shape_cast %20 : vector<256x256xf32> to vector<32x8x256xf32>
    %cst_24 = arith.constant dense<0.000000e+00> : vector<8x256xf32>
    %51 = vector.multi_reduction <add>, %50, %cst_24 [0] : vector<32x8x256xf32> to vector<8x256xf32>
    %52 = arith.addf %49, %51 : vector<8x256xf32>
    %c2_25 = arith.constant 2 : index
    %c0_26 = arith.constant 0 : index
    %c0_27 = arith.constant 0 : index
    %53 = vector.load %arg4[%c2_25, %c0_26, %c0_27] : memref<3x8x256xf32, #tpu.memory_space<vmem>>, vector<1x8x256xf32>
    %54 = vector.shape_cast %53 : vector<1x8x256xf32> to vector<8x256xf32>
    %55 = vector.shape_cast %52 : vector<8x256xf32> to vector<1x8x256xf32>
    tpu.vector_store %arg4[%c2_25, %c0_26, %c0_27], %55 {strides = array<i32>} : memref<3x8x256xf32, #tpu.memory_space<vmem>>, vector<1x8x256xf32>,
    return
  }
  func.func @transform_0(%arg0: i32, %arg1: i32) -> (i32, i32, i32) {
    %c1_i32 = arith.constant 1 : i32
    %0 = arith.muli %arg0, %c1_i32 : i32
    %1 = arith.addi %0, %arg1 : i32
    %c0_i32 = arith.constant 0 : i32
    %c0_i32_0 = arith.constant 0 : i32
    %c0_i32_1 = arith.constant 0 : i32
    return %c0_i32, %1, %c0_i32_0 : i32, i32, i32
  }
  func.func @transform_1(%arg0: i32, %arg1: i32) -> (i32, i32) {
    %c0_i32 = arith.constant 0 : i32
    %c0_i32_0 = arith.constant 0 : i32
    %c0_i32_1 = arith.constant 0 : i32
    return %c0_i32, %c0_i32_0 : i32, i32
  }
  func.func @transform_2(%arg0: i32, %arg1: i32) -> (i32, i32, i32) {
    %c0_i32 = arith.constant 0 : i32
    %c0_i32_0 = arith.constant 0 : i32
    %c0_i32_1 = arith.constant 0 : i32
    return %arg0, %c0_i32, %c0_i32_0 : i32, i32, i32
  }
}

module attributes {stable_mosaic.version = 11 : i64} {
  func.func @_stft_loss_kernel(%arg0: i32, %arg1: i32, %arg2: memref<2x256x256xbf16, #tpu.memory_space<vmem>>, %arg3: memref<256x512xbf16, #tpu.memory_space<vmem>>, %arg4: memref<3x8x256xf32, #tpu.memory_space<vmem>>) attributes {dimension_semantics = [#tpu.dimension_semantics<parallel>, #tpu.dimension_semantics<arbitrary>], iteration_bounds = array<i64: 1, 1>, scalar_prefetch = 0 : i64, scratch_operands = 0 : i64, tpu.core_type = #tpu.core_type<tc>, window_params = [{transform_indices = @transform_0, window_bounds = array<i64: 2, 256, 256>}, {pipeline_mode = #tpu.pipeline_mode<synchronous>, transform_indices = @transform_1, window_bounds = array<i64: 256, 512>}, {transform_indices = @transform_2, window_bounds = array<i64: 3, 8, 256>}]} {
    %c0_i32 = arith.constant 0 : i32
    %0 = arith.cmpi eq, %arg1, %c0_i32 : i32
    %1 = arith.extui %0 : i1 to i32
    %c0_i32_0 = arith.constant 0 : i32
    %2 = arith.cmpi ne, %1, %c0_i32_0 : i32
    scf.if %2 {
      %cst_28 = arith.constant 0.000000e+00 : f32
      %56 = vector.broadcast %cst_28 : f32 to vector<3x8x256xf32>
      %c0_29 = arith.constant 0 : index
      %c0_30 = arith.constant 0 : index
      %c0_31 = arith.constant 0 : index
      %57 = vector.load %arg4[%c0_29, %c0_30, %c0_31] : memref<3x8x256xf32, #tpu.memory_space<vmem>>, vector<3x8x256xf32>
      tpu.vector_store %arg4[%c0_29, %c0_30, %c0_31], %56 {strides = array<i32>} : memref<3x8x256xf32, #tpu.memory_space<vmem>>, vector<3x8x256xf32>,
    } else {
    }
    %c0 = arith.constant 0 : index
    %c0_1 = arith.constant 0 : index
    %c0_2 = arith.constant 0 : index
    %3 = vector.load %arg2[%c0, %c0_1, %c0_2] : memref<2x256x256xbf16, #tpu.memory_space<vmem>>, vector<2x256x256xbf16>
    %4 = vector.shape_cast %3 : vector<2x256x256xbf16> to vector<512x256xbf16>
    %c0_3 = arith.constant 0 : index
    %c0_4 = arith.constant 0 : index
    %5 = vector.load %arg3[%c0_3, %c0_4] : memref<256x512xbf16, #tpu.memory_space<vmem>>, vector<256x512xbf16>
    %cst = arith.constant dense<0.000000e+00> : vector<512x512xf32>
    %6 = tpu.matmul %4, %5, %cst {dimension_numbers = #tpu.dot_dimension_numbers<[1], [0], [0], [1], [0, 0, 1, 1], [], []>} : vector<512x256xbf16>, vector<256x512xbf16>, vector<512x512xf32> -> vector<512x512xf32>
    %7 = vector.extract_strided_slice %6 {offsets = [0, 0], sizes = [256, 256], strides = [1, 1]} : vector<512x512xf32> to vector<256x256xf32>
    %8 = vector.extract_strided_slice %6 {offsets = [0, 256], sizes = [256, 256], strides = [1, 1]} : vector<512x512xf32> to vector<256x256xf32>
    %9 = vector.extract_strided_slice %6 {offsets = [256, 0], sizes = [256, 256], strides = [1, 1]} : vector<512x512xf32> to vector<256x256xf32>
    %10 = vector.extract_strided_slice %6 {offsets = [256, 256], sizes = [256, 256], strides = [1, 1]} : vector<512x512xf32> to vector<256x256xf32>
    %11 = arith.mulf %7, %7 : vector<256x256xf32>
    %12 = arith.mulf %8, %8 : vector<256x256xf32>
    %13 = arith.addf %11, %12 : vector<256x256xf32>
    %cst_5 = arith.constant 9.99999993E-9 : f32
    %14 = vector.broadcast %cst_5 : f32 to vector<256x256xf32>
    %15 = arith.maximumf %13, %14 : vector<256x256xf32>
    %16 = arith.mulf %9, %9 : vector<256x256xf32>
    %17 = arith.mulf %10, %10 : vector<256x256xf32>
    %18 = arith.addf %16, %17 : vector<256x256xf32>
    %cst_6 = arith.constant 9.99999993E-9 : f32
    %19 = vector.broadcast %cst_6 : f32 to vector<256x256xf32>
    %20 = arith.maximumf %18, %19 : vector<256x256xf32>
    %21 = arith.divf %20, %15 : vector<256x256xf32>
    %22 = math.log %21 : vector<256x256xf32>
    %23 = math.absf %22 : vector<256x256xf32>
    %cst_7 = arith.constant 5.000000e-01 : f32
    %24 = vector.broadcast %cst_7 : f32 to vector<256x256xf32>
    %25 = arith.mulf %24, %23 : vector<256x256xf32>
    %26 = arith.addf %20, %15 : vector<256x256xf32>
    %27 = arith.mulf %20, %15 : vector<256x256xf32>
    %28 = math.sqrt %27 : vector<256x256xf32>
    %cst_8 = arith.constant 2.000000e+00 : f32
    %29 = vector.broadcast %cst_8 : f32 to vector<256x256xf32>
    %30 = arith.mulf %29, %28 : vector<256x256xf32>
    %31 = arith.subf %26, %30 : vector<256x256xf32>
    %c0_9 = arith.constant 0 : index
    %c0_10 = arith.constant 0 : index
    %c0_11 = arith.constant 0 : index
    %32 = vector.load %arg4[%c0_9, %c0_10, %c0_11] : memref<3x8x256xf32, #tpu.memory_space<vmem>>, vector<1x8x256xf32>
    %33 = vector.shape_cast %32 : vector<1x8x256xf32> to vector<8x256xf32>
    %34 = vector.shape_cast %25 : vector<256x256xf32> to vector<32x8x256xf32>
    %cst_12 = arith.constant dense<0.000000e+00> : vector<8x256xf32>
    %35 = vector.multi_reduction <add>, %34, %cst_12 [0] : vector<32x8x256xf32> to vector<8x256xf32>
    %36 = arith.addf %33, %35 : vector<8x256xf32>
    %c0_13 = arith.constant 0 : index
    %c0_14 = arith.constant 0 : index
    %c0_15 = arith.constant 0 : index
    %37 = vector.load %arg4[%c0_13, %c0_14, %c0_15] : memref<3x8x256xf32, #tpu.memory_space<vmem>>, vector<1x8x256xf32>
    %38 = vector.shape_cast %37 : vector<1x8x256xf32> to vector<8x256xf32>
    %39 = vector.shape_cast %36 : vector<8x256xf32> to vector<1x8x256xf32>
    tpu.vector_store %arg4[%c0_13, %c0_14, %c0_15], %39 {strides = array<i32>} : memref<3x8x256xf32, #tpu.memory_space<vmem>>, vector<1x8x256xf32>,
    %c1 = arith.constant 1 : index
    %c0_16 = arith.constant 0 : index
    %c0_17 = arith.constant 0 : index
    %40 = vector.load %arg4[%c1, %c0_16, %c0_17] : memref<3x8x256xf32, #tpu.memory_space<vmem>>, vector<1x8x256xf32>
    %41 = vector.shape_cast %40 : vector<1x8x256xf32> to vector<8x256xf32>
    %42 = vector.shape_cast %31 : vector<256x256xf32> to vector<32x8x256xf32>
    %cst_18 = arith.constant dense<0.000000e+00> : vector<8x256xf32>
    %43 = vector.multi_reduction <add>, %42, %cst_18 [0] : vector<32x8x256xf32> to vector<8x256xf32>
    %44 = arith.addf %41, %43 : vector<8x256xf32>
    %c1_19 = arith.constant 1 : index
    %c0_20 = arith.constant 0 : index
    %c0_21 = arith.constant 0 : index
    %45 = vector.load %arg4[%c1_19, %c0_20, %c0_21] : memref<3x8x256xf32, #tpu.memory_space<vmem>>, vector<1x8x256xf32>
    %46 = vector.shape_cast %45 : vector<1x8x256xf32> to vector<8x256xf32>
    %47 = vector.shape_cast %44 : vector<8x256xf32> to vector<1x8x256xf32>
    tpu.vector_store %arg4[%c1_19, %c0_20, %c0_21], %47 {strides = array<i32>} : memref<3x8x256xf32, #tpu.memory_space<vmem>>, vector<1x8x256xf32>,
    %c2 = arith.constant 2 : index
    %c0_22 = arith.constant 0 : index
    %c0_23 = arith.constant 0 : index
    %48 = vector.load %arg4[%c2, %c0_22, %c0_23] : memref<3x8x256xf32, #tpu.memory_space<vmem>>, vector<1x8x256xf32>
    %49 = vector.shape_cast %48 : vector<1x8x256xf32> to vector<8x256xf32>
    %50 = vector.shape_cast %20 : vector<256x256xf32> to vector<32x8x256xf32>
    %cst_24 = arith.constant dense<0.000000e+00> : vector<8x256xf32>
    %51 = vector.multi_reduction <add>, %50, %cst_24 [0] : vector<32x8x256xf32> to vector<8x256xf32>
    %52 = arith.addf %49, %51 : vector<8x256xf32>
    %c2_25 = arith.constant 2 : index
    %c0_26 = arith.constant 0 : index
    %c0_27 = arith.constant 0 : index
    %53 = vector.load %arg4[%c2_25, %c0_26, %c0_27] : memref<3x8x256xf32, #tpu.memory_space<vmem>>, vector<1x8x256xf32>
    %54 = vector.shape_cast %53 : vector<1x8x256xf32> to vector<8x256xf32>
    %55 = vector.shape_cast %52 : vector<8x256xf32> to vector<1x8x256xf32>
    tpu.vector_store %arg4[%c2_25, %c0_26, %c0_27], %55 {strides = array<i32>} : memref<3x8x256xf32, #tpu.memory_space<vmem>>, vector<1x8x256xf32>,
    return
  }
  func.func @transform_0(%arg0: i32, %arg1: i32) -> (i32, i32, i32) {
    %c1_i32 = arith.constant 1 : i32
    %0 = arith.muli %arg0, %c1_i32 : i32
    %1 = arith.addi %0, %arg1 : i32
    %c0_i32 = arith.constant 0 : i32
    %c0_i32_0 = arith.constant 0 : i32
    %c0_i32_1 = arith.constant 0 : i32
    return %c0_i32, %1, %c0_i32_0 : i32, i32, i32
  }
  func.func @transform_1(%arg0: i32, %arg1: i32) -> (i32, i32) {
    %c0_i32 = arith.constant 0 : i32
    %c0_i32_0 = arith.constant 0 : i32
    %c0_i32_1 = arith.constant 0 : i32
    return %c0_i32, %c0_i32_0 : i32, i32
  }
  func.func @transform_2(%arg0: i32, %arg1: i32) -> (i32, i32, i32) {
    %c0_i32 = arith.constant 0 : i32
    %c0_i32_0 = arith.constant 0 : i32
    %c0_i32_1 = arith.constant 0 : i32
    return %arg0, %c0_i32, %c0_i32_0 : i32, i32, i32
  }
}

</mosaic_0001>

<llo_original>
// kernel: tpu_custom_call.1
$region0: #{tpu_custom_call.1}
  #allocation0 [shape = 'u32[]', space=smem, size = 0x4, offset = 0x4, fixed_abs, tag = 'smem constant byte address 0x4 - core index']
  #allocation1 [shape = 'u32[144,128]{1,0:T(1,128)}', space=vmem, size = 0x12000, scoped, tag = 'internal scratch']
  %s0 = inlined_call_operand.hbm [shape: bf16[2,256,256], index: 0, kind: input, shape index: {}]
  %s1 = inlined_call_operand.hbm [shape: bf16[256,512], index: 1, kind: input, shape index: {}]
  %s2 = inlined_call_operand.hbm [shape: f32[3,8,256], index: 2, kind: output, shape index: {}]
  %s3 = sld [smem:[#allocation0]]
  $region30: #{tpu_custom_call.1} parent=0
    _
  %s5 = ssub.s32 1, %s3
  %s6 = scalar_select 0, %s5, %s3
  $region1: #{tpu_custom_call.1} parent=0
    #allocation2 [shape = 'u8[262144]{0}', space=vmem, size = 0x40000, scoped, tag = 'input window, operand 0, single buffered']
    #allocation3 [shape = 's32[1]{0}', space=sflag, size = 0x4, scoped, tag = 'scoped memory for tpu_custom_call.1']
    #allocation4 [shape = 's32[1]{0}', space=sflag, size = 0x4, scoped, tag = 'scoped memory for tpu_custom_call.1']
    #allocation5 [shape = 'u8[262144]{0}', space=vmem, size = 0x40000, scoped, tag = 'input window, operand 1, single buffered']
    #allocation6 [shape = 's32[1]{0}', space=sflag, size = 0x4, scoped, tag = 'scoped memory for tpu_custom_call.1']
    #allocation7 [shape = 'u8[24576]{0}', space=vmem, size = 0x6000, scoped, tag = 'output window, operand 0, single buffered']
    %7 = vsyncpa [#allocation3], 0
    %8 = vsyncpa [#allocation6], 0
    %9 = vsyncpa [#allocation4], 0
    // Predicated region
    $region2: #{tpu_custom_call.1} parent=1 // pred_check
      _
    $region3: #{tpu_custom_call.1} parent=1 // pred_check_branch
      %11 = sbr.rel (0) target = $region5
    $region4: #{tpu_custom_call.1} parent=1 // pred_region
      %s12 = sadd.s32 0, 0
      %s13 = smul.u32 32, %s12
      %s15 = ssub.s32 8192, 8192
      %16 = vsyncadd [#allocation3], %s15
      %s17 = smul.addr %s13, 2
      %s18 = smul.addr %s17, 64
      %s19 = scalar_lea.hbm %s0, %s18
      %s20 = sshll.u32 [#allocation2], 4
      %s21 = int_to_ptr.vmem [resolvable:$true] %s20
      %26 = dma.hbm_to_vmem [thread:$0]  %s19, 8192, %s21, [#allocation3], 128, 128, 8
    $region5: #{tpu_custom_call.1} parent=1 // pred_fallthru
      _
    // Predicated region
    $region6: #{tpu_custom_call.1} parent=1 // pred_check
      _
    $region7: #{tpu_custom_call.1} parent=1 // pred_check_branch
      %28 = sbr.rel (0) target = $region9
    $region8: #{tpu_custom_call.1} parent=1 // pred_region
      %s30 = ssub.s32 8192, 8192
      %31 = vsyncadd [#allocation6], %s30
      %s32 = sshll.u32 [#allocation5], 4
      %s33 = int_to_ptr.vmem [resolvable:$true] %s32
      %38 = dma.hbm_to_vmem [thread:$0]  %s1, 8192, %s33, [#allocation6], 256, 256, 16
    $region9: #{tpu_custom_call.1} parent=1 // pred_fallthru
      _
    // Predicated region
    $region10: #{tpu_custom_call.1} parent=1 // pred_check
      _
    $region11: #{tpu_custom_call.1} parent=1 // pred_check_branch
      %40 = sbr.rel (0) target = $region13
    $region12: #{tpu_custom_call.1} parent=1 // pred_region
      %41 = dma.done [#allocation3], 8192
    $region13: #{tpu_custom_call.1} parent=1 // pred_fallthru
      _
    // Predicated region
    $region14: #{tpu_custom_call.1} parent=1 // pred_check
      _
    $region15: #{tpu_custom_call.1} parent=1 // pred_check_branch
      %43 = sbr.rel (0) target = $region17
    $region16: #{tpu_custom_call.1} parent=1 // pred_region
      %44 = dma.done [#allocation6], 8192
    $region17: #{tpu_custom_call.1} parent=1 // pred_fallthru
      _
    %s45 = sadd.s32 0, 0
    %s46 = smul.u32 32, %s45
    %p47 = scmp.eq.s32.totalorder 0, 0
    // Predicated region
    $region18: #{tpu_custom_call.1} parent=1 // pred_check
      %p48 = pneg %p47
    $region19: #{tpu_custom_call.1} parent=1 // pred_check_branch
      %50 = sbr.rel (%p48) target = $region21
    $region20: #{tpu_custom_call.1} parent=1 // pred_region
      %51 = vst [vmem:[#allocation7] sm:$0xff] 0.0
      %52 = vst [vmem:[#allocation7 + $0x8] sm:$0xff] 0.0
      %53 = vst [vmem:[#allocation7 + $0x10] sm:$0xff] 0.0
      %54 = vst [vmem:[#allocation7 + $0x18] sm:$0xff] 0.0
      %55 = vst [vmem:[#allocation7 + $0x20] sm:$0xff] 0.0
      %56 = vst [vmem:[#allocation7 + $0x28] sm:$0xff] 0.0
    $region21: #{tpu_custom_call.1} parent=1 // pred_fallthru
      _
    %v57 = vld [vmem:[#allocation2] sm:$0xff]
    %v58 = vld [vmem:[#allocation2 + $0x8] sm:$0xff]
    %v59 = vld [vmem:[#allocation2 + $0x10] sm:$0xff]
    %v60 = vld [vmem:[#allocation2 + $0x18] sm:$0xff]
    %v61 = vld [vmem:[#allocation2 + $0x20] sm:$0xff]
    %v62 = vld [vmem:[#allocation2 + $0x28] sm:$0xff]
    %v63 = vld [vmem:[#allocation2 + $0x30] sm:$0xff]
    %v64 = vld [vmem:[#allocation2 + $0x38] sm:$0xff]
    %v65 = vld [vmem:[#allocation2 + $0x40] sm:$0xff]
    %v66 = vld [vmem:[#allocation2 + $0x48] sm:$0xff]
    %v67 = vld [vmem:[#allocation2 + $0x50] sm:$0xff]
    %v68 = vld [vmem:[#allocation2 + $0x58] sm:$0xff]
    %v69 = vld [vmem:[#allocation2 + $0x60] sm:$0xff]
    %v70 = vld [vmem:[#allocation2 + $0x68] sm:$0xff]
    %v71 = vld [vmem:[#allocation2 + $0x70] sm:$0xff]
    %v72 = vld [vmem:[#allocation2 + $0x78] sm:$0xff]
    %v73 = vld [vmem:[#allocation2 + $0x80] sm:$0xff]
    %v74 = vld [vmem:[#allocation2 + $0x88] sm:$0xff]
    %v75 = vld [vmem:[#allocation2 + $0x90] sm:$0xff]
    %v76 = vld [vmem:[#allocation2 + $0x98] sm:$0xff]
    %v77 = vld [vmem:[#allocation2 + $0xa0] sm:$0xff]
    %v78 = vld [vmem:[#allocation2 + $0xa8] sm:$0xff]
    %v79 = vld [vmem:[#allocation2 + $0xb0] sm:$0xff]
    %v80 = vld [vmem:[#allocation2 + $0xb8] sm:$0xff]
    %v81 = vld [vmem:[#allocation2 + $0xc0] sm:$0xff]
    %v82 = vld [vmem:[#allocation2 + $0xc8] sm:$0xff]
    %v83 = vld [vmem:[#allocation2 + $0xd0] sm:$0xff]
    %v84 = vld [vmem:[#allocation2 + $0xd8] sm:$0xff]
    %v85 = vld [vmem:[#allocation2 + $0xe0] sm:$0xff]
    %v86 = vld [vmem:[#allocation2 + $0xe8] sm:$0xff]
    %v87 = vld [vmem:[#allocation2 + $0xf0] sm:$0xff]
    %v88 = vld [vmem:[#allocation2 + $0xf8] sm:$0xff]
    %v89 = vld [vmem:[#allocation2 + $0x100] sm:$0xff]
    %v90 = vld [vmem:[#allocation2 + $0x108] sm:$0xff]
    %v91 = vld [vmem:[#allocation2 + $0x110] sm:$0xff]
    %v92 = vld [vmem:[#allocation2 + $0x118] sm:$0xff]
    %v93 = vld [vmem:[#allocation2 + $0x120] sm:$0xff]
    %v94 = vld [vmem:[#allocation2 + $0x128] sm:$0xff]
    %v95 = vld [vmem:[#allocation2 + $0x130] sm:$0xff]
    %v96 = vld [vmem:[#allocation2 + $0x138] sm:$0xff]
    %v97 = vld [vmem:[#allocation2 + $0x140] sm:$0xff]
    %v98 = vld [vmem:[#allocation2 + $0x148] sm:$0xff]
    %v99 = vld [vmem:[#allocation2 + $0x150] sm:$0xff]
    %v100 = vld [vmem:[#allocation2 + $0x158] sm:$0xff]
    %v101 = vld [vmem:[#allocation2 + $0x160] sm:$0xff]
    %v102 = vld [vmem:[#allocation2 + $0x168] sm:$0xff]
    %v103 = vld [vmem:[#allocation2 + $0x170] sm:$0xff]
    %v104 = vld [vmem:[#allocation2 + $0x178] sm:$0xff]
    %v105 = vld [vmem:[#allocation2 + $0x180] sm:$0xff]
    %v106 = vld [vmem:[#allocation2 + $0x188] sm:$0xff]
    %v107 = vld [vmem:[#allocation2 + $0x190] sm:$0xff]
    %v108 = vld [vmem:[#allocation2 + $0x198] sm:$0xff]
    %v109 = vld [vmem:[#allocation2 + $0x1a0] sm:$0xff]
    %v110 = vld [vmem:[#allocation2 + $0x1a8] sm:$0xff]
    %v111 = vld [vmem:[#allocation2 + $0x1b0] sm:$0xff]
    %v112 = vld [vmem:[#allocation2 + $0x1b8] sm:$0xff]
    %v113 = vld [vmem:[#allocation2 + $0x1c0] sm:$0xff]
    %v114 = vld [vmem:[#allocation2 + $0x1c8] sm:$0xff]
    %v115 = vld [vmem:[#allocation2 + $0x1d0] sm:$0xff]
    %v116 = vld [vmem:[#allocation2 + $0x1d8] sm:$0xff]
    %v117 = vld [vmem:[#allocation2 + $0x1e0] sm:$0xff]
    %v118 = vld [vmem:[#allocation2 + $0x1e8] sm:$0xff]
    %v119 = vld [vmem:[#allocation2 + $0x1f0] sm:$0xff]
    %v120 = vld [vmem:[#allocation2 + $0x1f8] sm:$0xff]
    %v121 = vld [vmem:[#allocation5] sm:$0xff]
    %v122 = vld [vmem:[#allocation5 + $0x8] sm:$0xff]
    %v123 = vld [vmem:[#allocation5 + $0x10] sm:$0xff]
    %v124 = vld [vmem:[#allocation5 + $0x18] sm:$0xff]
    %v125 = vld [vmem:[#allocation5 + $0x20] sm:$0xff]
    %v126 = vld [vmem:[#allocation5 + $0x28] sm:$0xff]
    %v127 = vld [vmem:[#allocation5 + $0x30] sm:$0xff]
    %v128 = vld [vmem:[#allocation5 + $0x38] sm:$0xff]
    %v129 = vld [vmem:[#allocation5 + $0x40] sm:$0xff]
    %v130 = vld [vmem:[#allocation5 + $0x48] sm:$0xff]
    %v131 = vld [vmem:[#allocation5 + $0x50] sm:$0xff]
    %v132 = vld [vmem:[#allocation5 + $0x58] sm:$0xff]
    %v133 = vld [vmem:[#allocation5 + $0x60] sm:$0xff]
    %v134 = vld [vmem:[#allocation5 + $0x68] sm:$0xff]
    %v135 = vld [vmem:[#allocation5 + $0x70] sm:$0xff]
    %v136 = vld [vmem:[#allocation5 + $0x78] sm:$0xff]
    %v137 = vld [vmem:[#allocation5 + $0x80] sm:$0xff]
    %v138 = vld [vmem:[#allocation5 + $0x88] sm:$0xff]
    %v139 = vld [vmem:[#allocation5 + $0x90] sm:$0xff]
    %v140 = vld [vmem:[#allocation5 + $0x98] sm:$0xff]
    %v141 = vld [vmem:[#allocation5 + $0xa0] sm:$0xff]
    %v142 = vld [vmem:[#allocation5 + $0xa8] sm:$0xff]
    %v143 = vld [vmem:[#allocation5 + $0xb0] sm:$0xff]
    %v144 = vld [vmem:[#allocation5 + $0xb8] sm:$0xff]
    %v145 = vld [vmem:[#allocation5 + $0xc0] sm:$0xff]
    %v146 = vld [vmem:[#allocation5 + $0xc8] sm:$0xff]
    %v147 = vld [vmem:[#allocation5 + $0xd0] sm:$0xff]
    %v148 = vld [vmem:[#allocation5 + $0xd8] sm:$0xff]
    %v149 = vld [vmem:[#allocation5 + $0xe0] sm:$0xff]
    %v150 = vld [vmem:[#allocation5 + $0xe8] sm:$0xff]
    %v151 = vld [vmem:[#allocation5 + $0xf0] sm:$0xff]
    %v152 = vld [vmem:[#allocation5 + $0xf8] sm:$0xff]
    %v153 = vld [vmem:[#allocation5 + $0x100] sm:$0xff]
    %v154 = vld [vmem:[#allocation5 + $0x108] sm:$0xff]
    %v155 = vld [vmem:[#allocation5 + $0x110] sm:$0xff]
    %v156 = vld [vmem:[#allocation5 + $0x118] sm:$0xff]
    %v157 = vld [vmem:[#allocation5 + $0x120] sm:$0xff]
    %v158 = vld [vmem:[#allocation5 + $0x128] sm:$0xff]
    %v159 = vld [vmem:[#allocation5 + $0x130] sm:$0xff]
    %v160 = vld [vmem:[#allocation5 + $0x138] sm:$0xff]
    %v161 = vld [vmem:[#allocation5 + $0x140] sm:$0xff]
    %v162 = vld [vmem:[#allocation5 + $0x148] sm:$0xff]
    %v163 = vld [vmem:[#allocation5 + $0x150] sm:$0xff]
    %v164 = vld [vmem:[#allocation5 + $0x158] sm:$0xff]
    %v165 = vld [vmem:[#allocation5 + $0x160] sm:$0xff]
    %v166 = vld [vmem:[#allocation5 + $0x168] sm:$0xff]
    %v167 = vld [vmem:[#allocation5 + $0x170] sm:$0xff]
    %v168 = vld [vmem:[#allocation5 + $0x178] sm:$0xff]
    %v169 = vld [vmem:[#allocation5 + $0x180] sm:$0xff]
    %v170 = vld [vmem:[#allocation5 + $0x188] sm:$0xff]
    %v171 = vld [vmem:[#allocation5 + $0x190] sm:$0xff]
    %v172 = vld [vmem:[#allocation5 + $0x198] sm:$0xff]
    %v173 = vld [vmem:[#allocation5 + $0x1a0] sm:$0xff]
    %v174 = vld [vmem:[#allocation5 + $0x1a8] sm:$0xff]
    %v175 = vld [vmem:[#allocation5 + $0x1b0] sm:$0xff]
    %v176 = vld [vmem:[#allocation5 + $0x1b8] sm:$0xff]
    %v177 = vld [vmem:[#allocation5 + $0x1c0] sm:$0xff]
    %v178 = vld [vmem:[#allocation5 + $0x1c8] sm:$0xff]
    %v179 = vld [vmem:[#allocation5 + $0x1d0] sm:$0xff]
    %v180 = vld [vmem:[#allocation5 + $0x1d8] sm:$0xff]
    %v181 = vld [vmem:[#allocation5 + $0x1e0] sm:$0xff]
    %v182 = vld [vmem:[#allocation5 + $0x1e8] sm:$0xff]
    %v183 = vld [vmem:[#allocation5 + $0x1f0] sm:$0xff]
    %v184 = vld [vmem:[#allocation5 + $0x1f8] sm:$0xff]
    %v249 = vunpack.c.l.b16 %v57
    %v250 = vunpack.c.h.b16 %v57
    %v251 = vunpack.c.l.b16 %v58
    %v252 = vunpack.c.h.b16 %v58
    %v253 = vunpack.c.l.b16 %v59
    %v254 = vunpack.c.h.b16 %v59
    %v255 = vunpack.c.l.b16 %v60
    %v256 = vunpack.c.h.b16 %v60
    %v257 = vunpack.c.l.b16 %v61
    %v258 = vunpack.c.h.b16 %v61
    %v259 = vunpack.c.l.b16 %v62
    %v260 = vunpack.c.h.b16 %v62
    %v261 = vunpack.c.l.b16 %v63
    %v262 = vunpack.c.h.b16 %v63
    %v263 = vunpack.c.l.b16 %v64
    %v264 = vunpack.c.h.b16 %v64
    %v265 = vunpack.c.l.b16 %v65
    %v266 = vunpack.c.h.b16 %v65
    %v267 = vunpack.c.l.b16 %v66
    %v268 = vunpack.c.h.b16 %v66
    %v269 = vunpack.c.l.b16 %v67
    %v270 = vunpack.c.h.b16 %v67
    %v271 = vunpack.c.l.b16 %v68
    %v272 = vunpack.c.h.b16 %v68
    %v273 = vunpack.c.l.b16 %v69
    %v274 = vunpack.c.h.b16 %v69
    %v275 = vunpack.c.l.b16 %v70
    %v276 = vunpack.c.h.b16 %v70
    %v277 = vunpack.c.l.b16 %v71
    %v278 = vunpack.c.h.b16 %v71
    %v279 = vunpack.c.l.b16 %v72
    %v280 = vunpack.c.h.b16 %v72
    %v281 = vunpack.c.l.b16 %v73
    %v282 = vunpack.c.h.b16 %v73
    %v283 = vunpack.c.l.b16 %v74
    %v284 = vunpack.c.h.b16 %v74
    %v285 = vunpack.c.l.b16 %v75
    %v286 = vunpack.c.h.b16 %v75
    %v287 = vunpack.c.l.b16 %v76
    %v288 = vunpack.c.h.b16 %v76
    %v289 = vunpack.c.l.b16 %v77
    %v290 = vunpack.c.h.b16 %v77
    %v291 = vunpack.c.l.b16 %v78
    %v292 = vunpack.c.h.b16 %v78
    %v293 = vunpack.c.l.b16 %v79
    %v294 = vunpack.c.h.b16 %v79
    %v295 = vunpack.c.l.b16 %v80
    %v296 = vunpack.c.h.b16 %v80
    %v297 = vunpack.c.l.b16 %v81
    %v298 = vunpack.c.h.b16 %v81
    %v299 = vunpack.c.l.b16 %v82
    %v300 = vunpack.c.h.b16 %v82
    %v301 = vunpack.c.l.b16 %v83
    %v302 = vunpack.c.h.b16 %v83
    %v303 = vunpack.c.l.b16 %v84
    %v304 = vunpack.c.h.b16 %v84
    %v305 = vunpack.c.l.b16 %v85
    %v306 = vunpack.c.h.b16 %v85
    %v307 = vunpack.c.l.b16 %v86
    %v308 = vunpack.c.h.b16 %v86
    %v309 = vunpack.c.l.b16 %v87
    %v310 = vunpack.c.h.b16 %v87
    %v311 = vunpack.c.l.b16 %v88
    %v312 = vunpack.c.h.b16 %v88
    %v313 = vunpack.c.l.b16 %v89
    %v314 = vunpack.c.h.b16 %v89
    %v315 = vunpack.c.l.b16 %v90
    %v316 = vunpack.c.h.b16 %v90
    %v317 = vunpack.c.l.b16 %v91
    %v318 = vunpack.c.h.b16 %v91
    %v319 = vunpack.c.l.b16 %v92
    %v320 = vunpack.c.h.b16 %v92
    %v321 = vunpack.c.l.b16 %v93
    %v322 = vunpack.c.h.b16 %v93
    %v323 = vunpack.c.l.b16 %v94
    %v324 = vunpack.c.h.b16 %v94
    %v325 = vunpack.c.l.b16 %v95
    %v326 = vunpack.c.h.b16 %v95
    %v327 = vunpack.c.l.b16 %v96
    %v328 = vunpack.c.h.b16 %v96
    %v329 = vunpack.c.l.b16 %v97
    %v330 = vunpack.c.h.b16 %v97
    %v331 = vunpack.c.l.b16 %v98
    %v332 = vunpack.c.h.b16 %v98
    %v333 = vunpack.c.l.b16 %v99
    %v334 = vunpack.c.h.b16 %v99
    %v335 = vunpack.c.l.b16 %v100
    %v336 = vunpack.c.h.b16 %v100
    %v337 = vunpack.c.l.b16 %v101
    %v338 = vunpack.c.h.b16 %v101
    %v339 = vunpack.c.l.b16 %v102
    %v340 = vunpack.c.h.b16 %v102
    %v341 = vunpack.c.l.b16 %v103
    %v342 = vunpack.c.h.b16 %v103
    %v343 = vunpack.c.l.b16 %v104
    %v344 = vunpack.c.h.b16 %v104
    %v345 = vunpack.c.l.b16 %v105
    %v346 = vunpack.c.h.b16 %v105
    %v347 = vunpack.c.l.b16 %v106
    %v348 = vunpack.c.h.b16 %v106
    %v349 = vunpack.c.l.b16 %v107
    %v350 = vunpack.c.h.b16 %v107
    %v351 = vunpack.c.l.b16 %v108
    %v352 = vunpack.c.h.b16 %v108
    %v353 = vunpack.c.l.b16 %v109
    %v354 = vunpack.c.h.b16 %v109
    %v355 = vunpack.c.l.b16 %v110
    %v356 = vunpack.c.h.b16 %v110
    %v357 = vunpack.c.l.b16 %v111
    %v358 = vunpack.c.h.b16 %v111
    %v359 = vunpack.c.l.b16 %v112
    %v360 = vunpack.c.h.b16 %v112
    %v361 = vunpack.c.l.b16 %v113
    %v362 = vunpack.c.h.b16 %v113
    %v363 = vunpack.c.l.b16 %v114
    %v364 = vunpack.c.h.b16 %v114
    %v365 = vunpack.c.l.b16 %v115
    %v366 = vunpack.c.h.b16 %v115
    %v367 = vunpack.c.l.b16 %v116
    %v368 = vunpack.c.h.b16 %v116
    %v369 = vunpack.c.l.b16 %v117
    %v370 = vunpack.c.h.b16 %v117
    %v371 = vunpack.c.l.b16 %v118
    %v372 = vunpack.c.h.b16 %v118
    %v373 = vunpack.c.l.b16 %v119
    %v374 = vunpack.c.h.b16 %v119
    %v375 = vunpack.c.l.b16 %v120
    %v376 = vunpack.c.h.b16 %v120
    %v377 = vpack.c.b16 %v251, %v249
    %v378 = vpack.c.b16 %v252, %v250
    %v379 = vpack.c.b16 %v255, %v253
    %v380 = vpack.c.b16 %v256, %v254
    %v381 = vpack.c.b16 %v259, %v257
    %v382 = vpack.c.b16 %v260, %v258
    %v383 = vpack.c.b16 %v263, %v261
    %v384 = vpack.c.b16 %v264, %v262
    %v385 = vpack.c.b16 %v267, %v265
    %v386 = vpack.c.b16 %v268, %v266
    %v387 = vpack.c.b16 %v271, %v269
    %v388 = vpack.c.b16 %v272, %v270
    %v389 = vpack.c.b16 %v275, %v273
    %v390 = vpack.c.b16 %v276, %v274
    %v391 = vpack.c.b16 %v279, %v277
    %v392 = vpack.c.b16 %v280, %v278
    %v393 = vpack.c.b16 %v283, %v281
    %v394 = vpack.c.b16 %v284, %v282
    %v395 = vpack.c.b16 %v287, %v285
    %v396 = vpack.c.b16 %v288, %v286
    %v397 = vpack.c.b16 %v291, %v289
    %v398 = vpack.c.b16 %v292, %v290
    %v399 = vpack.c.b16 %v295, %v293
    %v400 = vpack.c.b16 %v296, %v294
    %v401 = vpack.c.b16 %v299, %v297
    %v402 = vpack.c.b16 %v300, %v298
    %v403 = vpack.c.b16 %v303, %v301
    %v404 = vpack.c.b16 %v304, %v302
    %v405 = vpack.c.b16 %v307, %v305
    %v406 = vpack.c.b16 %v308, %v306
    %v407 = vpack.c.b16 %v311, %v309
    %v408 = vpack.c.b16 %v312, %v310
    %v409 = vpack.c.b16 %v315, %v313
    %v410 = vpack.c.b16 %v316, %v314
    %v411 = vpack.c.b16 %v319, %v317
    %v412 = vpack.c.b16 %v320, %v318
    %v413 = vpack.c.b16 %v323, %v321
    %v414 = vpack.c.b16 %v324, %v322
    %v415 = vpack.c.b16 %v327, %v325
    %v416 = vpack.c.b16 %v328, %v326
    %v417 = vpack.c.b16 %v331, %v329
    %v418 = vpack.c.b16 %v332, %v330
    %v419 = vpack.c.b16 %v335, %v333
    %v420 = vpack.c.b16 %v336, %v334
    %v421 = vpack.c.b16 %v339, %v337
    %v422 = vpack.c.b16 %v340, %v338
    %v423 = vpack.c.b16 %v343, %v341
    %v424 = vpack.c.b16 %v344, %v342
    %v425 = vpack.c.b16 %v347, %v345
    %v426 = vpack.c.b16 %v348, %v346
    %v427 = vpack.c.b16 %v351, %v349
    %v428 = vpack.c.b16 %v352, %v350
    %v429 = vpack.c.b16 %v355, %v353
    %v430 = vpack.c.b16 %v356, %v354
    %v431 = vpack.c.b16 %v359, %v357
    %v432 = vpack.c.b16 %v360, %v358
    %v433 = vpack.c.b16 %v363, %v361
    %v434 = vpack.c.b16 %v364, %v362
    %v435 = vpack.c.b16 %v367, %v365
    %v436 = vpack.c.b16 %v368, %v366
    %v437 = vpack.c.b16 %v371, %v369
    %v438 = vpack.c.b16 %v372, %v370
    %v439 = vpack.c.b16 %v375, %v373
    %v440 = vpack.c.b16 %v376, %v374
    %v569 = vunpack.c.l.b16 %v121
    %v570 = vunpack.c.h.b16 %v121
    %v571 = vunpack.c.l.b16 %v122
    %v572 = vunpack.c.h.b16 %v122
    %v573 = vunpack.c.l.b16 %v123
    %v574 = vunpack.c.h.b16 %v123
    %v575 = vunpack.c.l.b16 %v124
    %v576 = vunpack.c.h.b16 %v124
    %v577 = vunpack.c.l.b16 %v125
    %v578 = vunpack.c.h.b16 %v125
    %v579 = vunpack.c.l.b16 %v126
    %v580 = vunpack.c.h.b16 %v126
    %v581 = vunpack.c.l.b16 %v127
    %v582 = vunpack.c.h.b16 %v127
    %v583 = vunpack.c.l.b16 %v128
    %v584 = vunpack.c.h.b16 %v128
    %v585 = vunpack.c.l.b16 %v129
    %v586 = vunpack.c.h.b16 %v129
    %v587 = vunpack.c.l.b16 %v130
    %v588 = vunpack.c.h.b16 %v130
    %v589 = vunpack.c.l.b16 %v131
    %v590 = vunpack.c.h.b16 %v131
    %v591 = vunpack.c.l.b16 %v132
    %v592 = vunpack.c.h.b16 %v132
    %v593 = vunpack.c.l.b16 %v133
    %v594 = vunpack.c.h.b16 %v133
    %v595 = vunpack.c.l.b16 %v134
    %v596 = vunpack.c.h.b16 %v134
    %v597 = vunpack.c.l.b16 %v135
    %v598 = vunpack.c.h.b16 %v135
    %v599 = vunpack.c.l.b16 %v136
    %v600 = vunpack.c.h.b16 %v136
    %v601 = vunpack.c.l.b16 %v137
    %v602 = vunpack.c.h.b16 %v137
    %v603 = vunpack.c.l.b16 %v138
    %v604 = vunpack.c.h.b16 %v138
    %v605 = vunpack.c.l.b16 %v139
    %v606 = vunpack.c.h.b16 %v139
    %v607 = vunpack.c.l.b16 %v140
    %v608 = vunpack.c.h.b16 %v140
    %v609 = vunpack.c.l.b16 %v141
    %v610 = vunpack.c.h.b16 %v141
    %v611 = vunpack.c.l.b16 %v142
    %v612 = vunpack.c.h.b16 %v142
    %v613 = vunpack.c.l.b16 %v143
    %v614 = vunpack.c.h.b16 %v143
    %v615 = vunpack.c.l.b16 %v144
    %v616 = vunpack.c.h.b16 %v144
    %v617 = vunpack.c.l.b16 %v145
    %v618 = vunpack.c.h.b16 %v145
    %v619 = vunpack.c.l.b16 %v146
    %v620 = vunpack.c.h.b16 %v146
    %v621 = vunpack.c.l.b16 %v147
    %v622 = vunpack.c.h.b16 %v147
    %v623 = vunpack.c.l.b16 %v148
    %v624 = vunpack.c.h.b16 %v148
    %v625 = vunpack.c.l.b16 %v149
    %v626 = vunpack.c.h.b16 %v149
    %v627 = vunpack.c.l.b16 %v150
    %v628 = vunpack.c.h.b16 %v150
    %v629 = vunpack.c.l.b16 %v151
    %v630 = vunpack.c.h.b16 %v151
    %v631 = vunpack.c.l.b16 %v152
    %v632 = vunpack.c.h.b16 %v152
    %v633 = vunpack.c.l.b16 %v153
    %v634 = vunpack.c.h.b16 %v153
    %v635 = vunpack.c.l.b16 %v154
    %v636 = vunpack.c.h.b16 %v154
    %v637 = vunpack.c.l.b16 %v155
    %v638 = vunpack.c.h.b16 %v155
    %v639 = vunpack.c.l.b16 %v156
    %v640 = vunpack.c.h.b16 %v156
    %v641 = vunpack.c.l.b16 %v157
    %v642 = vunpack.c.h.b16 %v157
    %v643 = vunpack.c.l.b16 %v158
    %v644 = vunpack.c.h.b16 %v158
    %v645 = vunpack.c.l.b16 %v159
    %v646 = vunpack.c.h.b16 %v159
    %v647 = vunpack.c.l.b16 %v160
    %v648 = vunpack.c.h.b16 %v160
    %v649 = vunpack.c.l.b16 %v161
    %v650 = vunpack.c.h.b16 %v161
    %v651 = vunpack.c.l.b16 %v162
    %v652 = vunpack.c.h.b16 %v162
    %v653 = vunpack.c.l.b16 %v163
    %v654 = vunpack.c.h.b16 %v163
    %v655 = vunpack.c.l.b16 %v164
    %v656 = vunpack.c.h.b16 %v164
    %v657 = vunpack.c.l.b16 %v165
    %v658 = vunpack.c.h.b16 %v165
    %v659 = vunpack.c.l.b16 %v166
    %v660 = vunpack.c.h.b16 %v166
    %v661 = vunpack.c.l.b16 %v167
    %v662 = vunpack.c.h.b16 %v167
    %v663 = vunpack.c.l.b16 %v168
    %v664 = vunpack.c.h.b16 %v168
    %v665 = vunpack.c.l.b16 %v169
    %v666 = vunpack.c.h.b16 %v169
    %v667 = vunpack.c.l.b16 %v170
    %v668 = vunpack.c.h.b16 %v170
    %v669 = vunpack.c.l.b16 %v171
    %v670 = vunpack.c.h.b16 %v171
    %v671 = vunpack.c.l.b16 %v172
    %v672 = vunpack.c.h.b16 %v172
    %v673 = vunpack.c.l.b16 %v173
    %v674 = vunpack.c.h.b16 %v173
    %v675 = vunpack.c.l.b16 %v174
    %v676 = vunpack.c.h.b16 %v174
    %v677 = vunpack.c.l.b16 %v175
    %v678 = vunpack.c.h.b16 %v175
    %v679 = vunpack.c.l.b16 %v176
    %v680 = vunpack.c.h.b16 %v176
    %v681 = vunpack.c.l.b16 %v177
    %v682 = vunpack.c.h.b16 %v177
    %v683 = vunpack.c.l.b16 %v178
    %v684 = vunpack.c.h.b16 %v178
    %v685 = vunpack.c.l.b16 %v179
    %v686 = vunpack.c.h.b16 %v179
    %v687 = vunpack.c.l.b16 %v180
    %v688 = vunpack.c.h.b16 %v180
    %v689 = vunpack.c.l.b16 %v181
    %v690 = vunpack.c.h.b16 %v181
    %v691 = vunpack.c.l.b16 %v182
    %v692 = vunpack.c.h.b16 %v182
    %v693 = vunpack.c.l.b16 %v183
    %v694 = vunpack.c.h.b16 %v183
    %v695 = vunpack.c.l.b16 %v184
    %v696 = vunpack.c.h.b16 %v184
    %v697 = vpack.c.b16 %v573, %v569
    %v698 = vpack.c.b16 %v574, %v570
    %v699 = vpack.c.b16 %v575, %v571
    %v700 = vpack.c.b16 %v576, %v572
    %v701 = vpack.c.b16 %v581, %v577
    %v702 = vpack.c.b16 %v582, %v578
    %v703 = vpack.c.b16 %v583, %v579
    %v704 = vpack.c.b16 %v584, %v580
    %v705 = vpack.c.b16 %v589, %v585
    %v706 = vpack.c.b16 %v590, %v586
    %v707 = vpack.c.b16 %v591, %v587
    %v708 = vpack.c.b16 %v592, %v588
    %v709 = vpack.c.b16 %v597, %v593
    %v710 = vpack.c.b16 %v598, %v594
    %v711 = vpack.c.b16 %v599, %v595
    %v712 = vpack.c.b16 %v600, %v596
    %v713 = vpack.c.b16 %v605, %v601
    %v714 = vpack.c.b16 %v606, %v602
    %v715 = vpack.c.b16 %v607, %v603
    %v716 = vpack.c.b16 %v608, %v604
    %v717 = vpack.c.b16 %v613, %v609
    %v718 = vpack.c.b16 %v614, %v610
    %v719 = vpack.c.b16 %v615, %v611
    %v720 = vpack.c.b16 %v616, %v612
    %v721 = vpack.c.b16 %v621, %v617
    %v722 = vpack.c.b16 %v622, %v618
    %v723 = vpack.c.b16 %v623, %v619
    %v724 = vpack.c.b16 %v624, %v620
    %v725 = vpack.c.b16 %v629, %v625
    %v726 = vpack.c.b16 %v630, %v626
    %v727 = vpack.c.b16 %v631, %v627
    %v728 = vpack.c.b16 %v632, %v628
    %v729 = vpack.c.b16 %v637, %v633
    %v730 = vpack.c.b16 %v638, %v634
    %v731 = vpack.c.b16 %v639, %v635
    %v732 = vpack.c.b16 %v640, %v636
    %v733 = vpack.c.b16 %v645, %v641
    %v734 = vpack.c.b16 %v646, %v642
    %v735 = vpack.c.b16 %v647, %v643
    %v736 = vpack.c.b16 %v648, %v644
    %v737 = vpack.c.b16 %v653, %v649
    %v738 = vpack.c.b16 %v654, %v650
    %v739 = vpack.c.b16 %v655, %v651
    %v740 = vpack.c.b16 %v656, %v652
    %v741 = vpack.c.b16 %v661, %v657
    %v742 = vpack.c.b16 %v662, %v658
    %v743 = vpack.c.b16 %v663, %v659
    %v744 = vpack.c.b16 %v664, %v660
    %v745 = vpack.c.b16 %v669, %v665
    %v746 = vpack.c.b16 %v670, %v666
    %v747 = vpack.c.b16 %v671, %v667
    %v748 = vpack.c.b16 %v672, %v668
    %v749 = vpack.c.b16 %v677, %v673
    %v750 = vpack.c.b16 %v678, %v674
    %v751 = vpack.c.b16 %v679, %v675
    %v752 = vpack.c.b16 %v680, %v676
    %v753 = vpack.c.b16 %v685, %v681
    %v754 = vpack.c.b16 %v686, %v682
    %v755 = vpack.c.b16 %v687, %v683
    %v756 = vpack.c.b16 %v688, %v684
    %v757 = vpack.c.b16 %v693, %v689
    %v758 = vpack.c.b16 %v694, %v690
    %v759 = vpack.c.b16 %v695, %v691
    %v760 = vpack.c.b16 %v696, %v692
    %825 = vmatprep.subr.bf16.mxu0 %v726
    %826 = vmatpush1.bf16.msra.mxu0 %v725
    %827 = vmatprep.subr.bf16.mxu0 %v722
    %828 = vmatpush1.bf16.msra.mxu0 %v721
    %829 = vmatprep.subr.bf16.mxu0 %v718
    %830 = vmatpush1.bf16.msra.mxu0 %v717
    %831 = vmatprep.subr.bf16.mxu0 %v714
    %832 = vmatpush1.bf16.msra.mxu0 %v713
    %833 = vmatprep.subr.bf16.mxu0 %v710
    %834 = vmatpush1.bf16.msra.mxu0 %v709
    %835 = vmatprep.subr.bf16.mxu0 %v706
    %836 = vmatpush1.bf16.msra.mxu0 %v705
    %837 = vmatprep.subr.bf16.mxu0 %v702
    %838 = vmatpush1.bf16.msra.mxu0 %v701
    %839 = vmatprep.subr.bf16.mxu0 %v698
    %840 = vmatpush1.bf16.msra.mxu0 %v697
    %841 = vmatprep.subr.bf16.mxu0 %v758
    %842 = vmatpush2.bf16.msra.mxu0 %v757
    %843 = vmatprep.subr.bf16.mxu0 %v754
    %844 = vmatpush2.bf16.msra.mxu0 %v753
    %845 = vmatprep.subr.bf16.mxu0 %v750
    %846 = vmatpush2.bf16.msra.mxu0 %v749
    %847 = vmatprep.subr.bf16.mxu0 %v746
    %848 = vmatpush2.bf16.msra.mxu0 %v745
    %849 = vmatprep.subr.bf16.mxu0 %v742
    %850 = vmatpush2.bf16.msra.mxu0 %v741
    %851 = vmatprep.subr.bf16.mxu0 %v738
    %852 = vmatpush2.bf16.msra.mxu0 %v737
    %853 = vmatprep.subr.bf16.mxu0 %v734
    %854 = vmatpush2.bf16.msra.mxu0 %v733
    %855 = vmatprep.subr.bf16.mxu0 %v730
    %856 = vmatpush2.bf16.msra.mxu0 %v729
    %857 = vmatprep.mubr.bf16.mxu0 %v378
    %858 = vmatmul.mubr.bf16.gmra.mxu0 %v377
    %v859 = vpop.f32.mrf.mxu0
    %v860 = vadd.f32 0.0, %v859
    %v861 = vpop.f32.mrf.mxu0
    %v862 = vadd.f32 0.0, %v861
    %v863 = vpop.f32.mrf.mxu0
    %v864 = vadd.f32 0.0, %v863
    %v865 = vpop.f32.mrf.mxu0
    %v866 = vadd.f32 0.0, %v865
    %867 = vmatprep.mubr.bf16.mxu0 %v380
    %868 = vmatmul.mubr.bf16.gmra.mxu0 %v379
    %v869 = vpop.f32.mrf.mxu0
    %v870 = vadd.f32 0.0, %v869
    %v871 = vpop.f32.mrf.mxu0
    %v872 = vadd.f32 0.0, %v871
    %v873 = vpop.f32.mrf.mxu0
    %v874 = vadd.f32 0.0, %v873
    %v875 = vpop.f32.mrf.mxu0
    %v876 = vadd.f32 0.0, %v875
    %877 = vmatprep.mubr.bf16.mxu0 %v382
    %878 = vmatmul.mubr.bf16.gmra.mxu0 %v381
    %v879 = vpop.f32.mrf.mxu0
    %v880 = vadd.f32 0.0, %v879
    %v881 = vpop.f32.mrf.mxu0
    %v882 = vadd.f32 0.0, %v881
    %v883 = vpop.f32.mrf.mxu0
    %v884 = vadd.f32 0.0, %v883
    %v885 = vpop.f32.mrf.mxu0
    %v886 = vadd.f32 0.0, %v885
    %887 = vmatprep.mubr.bf16.mxu0 %v384
    %888 = vmatmul.mubr.bf16.gmra.mxu0 %v383
    %v889 = vpop.f32.mrf.mxu0
    %v890 = vadd.f32 0.0, %v889
    %v891 = vpop.f32.mrf.mxu0
    %v892 = vadd.f32 0.0, %v891
    %v893 = vpop.f32.mrf.mxu0
    %v894 = vadd.f32 0.0, %v893
    %v895 = vpop.f32.mrf.mxu0
    %v896 = vadd.f32 0.0, %v895
    %897 = vmatprep.mubr.bf16.mxu0 %v386
    %898 = vmatmul.mubr.bf16.gmra.mxu0 %v385
    %v899 = vpop.f32.mrf.mxu0
    %v900 = vadd.f32 0.0, %v899
    %v901 = vpop.f32.mrf.mxu0
    %v902 = vadd.f32 0.0, %v901
    %v903 = vpop.f32.mrf.mxu0
    %v904 = vadd.f32 0.0, %v903
    %v905 = vpop.f32.mrf.mxu0
    %v906 = vadd.f32 0.0, %v905
    %907 = vmatprep.mubr.bf16.mxu0 %v388
    %908 = vmatmul.mubr.bf16.gmra.mxu0 %v387
    %v909 = vpop.f32.mrf.mxu0
    %v910 = vadd.f32 0.0, %v909
    %v911 = vpop.f32.mrf.mxu0
    %v912 = vadd.f32 0.0, %v911
    %v913 = vpop.f32.mrf.mxu0
    %v914 = vadd.f32 0.0, %v913
    %v915 = vpop.f32.mrf.mxu0
    %v916 = vadd.f32 0.0, %v915
    %917 = vmatprep.mubr.bf16.mxu0 %v390
    %918 = vmatmul.mubr.bf16.gmra.mxu0 %v389
    %v919 = vpop.f32.mrf.mxu0
    %v920 = vadd.f32 0.0, %v919
    %v921 = vpop.f32.mrf.mxu0
    %v922 = vadd.f32 0.0, %v921
    %v923 = vpop.f32.mrf.mxu0
    %v924 = vadd.f32 0.0, %v923
    %v925 = vpop.f32.mrf.mxu0
    %v926 = vadd.f32 0.0, %v925
    %927 = vmatprep.mubr.bf16.mxu0 %v392
    %928 = vmatmul.mubr.bf16.gmra.mxu0 %v391
    %v929 = vpop.f32.mrf.mxu0
    %v930 = vadd.f32 0.0, %v929
    %v931 = vpop.f32.mrf.mxu0
    %v932 = vadd.f32 0.0, %v931
    %v933 = vpop.f32.mrf.mxu0
    %v934 = vadd.f32 0.0, %v933
    %v935 = vpop.f32.mrf.mxu0
    %v936 = vadd.f32 0.0, %v935
    %937 = vmatprep.mubr.bf16.mxu0 %v394
    %938 = vmatmul.mubr.bf16.gmra.mxu0 %v393
    %v939 = vpop.f32.mrf.mxu0
    %v940 = vadd.f32 0.0, %v939
    %v941 = vpop.f32.mrf.mxu0
    %v942 = vadd.f32 0.0, %v941
    %v943 = vpop.f32.mrf.mxu0
    %v944 = vadd.f32 0.0, %v943
    %v945 = vpop.f32.mrf.mxu0
    %v946 = vadd.f32 0.0, %v945
    %947 = vmatprep.mubr.bf16.mxu0 %v396
    %948 = vmatmul.mubr.bf16.gmra.mxu0 %v395
    %v949 = vpop.f32.mrf.mxu0
    %v950 = vadd.f32 0.0, %v949
    %v951 = vpop.f32.mrf.mxu0
    %v952 = vadd.f32 0.0, %v951
    %v953 = vpop.f32.mrf.mxu0
    %v954 = vadd.f32 0.0, %v953
    %v955 = vpop.f32.mrf.mxu0
    %v956 = vadd.f32 0.0, %v955
    %957 = vmatprep.mubr.bf16.mxu0 %v398
    %958 = vmatmul.mubr.bf16.gmra.mxu0 %v397
    %v959 = vpop.f32.mrf.mxu0
    %v960 = vadd.f32 0.0, %v959
    %v961 = vpop.f32.mrf.mxu0
    %v962 = vadd.f32 0.0, %v961
    %v963 = vpop.f32.mrf.mxu0
    %v964 = vadd.f32 0.0, %v963
    %v965 = vpop.f32.mrf.mxu0
    %v966 = vadd.f32 0.0, %v965
    %967 = vmatprep.mubr.bf16.mxu0 %v400
    %968 = vmatmul.mubr.bf16.gmra.mxu0 %v399
    %v969 = vpop.f32.mrf.mxu0
    %v970 = vadd.f32 0.0, %v969
    %v971 = vpop.f32.mrf.mxu0
    %v972 = vadd.f32 0.0, %v971
    %v973 = vpop.f32.mrf.mxu0
    %v974 = vadd.f32 0.0, %v973
    %v975 = vpop.f32.mrf.mxu0
    %v976 = vadd.f32 0.0, %v975
    %977 = vmatprep.mubr.bf16.mxu0 %v402
    %978 = vmatmul.mubr.bf16.gmra.mxu0 %v401
    %v979 = vpop.f32.mrf.mxu0
    %v980 = vadd.f32 0.0, %v979
    %v981 = vpop.f32.mrf.mxu0
    %v982 = vadd.f32 0.0, %v981
    %v983 = vpop.f32.mrf.mxu0
    %v984 = vadd.f32 0.0, %v983
    %v985 = vpop.f32.mrf.mxu0
    %v986 = vadd.f32 0.0, %v985
    %987 = vmatprep.mubr.bf16.mxu0 %v404
    %988 = vmatmul.mubr.bf16.gmra.mxu0 %v403
    %v989 = vpop.f32.mrf.mxu0
    %v990 = vadd.f32 0.0, %v989
    %v991 = vpop.f32.mrf.mxu0
    %v992 = vadd.f32 0.0, %v991
    %v993 = vpop.f32.mrf.mxu0
    %v994 = vadd.f32 0.0, %v993
    %v995 = vpop.f32.mrf.mxu0
    %v996 = vadd.f32 0.0, %v995
    %997 = vmatprep.mubr.bf16.mxu0 %v406
    %998 = vmatmul.mubr.bf16.gmra.mxu0 %v405
    %v999 = vpop.f32.mrf.mxu0
    %v1000 = vadd.f32 0.0, %v999
    %v1001 = vpop.f32.mrf.mxu0
    %v1002 = vadd.f32 0.0, %v1001
    %v1003 = vpop.f32.mrf.mxu0
    %v1004 = vadd.f32 0.0, %v1003
    %v1005 = vpop.f32.mrf.mxu0
    %v1006 = vadd.f32 0.0, %v1005
    %1007 = vmatprep.mubr.bf16.mxu0 %v408
    %1008 = vmatmul.mubr.bf16.gmra.mxu0 %v407
    %v1009 = vpop.f32.mrf.mxu0
    %v1010 = vadd.f32 0.0, %v1009
    %v1011 = vpop.f32.mrf.mxu0
    %v1012 = vadd.f32 0.0, %v1011
    %v1013 = vpop.f32.mrf.mxu0
    %v1014 = vadd.f32 0.0, %v1013
    %v1015 = vpop.f32.mrf.mxu0
    %v1016 = vadd.f32 0.0, %v1015
    %1017 = vmatprep.mubr.bf16.mxu0 %v410
    %1018 = vmatmul.mubr.bf16.gmra.mxu0 %v409
    %v1019 = vpop.f32.mrf.mxu0
    %v1020 = vadd.f32 0.0, %v1019
    %v1021 = vpop.f32.mrf.mxu0
    %v1022 = vadd.f32 0.0, %v1021
    %v1023 = vpop.f32.mrf.mxu0
    %v1024 = vadd.f32 0.0, %v1023
    %v1025 = vpop.f32.mrf.mxu0
    %v1026 = vadd.f32 0.0, %v1025
    %1027 = vmatprep.mubr.bf16.mxu0 %v412
    %1028 = vmatmul.mubr.bf16.gmra.mxu0 %v411
    %v1029 = vpop.f32.mrf.mxu0
    %v1030 = vadd.f32 0.0, %v1029
    %v1031 = vpop.f32.mrf.mxu0
    %v1032 = vadd.f32 0.0, %v1031
    %v1033 = vpop.f32.mrf.mxu0
    %v1034 = vadd.f32 0.0, %v1033
    %v1035 = vpop.f32.mrf.mxu0
    %v1036 = vadd.f32 0.0, %v1035
    %1037 = vmatprep.mubr.bf16.mxu0 %v414
    %1038 = vmatmul.mubr.bf16.gmra.mxu0 %v413
    %v1039 = vpop.f32.mrf.mxu0
    %v1040 = vadd.f32 0.0, %v1039
    %v1041 = vpop.f32.mrf.mxu0
    %v1042 = vadd.f32 0.0, %v1041
    %v1043 = vpop.f32.mrf.mxu0
    %v1044 = vadd.f32 0.0, %v1043
    %v1045 = vpop.f32.mrf.mxu0
    %v1046 = vadd.f32 0.0, %v1045
    %1047 = vmatprep.mubr.bf16.mxu0 %v416
    %1048 = vmatmul.mubr.bf16.gmra.mxu0 %v415
    %v1049 = vpop.f32.mrf.mxu0
    %v1050 = vadd.f32 0.0, %v1049
    %v1051 = vpop.f32.mrf.mxu0
    %v1052 = vadd.f32 0.0, %v1051
    %v1053 = vpop.f32.mrf.mxu0
    %v1054 = vadd.f32 0.0, %v1053
    %v1055 = vpop.f32.mrf.mxu0
    %v1056 = vadd.f32 0.0, %v1055
    %1057 = vmatprep.mubr.bf16.mxu0 %v418
    %1058 = vmatmul.mubr.bf16.gmra.mxu0 %v417
    %v1059 = vpop.f32.mrf.mxu0
    %v1060 = vadd.f32 0.0, %v1059
    %v1061 = vpop.f32.mrf.mxu0
    %v1062 = vadd.f32 0.0, %v1061
    %v1063 = vpop.f32.mrf.mxu0
    %v1064 = vadd.f32 0.0, %v1063
    %v1065 = vpop.f32.mrf.mxu0
    %v1066 = vadd.f32 0.0, %v1065
    %1067 = vmatprep.mubr.bf16.mxu0 %v420
    %1068 = vmatmul.mubr.bf16.gmra.mxu0 %v419
    %v1069 = vpop.f32.mrf.mxu0
    %v1070 = vadd.f32 0.0, %v1069
    %v1071 = vpop.f32.mrf.mxu0
    %v1072 = vadd.f32 0.0, %v1071
    %v1073 = vpop.f32.mrf.mxu0
    %v1074 = vadd.f32 0.0, %v1073
    %v1075 = vpop.f32.mrf.mxu0
    %v1076 = vadd.f32 0.0, %v1075
    %1077 = vmatprep.mubr.bf16.mxu0 %v422
    %1078 = vmatmul.mubr.bf16.gmra.mxu0 %v421
    %v1079 = vpop.f32.mrf.mxu0
    %v1080 = vadd.f32 0.0, %v1079
    %v1081 = vpop.f32.mrf.mxu0
    %v1082 = vadd.f32 0.0, %v1081
    %v1083 = vpop.f32.mrf.mxu0
    %v1084 = vadd.f32 0.0, %v1083
    %v1085 = vpop.f32.mrf.mxu0
    %v1086 = vadd.f32 0.0, %v1085
    %1087 = vmatprep.mubr.bf16.mxu0 %v424
    %1088 = vmatmul.mubr.bf16.gmra.mxu0 %v423
    %v1089 = vpop.f32.mrf.mxu0
    %v1090 = vadd.f32 0.0, %v1089
    %v1091 = vpop.f32.mrf.mxu0
    %v1092 = vadd.f32 0.0, %v1091
    %v1093 = vpop.f32.mrf.mxu0
    %v1094 = vadd.f32 0.0, %v1093
    %v1095 = vpop.f32.mrf.mxu0
    %v1096 = vadd.f32 0.0, %v1095
    %1097 = vmatprep.mubr.bf16.mxu0 %v426
    %1098 = vmatmul.mubr.bf16.gmra.mxu0 %v425
    %v1099 = vpop.f32.mrf.mxu0
    %v1100 = vadd.f32 0.0, %v1099
    %v1101 = vpop.f32.mrf.mxu0
    %v1102 = vadd.f32 0.0, %v1101
    %v1103 = vpop.f32.mrf.mxu0
    %v1104 = vadd.f32 0.0, %v1103
    %v1105 = vpop.f32.mrf.mxu0
    %v1106 = vadd.f32 0.0, %v1105
    %1107 = vmatprep.mubr.bf16.mxu0 %v428
    %1108 = vmatmul.mubr.bf16.gmra.mxu0 %v427
    %v1109 = vpop.f32.mrf.mxu0
    %v1110 = vadd.f32 0.0, %v1109
    %v1111 = vpop.f32.mrf.mxu0
    %v1112 = vadd.f32 0.0, %v1111
    %v1113 = vpop.f32.mrf.mxu0
    %v1114 = vadd.f32 0.0, %v1113
    %v1115 = vpop.f32.mrf.mxu0
    %v1116 = vadd.f32 0.0, %v1115
    %1117 = vmatprep.mubr.bf16.mxu0 %v430
    %1118 = vmatmul.mubr.bf16.gmra.mxu0 %v429
    %v1119 = vpop.f32.mrf.mxu0
    %v1120 = vadd.f32 0.0, %v1119
    %v1121 = vpop.f32.mrf.mxu0
    %v1122 = vadd.f32 0.0, %v1121
    %v1123 = vpop.f32.mrf.mxu0
    %v1124 = vadd.f32 0.0, %v1123
    %v1125 = vpop.f32.mrf.mxu0
    %v1126 = vadd.f32 0.0, %v1125
    %1127 = vmatprep.mubr.bf16.mxu0 %v432
    %1128 = vmatmul.mubr.bf16.gmra.mxu0 %v431
    %v1129 = vpop.f32.mrf.mxu0
    %v1130 = vadd.f32 0.0, %v1129
    %v1131 = vpop.f32.mrf.mxu0
    %v1132 = vadd.f32 0.0, %v1131
    %v1133 = vpop.f32.mrf.mxu0
    %v1134 = vadd.f32 0.0, %v1133
    %v1135 = vpop.f32.mrf.mxu0
    %v1136 = vadd.f32 0.0, %v1135
    %1137 = vmatprep.mubr.bf16.mxu0 %v434
    %1138 = vmatmul.mubr.bf16.gmra.mxu0 %v433
    %v1139 = vpop.f32.mrf.mxu0
    %v1140 = vadd.f32 0.0, %v1139
    %v1141 = vpop.f32.mrf.mxu0
    %v1142 = vadd.f32 0.0, %v1141
    %v1143 = vpop.f32.mrf.mxu0
    %v1144 = vadd.f32 0.0, %v1143
    %v1145 = vpop.f32.mrf.mxu0
    %v1146 = vadd.f32 0.0, %v1145
    %1147 = vmatprep.mubr.bf16.mxu0 %v436
    %1148 = vmatmul.mubr.bf16.gmra.mxu0 %v435
    %v1149 = vpop.f32.mrf.mxu0
    %v1150 = vadd.f32 0.0, %v1149
    %v1151 = vpop.f32.mrf.mxu0
    %v1152 = vadd.f32 0.0, %v1151
    %v1153 = vpop.f32.mrf.mxu0
    %v1154 = vadd.f32 0.0, %v1153
    %v1155 = vpop.f32.mrf.mxu0
    %v1156 = vadd.f32 0.0, %v1155
    %1157 = vmatprep.mubr.bf16.mxu0 %v438
    %1158 = vmatmul.mubr.bf16.gmra.mxu0 %v437
    %v1159 = vpop.f32.mrf.mxu0
    %v1160 = vadd.f32 0.0, %v1159
    %v1161 = vpop.f32.mrf.mxu0
    %v1162 = vadd.f32 0.0, %v1161
    %v1163 = vpop.f32.mrf.mxu0
    %v1164 = vadd.f32 0.0, %v1163
    %v1165 = vpop.f32.mrf.mxu0
    %v1166 = vadd.f32 0.0, %v1165
    %1167 = vmatprep.mubr.bf16.mxu0 %v440
    %1168 = vmatmul.mubr.bf16.gmra.mxu0 %v439
    %v1169 = vpop.f32.mrf.mxu0
    %v1170 = vadd.f32 0.0, %v1169
    %v1171 = vpop.f32.mrf.mxu0
    %v1172 = vadd.f32 0.0, %v1171
    %v1173 = vpop.f32.mrf.mxu0
    %v1174 = vadd.f32 0.0, %v1173
    %v1175 = vpop.f32.mrf.mxu0
    %v1176 = vadd.f32 0.0, %v1175
    %1177 = vdwg.mxu0
    %1178 = vmatprep.subr.bf16.mxu0 %v728
    %1179 = vmatpush1.bf16.msra.mxu0 %v727
    %1180 = vmatprep.subr.bf16.mxu0 %v724
    %1181 = vmatpush1.bf16.msra.mxu0 %v723
    %1182 = vmatprep.subr.bf16.mxu0 %v720
    %1183 = vmatpush1.bf16.msra.mxu0 %v719
    %1184 = vmatprep.subr.bf16.mxu0 %v716
    %1185 = vmatpush1.bf16.msra.mxu0 %v715
    %1186 = vmatprep.subr.bf16.mxu0 %v712
    %1187 = vmatpush1.bf16.msra.mxu0 %v711
    %1188 = vmatprep.subr.bf16.mxu0 %v708
    %1189 = vmatpush1.bf16.msra.mxu0 %v707
    %1190 = vmatprep.subr.bf16.mxu0 %v704
    %1191 = vmatpush1.bf16.msra.mxu0 %v703
    %1192 = vmatprep.subr.bf16.mxu0 %v700
    %1193 = vmatpush1.bf16.msra.mxu0 %v699
    %1194 = vmatprep.subr.bf16.mxu0 %v760
    %1195 = vmatpush2.bf16.msra.mxu0 %v759
    %1196 = vmatprep.subr.bf16.mxu0 %v756
    %1197 = vmatpush2.bf16.msra.mxu0 %v755
    %1198 = vmatprep.subr.bf16.mxu0 %v752
    %1199 = vmatpush2.bf16.msra.mxu0 %v751
    %1200 = vmatprep.subr.bf16.mxu0 %v748
    %1201 = vmatpush2.bf16.msra.mxu0 %v747
    %1202 = vmatprep.subr.bf16.mxu0 %v744
    %1203 = vmatpush2.bf16.msra.mxu0 %v743
    %1204 = vmatprep.subr.bf16.mxu0 %v740
    %1205 = vmatpush2.bf16.msra.mxu0 %v739
    %1206 = vmatprep.subr.bf16.mxu0 %v736
    %1207 = vmatpush2.bf16.msra.mxu0 %v735
    %1208 = vmatprep.subr.bf16.mxu0 %v732
    %1209 = vmatpush2.bf16.msra.mxu0 %v731
    %1210 = vmatprep.mubr.bf16.mxu0 %v378
    %1211 = vmatmul.mubr.bf16.gmra.mxu0 %v377
    %v1212 = vpop.f32.mrf.mxu0
    %v1213 = vadd.f32 0.0, %v1212
    %v1214 = vpop.f32.mrf.mxu0
    %v1215 = vadd.f32 0.0, %v1214
    %v1216 = vpop.f32.mrf.mxu0
    %v1217 = vadd.f32 0.0, %v1216
    %v1218 = vpop.f32.mrf.mxu0
    %v1219 = vadd.f32 0.0, %v1218
    %1220 = vmatprep.mubr.bf16.mxu0 %v380
    %1221 = vmatmul.mubr.bf16.gmra.mxu0 %v379
    %v1222 = vpop.f32.mrf.mxu0
    %v1223 = vadd.f32 0.0, %v1222
    %v1224 = vpop.f32.mrf.mxu0
    %v1225 = vadd.f32 0.0, %v1224
    %v1226 = vpop.f32.mrf.mxu0
    %v1227 = vadd.f32 0.0, %v1226
    %v1228 = vpop.f32.mrf.mxu0
    %v1229 = vadd.f32 0.0, %v1228
    %1230 = vmatprep.mubr.bf16.mxu0 %v382
    %1231 = vmatmul.mubr.bf16.gmra.mxu0 %v381
    %v1232 = vpop.f32.mrf.mxu0
    %v1233 = vadd.f32 0.0, %v1232
    %v1234 = vpop.f32.mrf.mxu0
    %v1235 = vadd.f32 0.0, %v1234
    %v1236 = vpop.f32.mrf.mxu0
    %v1237 = vadd.f32 0.0, %v1236
    %v1238 = vpop.f32.mrf.mxu0
    %v1239 = vadd.f32 0.0, %v1238
    %1240 = vmatprep.mubr.bf16.mxu0 %v384
    %1241 = vmatmul.mubr.bf16.gmra.mxu0 %v383
    %v1242 = vpop.f32.mrf.mxu0
    %v1243 = vadd.f32 0.0, %v1242
    %v1244 = vpop.f32.mrf.mxu0
    %v1245 = vadd.f32 0.0, %v1244
    %v1246 = vpop.f32.mrf.mxu0
    %v1247 = vadd.f32 0.0, %v1246
    %v1248 = vpop.f32.mrf.mxu0
    %v1249 = vadd.f32 0.0, %v1248
    %1250 = vmatprep.mubr.bf16.mxu0 %v386
    %1251 = vmatmul.mubr.bf16.gmra.mxu0 %v385
    %v1252 = vpop.f32.mrf.mxu0
    %v1253 = vadd.f32 0.0, %v1252
    %v1254 = vpop.f32.mrf.mxu0
    %v1255 = vadd.f32 0.0, %v1254
    %v1256 = vpop.f32.mrf.mxu0
    %v1257 = vadd.f32 0.0, %v1256
    %v1258 = vpop.f32.mrf.mxu0
    %v1259 = vadd.f32 0.0, %v1258
    %1260 = vmatprep.mubr.bf16.mxu0 %v388
    %1261 = vmatmul.mubr.bf16.gmra.mxu0 %v387
    %v1262 = vpop.f32.mrf.mxu0
    %v1263 = vadd.f32 0.0, %v1262
    %v1264 = vpop.f32.mrf.mxu0
    %v1265 = vadd.f32 0.0, %v1264
    %v1266 = vpop.f32.mrf.mxu0
    %v1267 = vadd.f32 0.0, %v1266
    %v1268 = vpop.f32.mrf.mxu0
    %v1269 = vadd.f32 0.0, %v1268
    %1270 = vmatprep.mubr.bf16.mxu0 %v390
    %1271 = vmatmul.mubr.bf16.gmra.mxu0 %v389
    %v1272 = vpop.f32.mrf.mxu0
    %v1273 = vadd.f32 0.0, %v1272
    %v1274 = vpop.f32.mrf.mxu0
    %v1275 = vadd.f32 0.0, %v1274
    %v1276 = vpop.f32.mrf.mxu0
    %v1277 = vadd.f32 0.0, %v1276
    %v1278 = vpop.f32.mrf.mxu0
    %v1279 = vadd.f32 0.0, %v1278
    %1280 = vmatprep.mubr.bf16.mxu0 %v392
    %1281 = vmatmul.mubr.bf16.gmra.mxu0 %v391
    %v1282 = vpop.f32.mrf.mxu0
    %v1283 = vadd.f32 0.0, %v1282
    %v1284 = vpop.f32.mrf.mxu0
    %v1285 = vadd.f32 0.0, %v1284
    %v1286 = vpop.f32.mrf.mxu0
    %v1287 = vadd.f32 0.0, %v1286
    %v1288 = vpop.f32.mrf.mxu0
    %v1289 = vadd.f32 0.0, %v1288
    %1290 = vmatprep.mubr.bf16.mxu0 %v394
    %1291 = vmatmul.mubr.bf16.gmra.mxu0 %v393
    %v1292 = vpop.f32.mrf.mxu0
    %v1293 = vadd.f32 0.0, %v1292
    %v1294 = vpop.f32.mrf.mxu0
    %v1295 = vadd.f32 0.0, %v1294
    %v1296 = vpop.f32.mrf.mxu0
    %v1297 = vadd.f32 0.0, %v1296
    %v1298 = vpop.f32.mrf.mxu0
    %v1299 = vadd.f32 0.0, %v1298
    %1300 = vmatprep.mubr.bf16.mxu0 %v396
    %1301 = vmatmul.mubr.bf16.gmra.mxu0 %v395
    %v1302 = vpop.f32.mrf.mxu0
    %v1303 = vadd.f32 0.0, %v1302
    %v1304 = vpop.f32.mrf.mxu0
    %v1305 = vadd.f32 0.0, %v1304
    %v1306 = vpop.f32.mrf.mxu0
    %v1307 = vadd.f32 0.0, %v1306
    %v1308 = vpop.f32.mrf.mxu0
    %v1309 = vadd.f32 0.0, %v1308
    %1310 = vmatprep.mubr.bf16.mxu0 %v398
    %1311 = vmatmul.mubr.bf16.gmra.mxu0 %v397
    %v1312 = vpop.f32.mrf.mxu0
    %v1313 = vadd.f32 0.0, %v1312
    %v1314 = vpop.f32.mrf.mxu0
    %v1315 = vadd.f32 0.0, %v1314
    %v1316 = vpop.f32.mrf.mxu0
    %v1317 = vadd.f32 0.0, %v1316
    %v1318 = vpop.f32.mrf.mxu0
    %v1319 = vadd.f32 0.0, %v1318
    %1320 = vmatprep.mubr.bf16.mxu0 %v400
    %1321 = vmatmul.mubr.bf16.gmra.mxu0 %v399
    %v1322 = vpop.f32.mrf.mxu0
    %v1323 = vadd.f32 0.0, %v1322
    %v1324 = vpop.f32.mrf.mxu0
    %v1325 = vadd.f32 0.0, %v1324
    %v1326 = vpop.f32.mrf.mxu0
    %v1327 = vadd.f32 0.0, %v1326
    %v1328 = vpop.f32.mrf.mxu0
    %v1329 = vadd.f32 0.0, %v1328
    %1330 = vmatprep.mubr.bf16.mxu0 %v402
    %1331 = vmatmul.mubr.bf16.gmra.mxu0 %v401
    %v1332 = vpop.f32.mrf.mxu0
    %v1333 = vadd.f32 0.0, %v1332
    %v1334 = vpop.f32.mrf.mxu0
    %v1335 = vadd.f32 0.0, %v1334
    %v1336 = vpop.f32.mrf.mxu0
    %v1337 = vadd.f32 0.0, %v1336
    %v1338 = vpop.f32.mrf.mxu0
    %v1339 = vadd.f32 0.0, %v1338
    %1340 = vmatprep.mubr.bf16.mxu0 %v404
    %1341 = vmatmul.mubr.bf16.gmra.mxu0 %v403
    %v1342 = vpop.f32.mrf.mxu0
    %v1343 = vadd.f32 0.0, %v1342
    %v1344 = vpop.f32.mrf.mxu0
    %v1345 = vadd.f32 0.0, %v1344
    %v1346 = vpop.f32.mrf.mxu0
    %v1347 = vadd.f32 0.0, %v1346
    %v1348 = vpop.f32.mrf.mxu0
    %v1349 = vadd.f32 0.0, %v1348
    %1350 = vmatprep.mubr.bf16.mxu0 %v406
    %1351 = vmatmul.mubr.bf16.gmra.mxu0 %v405
    %v1352 = vpop.f32.mrf.mxu0
    %v1353 = vadd.f32 0.0, %v1352
    %v1354 = vpop.f32.mrf.mxu0
    %v1355 = vadd.f32 0.0, %v1354
    %v1356 = vpop.f32.mrf.mxu0
    %v1357 = vadd.f32 0.0, %v1356
    %v1358 = vpop.f32.mrf.mxu0
    %v1359 = vadd.f32 0.0, %v1358
    %1360 = vmatprep.mubr.bf16.mxu0 %v408
    %1361 = vmatmul.mubr.bf16.gmra.mxu0 %v407
    %v1362 = vpop.f32.mrf.mxu0
    %v1363 = vadd.f32 0.0, %v1362
    %v1364 = vpop.f32.mrf.mxu0
    %v1365 = vadd.f32 0.0, %v1364
    %v1366 = vpop.f32.mrf.mxu0
    %v1367 = vadd.f32 0.0, %v1366
    %v1368 = vpop.f32.mrf.mxu0
    %v1369 = vadd.f32 0.0, %v1368
    %1370 = vmatprep.mubr.bf16.mxu0 %v410
    %1371 = vmatmul.mubr.bf16.gmra.mxu0 %v409
    %v1372 = vpop.f32.mrf.mxu0
    %v1373 = vadd.f32 0.0, %v1372
    %v1374 = vpop.f32.mrf.mxu0
    %v1375 = vadd.f32 0.0, %v1374
    %v1376 = vpop.f32.mrf.mxu0
    %v1377 = vadd.f32 0.0, %v1376
    %v1378 = vpop.f32.mrf.mxu0
    %v1379 = vadd.f32 0.0, %v1378
    %1380 = vmatprep.mubr.bf16.mxu0 %v412
    %1381 = vmatmul.mubr.bf16.gmra.mxu0 %v411
    %v1382 = vpop.f32.mrf.mxu0
    %v1383 = vadd.f32 0.0, %v1382
    %v1384 = vpop.f32.mrf.mxu0
    %v1385 = vadd.f32 0.0, %v1384
    %v1386 = vpop.f32.mrf.mxu0
    %v1387 = vadd.f32 0.0, %v1386
    %v1388 = vpop.f32.mrf.mxu0
    %v1389 = vadd.f32 0.0, %v1388
    %1390 = vmatprep.mubr.bf16.mxu0 %v414
    %1391 = vmatmul.mubr.bf16.gmra.mxu0 %v413
    %v1392 = vpop.f32.mrf.mxu0
    %v1393 = vadd.f32 0.0, %v1392
    %v1394 = vpop.f32.mrf.mxu0
    %v1395 = vadd.f32 0.0, %v1394
    %v1396 = vpop.f32.mrf.mxu0
    %v1397 = vadd.f32 0.0, %v1396
    %v1398 = vpop.f32.mrf.mxu0
    %v1399 = vadd.f32 0.0, %v1398
    %1400 = vmatprep.mubr.bf16.mxu0 %v416
    %1401 = vmatmul.mubr.bf16.gmra.mxu0 %v415
    %v1402 = vpop.f32.mrf.mxu0
    %v1403 = vadd.f32 0.0, %v1402
    %v1404 = vpop.f32.mrf.mxu0
    %v1405 = vadd.f32 0.0, %v1404
    %v1406 = vpop.f32.mrf.mxu0
    %v1407 = vadd.f32 0.0, %v1406
    %v1408 = vpop.f32.mrf.mxu0
    %v1409 = vadd.f32 0.0, %v1408
    %1410 = vmatprep.mubr.bf16.mxu0 %v418
    %1411 = vmatmul.mubr.bf16.gmra.mxu0 %v417
    %v1412 = vpop.f32.mrf.mxu0
    %v1413 = vadd.f32 0.0, %v1412
    %v1414 = vpop.f32.mrf.mxu0
    %v1415 = vadd.f32 0.0, %v1414
    %v1416 = vpop.f32.mrf.mxu0
    %v1417 = vadd.f32 0.0, %v1416
    %v1418 = vpop.f32.mrf.mxu0
    %v1419 = vadd.f32 0.0, %v1418
    %1420 = vmatprep.mubr.bf16.mxu0 %v420
    %1421 = vmatmul.mubr.bf16.gmra.mxu0 %v419
    %v1422 = vpop.f32.mrf.mxu0
    %v1423 = vadd.f32 0.0, %v1422
    %v1424 = vpop.f32.mrf.mxu0
    %v1425 = vadd.f32 0.0, %v1424
    %v1426 = vpop.f32.mrf.mxu0
    %v1427 = vadd.f32 0.0, %v1426
    %v1428 = vpop.f32.mrf.mxu0
    %v1429 = vadd.f32 0.0, %v1428
    %1430 = vmatprep.mubr.bf16.mxu0 %v422
    %1431 = vmatmul.mubr.bf16.gmra.mxu0 %v421
    %v1432 = vpop.f32.mrf.mxu0
    %v1433 = vadd.f32 0.0, %v1432
    %v1434 = vpop.f32.mrf.mxu0
    %v1435 = vadd.f32 0.0, %v1434
    %v1436 = vpop.f32.mrf.mxu0
    %v1437 = vadd.f32 0.0, %v1436
    %v1438 = vpop.f32.mrf.mxu0
    %v1439 = vadd.f32 0.0, %v1438
    %1440 = vmatprep.mubr.bf16.mxu0 %v424
    %1441 = vmatmul.mubr.bf16.gmra.mxu0 %v423
    %v1442 = vpop.f32.mrf.mxu0
    %v1443 = vadd.f32 0.0, %v1442
    %v1444 = vpop.f32.mrf.mxu0
    %v1445 = vadd.f32 0.0, %v1444
    %v1446 = vpop.f32.mrf.mxu0
    %v1447 = vadd.f32 0.0, %v1446
    %v1448 = vpop.f32.mrf.mxu0
    %v1449 = vadd.f32 0.0, %v1448
    %1450 = vmatprep.mubr.bf16.mxu0 %v426
    %1451 = vmatmul.mubr.bf16.gmra.mxu0 %v425
    %v1452 = vpop.f32.mrf.mxu0
    %v1453 = vadd.f32 0.0, %v1452
    %v1454 = vpop.f32.mrf.mxu0
    %v1455 = vadd.f32 0.0, %v1454
    %v1456 = vpop.f32.mrf.mxu0
    %v1457 = vadd.f32 0.0, %v1456
    %v1458 = vpop.f32.mrf.mxu0
    %v1459 = vadd.f32 0.0, %v1458
    %1460 = vmatprep.mubr.bf16.mxu0 %v428
    %1461 = vmatmul.mubr.bf16.gmra.mxu0 %v427
    %v1462 = vpop.f32.mrf.mxu0
    %v1463 = vadd.f32 0.0, %v1462
    %v1464 = vpop.f32.mrf.mxu0
    %v1465 = vadd.f32 0.0, %v1464
    %v1466 = vpop.f32.mrf.mxu0
    %v1467 = vadd.f32 0.0, %v1466
    %v1468 = vpop.f32.mrf.mxu0
    %v1469 = vadd.f32 0.0, %v1468
    %1470 = vmatprep.mubr.bf16.mxu0 %v430
    %1471 = vmatmul.mubr.bf16.gmra.mxu0 %v429
    %v1472 = vpop.f32.mrf.mxu0
    %v1473 = vadd.f32 0.0, %v1472
    %v1474 = vpop.f32.mrf.mxu0
    %v1475 = vadd.f32 0.0, %v1474
    %v1476 = vpop.f32.mrf.mxu0
    %v1477 = vadd.f32 0.0, %v1476
    %v1478 = vpop.f32.mrf.mxu0
    %v1479 = vadd.f32 0.0, %v1478
    %1480 = vmatprep.mubr.bf16.mxu0 %v432
    %1481 = vmatmul.mubr.bf16.gmra.mxu0 %v431
    %v1482 = vpop.f32.mrf.mxu0
    %v1483 = vadd.f32 0.0, %v1482
    %v1484 = vpop.f32.mrf.mxu0
    %v1485 = vadd.f32 0.0, %v1484
    %v1486 = vpop.f32.mrf.mxu0
    %v1487 = vadd.f32 0.0, %v1486
    %v1488 = vpop.f32.mrf.mxu0
    %v1489 = vadd.f32 0.0, %v1488
    %1490 = vmatprep.mubr.bf16.mxu0 %v434
    %1491 = vmatmul.mubr.bf16.gmra.mxu0 %v433
    %v1492 = vpop.f32.mrf.mxu0
    %v1493 = vadd.f32 0.0, %v1492
    %v1494 = vpop.f32.mrf.mxu0
    %v1495 = vadd.f32 0.0, %v1494
    %v1496 = vpop.f32.mrf.mxu0
    %v1497 = vadd.f32 0.0, %v1496
    %v1498 = vpop.f32.mrf.mxu0
    %v1499 = vadd.f32 0.0, %v1498
    %1500 = vmatprep.mubr.bf16.mxu0 %v436
    %1501 = vmatmul.mubr.bf16.gmra.mxu0 %v435
    %v1502 = vpop.f32.mrf.mxu0
    %v1503 = vadd.f32 0.0, %v1502
    %v1504 = vpop.f32.mrf.mxu0
    %v1505 = vadd.f32 0.0, %v1504
    %v1506 = vpop.f32.mrf.mxu0
    %v1507 = vadd.f32 0.0, %v1506
    %v1508 = vpop.f32.mrf.mxu0
    %v1509 = vadd.f32 0.0, %v1508
    %1510 = vmatprep.mubr.bf16.mxu0 %v438
    %1511 = vmatmul.mubr.bf16.gmra.mxu0 %v437
    %v1512 = vpop.f32.mrf.mxu0
    %v1513 = vadd.f32 0.0, %v1512
    %v1514 = vpop.f32.mrf.mxu0
    %v1515 = vadd.f32 0.0, %v1514
    %v1516 = vpop.f32.mrf.mxu0
    %v1517 = vadd.f32 0.0, %v1516
    %v1518 = vpop.f32.mrf.mxu0
    %v1519 = vadd.f32 0.0, %v1518
    %1520 = vmatprep.mubr.bf16.mxu0 %v440
    %1521 = vmatmul.mubr.bf16.gmra.mxu0 %v439
    %v1522 = vpop.f32.mrf.mxu0
    %v1523 = vadd.f32 0.0, %v1522
    %v1524 = vpop.f32.mrf.mxu0
    %v1525 = vadd.f32 0.0, %v1524
    %v1526 = vpop.f32.mrf.mxu0
    %v1527 = vadd.f32 0.0, %v1526
    %v1528 = vpop.f32.mrf.mxu0
    %v1529 = vadd.f32 0.0, %v1528
    %1530 = vdwg.mxu0
    %v1531 = vmul.f32 %v860, %v860
    %v1532 = vmul.f32 %v862, %v862
    %v1533 = vmul.f32 %v864, %v864
    %v1534 = vmul.f32 %v866, %v866
    %v1535 = vmul.f32 %v870, %v870
    %v1536 = vmul.f32 %v872, %v872
    %v1537 = vmul.f32 %v874, %v874
    %v1538 = vmul.f32 %v876, %v876
    %v1539 = vmul.f32 %v880, %v880
    %v1540 = vmul.f32 %v882, %v882
    %v1541 = vmul.f32 %v884, %v884
    %v1542 = vmul.f32 %v886, %v886
    %v1543 = vmul.f32 %v890, %v890
    %v1544 = vmul.f32 %v892, %v892
    %v1545 = vmul.f32 %v894, %v894
    %v1546 = vmul.f32 %v896, %v896
    %v1547 = vmul.f32 %v900, %v900
    %v1548 = vmul.f32 %v902, %v902
    %v1549 = vmul.f32 %v904, %v904
    %v1550 = vmul.f32 %v906, %v906
    %v1551 = vmul.f32 %v910, %v910
    %v1552 = vmul.f32 %v912, %v912
    %v1553 = vmul.f32 %v914, %v914
    %v1554 = vmul.f32 %v916, %v916
    %v1555 = vmul.f32 %v920, %v920
    %v1556 = vmul.f32 %v922, %v922
    %v1557 = vmul.f32 %v924, %v924
    %v1558 = vmul.f32 %v926, %v926
    %v1559 = vmul.f32 %v930, %v930
    %v1560 = vmul.f32 %v932, %v932
    %v1561 = vmul.f32 %v934, %v934
    %v1562 = vmul.f32 %v936, %v936
    %v1563 = vmul.f32 %v940, %v940
    %v1564 = vmul.f32 %v942, %v942
    %v1565 = vmul.f32 %v944, %v944
    %v1566 = vmul.f32 %v946, %v946
    %v1567 = vmul.f32 %v950, %v950
    %v1568 = vmul.f32 %v952, %v952
    %v1569 = vmul.f32 %v954, %v954
    %v1570 = vmul.f32 %v956, %v956
    %v1571 = vmul.f32 %v960, %v960
    %v1572 = vmul.f32 %v962, %v962
    %v1573 = vmul.f32 %v964, %v964
    %v1574 = vmul.f32 %v966, %v966
    %v1575 = vmul.f32 %v970, %v970
    %v1576 = vmul.f32 %v972, %v972
    %v1577 = vmul.f32 %v974, %v974
    %v1578 = vmul.f32 %v976, %v976
    %v1579 = vmul.f32 %v980, %v980
    %v1580 = vmul.f32 %v982, %v982
    %v1581 = vmul.f32 %v984, %v984
    %v1582 = vmul.f32 %v986, %v986
    %v1583 = vmul.f32 %v990, %v990
    %v1584 = vmul.f32 %v992, %v992
    %v1585 = vmul.f32 %v994, %v994
    %v1586 = vmul.f32 %v996, %v996
    %v1587 = vmul.f32 %v1000, %v1000
    %v1588 = vmul.f32 %v1002, %v1002
    %v1589 = vmul.f32 %v1004, %v1004
    %v1590 = vmul.f32 %v1006, %v1006
    %v1591 = vmul.f32 %v1010, %v1010
    %v1592 = vmul.f32 %v1012, %v1012
    %v1593 = vmul.f32 %v1014, %v1014
    %v1594 = vmul.f32 %v1016, %v1016
    %v1595 = vmul.f32 %v1213, %v1213
    %v1596 = vmul.f32 %v1215, %v1215
    %v1597 = vmul.f32 %v1217, %v1217
    %v1598 = vmul.f32 %v1219, %v1219
    %v1599 = vmul.f32 %v1223, %v1223
    %v1600 = vmul.f32 %v1225, %v1225
    %v1601 = vmul.f32 %v1227, %v1227
    %v1602 = vmul.f32 %v1229, %v1229
    %v1603 = vmul.f32 %v1233, %v1233
    %v1604 = vmul.f32 %v1235, %v1235
    %v1605 = vmul.f32 %v1237, %v1237
    %v1606 = vmul.f32 %v1239, %v1239
    %v1607 = vmul.f32 %v1243, %v1243
    %v1608 = vmul.f32 %v1245, %v1245
    %v1609 = vmul.f32 %v1247, %v1247
    %v1610 = vmul.f32 %v1249, %v1249
    %v1611 = vmul.f32 %v1253, %v1253
    %v1612 = vmul.f32 %v1255, %v1255
    %v1613 = vmul.f32 %v1257, %v1257
    %v1614 = vmul.f32 %v1259, %v1259
    %v1615 = vmul.f32 %v1263, %v1263
    %v1616 = vmul.f32 %v1265, %v1265
    %v1617 = vmul.f32 %v1267, %v1267
    %v1618 = vmul.f32 %v1269, %v1269
    %v1619 = vmul.f32 %v1273, %v1273
    %v1620 = vmul.f32 %v1275, %v1275
    %v1621 = vmul.f32 %v1277, %v1277
    %v1622 = vmul.f32 %v1279, %v1279
    %v1623 = vmul.f32 %v1283, %v1283
    %v1624 = vmul.f32 %v1285, %v1285
    %v1625 = vmul.f32 %v1287, %v1287
    %v1626 = vmul.f32 %v1289, %v1289
    %v1627 = vmul.f32 %v1293, %v1293
    %v1628 = vmul.f32 %v1295, %v1295
    %v1629 = vmul.f32 %v1297, %v1297
    %v1630 = vmul.f32 %v1299, %v1299
    %v1631 = vmul.f32 %v1303, %v1303
    %v1632 = vmul.f32 %v1305, %v1305
    %v1633 = vmul.f32 %v1307, %v1307
    %v1634 = vmul.f32 %v1309, %v1309
    %v1635 = vmul.f32 %v1313, %v1313
    %v1636 = vmul.f32 %v1315, %v1315
    %v1637 = vmul.f32 %v1317, %v1317
    %v1638 = vmul.f32 %v1319, %v1319
    %v1639 = vmul.f32 %v1323, %v1323
    %v1640 = vmul.f32 %v1325, %v1325
    %v1641 = vmul.f32 %v1327, %v1327
    %v1642 = vmul.f32 %v1329, %v1329
    %v1643 = vmul.f32 %v1333, %v1333
    %v1644 = vmul.f32 %v1335, %v1335
    %v1645 = vmul.f32 %v1337, %v1337
    %v1646 = vmul.f32 %v1339, %v1339
    %v1647 = vmul.f32 %v1343, %v1343
    %v1648 = vmul.f32 %v1345, %v1345
    %v1649 = vmul.f32 %v1347, %v1347
    %v1650 = vmul.f32 %v1349, %v1349
    %v1651 = vmul.f32 %v1353, %v1353
    %v1652 = vmul.f32 %v1355, %v1355
    %v1653 = vmul.f32 %v1357, %v1357
    %v1654 = vmul.f32 %v1359, %v1359
    %v1655 = vmul.f32 %v1363, %v1363
    %v1656 = vmul.f32 %v1365, %v1365
    %v1657 = vmul.f32 %v1367, %v1367
    %v1658 = vmul.f32 %v1369, %v1369
    %v1659 = vadd.f32 %v1531, %v1595
    %v1660 = vadd.f32 %v1532, %v1596
    %v1661 = vadd.f32 %v1533, %v1597
    %v1662 = vadd.f32 %v1534, %v1598
    %v1663 = vadd.f32 %v1535, %v1599
    %v1664 = vadd.f32 %v1536, %v1600
    %v1665 = vadd.f32 %v1537, %v1601
    %v1666 = vadd.f32 %v1538, %v1602
    %v1667 = vadd.f32 %v1539, %v1603
    %v1668 = vadd.f32 %v1540, %v1604
    %v1669 = vadd.f32 %v1541, %v1605
    %v1670 = vadd.f32 %v1542, %v1606
    %v1671 = vadd.f32 %v1543, %v1607
    %v1672 = vadd.f32 %v1544, %v1608
    %v1673 = vadd.f32 %v1545, %v1609
    %v1674 = vadd.f32 %v1546, %v1610
    %v1675 = vadd.f32 %v1547, %v1611
    %v1676 = vadd.f32 %v1548, %v1612
    %v1677 = vadd.f32 %v1549, %v1613
    %v1678 = vadd.f32 %v1550, %v1614
    %v1679 = vadd.f32 %v1551, %v1615
    %v1680 = vadd.f32 %v1552, %v1616
    %v1681 = vadd.f32 %v1553, %v1617
    %v1682 = vadd.f32 %v1554, %v1618
    %v1683 = vadd.f32 %v1555, %v1619
    %v1684 = vadd.f32 %v1556, %v1620
    %v1685 = vadd.f32 %v1557, %v1621
    %v1686 = vadd.f32 %v1558, %v1622
    %v1687 = vadd.f32 %v1559, %v1623
    %v1688 = vadd.f32 %v1560, %v1624
    %v1689 = vadd.f32 %v1561, %v1625
    %v1690 = vadd.f32 %v1562, %v1626
    %v1691 = vadd.f32 %v1563, %v1627
    %v1692 = vadd.f32 %v1564, %v1628
    %v1693 = vadd.f32 %v1565, %v1629
    %v1694 = vadd.f32 %v1566, %v1630
    %v1695 = vadd.f32 %v1567, %v1631
    %v1696 = vadd.f32 %v1568, %v1632
    %v1697 = vadd.f32 %v1569, %v1633
    %v1698 = vadd.f32 %v1570, %v1634
    %v1699 = vadd.f32 %v1571, %v1635
    %v1700 = vadd.f32 %v1572, %v1636
    %v1701 = vadd.f32 %v1573, %v1637
    %v1702 = vadd.f32 %v1574, %v1638
    %v1703 = vadd.f32 %v1575, %v1639
    %v1704 = vadd.f32 %v1576, %v1640
    %v1705 = vadd.f32 %v1577, %v1641
    %v1706 = vadd.f32 %v1578, %v1642
    %v1707 = vadd.f32 %v1579, %v1643
    %v1708 = vadd.f32 %v1580, %v1644
    %v1709 = vadd.f32 %v1581, %v1645
    %v1710 = vadd.f32 %v1582, %v1646
    %v1711 = vadd.f32 %v1583, %v1647
    %v1712 = vadd.f32 %v1584, %v1648
    %v1713 = vadd.f32 %v1585, %v1649
    %v1714 = vadd.f32 %v1586, %v1650
    %v1715 = vadd.f32 %v1587, %v1651
    %v1716 = vadd.f32 %v1588, %v1652
    %v1717 = vadd.f32 %v1589, %v1653
    %v1718 = vadd.f32 %v1590, %v1654
    %v1719 = vadd.f32 %v1591, %v1655
    %v1720 = vadd.f32 %v1592, %v1656
    %v1721 = vadd.f32 %v1593, %v1657
    %v1722 = vadd.f32 %v1594, %v1658
    %v1723 = vmax.f32 %v1659, 1e-08
    %v1724 = vmax.f32 %v1660, 1e-08
    %v1725 = vmax.f32 %v1661, 1e-08
    %v1726 = vmax.f32 %v1662, 1e-08
    %v1727 = vmax.f32 %v1663, 1e-08
    %v1728 = vmax.f32 %v1664, 1e-08
    %v1729 = vmax.f32 %v1665, 1e-08
    %v1730 = vmax.f32 %v1666, 1e-08
    %v1731 = vmax.f32 %v1667, 1e-08
    %v1732 = vmax.f32 %v1668, 1e-08
    %v1733 = vmax.f32 %v1669, 1e-08
    %v1734 = vmax.f32 %v1670, 1e-08
    %v1735 = vmax.f32 %v1671, 1e-08
    %v1736 = vmax.f32 %v1672, 1e-08
    %v1737 = vmax.f32 %v1673, 1e-08
    %v1738 = vmax.f32 %v1674, 1e-08
    %v1739 = vmax.f32 %v1675, 1e-08
    %v1740 = vmax.f32 %v1676, 1e-08
    %v1741 = vmax.f32 %v1677, 1e-08
    %v1742 = vmax.f32 %v1678, 1e-08
    %v1743 = vmax.f32 %v1679, 1e-08
    %v1744 = vmax.f32 %v1680, 1e-08
    %v1745 = vmax.f32 %v1681, 1e-08
    %v1746 = vmax.f32 %v1682, 1e-08
    %v1747 = vmax.f32 %v1683, 1e-08
    %v1748 = vmax.f32 %v1684, 1e-08
    %v1749 = vmax.f32 %v1685, 1e-08
    %v1750 = vmax.f32 %v1686, 1e-08
    %v1751 = vmax.f32 %v1687, 1e-08
    %v1752 = vmax.f32 %v1688, 1e-08
    %v1753 = vmax.f32 %v1689, 1e-08
    %v1754 = vmax.f32 %v1690, 1e-08
    %v1755 = vmax.f32 %v1691, 1e-08
    %v1756 = vmax.f32 %v1692, 1e-08
    %v1757 = vmax.f32 %v1693, 1e-08
    %v1758 = vmax.f32 %v1694, 1e-08
    %v1759 = vmax.f32 %v1695, 1e-08
    %v1760 = vmax.f32 %v1696, 1e-08
    %v1761 = vmax.f32 %v1697, 1e-08
    %v1762 = vmax.f32 %v1698, 1e-08
    %v1763 = vmax.f32 %v1699, 1e-08
    %v1764 = vmax.f32 %v1700, 1e-08
    %v1765 = vmax.f32 %v1701, 1e-08
    %v1766 = vmax.f32 %v1702, 1e-08
    %v1767 = vmax.f32 %v1703, 1e-08
    %v1768 = vmax.f32 %v1704, 1e-08
    %v1769 = vmax.f32 %v1705, 1e-08
    %v1770 = vmax.f32 %v1706, 1e-08
    %v1771 = vmax.f32 %v1707, 1e-08
    %v1772 = vmax.f32 %v1708, 1e-08
    %v1773 = vmax.f32 %v1709, 1e-08
    %v1774 = vmax.f32 %v1710, 1e-08
    %v1775 = vmax.f32 %v1711, 1e-08
    %v1776 = vmax.f32 %v1712, 1e-08
    %v1777 = vmax.f32 %v1713, 1e-08
    %v1778 = vmax.f32 %v1714, 1e-08
    %v1779 = vmax.f32 %v1715, 1e-08
    %v1780 = vmax.f32 %v1716, 1e-08
    %v1781 = vmax.f32 %v1717, 1e-08
    %v1782 = vmax.f32 %v1718, 1e-08
    %v1783 = vmax.f32 %v1719, 1e-08
    %v1784 = vmax.f32 %v1720, 1e-08
    %v1785 = vmax.f32 %v1721, 1e-08
    %v1786 = vmax.f32 %v1722, 1e-08
    %v1787 = vmul.f32 %v1020, %v1020
    %v1788 = vmul.f32 %v1022, %v1022
    %v1789 = vmul.f32 %v1024, %v1024
    %v1790 = vmul.f32 %v1026, %v1026
    %v1791 = vmul.f32 %v1030, %v1030
    %v1792 = vmul.f32 %v1032, %v1032
    %v1793 = vmul.f32 %v1034, %v1034
    %v1794 = vmul.f32 %v1036, %v1036
    %v1795 = vmul.f32 %v1040, %v1040
    %v1796 = vmul.f32 %v1042, %v1042
    %v1797 = vmul.f32 %v1044, %v1044
    %v1798 = vmul.f32 %v1046, %v1046
    %v1799 = vmul.f32 %v1050, %v1050
    %v1800 = vmul.f32 %v1052, %v1052
    %v1801 = vmul.f32 %v1054, %v1054
    %v1802 = vmul.f32 %v1056, %v1056
    %v1803 = vmul.f32 %v1060, %v1060
    %v1804 = vmul.f32 %v1062, %v1062
    %v1805 = vmul.f32 %v1064, %v1064
    %v1806 = vmul.f32 %v1066, %v1066
    %v1807 = vmul.f32 %v1070, %v1070
    %v1808 = vmul.f32 %v1072, %v1072
    %v1809 = vmul.f32 %v1074, %v1074
    %v1810 = vmul.f32 %v1076, %v1076
    %v1811 = vmul.f32 %v1080, %v1080
    %v1812 = vmul.f32 %v1082, %v1082
    %v1813 = vmul.f32 %v1084, %v1084
    %v1814 = vmul.f32 %v1086, %v1086
    %v1815 = vmul.f32 %v1090, %v1090
    %v1816 = vmul.f32 %v1092, %v1092
    %v1817 = vmul.f32 %v1094, %v1094
    %v1818 = vmul.f32 %v1096, %v1096
    %v1819 = vmul.f32 %v1100, %v1100
    %v1820 = vmul.f32 %v1102, %v1102
    %v1821 = vmul.f32 %v1104, %v1104
    %v1822 = vmul.f32 %v1106, %v1106
    %v1823 = vmul.f32 %v1110, %v1110
    %v1824 = vmul.f32 %v1112, %v1112
    %v1825 = vmul.f32 %v1114, %v1114
    %v1826 = vmul.f32 %v1116, %v1116
    %v1827 = vmul.f32 %v1120, %v1120
    %v1828 = vmul.f32 %v1122, %v1122
    %v1829 = vmul.f32 %v1124, %v1124
    %v1830 = vmul.f32 %v1126, %v1126
    %v1831 = vmul.f32 %v1130, %v1130
    %v1832 = vmul.f32 %v1132, %v1132
    %v1833 = vmul.f32 %v1134, %v1134
    %v1834 = vmul.f32 %v1136, %v1136
    %v1835 = vmul.f32 %v1140, %v1140
    %v1836 = vmul.f32 %v1142, %v1142
    %v1837 = vmul.f32 %v1144, %v1144
    %v1838 = vmul.f32 %v1146, %v1146
    %v1839 = vmul.f32 %v1150, %v1150
    %v1840 = vmul.f32 %v1152, %v1152
    %v1841 = vmul.f32 %v1154, %v1154
    %v1842 = vmul.f32 %v1156, %v1156
    %v1843 = vmul.f32 %v1160, %v1160
    %v1844 = vmul.f32 %v1162, %v1162
    %v1845 = vmul.f32 %v1164, %v1164
    %v1846 = vmul.f32 %v1166, %v1166
    %v1847 = vmul.f32 %v1170, %v1170
    %v1848 = vmul.f32 %v1172, %v1172
    %v1849 = vmul.f32 %v1174, %v1174
    %v1850 = vmul.f32 %v1176, %v1176
    %v1851 = vmul.f32 %v1373, %v1373
    %v1852 = vmul.f32 %v1375, %v1375
    %v1853 = vmul.f32 %v1377, %v1377
    %v1854 = vmul.f32 %v1379, %v1379
    %v1855 = vmul.f32 %v1383, %v1383
    %v1856 = vmul.f32 %v1385, %v1385
    %v1857 = vmul.f32 %v1387, %v1387
    %v1858 = vmul.f32 %v1389, %v1389
    %v1859 = vmul.f32 %v1393, %v1393
    %v1860 = vmul.f32 %v1395, %v1395
    %v1861 = vmul.f32 %v1397, %v1397
    %v1862 = vmul.f32 %v1399, %v1399
    %v1863 = vmul.f32 %v1403, %v1403
    %v1864 = vmul.f32 %v1405, %v1405
    %v1865 = vmul.f32 %v1407, %v1407
    %v1866 = vmul.f32 %v1409, %v1409
    %v1867 = vmul.f32 %v1413, %v1413
    %v1868 = vmul.f32 %v1415, %v1415
    %v1869 = vmul.f32 %v1417, %v1417
    %v1870 = vmul.f32 %v1419, %v1419
    %v1871 = vmul.f32 %v1423, %v1423
    %v1872 = vmul.f32 %v1425, %v1425
    %v1873 = vmul.f32 %v1427, %v1427
    %v1874 = vmul.f32 %v1429, %v1429
    %v1875 = vmul.f32 %v1433, %v1433
    %v1876 = vmul.f32 %v1435, %v1435
    %v1877 = vmul.f32 %v1437, %v1437
    %v1878 = vmul.f32 %v1439, %v1439
    %v1879 = vmul.f32 %v1443, %v1443
    %v1880 = vmul.f32 %v1445, %v1445
    %v1881 = vmul.f32 %v1447, %v1447
    %v1882 = vmul.f32 %v1449, %v1449
    %v1883 = vmul.f32 %v1453, %v1453
    %v1884 = vmul.f32 %v1455, %v1455
    %v1885 = vmul.f32 %v1457, %v1457
    %v1886 = vmul.f32 %v1459, %v1459
    %v1887 = vmul.f32 %v1463, %v1463
    %v1888 = vmul.f32 %v1465, %v1465
    %v1889 = vmul.f32 %v1467, %v1467
    %v1890 = vmul.f32 %v1469, %v1469
    %v1891 = vmul.f32 %v1473, %v1473
    %v1892 = vmul.f32 %v1475, %v1475
    %v1893 = vmul.f32 %v1477, %v1477
    %v1894 = vmul.f32 %v1479, %v1479
    %v1895 = vmul.f32 %v1483, %v1483
    %v1896 = vmul.f32 %v1485, %v1485
    %v1897 = vmul.f32 %v1487, %v1487
    %v1898 = vmul.f32 %v1489, %v1489
    %v1899 = vmul.f32 %v1493, %v1493
    %v1900 = vmul.f32 %v1495, %v1495
    %v1901 = vmul.f32 %v1497, %v1497
    %v1902 = vmul.f32 %v1499, %v1499
    %v1903 = vmul.f32 %v1503, %v1503
    %v1904 = vmul.f32 %v1505, %v1505
    %v1905 = vmul.f32 %v1507, %v1507
    %v1906 = vmul.f32 %v1509, %v1509
    %v1907 = vmul.f32 %v1513, %v1513
    %v1908 = vmul.f32 %v1515, %v1515
    %v1909 = vmul.f32 %v1517, %v1517
    %v1910 = vmul.f32 %v1519, %v1519
    %v1911 = vmul.f32 %v1523, %v1523
    %v1912 = vmul.f32 %v1525, %v1525
    %v1913 = vmul.f32 %v1527, %v1527
    %v1914 = vmul.f32 %v1529, %v1529
    %v1915 = vadd.f32 %v1787, %v1851
    %v1916 = vadd.f32 %v1788, %v1852
    %v1917 = vadd.f32 %v1789, %v1853
    %v1918 = vadd.f32 %v1790, %v1854
    %v1919 = vadd.f32 %v1791, %v1855
    %v1920 = vadd.f32 %v1792, %v1856
    %v1921 = vadd.f32 %v1793, %v1857
    %v1922 = vadd.f32 %v1794, %v1858
    %v1923 = vadd.f32 %v1795, %v1859
    %v1924 = vadd.f32 %v1796, %v1860
    %v1925 = vadd.f32 %v1797, %v1861
    %v1926 = vadd.f32 %v1798, %v1862
    %v1927 = vadd.f32 %v1799, %v1863
    %v1928 = vadd.f32 %v1800, %v1864
    %v1929 = vadd.f32 %v1801, %v1865
    %v1930 = vadd.f32 %v1802, %v1866
    %v1931 = vadd.f32 %v1803, %v1867
    %v1932 = vadd.f32 %v1804, %v1868
    %v1933 = vadd.f32 %v1805, %v1869
    %v1934 = vadd.f32 %v1806, %v1870
    %v1935 = vadd.f32 %v1807, %v1871
    %v1936 = vadd.f32 %v1808, %v1872
    %v1937 = vadd.f32 %v1809, %v1873
    %v1938 = vadd.f32 %v1810, %v1874
    %v1939 = vadd.f32 %v1811, %v1875
    %v1940 = vadd.f32 %v1812, %v1876
    %v1941 = vadd.f32 %v1813, %v1877
    %v1942 = vadd.f32 %v1814, %v1878
    %v1943 = vadd.f32 %v1815, %v1879
    %v1944 = vadd.f32 %v1816, %v1880
    %v1945 = vadd.f32 %v1817, %v1881
    %v1946 = vadd.f32 %v1818, %v1882
    %v1947 = vadd.f32 %v1819, %v1883
    %v1948 = vadd.f32 %v1820, %v1884
    %v1949 = vadd.f32 %v1821, %v1885
    %v1950 = vadd.f32 %v1822, %v1886
    %v1951 = vadd.f32 %v1823, %v1887
    %v1952 = vadd.f32 %v1824, %v1888
    %v1953 = vadd.f32 %v1825, %v1889
    %v1954 = vadd.f32 %v1826, %v1890
    %v1955 = vadd.f32 %v1827, %v1891
    %v1956 = vadd.f32 %v1828, %v1892
    %v1957 = vadd.f32 %v1829, %v1893
    %v1958 = vadd.f32 %v1830, %v1894
    %v1959 = vadd.f32 %v1831, %v1895
    %v1960 = vadd.f32 %v1832, %v1896
    %v1961 = vadd.f32 %v1833, %v1897
    %v1962 = vadd.f32 %v1834, %v1898
    %v1963 = vadd.f32 %v1835, %v1899
    %v1964 = vadd.f32 %v1836, %v1900
    %v1965 = vadd.f32 %v1837, %v1901
    %v1966 = vadd.f32 %v1838, %v1902
    %v1967 = vadd.f32 %v1839, %v1903
    %v1968 = vadd.f32 %v1840, %v1904
    %v1969 = vadd.f32 %v1841, %v1905
    %v1970 = vadd.f32 %v1842, %v1906
    %v1971 = vadd.f32 %v1843, %v1907
    %v1972 = vadd.f32 %v1844, %v1908
    %v1973 = vadd.f32 %v1845, %v1909
    %v1974 = vadd.f32 %v1846, %v1910
    %v1975 = vadd.f32 %v1847, %v1911
    %v1976 = vadd.f32 %v1848, %v1912
    %v1977 = vadd.f32 %v1849, %v1913
    %v1978 = vadd.f32 %v1850, %v1914
    %v1979 = vmax.f32 %v1915, 1e-08
    %v1980 = vmax.f32 %v1916, 1e-08
    %v1981 = vmax.f32 %v1917, 1e-08
    %v1982 = vmax.f32 %v1918, 1e-08
    %v1983 = vmax.f32 %v1919, 1e-08
    %v1984 = vmax.f32 %v1920, 1e-08
    %v1985 = vmax.f32 %v1921, 1e-08
    %v1986 = vmax.f32 %v1922, 1e-08
    %v1987 = vmax.f32 %v1923, 1e-08
    %v1988 = vmax.f32 %v1924, 1e-08
    %v1989 = vmax.f32 %v1925, 1e-08
    %v1990 = vmax.f32 %v1926, 1e-08
    %v1991 = vmax.f32 %v1927, 1e-08
    %v1992 = vmax.f32 %v1928, 1e-08
    %v1993 = vmax.f32 %v1929, 1e-08
    %v1994 = vmax.f32 %v1930, 1e-08
    %v1995 = vmax.f32 %v1931, 1e-08
    %v1996 = vmax.f32 %v1932, 1e-08
    %v1997 = vmax.f32 %v1933, 1e-08
    %v1998 = vmax.f32 %v1934, 1e-08
    %v1999 = vmax.f32 %v1935, 1e-08
    %v2000 = vmax.f32 %v1936, 1e-08
    %v2001 = vmax.f32 %v1937, 1e-08
    %v2002 = vmax.f32 %v1938, 1e-08
    %v2003 = vmax.f32 %v1939, 1e-08
    %v2004 = vmax.f32 %v1940, 1e-08
    %v2005 = vmax.f32 %v1941, 1e-08
    %v2006 = vmax.f32 %v1942, 1e-08
    %v2007 = vmax.f32 %v1943, 1e-08
    %v2008 = vmax.f32 %v1944, 1e-08
    %v2009 = vmax.f32 %v1945, 1e-08
    %v2010 = vmax.f32 %v1946, 1e-08
    %v2011 = vmax.f32 %v1947, 1e-08
    %v2012 = vmax.f32 %v1948, 1e-08
    %v2013 = vmax.f32 %v1949, 1e-08
    %v2014 = vmax.f32 %v1950, 1e-08
    %v2015 = vmax.f32 %v1951, 1e-08
    %v2016 = vmax.f32 %v1952, 1e-08
    %v2017 = vmax.f32 %v1953, 1e-08
    %v2018 = vmax.f32 %v1954, 1e-08
    %v2019 = vmax.f32 %v1955, 1e-08
    %v2020 = vmax.f32 %v1956, 1e-08
    %v2021 = vmax.f32 %v1957, 1e-08
    %v2022 = vmax.f32 %v1958, 1e-08
    %v2023 = vmax.f32 %v1959, 1e-08
    %v2024 = vmax.f32 %v1960, 1e-08
    %v2025 = vmax.f32 %v1961, 1e-08
    %v2026 = vmax.f32 %v1962, 1e-08
    %v2027 = vmax.f32 %v1963, 1e-08
    %v2028 = vmax.f32 %v1964, 1e-08
    %v2029 = vmax.f32 %v1965, 1e-08
    %v2030 = vmax.f32 %v1966, 1e-08
    %v2031 = vmax.f32 %v1967, 1e-08
    %v2032 = vmax.f32 %v1968, 1e-08
    %v2033 = vmax.f32 %v1969, 1e-08
    %v2034 = vmax.f32 %v1970, 1e-08
    %v2035 = vmax.f32 %v1971, 1e-08
    %v2036 = vmax.f32 %v1972, 1e-08
    %v2037 = vmax.f32 %v1973, 1e-08
    %v2038 = vmax.f32 %v1974, 1e-08
    %v2039 = vmax.f32 %v1975, 1e-08
    %v2040 = vmax.f32 %v1976, 1e-08
    %v2041 = vmax.f32 %v1977, 1e-08
    %v2042 = vmax.f32 %v1978, 1e-08
    %v2043 = vrcp.pop %v1723
    %v2044 = vmul.f32 %v1979, %v2043
    %v2045 = vrcp.pop %v1724
    %v2046 = vmul.f32 %v1980, %v2045
    %v2047 = vrcp.pop %v1725
    %v2048 = vmul.f32 %v1981, %v2047
    %v2049 = vrcp.pop %v1726
    %v2050 = vmul.f32 %v1982, %v2049
    %v2051 = vrcp.pop %v1727
    %v2052 = vmul.f32 %v1983, %v2051
    %v2053 = vrcp.pop %v1728
    %v2054 = vmul.f32 %v1984, %v2053
    %v2055 = vrcp.pop %v1729
    %v2056 = vmul.f32 %v1985, %v2055
    %v2057 = vrcp.pop %v1730
    %v2058 = vmul.f32 %v1986, %v2057
    %v2059 = vrcp.pop %v1731
    %v2060 = vmul.f32 %v1987, %v2059
    %v2061 = vrcp.pop %v1732
    %v2062 = vmul.f32 %v1988, %v2061
    %v2063 = vrcp.pop %v1733
    %v2064 = vmul.f32 %v1989, %v2063
    %v2065 = vrcp.pop %v1734
    %v2066 = vmul.f32 %v1990, %v2065
    %v2067 = vrcp.pop %v1735
    %v2068 = vmul.f32 %v1991, %v2067
    %v2069 = vrcp.pop %v1736
    %v2070 = vmul.f32 %v1992, %v2069
    %v2071 = vrcp.pop %v1737
    %v2072 = vmul.f32 %v1993, %v2071
    %v2073 = vrcp.pop %v1738
    %v2074 = vmul.f32 %v1994, %v2073
    %v2075 = vrcp.pop %v1739
    %v2076 = vmul.f32 %v1995, %v2075
    %v2077 = vrcp.pop %v1740
    %v2078 = vmul.f32 %v1996, %v2077
    %v2079 = vrcp.pop %v1741
    %v2080 = vmul.f32 %v1997, %v2079
    %v2081 = vrcp.pop %v1742
    %v2082 = vmul.f32 %v1998, %v2081
    %v2083 = vrcp.pop %v1743
    %v2084 = vmul.f32 %v1999, %v2083
    %v2085 = vrcp.pop %v1744
    %v2086 = vmul.f32 %v2000, %v2085
    %v2087 = vrcp.pop %v1745
    %v2088 = vmul.f32 %v2001, %v2087
    %v2089 = vrcp.pop %v1746
    %v2090 = vmul.f32 %v2002, %v2089
    %v2091 = vrcp.pop %v1747
    %v2092 = vmul.f32 %v2003, %v2091
    %v2093 = vrcp.pop %v1748
    %v2094 = vmul.f32 %v2004, %v2093
    %v2095 = vrcp.pop %v1749
    %v2096 = vmul.f32 %v2005, %v2095
    %v2097 = vrcp.pop %v1750
    %v2098 = vmul.f32 %v2006, %v2097
    %v2099 = vrcp.pop %v1751
    %v2100 = vmul.f32 %v2007, %v2099
    %v2101 = vrcp.pop %v1752
    %v2102 = vmul.f32 %v2008, %v2101
    %v2103 = vrcp.pop %v1753
    %v2104 = vmul.f32 %v2009, %v2103
    %v2105 = vrcp.pop %v1754
    %v2106 = vmul.f32 %v2010, %v2105
    %v2107 = vrcp.pop %v1755
    %v2108 = vmul.f32 %v2011, %v2107
    %v2109 = vrcp.pop %v1756
    %v2110 = vmul.f32 %v2012, %v2109
    %v2111 = vrcp.pop %v1757
    %v2112 = vmul.f32 %v2013, %v2111
    %v2113 = vrcp.pop %v1758
    %v2114 = vmul.f32 %v2014, %v2113
    %v2115 = vrcp.pop %v1759
    %v2116 = vmul.f32 %v2015, %v2115
    %v2117 = vrcp.pop %v1760
    %v2118 = vmul.f32 %v2016, %v2117
    %v2119 = vrcp.pop %v1761
    %v2120 = vmul.f32 %v2017, %v2119
    %v2121 = vrcp.pop %v1762
    %v2122 = vmul.f32 %v2018, %v2121
    %v2123 = vrcp.pop %v1763
    %v2124 = vmul.f32 %v2019, %v2123
    %v2125 = vrcp.pop %v1764
    %v2126 = vmul.f32 %v2020, %v2125
    %v2127 = vrcp.pop %v1765
    %v2128 = vmul.f32 %v2021, %v2127
    %v2129 = vrcp.pop %v1766
    %v2130 = vmul.f32 %v2022, %v2129
    %v2131 = vrcp.pop %v1767
    %v2132 = vmul.f32 %v2023, %v2131
    %v2133 = vrcp.pop %v1768
    %v2134 = vmul.f32 %v2024, %v2133
    %v2135 = vrcp.pop %v1769
    %v2136 = vmul.f32 %v2025, %v2135
    %v2137 = vrcp.pop %v1770
    %v2138 = vmul.f32 %v2026, %v2137
    %v2139 = vrcp.pop %v1771
    %v2140 = vmul.f32 %v2027, %v2139
    %v2141 = vrcp.pop %v1772
    %v2142 = vmul.f32 %v2028, %v2141
    %v2143 = vrcp.pop %v1773
    %v2144 = vmul.f32 %v2029, %v2143
    %v2145 = vrcp.pop %v1774
    %v2146 = vmul.f32 %v2030, %v2145
    %v2147 = vrcp.pop %v1775
    %v2148 = vmul.f32 %v2031, %v2147
    %v2149 = vrcp.pop %v1776
    %v2150 = vmul.f32 %v2032, %v2149
    %v2151 = vrcp.pop %v1777
    %v2152 = vmul.f32 %v2033, %v2151
    %v2153 = vrcp.pop %v1778
    %v2154 = vmul.f32 %v2034, %v2153
    %v2155 = vrcp.pop %v1779
    %v2156 = vmul.f32 %v2035, %v2155
    %v2157 = vrcp.pop %v1780
    %v2158 = vmul.f32 %v2036, %v2157
    %v2159 = vrcp.pop %v1781
    %v2160 = vmul.f32 %v2037, %v2159
    %v2161 = vrcp.pop %v1782
    %v2162 = vmul.f32 %v2038, %v2161
    %v2163 = vrcp.pop %v1783
    %v2164 = vmul.f32 %v2039, %v2163
    %v2165 = vrcp.pop %v1784
    %v2166 = vmul.f32 %v2040, %v2165
    %v2167 = vrcp.pop %v1785
    %v2168 = vmul.f32 %v2041, %v2167
    %v2169 = vrcp.pop %v1786
    %v2170 = vmul.f32 %v2042, %v2169
    %v2171 = vlog2.pop %v2044
    %v2172 = vmul.f32 %v2171, 0.6931472
    %v2173 = vlog2.pop %v2046
    %v2174 = vmul.f32 %v2173, 0.6931472
    %v2175 = vlog2.pop %v2048
    %v2176 = vmul.f32 %v2175, 0.6931472
    %v2177 = vlog2.pop %v2050
    %v2178 = vmul.f32 %v2177, 0.6931472
    %v2179 = vlog2.pop %v2052
    %v2180 = vmul.f32 %v2179, 0.6931472
    %v2181 = vlog2.pop %v2054
    %v2182 = vmul.f32 %v2181, 0.6931472
    %v2183 = vlog2.pop %v2056
    %v2184 = vmul.f32 %v2183, 0.6931472
    %v2185 = vlog2.pop %v2058
    %v2186 = vmul.f32 %v2185, 0.6931472
    %v2187 = vlog2.pop %v2060
    %v2188 = vmul.f32 %v2187, 0.6931472
    %v2189 = vlog2.pop %v2062
    %v2190 = vmul.f32 %v2189, 0.6931472
    %v2191 = vlog2.pop %v2064
    %v2192 = vmul.f32 %v2191, 0.6931472
    %v2193 = vlog2.pop %v2066
    %v2194 = vmul.f32 %v2193, 0.6931472
    %v2195 = vlog2.pop %v2068
    %v2196 = vmul.f32 %v2195, 0.6931472
    %v2197 = vlog2.pop %v2070
    %v2198 = vmul.f32 %v2197, 0.6931472
    %v2199 = vlog2.pop %v2072
    %v2200 = vmul.f32 %v2199, 0.6931472
    %v2201 = vlog2.pop %v2074
    %v2202 = vmul.f32 %v2201, 0.6931472
    %v2203 = vlog2.pop %v2076
    %v2204 = vmul.f32 %v2203, 0.6931472
    %v2205 = vlog2.pop %v2078
    %v2206 = vmul.f32 %v2205, 0.6931472
    %v2207 = vlog2.pop %v2080
    %v2208 = vmul.f32 %v2207, 0.6931472
    %v2209 = vlog2.pop %v2082
    %v2210 = vmul.f32 %v2209, 0.6931472
    %v2211 = vlog2.pop %v2084
    %v2212 = vmul.f32 %v2211, 0.6931472
    %v2213 = vlog2.pop %v2086
    %v2214 = vmul.f32 %v2213, 0.6931472
    %v2215 = vlog2.pop %v2088
    %v2216 = vmul.f32 %v2215, 0.6931472
    %v2217 = vlog2.pop %v2090
    %v2218 = vmul.f32 %v2217, 0.6931472
    %v2219 = vlog2.pop %v2092
    %v2220 = vmul.f32 %v2219, 0.6931472
    %v2221 = vlog2.pop %v2094
    %v2222 = vmul.f32 %v2221, 0.6931472
    %v2223 = vlog2.pop %v2096
    %v2224 = vmul.f32 %v2223, 0.6931472
    %v2225 = vlog2.pop %v2098
    %v2226 = vmul.f32 %v2225, 0.6931472
    %v2227 = vlog2.pop %v2100
    %v2228 = vmul.f32 %v2227, 0.6931472
    %v2229 = vlog2.pop %v2102
    %v2230 = vmul.f32 %v2229, 0.6931472
    %v2231 = vlog2.pop %v2104
    %v2232 = vmul.f32 %v2231, 0.6931472
    %v2233 = vlog2.pop %v2106
    %v2234 = vmul.f32 %v2233, 0.6931472
    %v2235 = vlog2.pop %v2108
    %v2236 = vmul.f32 %v2235, 0.6931472
    %v2237 = vlog2.pop %v2110
    %v2238 = vmul.f32 %v2237, 0.6931472
    %v2239 = vlog2.pop %v2112
    %v2240 = vmul.f32 %v2239, 0.6931472
    %v2241 = vlog2.pop %v2114
    %v2242 = vmul.f32 %v2241, 0.6931472
    %v2243 = vlog2.pop %v2116
    %v2244 = vmul.f32 %v2243, 0.6931472
    %v2245 = vlog2.pop %v2118
    %v2246 = vmul.f32 %v2245, 0.6931472
    %v2247 = vlog2.pop %v2120
    %v2248 = vmul.f32 %v2247, 0.6931472
    %v2249 = vlog2.pop %v2122
    %v2250 = vmul.f32 %v2249, 0.6931472
    %v2251 = vlog2.pop %v2124
    %v2252 = vmul.f32 %v2251, 0.6931472
    %v2253 = vlog2.pop %v2126
    %v2254 = vmul.f32 %v2253, 0.6931472
    %v2255 = vlog2.pop %v2128
    %v2256 = vmul.f32 %v2255, 0.6931472
    %v2257 = vlog2.pop %v2130
    %v2258 = vmul.f32 %v2257, 0.6931472
    %v2259 = vlog2.pop %v2132
    %v2260 = vmul.f32 %v2259, 0.6931472
    %v2261 = vlog2.pop %v2134
    %v2262 = vmul.f32 %v2261, 0.6931472
    %v2263 = vlog2.pop %v2136
    %v2264 = vmul.f32 %v2263, 0.6931472
    %v2265 = vlog2.pop %v2138
    %v2266 = vmul.f32 %v2265, 0.6931472
    %v2267 = vlog2.pop %v2140
    %v2268 = vmul.f32 %v2267, 0.6931472
    %v2269 = vlog2.pop %v2142
    %v2270 = vmul.f32 %v2269, 0.6931472
    %v2271 = vlog2.pop %v2144
    %v2272 = vmul.f32 %v2271, 0.6931472
    %v2273 = vlog2.pop %v2146
    %v2274 = vmul.f32 %v2273, 0.6931472
    %v2275 = vlog2.pop %v2148
    %v2276 = vmul.f32 %v2275, 0.6931472
    %v2277 = vlog2.pop %v2150
    %v2278 = vmul.f32 %v2277, 0.6931472
    %v2279 = vlog2.pop %v2152
    %v2280 = vmul.f32 %v2279, 0.6931472
    %v2281 = vlog2.pop %v2154
    %v2282 = vmul.f32 %v2281, 0.6931472
    %v2283 = vlog2.pop %v2156
    %v2284 = vmul.f32 %v2283, 0.6931472
    %v2285 = vlog2.pop %v2158
    %v2286 = vmul.f32 %v2285, 0.6931472
    %v2287 = vlog2.pop %v2160
    %v2288 = vmul.f32 %v2287, 0.6931472
    %v2289 = vlog2.pop %v2162
    %v2290 = vmul.f32 %v2289, 0.6931472
    %v2291 = vlog2.pop %v2164
    %v2292 = vmul.f32 %v2291, 0.6931472
    %v2293 = vlog2.pop %v2166
    %v2294 = vmul.f32 %v2293, 0.6931472
    %v2295 = vlog2.pop %v2168
    %v2296 = vmul.f32 %v2295, 0.6931472
    %v2297 = vlog2.pop %v2170
    %v2298 = vmul.f32 %v2297, 0.6931472
    %v2299 = vand.u32 2147483647, %v2172
    %v2300 = vand.u32 2147483647, %v2174
    %v2301 = vand.u32 2147483647, %v2176
    %v2302 = vand.u32 2147483647, %v2178
    %v2303 = vand.u32 2147483647, %v2180
    %v2304 = vand.u32 2147483647, %v2182
    %v2305 = vand.u32 2147483647, %v2184
    %v2306 = vand.u32 2147483647, %v2186
    %v2307 = vand.u32 2147483647, %v2188
    %v2308 = vand.u32 2147483647, %v2190
    %v2309 = vand.u32 2147483647, %v2192
    %v2310 = vand.u32 2147483647, %v2194
    %v2311 = vand.u32 2147483647, %v2196
    %v2312 = vand.u32 2147483647, %v2198
    %v2313 = vand.u32 2147483647, %v2200
    %v2314 = vand.u32 2147483647, %v2202
    %v2315 = vand.u32 2147483647, %v2204
    %v2316 = vand.u32 2147483647, %v2206
    %v2317 = vand.u32 2147483647, %v2208
    %v2318 = vand.u32 2147483647, %v2210
    %v2319 = vand.u32 2147483647, %v2212
    %v2320 = vand.u32 2147483647, %v2214
    %v2321 = vand.u32 2147483647, %v2216
    %v2322 = vand.u32 2147483647, %v2218
    %v2323 = vand.u32 2147483647, %v2220
    %v2324 = vand.u32 2147483647, %v2222
    %v2325 = vand.u32 2147483647, %v2224
    %v2326 = vand.u32 2147483647, %v2226
    %v2327 = vand.u32 2147483647, %v2228
    %v2328 = vand.u32 2147483647, %v2230
    %v2329 = vand.u32 2147483647, %v2232
    %v2330 = vand.u32 2147483647, %v2234
    %v2331 = vand.u32 2147483647, %v2236
    %v2332 = vand.u32 2147483647, %v2238
    %v2333 = vand.u32 2147483647, %v2240
    %v2334 = vand.u32 2147483647, %v2242
    %v2335 = vand.u32 2147483647, %v2244
    %v2336 = vand.u32 2147483647, %v2246
    %v2337 = vand.u32 2147483647, %v2248
    %v2338 = vand.u32 2147483647, %v2250
    %v2339 = vand.u32 2147483647, %v2252
    %v2340 = vand.u32 2147483647, %v2254
    %v2341 = vand.u32 2147483647, %v2256
    %v2342 = vand.u32 2147483647, %v2258
    %v2343 = vand.u32 2147483647, %v2260
    %v2344 = vand.u32 2147483647, %v2262
    %v2345 = vand.u32 2147483647, %v2264
    %v2346 = vand.u32 2147483647, %v2266
    %v2347 = vand.u32 2147483647, %v2268
    %v2348 = vand.u32 2147483647, %v2270
    %v2349 = vand.u32 2147483647, %v2272
    %v2350 = vand.u32 2147483647, %v2274
    %v2351 = vand.u32 2147483647, %v2276
    %v2352 = vand.u32 2147483647, %v2278
    %v2353 = vand.u32 2147483647, %v2280
    %v2354 = vand.u32 2147483647, %v2282
    %v2355 = vand.u32 2147483647, %v2284
    %v2356 = vand.u32 2147483647, %v2286
    %v2357 = vand.u32 2147483647, %v2288
    %v2358 = vand.u32 2147483647, %v2290
    %v2359 = vand.u32 2147483647, %v2292
    %v2360 = vand.u32 2147483647, %v2294
    %v2361 = vand.u32 2147483647, %v2296
    %v2362 = vand.u32 2147483647, %v2298
    %v2363 = vmul.f32 %v2299, 0.5
    %v2364 = vmul.f32 %v2300, 0.5
    %v2365 = vmul.f32 %v2301, 0.5
    %v2366 = vmul.f32 %v2302, 0.5
    %v2367 = vmul.f32 %v2303, 0.5
    %v2368 = vmul.f32 %v2304, 0.5
    %v2369 = vmul.f32 %v2305, 0.5
    %v2370 = vmul.f32 %v2306, 0.5
    %v2371 = vmul.f32 %v2307, 0.5
    %v2372 = vmul.f32 %v2308, 0.5
    %v2373 = vmul.f32 %v2309, 0.5
    %v2374 = vmul.f32 %v2310, 0.5
    %v2375 = vmul.f32 %v2311, 0.5
    %v2376 = vmul.f32 %v2312, 0.5
    %v2377 = vmul.f32 %v2313, 0.5
    %v2378 = vmul.f32 %v2314, 0.5
    %v2379 = vmul.f32 %v2315, 0.5
    %v2380 = vmul.f32 %v2316, 0.5
    %v2381 = vmul.f32 %v2317, 0.5
    %v2382 = vmul.f32 %v2318, 0.5
    %v2383 = vmul.f32 %v2319, 0.5
    %v2384 = vmul.f32 %v2320, 0.5
    %v2385 = vmul.f32 %v2321, 0.5
    %v2386 = vmul.f32 %v2322, 0.5
    %v2387 = vmul.f32 %v2323, 0.5
    %v2388 = vmul.f32 %v2324, 0.5
    %v2389 = vmul.f32 %v2325, 0.5
    %v2390 = vmul.f32 %v2326, 0.5
    %v2391 = vmul.f32 %v2327, 0.5
    %v2392 = vmul.f32 %v2328, 0.5
    %v2393 = vmul.f32 %v2329, 0.5
    %v2394 = vmul.f32 %v2330, 0.5
    %v2395 = vmul.f32 %v2331, 0.5
    %v2396 = vmul.f32 %v2332, 0.5
    %v2397 = vmul.f32 %v2333, 0.5
    %v2398 = vmul.f32 %v2334, 0.5
    %v2399 = vmul.f32 %v2335, 0.5
    %v2400 = vmul.f32 %v2336, 0.5
    %v2401 = vmul.f32 %v2337, 0.5
    %v2402 = vmul.f32 %v2338, 0.5
    %v2403 = vmul.f32 %v2339, 0.5
    %v2404 = vmul.f32 %v2340, 0.5
    %v2405 = vmul.f32 %v2341, 0.5
    %v2406 = vmul.f32 %v2342, 0.5
    %v2407 = vmul.f32 %v2343, 0.5
    %v2408 = vmul.f32 %v2344, 0.5
    %v2409 = vmul.f32 %v2345, 0.5
    %v2410 = vmul.f32 %v2346, 0.5
    %v2411 = vmul.f32 %v2347, 0.5
    %v2412 = vmul.f32 %v2348, 0.5
    %v2413 = vmul.f32 %v2349, 0.5
    %v2414 = vmul.f32 %v2350, 0.5
    %v2415 = vmul.f32 %v2351, 0.5
    %v2416 = vmul.f32 %v2352, 0.5
    %v2417 = vmul.f32 %v2353, 0.5
    %v2418 = vmul.f32 %v2354, 0.5
    %v2419 = vmul.f32 %v2355, 0.5
    %v2420 = vmul.f32 %v2356, 0.5
    %v2421 = vmul.f32 %v2357, 0.5
    %v2422 = vmul.f32 %v2358, 0.5
    %v2423 = vmul.f32 %v2359, 0.5
    %v2424 = vmul.f32 %v2360, 0.5
    %v2425 = vmul.f32 %v2361, 0.5
    %v2426 = vmul.f32 %v2362, 0.5
    %v2427 = vadd.f32 %v1979, %v1723
    %v2428 = vadd.f32 %v1980, %v1724
    %v2429 = vadd.f32 %v1981, %v1725
    %v2430 = vadd.f32 %v1982, %v1726
    %v2431 = vadd.f32 %v1983, %v1727
    %v2432 = vadd.f32 %v1984, %v1728
    %v2433 = vadd.f32 %v1985, %v1729
    %v2434 = vadd.f32 %v1986, %v1730
    %v2435 = vadd.f32 %v1987, %v1731
    %v2436 = vadd.f32 %v1988, %v1732
    %v2437 = vadd.f32 %v1989, %v1733
    %v2438 = vadd.f32 %v1990, %v1734
    %v2439 = vadd.f32 %v1991, %v1735
    %v2440 = vadd.f32 %v1992, %v1736
    %v2441 = vadd.f32 %v1993, %v1737
    %v2442 = vadd.f32 %v1994, %v1738
    %v2443 = vadd.f32 %v1995, %v1739
    %v2444 = vadd.f32 %v1996, %v1740
    %v2445 = vadd.f32 %v1997, %v1741
    %v2446 = vadd.f32 %v1998, %v1742
    %v2447 = vadd.f32 %v1999, %v1743
    %v2448 = vadd.f32 %v2000, %v1744
    %v2449 = vadd.f32 %v2001, %v1745
    %v2450 = vadd.f32 %v2002, %v1746
    %v2451 = vadd.f32 %v2003, %v1747
    %v2452 = vadd.f32 %v2004, %v1748
    %v2453 = vadd.f32 %v2005, %v1749
    %v2454 = vadd.f32 %v2006, %v1750
    %v2455 = vadd.f32 %v2007, %v1751
    %v2456 = vadd.f32 %v2008, %v1752
    %v2457 = vadd.f32 %v2009, %v1753
    %v2458 = vadd.f32 %v2010, %v1754
    %v2459 = vadd.f32 %v2011, %v1755
    %v2460 = vadd.f32 %v2012, %v1756
    %v2461 = vadd.f32 %v2013, %v1757
    %v2462 = vadd.f32 %v2014, %v1758
    %v2463 = vadd.f32 %v2015, %v1759
    %v2464 = vadd.f32 %v2016, %v1760
    %v2465 = vadd.f32 %v2017, %v1761
    %v2466 = vadd.f32 %v2018, %v1762
    %v2467 = vadd.f32 %v2019, %v1763
    %v2468 = vadd.f32 %v2020, %v1764
    %v2469 = vadd.f32 %v2021, %v1765
    %v2470 = vadd.f32 %v2022, %v1766
    %v2471 = vadd.f32 %v2023, %v1767
    %v2472 = vadd.f32 %v2024, %v1768
    %v2473 = vadd.f32 %v2025, %v1769
    %v2474 = vadd.f32 %v2026, %v1770
    %v2475 = vadd.f32 %v2027, %v1771
    %v2476 = vadd.f32 %v2028, %v1772
    %v2477 = vadd.f32 %v2029, %v1773
    %v2478 = vadd.f32 %v2030, %v1774
    %v2479 = vadd.f32 %v2031, %v1775
    %v2480 = vadd.f32 %v2032, %v1776
    %v2481 = vadd.f32 %v2033, %v1777
    %v2482 = vadd.f32 %v2034, %v1778
    %v2483 = vadd.f32 %v2035, %v1779
    %v2484 = vadd.f32 %v2036, %v1780
    %v2485 = vadd.f32 %v2037, %v1781
    %v2486 = vadd.f32 %v2038, %v1782
    %v2487 = vadd.f32 %v2039, %v1783
    %v2488 = vadd.f32 %v2040, %v1784
    %v2489 = vadd.f32 %v2041, %v1785
    %v2490 = vadd.f32 %v2042, %v1786
    %v2491 = vmul.f32 %v1979, %v1723
    %v2492 = vmul.f32 %v1980, %v1724
    %v2493 = vmul.f32 %v1981, %v1725
    %v2494 = vmul.f32 %v1982, %v1726
    %v2495 = vmul.f32 %v1983, %v1727
    %v2496 = vmul.f32 %v1984, %v1728
    %v2497 = vmul.f32 %v1985, %v1729
    %v2498 = vmul.f32 %v1986, %v1730
    %v2499 = vmul.f32 %v1987, %v1731
    %v2500 = vmul.f32 %v1988, %v1732
    %v2501 = vmul.f32 %v1989, %v1733
    %v2502 = vmul.f32 %v1990, %v1734
    %v2503 = vmul.f32 %v1991, %v1735
    %v2504 = vmul.f32 %v1992, %v1736
    %v2505 = vmul.f32 %v1993, %v1737
    %v2506 = vmul.f32 %v1994, %v1738
    %v2507 = vmul.f32 %v1995, %v1739
    %v2508 = vmul.f32 %v1996, %v1740
    %v2509 = vmul.f32 %v1997, %v1741
    %v2510 = vmul.f32 %v1998, %v1742
    %v2511 = vmul.f32 %v1999, %v1743
    %v2512 = vmul.f32 %v2000, %v1744
    %v2513 = vmul.f32 %v2001, %v1745
    %v2514 = vmul.f32 %v2002, %v1746
    %v2515 = vmul.f32 %v2003, %v1747
    %v2516 = vmul.f32 %v2004, %v1748
    %v2517 = vmul.f32 %v2005, %v1749
    %v2518 = vmul.f32 %v2006, %v1750
    %v2519 = vmul.f32 %v2007, %v1751
    %v2520 = vmul.f32 %v2008, %v1752
    %v2521 = vmul.f32 %v2009, %v1753
    %v2522 = vmul.f32 %v2010, %v1754
    %v2523 = vmul.f32 %v2011, %v1755
    %v2524 = vmul.f32 %v2012, %v1756
    %v2525 = vmul.f32 %v2013, %v1757
    %v2526 = vmul.f32 %v2014, %v1758
    %v2527 = vmul.f32 %v2015, %v1759
    %v2528 = vmul.f32 %v2016, %v1760
    %v2529 = vmul.f32 %v2017, %v1761
    %v2530 = vmul.f32 %v2018, %v1762
    %v2531 = vmul.f32 %v2019, %v1763
    %v2532 = vmul.f32 %v2020, %v1764
    %v2533 = vmul.f32 %v2021, %v1765
    %v2534 = vmul.f32 %v2022, %v1766
    %v2535 = vmul.f32 %v2023, %v1767
    %v2536 = vmul.f32 %v2024, %v1768
    %v2537 = vmul.f32 %v2025, %v1769
    %v2538 = vmul.f32 %v2026, %v1770
    %v2539 = vmul.f32 %v2027, %v1771
    %v2540 = vmul.f32 %v2028, %v1772
    %v2541 = vmul.f32 %v2029, %v1773
    %v2542 = vmul.f32 %v2030, %v1774
    %v2543 = vmul.f32 %v2031, %v1775
    %v2544 = vmul.f32 %v2032, %v1776
    %v2545 = vmul.f32 %v2033, %v1777
    %v2546 = vmul.f32 %v2034, %v1778
    %v2547 = vmul.f32 %v2035, %v1779
    %v2548 = vmul.f32 %v2036, %v1780
    %v2549 = vmul.f32 %v2037, %v1781
    %v2550 = vmul.f32 %v2038, %v1782
    %v2551 = vmul.f32 %v2039, %v1783
    %v2552 = vmul.f32 %v2040, %v1784
    %v2553 = vmul.f32 %v2041, %v1785
    %v2554 = vmul.f32 %v2042, %v1786
    %v2555 = vrsqrt.pop %v2491
    %v2556 = vmul.f32 %v2491, %v2555
    %vm2557 = vcmp.eq.f32.partialorder %v2491, inf
    %v2558 = vsel %vm2557, %v2491, %v2556
    %vm2559 = vcmp.eq.f32.partialorder %v2491, 0.0
    %v2560 = vand.u32 %v2491, 2147483648
    %v2561 = vsel %vm2559, %v2560, %v2558
    %v2562 = vrsqrt.pop %v2492
    %v2563 = vmul.f32 %v2492, %v2562
    %vm2564 = vcmp.eq.f32.partialorder %v2492, inf
    %v2565 = vsel %vm2564, %v2492, %v2563
    %vm2566 = vcmp.eq.f32.partialorder %v2492, 0.0
    %v2567 = vand.u32 %v2492, 2147483648
    %v2568 = vsel %vm2566, %v2567, %v2565
    %v2569 = vrsqrt.pop %v2493
    %v2570 = vmul.f32 %v2493, %v2569
    %vm2571 = vcmp.eq.f32.partialorder %v2493, inf
    %v2572 = vsel %vm2571, %v2493, %v2570
    %vm2573 = vcmp.eq.f32.partialorder %v2493, 0.0
    %v2574 = vand.u32 %v2493, 2147483648
    %v2575 = vsel %vm2573, %v2574, %v2572
    %v2576 = vrsqrt.pop %v2494
    %v2577 = vmul.f32 %v2494, %v2576
    %vm2578 = vcmp.eq.f32.partialorder %v2494, inf
    %v2579 = vsel %vm2578, %v2494, %v2577
    %vm2580 = vcmp.eq.f32.partialorder %v2494, 0.0
    %v2581 = vand.u32 %v2494, 2147483648
    %v2582 = vsel %vm2580, %v2581, %v2579
    %v2583 = vrsqrt.pop %v2495
    %v2584 = vmul.f32 %v2495, %v2583
    %vm2585 = vcmp.eq.f32.partialorder %v2495, inf
    %v2586 = vsel %vm2585, %v2495, %v2584
    %vm2587 = vcmp.eq.f32.partialorder %v2495, 0.0
    %v2588 = vand.u32 %v2495, 2147483648
    %v2589 = vsel %vm2587, %v2588, %v2586
    %v2590 = vrsqrt.pop %v2496
    %v2591 = vmul.f32 %v2496, %v2590
    %vm2592 = vcmp.eq.f32.partialorder %v2496, inf
    %v2593 = vsel %vm2592, %v2496, %v2591
    %vm2594 = vcmp.eq.f32.partialorder %v2496, 0.0
    %v2595 = vand.u32 %v2496, 2147483648
    %v2596 = vsel %vm2594, %v2595, %v2593
    %v2597 = vrsqrt.pop %v2497
    %v2598 = vmul.f32 %v2497, %v2597
    %vm2599 = vcmp.eq.f32.partialorder %v2497, inf
    %v2600 = vsel %vm2599, %v2497, %v2598
    %vm2601 = vcmp.eq.f32.partialorder %v2497, 0.0
    %v2602 = vand.u32 %v2497, 2147483648
    %v2603 = vsel %vm2601, %v2602, %v2600
    %v2604 = vrsqrt.pop %v2498
    %v2605 = vmul.f32 %v2498, %v2604
    %vm2606 = vcmp.eq.f32.partialorder %v2498, inf
    %v2607 = vsel %vm2606, %v2498, %v2605
    %vm2608 = vcmp.eq.f32.partialorder %v2498, 0.0
    %v2609 = vand.u32 %v2498, 2147483648
    %v2610 = vsel %vm2608, %v2609, %v2607
    %v2611 = vrsqrt.pop %v2499
    %v2612 = vmul.f32 %v2499, %v2611
    %vm2613 = vcmp.eq.f32.partialorder %v2499, inf
    %v2614 = vsel %vm2613, %v2499, %v2612
    %vm2615 = vcmp.eq.f32.partialorder %v2499, 0.0
    %v2616 = vand.u32 %v2499, 2147483648
    %v2617 = vsel %vm2615, %v2616, %v2614
    %v2618 = vrsqrt.pop %v2500
    %v2619 = vmul.f32 %v2500, %v2618
    %vm2620 = vcmp.eq.f32.partialorder %v2500, inf
    %v2621 = vsel %vm2620, %v2500, %v2619
    %vm2622 = vcmp.eq.f32.partialorder %v2500, 0.0
    %v2623 = vand.u32 %v2500, 2147483648
    %v2624 = vsel %vm2622, %v2623, %v2621
    %v2625 = vrsqrt.pop %v2501
    %v2626 = vmul.f32 %v2501, %v2625
    %vm2627 = vcmp.eq.f32.partialorder %v2501, inf
    %v2628 = vsel %vm2627, %v2501, %v2626
    %vm2629 = vcmp.eq.f32.partialorder %v2501, 0.0
    %v2630 = vand.u32 %v2501, 2147483648
    %v2631 = vsel %vm2629, %v2630, %v2628
    %v2632 = vrsqrt.pop %v2502
    %v2633 = vmul.f32 %v2502, %v2632
    %vm2634 = vcmp.eq.f32.partialorder %v2502, inf
    %v2635 = vsel %vm2634, %v2502, %v2633
    %vm2636 = vcmp.eq.f32.partialorder %v2502, 0.0
    %v2637 = vand.u32 %v2502, 2147483648
    %v2638 = vsel %vm2636, %v2637, %v2635
    %v2639 = vrsqrt.pop %v2503
    %v2640 = vmul.f32 %v2503, %v2639
    %vm2641 = vcmp.eq.f32.partialorder %v2503, inf
    %v2642 = vsel %vm2641, %v2503, %v2640
    %vm2643 = vcmp.eq.f32.partialorder %v2503, 0.0
    %v2644 = vand.u32 %v2503, 2147483648
    %v2645 = vsel %vm2643, %v2644, %v2642
    %v2646 = vrsqrt.pop %v2504
    %v2647 = vmul.f32 %v2504, %v2646
    %vm2648 = vcmp.eq.f32.partialorder %v2504, inf
    %v2649 = vsel %vm2648, %v2504, %v2647
    %vm2650 = vcmp.eq.f32.partialorder %v2504, 0.0
    %v2651 = vand.u32 %v2504, 2147483648
    %v2652 = vsel %vm2650, %v2651, %v2649
    %v2653 = vrsqrt.pop %v2505
    %v2654 = vmul.f32 %v2505, %v2653
    %vm2655 = vcmp.eq.f32.partialorder %v2505, inf
    %v2656 = vsel %vm2655, %v2505, %v2654
    %vm2657 = vcmp.eq.f32.partialorder %v2505, 0.0
    %v2658 = vand.u32 %v2505, 2147483648
    %v2659 = vsel %vm2657, %v2658, %v2656
    %v2660 = vrsqrt.pop %v2506
    %v2661 = vmul.f32 %v2506, %v2660
    %vm2662 = vcmp.eq.f32.partialorder %v2506, inf
    %v2663 = vsel %vm2662, %v2506, %v2661
    %vm2664 = vcmp.eq.f32.partialorder %v2506, 0.0
    %v2665 = vand.u32 %v2506, 2147483648
    %v2666 = vsel %vm2664, %v2665, %v2663
    %v2667 = vrsqrt.pop %v2507
    %v2668 = vmul.f32 %v2507, %v2667
    %vm2669 = vcmp.eq.f32.partialorder %v2507, inf
    %v2670 = vsel %vm2669, %v2507, %v2668
    %vm2671 = vcmp.eq.f32.partialorder %v2507, 0.0
    %v2672 = vand.u32 %v2507, 2147483648
    %v2673 = vsel %vm2671, %v2672, %v2670
    %v2674 = vrsqrt.pop %v2508
    %v2675 = vmul.f32 %v2508, %v2674
    %vm2676 = vcmp.eq.f32.partialorder %v2508, inf
    %v2677 = vsel %vm2676, %v2508, %v2675
    %vm2678 = vcmp.eq.f32.partialorder %v2508, 0.0
    %v2679 = vand.u32 %v2508, 2147483648
    %v2680 = vsel %vm2678, %v2679, %v2677
    %v2681 = vrsqrt.pop %v2509
    %v2682 = vmul.f32 %v2509, %v2681
    %vm2683 = vcmp.eq.f32.partialorder %v2509, inf
    %v2684 = vsel %vm2683, %v2509, %v2682
    %vm2685 = vcmp.eq.f32.partialorder %v2509, 0.0
    %v2686 = vand.u32 %v2509, 2147483648
    %v2687 = vsel %vm2685, %v2686, %v2684
    %v2688 = vrsqrt.pop %v2510
    %v2689 = vmul.f32 %v2510, %v2688
    %vm2690 = vcmp.eq.f32.partialorder %v2510, inf
    %v2691 = vsel %vm2690, %v2510, %v2689
    %vm2692 = vcmp.eq.f32.partialorder %v2510, 0.0
    %v2693 = vand.u32 %v2510, 2147483648
    %v2694 = vsel %vm2692, %v2693, %v2691
    %v2695 = vrsqrt.pop %v2511
    %v2696 = vmul.f32 %v2511, %v2695
    %vm2697 = vcmp.eq.f32.partialorder %v2511, inf
    %v2698 = vsel %vm2697, %v2511, %v2696
    %vm2699 = vcmp.eq.f32.partialorder %v2511, 0.0
    %v2700 = vand.u32 %v2511, 2147483648
    %v2701 = vsel %vm2699, %v2700, %v2698
    %v2702 = vrsqrt.pop %v2512
    %v2703 = vmul.f32 %v2512, %v2702
    %vm2704 = vcmp.eq.f32.partialorder %v2512, inf
    %v2705 = vsel %vm2704, %v2512, %v2703
    %vm2706 = vcmp.eq.f32.partialorder %v2512, 0.0
    %v2707 = vand.u32 %v2512, 2147483648
    %v2708 = vsel %vm2706, %v2707, %v2705
    %v2709 = vrsqrt.pop %v2513
    %v2710 = vmul.f32 %v2513, %v2709
    %vm2711 = vcmp.eq.f32.partialorder %v2513, inf
    %v2712 = vsel %vm2711, %v2513, %v2710
    %vm2713 = vcmp.eq.f32.partialorder %v2513, 0.0
    %v2714 = vand.u32 %v2513, 2147483648
    %v2715 = vsel %vm2713, %v2714, %v2712
    %v2716 = vrsqrt.pop %v2514
    %v2717 = vmul.f32 %v2514, %v2716
    %vm2718 = vcmp.eq.f32.partialorder %v2514, inf
    %v2719 = vsel %vm2718, %v2514, %v2717
    %vm2720 = vcmp.eq.f32.partialorder %v2514, 0.0
    %v2721 = vand.u32 %v2514, 2147483648
    %v2722 = vsel %vm2720, %v2721, %v2719
    %v2723 = vrsqrt.pop %v2515
    %v2724 = vmul.f32 %v2515, %v2723
    %vm2725 = vcmp.eq.f32.partialorder %v2515, inf
    %v2726 = vsel %vm2725, %v2515, %v2724
    %vm2727 = vcmp.eq.f32.partialorder %v2515, 0.0
    %v2728 = vand.u32 %v2515, 2147483648
    %v2729 = vsel %vm2727, %v2728, %v2726
    %v2730 = vrsqrt.pop %v2516
    %v2731 = vmul.f32 %v2516, %v2730
    %vm2732 = vcmp.eq.f32.partialorder %v2516, inf
    %v2733 = vsel %vm2732, %v2516, %v2731
    %vm2734 = vcmp.eq.f32.partialorder %v2516, 0.0
    %v2735 = vand.u32 %v2516, 2147483648
    %v2736 = vsel %vm2734, %v2735, %v2733
    %v2737 = vrsqrt.pop %v2517
    %v2738 = vmul.f32 %v2517, %v2737
    %vm2739 = vcmp.eq.f32.partialorder %v2517, inf
    %v2740 = vsel %vm2739, %v2517, %v2738
    %vm2741 = vcmp.eq.f32.partialorder %v2517, 0.0
    %v2742 = vand.u32 %v2517, 2147483648
    %v2743 = vsel %vm2741, %v2742, %v2740
    %v2744 = vrsqrt.pop %v2518
    %v2745 = vmul.f32 %v2518, %v2744
    %vm2746 = vcmp.eq.f32.partialorder %v2518, inf
    %v2747 = vsel %vm2746, %v2518, %v2745
    %vm2748 = vcmp.eq.f32.partialorder %v2518, 0.0
    %v2749 = vand.u32 %v2518, 2147483648
    %v2750 = vsel %vm2748, %v2749, %v2747
    %v2751 = vrsqrt.pop %v2519
    %v2752 = vmul.f32 %v2519, %v2751
    %vm2753 = vcmp.eq.f32.partialorder %v2519, inf
    %v2754 = vsel %vm2753, %v2519, %v2752
    %vm2755 = vcmp.eq.f32.partialorder %v2519, 0.0
    %v2756 = vand.u32 %v2519, 2147483648
    %v2757 = vsel %vm2755, %v2756, %v2754
    %v2758 = vrsqrt.pop %v2520
    %v2759 = vmul.f32 %v2520, %v2758
    %vm2760 = vcmp.eq.f32.partialorder %v2520, inf
    %v2761 = vsel %vm2760, %v2520, %v2759
    %vm2762 = vcmp.eq.f32.partialorder %v2520, 0.0
    %v2763 = vand.u32 %v2520, 2147483648
    %v2764 = vsel %vm2762, %v2763, %v2761
    %v2765 = vrsqrt.pop %v2521
    %v2766 = vmul.f32 %v2521, %v2765
    %vm2767 = vcmp.eq.f32.partialorder %v2521, inf
    %v2768 = vsel %vm2767, %v2521, %v2766
    %vm2769 = vcmp.eq.f32.partialorder %v2521, 0.0
    %v2770 = vand.u32 %v2521, 2147483648
    %v2771 = vsel %vm2769, %v2770, %v2768
    %v2772 = vrsqrt.pop %v2522
    %v2773 = vmul.f32 %v2522, %v2772
    %vm2774 = vcmp.eq.f32.partialorder %v2522, inf
    %v2775 = vsel %vm2774, %v2522, %v2773
    %vm2776 = vcmp.eq.f32.partialorder %v2522, 0.0
    %v2777 = vand.u32 %v2522, 2147483648
    %v2778 = vsel %vm2776, %v2777, %v2775
    %v2779 = vrsqrt.pop %v2523
    %v2780 = vmul.f32 %v2523, %v2779
    %vm2781 = vcmp.eq.f32.partialorder %v2523, inf
    %v2782 = vsel %vm2781, %v2523, %v2780
    %vm2783 = vcmp.eq.f32.partialorder %v2523, 0.0
    %v2784 = vand.u32 %v2523, 2147483648
    %v2785 = vsel %vm2783, %v2784, %v2782
    %v2786 = vrsqrt.pop %v2524
    %v2787 = vmul.f32 %v2524, %v2786
    %vm2788 = vcmp.eq.f32.partialorder %v2524, inf
    %v2789 = vsel %vm2788, %v2524, %v2787
    %vm2790 = vcmp.eq.f32.partialorder %v2524, 0.0
    %v2791 = vand.u32 %v2524, 2147483648
    %v2792 = vsel %vm2790, %v2791, %v2789
    %v2793 = vrsqrt.pop %v2525
    %v2794 = vmul.f32 %v2525, %v2793
    %vm2795 = vcmp.eq.f32.partialorder %v2525, inf
    %v2796 = vsel %vm2795, %v2525, %v2794
    %vm2797 = vcmp.eq.f32.partialorder %v2525, 0.0
    %v2798 = vand.u32 %v2525, 2147483648
    %v2799 = vsel %vm2797, %v2798, %v2796
    %v2800 = vrsqrt.pop %v2526
    %v2801 = vmul.f32 %v2526, %v2800
    %vm2802 = vcmp.eq.f32.partialorder %v2526, inf
    %v2803 = vsel %vm2802, %v2526, %v2801
    %vm2804 = vcmp.eq.f32.partialorder %v2526, 0.0
    %v2805 = vand.u32 %v2526, 2147483648
    %v2806 = vsel %vm2804, %v2805, %v2803
    %v2807 = vrsqrt.pop %v2527
    %v2808 = vmul.f32 %v2527, %v2807
    %vm2809 = vcmp.eq.f32.partialorder %v2527, inf
    %v2810 = vsel %vm2809, %v2527, %v2808
    %vm2811 = vcmp.eq.f32.partialorder %v2527, 0.0
    %v2812 = vand.u32 %v2527, 2147483648
    %v2813 = vsel %vm2811, %v2812, %v2810
    %v2814 = vrsqrt.pop %v2528
    %v2815 = vmul.f32 %v2528, %v2814
    %vm2816 = vcmp.eq.f32.partialorder %v2528, inf
    %v2817 = vsel %vm2816, %v2528, %v2815
    %vm2818 = vcmp.eq.f32.partialorder %v2528, 0.0
    %v2819 = vand.u32 %v2528, 2147483648
    %v2820 = vsel %vm2818, %v2819, %v2817
    %v2821 = vrsqrt.pop %v2529
    %v2822 = vmul.f32 %v2529, %v2821
    %vm2823 = vcmp.eq.f32.partialorder %v2529, inf
    %v2824 = vsel %vm2823, %v2529, %v2822
    %vm2825 = vcmp.eq.f32.partialorder %v2529, 0.0
    %v2826 = vand.u32 %v2529, 2147483648
    %v2827 = vsel %vm2825, %v2826, %v2824
    %v2828 = vrsqrt.pop %v2530
    %v2829 = vmul.f32 %v2530, %v2828
    %vm2830 = vcmp.eq.f32.partialorder %v2530, inf
    %v2831 = vsel %vm2830, %v2530, %v2829
    %vm2832 = vcmp.eq.f32.partialorder %v2530, 0.0
    %v2833 = vand.u32 %v2530, 2147483648
    %v2834 = vsel %vm2832, %v2833, %v2831
    %v2835 = vrsqrt.pop %v2531
    %v2836 = vmul.f32 %v2531, %v2835
    %vm2837 = vcmp.eq.f32.partialorder %v2531, inf
    %v2838 = vsel %vm2837, %v2531, %v2836
    %vm2839 = vcmp.eq.f32.partialorder %v2531, 0.0
    %v2840 = vand.u32 %v2531, 2147483648
    %v2841 = vsel %vm2839, %v2840, %v2838
    %v2842 = vrsqrt.pop %v2532
    %v2843 = vmul.f32 %v2532, %v2842
    %vm2844 = vcmp.eq.f32.partialorder %v2532, inf
    %v2845 = vsel %vm2844, %v2532, %v2843
    %vm2846 = vcmp.eq.f32.partialorder %v2532, 0.0
    %v2847 = vand.u32 %v2532, 2147483648
    %v2848 = vsel %vm2846, %v2847, %v2845
    %v2849 = vrsqrt.pop %v2533
    %v2850 = vmul.f32 %v2533, %v2849
    %vm2851 = vcmp.eq.f32.partialorder %v2533, inf
    %v2852 = vsel %vm2851, %v2533, %v2850
    %vm2853 = vcmp.eq.f32.partialorder %v2533, 0.0
    %v2854 = vand.u32 %v2533, 2147483648
    %v2855 = vsel %vm2853, %v2854, %v2852
    %v2856 = vrsqrt.pop %v2534
    %v2857 = vmul.f32 %v2534, %v2856
    %vm2858 = vcmp.eq.f32.partialorder %v2534, inf
    %v2859 = vsel %vm2858, %v2534, %v2857
    %vm2860 = vcmp.eq.f32.partialorder %v2534, 0.0
    %v2861 = vand.u32 %v2534, 2147483648
    %v2862 = vsel %vm2860, %v2861, %v2859
    %v2863 = vrsqrt.pop %v2535
    %v2864 = vmul.f32 %v2535, %v2863
    %vm2865 = vcmp.eq.f32.partialorder %v2535, inf
    %v2866 = vsel %vm2865, %v2535, %v2864
    %vm2867 = vcmp.eq.f32.partialorder %v2535, 0.0
    %v2868 = vand.u32 %v2535, 2147483648
    %v2869 = vsel %vm2867, %v2868, %v2866
    %v2870 = vrsqrt.pop %v2536
    %v2871 = vmul.f32 %v2536, %v2870
    %vm2872 = vcmp.eq.f32.partialorder %v2536, inf
    %v2873 = vsel %vm2872, %v2536, %v2871
    %vm2874 = vcmp.eq.f32.partialorder %v2536, 0.0
    %v2875 = vand.u32 %v2536, 2147483648
    %v2876 = vsel %vm2874, %v2875, %v2873
    %v2877 = vrsqrt.pop %v2537
    %v2878 = vmul.f32 %v2537, %v2877
    %vm2879 = vcmp.eq.f32.partialorder %v2537, inf
    %v2880 = vsel %vm2879, %v2537, %v2878
    %vm2881 = vcmp.eq.f32.partialorder %v2537, 0.0
    %v2882 = vand.u32 %v2537, 2147483648
    %v2883 = vsel %vm2881, %v2882, %v2880
    %v2884 = vrsqrt.pop %v2538
    %v2885 = vmul.f32 %v2538, %v2884
    %vm2886 = vcmp.eq.f32.partialorder %v2538, inf
    %v2887 = vsel %vm2886, %v2538, %v2885
    %vm2888 = vcmp.eq.f32.partialorder %v2538, 0.0
    %v2889 = vand.u32 %v2538, 2147483648
    %v2890 = vsel %vm2888, %v2889, %v2887
    %v2891 = vrsqrt.pop %v2539
    %v2892 = vmul.f32 %v2539, %v2891
    %vm2893 = vcmp.eq.f32.partialorder %v2539, inf
    %v2894 = vsel %vm2893, %v2539, %v2892
    %vm2895 = vcmp.eq.f32.partialorder %v2539, 0.0
    %v2896 = vand.u32 %v2539, 2147483648
    %v2897 = vsel %vm2895, %v2896, %v2894
    %v2898 = vrsqrt.pop %v2540
    %v2899 = vmul.f32 %v2540, %v2898
    %vm2900 = vcmp.eq.f32.partialorder %v2540, inf
    %v2901 = vsel %vm2900, %v2540, %v2899
    %vm2902 = vcmp.eq.f32.partialorder %v2540, 0.0
    %v2903 = vand.u32 %v2540, 2147483648
    %v2904 = vsel %vm2902, %v2903, %v2901
    %v2905 = vrsqrt.pop %v2541
    %v2906 = vmul.f32 %v2541, %v2905
    %vm2907 = vcmp.eq.f32.partialorder %v2541, inf
    %v2908 = vsel %vm2907, %v2541, %v2906
    %vm2909 = vcmp.eq.f32.partialorder %v2541, 0.0
    %v2910 = vand.u32 %v2541, 2147483648
    %v2911 = vsel %vm2909, %v2910, %v2908
    %v2912 = vrsqrt.pop %v2542
    %v2913 = vmul.f32 %v2542, %v2912
    %vm2914 = vcmp.eq.f32.partialorder %v2542, inf
    %v2915 = vsel %vm2914, %v2542, %v2913
    %vm2916 = vcmp.eq.f32.partialorder %v2542, 0.0
    %v2917 = vand.u32 %v2542, 2147483648
    %v2918 = vsel %vm2916, %v2917, %v2915
    %v2919 = vrsqrt.pop %v2543
    %v2920 = vmul.f32 %v2543, %v2919
    %vm2921 = vcmp.eq.f32.partialorder %v2543, inf
    %v2922 = vsel %vm2921, %v2543, %v2920
    %vm2923 = vcmp.eq.f32.partialorder %v2543, 0.0
    %v2924 = vand.u32 %v2543, 2147483648
    %v2925 = vsel %vm2923, %v2924, %v2922
    %v2926 = vrsqrt.pop %v2544
    %v2927 = vmul.f32 %v2544, %v2926
    %vm2928 = vcmp.eq.f32.partialorder %v2544, inf
    %v2929 = vsel %vm2928, %v2544, %v2927
    %vm2930 = vcmp.eq.f32.partialorder %v2544, 0.0
    %v2931 = vand.u32 %v2544, 2147483648
    %v2932 = vsel %vm2930, %v2931, %v2929
    %v2933 = vrsqrt.pop %v2545
    %v2934 = vmul.f32 %v2545, %v2933
    %vm2935 = vcmp.eq.f32.partialorder %v2545, inf
    %v2936 = vsel %vm2935, %v2545, %v2934
    %vm2937 = vcmp.eq.f32.partialorder %v2545, 0.0
    %v2938 = vand.u32 %v2545, 2147483648
    %v2939 = vsel %vm2937, %v2938, %v2936
    %v2940 = vrsqrt.pop %v2546
    %v2941 = vmul.f32 %v2546, %v2940
    %vm2942 = vcmp.eq.f32.partialorder %v2546, inf
    %v2943 = vsel %vm2942, %v2546, %v2941
    %vm2944 = vcmp.eq.f32.partialorder %v2546, 0.0
    %v2945 = vand.u32 %v2546, 2147483648
    %v2946 = vsel %vm2944, %v2945, %v2943
    %v2947 = vrsqrt.pop %v2547
    %v2948 = vmul.f32 %v2547, %v2947
    %vm2949 = vcmp.eq.f32.partialorder %v2547, inf
    %v2950 = vsel %vm2949, %v2547, %v2948
    %vm2951 = vcmp.eq.f32.partialorder %v2547, 0.0
    %v2952 = vand.u32 %v2547, 2147483648
    %v2953 = vsel %vm2951, %v2952, %v2950
    %v2954 = vrsqrt.pop %v2548
    %v2955 = vmul.f32 %v2548, %v2954
    %vm2956 = vcmp.eq.f32.partialorder %v2548, inf
    %v2957 = vsel %vm2956, %v2548, %v2955
    %vm2958 = vcmp.eq.f32.partialorder %v2548, 0.0
    %v2959 = vand.u32 %v2548, 2147483648
    %v2960 = vsel %vm2958, %v2959, %v2957
    %v2961 = vrsqrt.pop %v2549
    %v2962 = vmul.f32 %v2549, %v2961
    %vm2963 = vcmp.eq.f32.partialorder %v2549, inf
    %v2964 = vsel %vm2963, %v2549, %v2962
    %vm2965 = vcmp.eq.f32.partialorder %v2549, 0.0
    %v2966 = vand.u32 %v2549, 2147483648
    %v2967 = vsel %vm2965, %v2966, %v2964
    %v2968 = vrsqrt.pop %v2550
    %v2969 = vmul.f32 %v2550, %v2968
    %vm2970 = vcmp.eq.f32.partialorder %v2550, inf
    %v2971 = vsel %vm2970, %v2550, %v2969
    %vm2972 = vcmp.eq.f32.partialorder %v2550, 0.0
    %v2973 = vand.u32 %v2550, 2147483648
    %v2974 = vsel %vm2972, %v2973, %v2971
    %v2975 = vrsqrt.pop %v2551
    %v2976 = vmul.f32 %v2551, %v2975
    %vm2977 = vcmp.eq.f32.partialorder %v2551, inf
    %v2978 = vsel %vm2977, %v2551, %v2976
    %vm2979 = vcmp.eq.f32.partialorder %v2551, 0.0
    %v2980 = vand.u32 %v2551, 2147483648
    %v2981 = vsel %vm2979, %v2980, %v2978
    %v2982 = vrsqrt.pop %v2552
    %v2983 = vmul.f32 %v2552, %v2982
    %vm2984 = vcmp.eq.f32.partialorder %v2552, inf
    %v2985 = vsel %vm2984, %v2552, %v2983
    %vm2986 = vcmp.eq.f32.partialorder %v2552, 0.0
    %v2987 = vand.u32 %v2552, 2147483648
    %v2988 = vsel %vm2986, %v2987, %v2985
    %v2989 = vrsqrt.pop %v2553
    %v2990 = vmul.f32 %v2553, %v2989
    %vm2991 = vcmp.eq.f32.partialorder %v2553, inf
    %v2992 = vsel %vm2991, %v2553, %v2990
    %vm2993 = vcmp.eq.f32.partialorder %v2553, 0.0
    %v2994 = vand.u32 %v2553, 2147483648
    %v2995 = vsel %vm2993, %v2994, %v2992
    %v2996 = vrsqrt.pop %v2554
    %v2997 = vmul.f32 %v2554, %v2996
    %vm2998 = vcmp.eq.f32.partialorder %v2554, inf
    %v2999 = vsel %vm2998, %v2554, %v2997
    %vm3000 = vcmp.eq.f32.partialorder %v2554, 0.0
    %v3001 = vand.u32 %v2554, 2147483648
    %v3002 = vsel %vm3000, %v3001, %v2999
    %v3003 = vmul.f32 %v2561, 2.0
    %v3004 = vmul.f32 %v2568, 2.0
    %v3005 = vmul.f32 %v2575, 2.0
    %v3006 = vmul.f32 %v2582, 2.0
    %v3007 = vmul.f32 %v2589, 2.0
    %v3008 = vmul.f32 %v2596, 2.0
    %v3009 = vmul.f32 %v2603, 2.0
    %v3010 = vmul.f32 %v2610, 2.0
    %v3011 = vmul.f32 %v2617, 2.0
    %v3012 = vmul.f32 %v2624, 2.0
    %v3013 = vmul.f32 %v2631, 2.0
    %v3014 = vmul.f32 %v2638, 2.0
    %v3015 = vmul.f32 %v2645, 2.0
    %v3016 = vmul.f32 %v2652, 2.0
    %v3017 = vmul.f32 %v2659, 2.0
    %v3018 = vmul.f32 %v2666, 2.0
    %v3019 = vmul.f32 %v2673, 2.0
    %v3020 = vmul.f32 %v2680, 2.0
    %v3021 = vmul.f32 %v2687, 2.0
    %v3022 = vmul.f32 %v2694, 2.0
    %v3023 = vmul.f32 %v2701, 2.0
    %v3024 = vmul.f32 %v2708, 2.0
    %v3025 = vmul.f32 %v2715, 2.0
    %v3026 = vmul.f32 %v2722, 2.0
    %v3027 = vmul.f32 %v2729, 2.0
    %v3028 = vmul.f32 %v2736, 2.0
    %v3029 = vmul.f32 %v2743, 2.0
    %v3030 = vmul.f32 %v2750, 2.0
    %v3031 = vmul.f32 %v2757, 2.0
    %v3032 = vmul.f32 %v2764, 2.0
    %v3033 = vmul.f32 %v2771, 2.0
    %v3034 = vmul.f32 %v2778, 2.0
    %v3035 = vmul.f32 %v2785, 2.0
    %v3036 = vmul.f32 %v2792, 2.0
    %v3037 = vmul.f32 %v2799, 2.0
    %v3038 = vmul.f32 %v2806, 2.0
    %v3039 = vmul.f32 %v2813, 2.0
    %v3040 = vmul.f32 %v2820, 2.0
    %v3041 = vmul.f32 %v2827, 2.0
    %v3042 = vmul.f32 %v2834, 2.0
    %v3043 = vmul.f32 %v2841, 2.0
    %v3044 = vmul.f32 %v2848, 2.0
    %v3045 = vmul.f32 %v2855, 2.0
    %v3046 = vmul.f32 %v2862, 2.0
    %v3047 = vmul.f32 %v2869, 2.0
    %v3048 = vmul.f32 %v2876, 2.0
    %v3049 = vmul.f32 %v2883, 2.0
    %v3050 = vmul.f32 %v2890, 2.0
    %v3051 = vmul.f32 %v2897, 2.0
    %v3052 = vmul.f32 %v2904, 2.0
    %v3053 = vmul.f32 %v2911, 2.0
    %v3054 = vmul.f32 %v2918, 2.0
    %v3055 = vmul.f32 %v2925, 2.0
    %v3056 = vmul.f32 %v2932, 2.0
    %v3057 = vmul.f32 %v2939, 2.0
    %v3058 = vmul.f32 %v2946, 2.0
    %v3059 = vmul.f32 %v2953, 2.0
    %v3060 = vmul.f32 %v2960, 2.0
    %v3061 = vmul.f32 %v2967, 2.0
    %v3062 = vmul.f32 %v2974, 2.0
    %v3063 = vmul.f32 %v2981, 2.0
    %v3064 = vmul.f32 %v2988, 2.0
    %v3065 = vmul.f32 %v2995, 2.0
    %v3066 = vmul.f32 %v3002, 2.0
    %v3067 = vsub.f32 %v2427, %v3003
    %v3068 = vsub.f32 %v2428, %v3004
    %v3069 = vsub.f32 %v2429, %v3005
    %v3070 = vsub.f32 %v2430, %v3006
    %v3071 = vsub.f32 %v2431, %v3007
    %v3072 = vsub.f32 %v2432, %v3008
    %v3073 = vsub.f32 %v2433, %v3009
    %v3074 = vsub.f32 %v2434, %v3010
    %v3075 = vsub.f32 %v2435, %v3011
    %v3076 = vsub.f32 %v2436, %v3012
    %v3077 = vsub.f32 %v2437, %v3013
    %v3078 = vsub.f32 %v2438, %v3014
    %v3079 = vsub.f32 %v2439, %v3015
    %v3080 = vsub.f32 %v2440, %v3016
    %v3081 = vsub.f32 %v2441, %v3017
    %v3082 = vsub.f32 %v2442, %v3018
    %v3083 = vsub.f32 %v2443, %v3019
    %v3084 = vsub.f32 %v2444, %v3020
    %v3085 = vsub.f32 %v2445, %v3021
    %v3086 = vsub.f32 %v2446, %v3022
    %v3087 = vsub.f32 %v2447, %v3023
    %v3088 = vsub.f32 %v2448, %v3024
    %v3089 = vsub.f32 %v2449, %v3025
    %v3090 = vsub.f32 %v2450, %v3026
    %v3091 = vsub.f32 %v2451, %v3027
    %v3092 = vsub.f32 %v2452, %v3028
    %v3093 = vsub.f32 %v2453, %v3029
    %v3094 = vsub.f32 %v2454, %v3030
    %v3095 = vsub.f32 %v2455, %v3031
    %v3096 = vsub.f32 %v2456, %v3032
    %v3097 = vsub.f32 %v2457, %v3033
    %v3098 = vsub.f32 %v2458, %v3034
    %v3099 = vsub.f32 %v2459, %v3035
    %v3100 = vsub.f32 %v2460, %v3036
    %v3101 = vsub.f32 %v2461, %v3037
    %v3102 = vsub.f32 %v2462, %v3038
    %v3103 = vsub.f32 %v2463, %v3039
    %v3104 = vsub.f32 %v2464, %v3040
    %v3105 = vsub.f32 %v2465, %v3041
    %v3106 = vsub.f32 %v2466, %v3042
    %v3107 = vsub.f32 %v2467, %v3043
    %v3108 = vsub.f32 %v2468, %v3044
    %v3109 = vsub.f32 %v2469, %v3045
    %v3110 = vsub.f32 %v2470, %v3046
    %v3111 = vsub.f32 %v2471, %v3047
    %v3112 = vsub.f32 %v2472, %v3048
    %v3113 = vsub.f32 %v2473, %v3049
    %v3114 = vsub.f32 %v2474, %v3050
    %v3115 = vsub.f32 %v2475, %v3051
    %v3116 = vsub.f32 %v2476, %v3052
    %v3117 = vsub.f32 %v2477, %v3053
    %v3118 = vsub.f32 %v2478, %v3054
    %v3119 = vsub.f32 %v2479, %v3055
    %v3120 = vsub.f32 %v2480, %v3056
    %v3121 = vsub.f32 %v2481, %v3057
    %v3122 = vsub.f32 %v2482, %v3058
    %v3123 = vsub.f32 %v2483, %v3059
    %v3124 = vsub.f32 %v2484, %v3060
    %v3125 = vsub.f32 %v2485, %v3061
    %v3126 = vsub.f32 %v2486, %v3062
    %v3127 = vsub.f32 %v2487, %v3063
    %v3128 = vsub.f32 %v2488, %v3064
    %v3129 = vsub.f32 %v2489, %v3065
    %v3130 = vsub.f32 %v2490, %v3066
    %v3131 = vld [vmem:[#allocation7] sm:$0xff]
    %v3132 = vld [vmem:[#allocation7 + $0x8] sm:$0xff]
    %v3133 = vadd.f32 %v2363, %v2365
    %v3134 = vadd.f32 %v3133, %v2367
    %v3135 = vadd.f32 %v3134, %v2369
    %v3136 = vadd.f32 %v3135, %v2371
    %v3137 = vadd.f32 %v3136, %v2373
    %v3138 = vadd.f32 %v3137, %v2375
    %v3139 = vadd.f32 %v3138, %v2377
    %v3140 = vadd.f32 %v3139, %v2379
    %v3141 = vadd.f32 %v3140, %v2381
    %v3142 = vadd.f32 %v3141, %v2383
    %v3143 = vadd.f32 %v3142, %v2385
    %v3144 = vadd.f32 %v3143, %v2387
    %v3145 = vadd.f32 %v3144, %v2389
    %v3146 = vadd.f32 %v3145, %v2391
    %v3147 = vadd.f32 %v3146, %v2393
    %v3148 = vadd.f32 %v3147, %v2395
    %v3149 = vadd.f32 %v3148, %v2397
    %v3150 = vadd.f32 %v3149, %v2399
    %v3151 = vadd.f32 %v3150, %v2401
    %v3152 = vadd.f32 %v3151, %v2403
    %v3153 = vadd.f32 %v3152, %v2405
    %v3154 = vadd.f32 %v3153, %v2407
    %v3155 = vadd.f32 %v3154, %v2409
    %v3156 = vadd.f32 %v3155, %v2411
    %v3157 = vadd.f32 %v3156, %v2413
    %v3158 = vadd.f32 %v3157, %v2415
    %v3159 = vadd.f32 %v3158, %v2417
    %v3160 = vadd.f32 %v3159, %v2419
    %v3161 = vadd.f32 %v3160, %v2421
    %v3162 = vadd.f32 %v3161, %v2423
    %v3163 = vadd.f32 %v3162, %v2425
    %v3164 = vadd.f32 %v2364, %v2366
    %v3165 = vadd.f32 %v3164, %v2368
    %v3166 = vadd.f32 %v3165, %v2370
    %v3167 = vadd.f32 %v3166, %v2372
    %v3168 = vadd.f32 %v3167, %v2374
    %v3169 = vadd.f32 %v3168, %v2376
    %v3170 = vadd.f32 %v3169, %v2378
    %v3171 = vadd.f32 %v3170, %v2380
    %v3172 = vadd.f32 %v3171, %v2382
    %v3173 = vadd.f32 %v3172, %v2384
    %v3174 = vadd.f32 %v3173, %v2386
    %v3175 = vadd.f32 %v3174, %v2388
    %v3176 = vadd.f32 %v3175, %v2390
    %v3177 = vadd.f32 %v3176, %v2392
    %v3178 = vadd.f32 %v3177, %v2394
    %v3179 = vadd.f32 %v3178, %v2396
    %v3180 = vadd.f32 %v3179, %v2398
    %v3181 = vadd.f32 %v3180, %v2400
    %v3182 = vadd.f32 %v3181, %v2402
    %v3183 = vadd.f32 %v3182, %v2404
    %v3184 = vadd.f32 %v3183, %v2406
    %v3185 = vadd.f32 %v3184, %v2408
    %v3186 = vadd.f32 %v3185, %v2410
    %v3187 = vadd.f32 %v3186, %v2412
    %v3188 = vadd.f32 %v3187, %v2414
    %v3189 = vadd.f32 %v3188, %v2416
    %v3190 = vadd.f32 %v3189, %v2418
    %v3191 = vadd.f32 %v3190, %v2420
    %v3192 = vadd.f32 %v3191, %v2422
    %v3193 = vadd.f32 %v3192, %v2424
    %v3194 = vadd.f32 %v3193, %v2426
    %v3195 = vadd.f32 %v3131, %v3163
    %v3196 = vadd.f32 %v3132, %v3194
    %3197 = vst [vmem:[#allocation7] sm:$0xff] %v3195
    %3198 = vst [vmem:[#allocation7 + $0x8] sm:$0xff] %v3196
    %s3199 = scalar_lea.vmem [#allocation7], 16
    %v3200 = vld [vmem:[%s3199] sm:$0xff]
    %v3201 = vld [vmem:[%s3199 + $0x8] sm:$0xff]
    %v3202 = vadd.f32 %v3067, %v3069
    %v3203 = vadd.f32 %v3202, %v3071
    %v3204 = vadd.f32 %v3203, %v3073
    %v3205 = vadd.f32 %v3204, %v3075
    %v3206 = vadd.f32 %v3205, %v3077
    %v3207 = vadd.f32 %v3206, %v3079
    %v3208 = vadd.f32 %v3207, %v3081
    %v3209 = vadd.f32 %v3208, %v3083
    %v3210 = vadd.f32 %v3209, %v3085
    %v3211 = vadd.f32 %v3210, %v3087
    %v3212 = vadd.f32 %v3211, %v3089
    %v3213 = vadd.f32 %v3212, %v3091
    %v3214 = vadd.f32 %v3213, %v3093
    %v3215 = vadd.f32 %v3214, %v3095
    %v3216 = vadd.f32 %v3215, %v3097
    %v3217 = vadd.f32 %v3216, %v3099
    %v3218 = vadd.f32 %v3217, %v3101
    %v3219 = vadd.f32 %v3218, %v3103
    %v3220 = vadd.f32 %v3219, %v3105
    %v3221 = vadd.f32 %v3220, %v3107
    %v3222 = vadd.f32 %v3221, %v3109
    %v3223 = vadd.f32 %v3222, %v3111
    %v3224 = vadd.f32 %v3223, %v3113
    %v3225 = vadd.f32 %v3224, %v3115
    %v3226 = vadd.f32 %v3225, %v3117
    %v3227 = vadd.f32 %v3226, %v3119
    %v3228 = vadd.f32 %v3227, %v3121
    %v3229 = vadd.f32 %v3228, %v3123
    %v3230 = vadd.f32 %v3229, %v3125
    %v3231 = vadd.f32 %v3230, %v3127
    %v3232 = vadd.f32 %v3231, %v3129
    %v3233 = vadd.f32 %v3068, %v3070
    %v3234 = vadd.f32 %v3233, %v3072
    %v3235 = vadd.f32 %v3234, %v3074
    %v3236 = vadd.f32 %v3235, %v3076
    %v3237 = vadd.f32 %v3236, %v3078
    %v3238 = vadd.f32 %v3237, %v3080
    %v3239 = vadd.f32 %v3238, %v3082
    %v3240 = vadd.f32 %v3239, %v3084
    %v3241 = vadd.f32 %v3240, %v3086
    %v3242 = vadd.f32 %v3241, %v3088
    %v3243 = vadd.f32 %v3242, %v3090
    %v3244 = vadd.f32 %v3243, %v3092
    %v3245 = vadd.f32 %v3244, %v3094
    %v3246 = vadd.f32 %v3245, %v3096
    %v3247 = vadd.f32 %v3246, %v3098
    %v3248 = vadd.f32 %v3247, %v3100
    %v3249 = vadd.f32 %v3248, %v3102
    %v3250 = vadd.f32 %v3249, %v3104
    %v3251 = vadd.f32 %v3250, %v3106
    %v3252 = vadd.f32 %v3251, %v3108
    %v3253 = vadd.f32 %v3252, %v3110
    %v3254 = vadd.f32 %v3253, %v3112
    %v3255 = vadd.f32 %v3254, %v3114
    %v3256 = vadd.f32 %v3255, %v3116
    %v3257 = vadd.f32 %v3256, %v3118
    %v3258 = vadd.f32 %v3257, %v3120
    %v3259 = vadd.f32 %v3258, %v3122
    %v3260 = vadd.f32 %v3259, %v3124
    %v3261 = vadd.f32 %v3260, %v3126
    %v3262 = vadd.f32 %v3261, %v3128
    %v3263 = vadd.f32 %v3262, %v3130
    %v3264 = vadd.f32 %v3200, %v3232
    %v3265 = vadd.f32 %v3201, %v3263
    %3266 = vst [vmem:[%s3199] sm:$0xff] %v3264
    %3267 = vst [vmem:[%s3199 + $0x8] sm:$0xff] %v3265
    %s3268 = scalar_lea.vmem [#allocation7], 32
    %v3269 = vld [vmem:[%s3268] sm:$0xff]
    %v3270 = vld [vmem:[%s3268 + $0x8] sm:$0xff]
    %v3271 = vadd.f32 %v1979, %v1981
    %v3272 = vadd.f32 %v3271, %v1983
    %v3273 = vadd.f32 %v3272, %v1985
    %v3274 = vadd.f32 %v3273, %v1987
    %v3275 = vadd.f32 %v3274, %v1989
    %v3276 = vadd.f32 %v3275, %v1991
    %v3277 = vadd.f32 %v3276, %v1993
    %v3278 = vadd.f32 %v3277, %v1995
    %v3279 = vadd.f32 %v3278, %v1997
    %v3280 = vadd.f32 %v3279, %v1999
    %v3281 = vadd.f32 %v3280, %v2001
    %v3282 = vadd.f32 %v3281, %v2003
    %v3283 = vadd.f32 %v3282, %v2005
    %v3284 = vadd.f32 %v3283, %v2007
    %v3285 = vadd.f32 %v3284, %v2009
    %v3286 = vadd.f32 %v3285, %v2011
    %v3287 = vadd.f32 %v3286, %v2013
    %v3288 = vadd.f32 %v3287, %v2015
    %v3289 = vadd.f32 %v3288, %v2017
    %v3290 = vadd.f32 %v3289, %v2019
    %v3291 = vadd.f32 %v3290, %v2021
    %v3292 = vadd.f32 %v3291, %v2023
    %v3293 = vadd.f32 %v3292, %v2025
    %v3294 = vadd.f32 %v3293, %v2027
    %v3295 = vadd.f32 %v3294, %v2029
    %v3296 = vadd.f32 %v3295, %v2031
    %v3297 = vadd.f32 %v3296, %v2033
    %v3298 = vadd.f32 %v3297, %v2035
    %v3299 = vadd.f32 %v3298, %v2037
    %v3300 = vadd.f32 %v3299, %v2039
    %v3301 = vadd.f32 %v3300, %v2041
    %v3302 = vadd.f32 %v1980, %v1982
    %v3303 = vadd.f32 %v3302, %v1984
    %v3304 = vadd.f32 %v3303, %v1986
    %v3305 = vadd.f32 %v3304, %v1988
    %v3306 = vadd.f32 %v3305, %v1990
    %v3307 = vadd.f32 %v3306, %v1992
    %v3308 = vadd.f32 %v3307, %v1994
    %v3309 = vadd.f32 %v3308, %v1996
    %v3310 = vadd.f32 %v3309, %v1998
    %v3311 = vadd.f32 %v3310, %v2000
    %v3312 = vadd.f32 %v3311, %v2002
    %v3313 = vadd.f32 %v3312, %v2004
    %v3314 = vadd.f32 %v3313, %v2006
    %v3315 = vadd.f32 %v3314, %v2008
    %v3316 = vadd.f32 %v3315, %v2010
    %v3317 = vadd.f32 %v3316, %v2012
    %v3318 = vadd.f32 %v3317, %v2014
    %v3319 = vadd.f32 %v3318, %v2016
    %v3320 = vadd.f32 %v3319, %v2018
    %v3321 = vadd.f32 %v3320, %v2020
    %v3322 = vadd.f32 %v3321, %v2022
    %v3323 = vadd.f32 %v3322, %v2024
    %v3324 = vadd.f32 %v3323, %v2026
    %v3325 = vadd.f32 %v3324, %v2028
    %v3326 = vadd.f32 %v3325, %v2030
    %v3327 = vadd.f32 %v3326, %v2032
    %v3328 = vadd.f32 %v3327, %v2034
    %v3329 = vadd.f32 %v3328, %v2036
    %v3330 = vadd.f32 %v3329, %v2038
    %v3331 = vadd.f32 %v3330, %v2040
    %v3332 = vadd.f32 %v3331, %v2042
    %v3333 = vadd.f32 %v3269, %v3301
    %v3334 = vadd.f32 %v3270, %v3332
    %3335 = vst [vmem:[%s3268] sm:$0xff] %v3333
    %3336 = vst [vmem:[%s3268 + $0x8] sm:$0xff] %v3334
    // Predicated region
    $region22: #{tpu_custom_call.1} parent=1 // pred_check
      _
    $region23: #{tpu_custom_call.1} parent=1 // pred_check_branch
      %3338 = sbr.rel (0) target = $region25
    $region24: #{tpu_custom_call.1} parent=1 // pred_region
      %s3340 = ssub.s32 768, 768
      %3341 = vsyncadd [#allocation4], %s3340
      %s3342 = sshll.u32 [#allocation7], 4
      %s3343 = int_to_ptr.vmem [resolvable:$true] %s3342
      %3348 = dma.vmem_to_hbm [thread:$0]  %s3343, 768, %s2, [#allocation4], 256, 256, 16
    $region25: #{tpu_custom_call.1} parent=1 // pred_fallthru
      _
    // Predicated region
    $region26: #{tpu_custom_call.1} parent=1 // pred_check
      _
    $region27: #{tpu_custom_call.1} parent=1 // pred_check_branch
      %3350 = sbr.rel (0) target = $region29
    $region28: #{tpu_custom_call.1} parent=1 // pred_region
      %3351 = dma.done [#allocation4], 768
    $region29: #{tpu_custom_call.1} parent=1 // pred_fallthru
      _
    %3352 = vsyncpa [#allocation3], 1
    %3353 = vsyncpa [#allocation6], 1
    %3354 = vsyncpa [#allocation4], 1

// kernel: tpu_custom_call.1
$region0: #{tpu_custom_call.1}
  #allocation0 [shape = 'u32[]', space=smem, size = 0x4, offset = 0x4, fixed_abs, tag = 'smem constant byte address 0x4 - core index']
  #allocation1 [shape = 'u32[144,128]{1,0:T(1,128)}', space=vmem, size = 0x12000, scoped, tag = 'internal scratch']
  %s0 = inlined_call_operand.hbm [shape: bf16[2,256,256], index: 0, kind: input, shape index: {}]
  %s1 = inlined_call_operand.hbm [shape: bf16[256,512], index: 1, kind: input, shape index: {}]
  %s2 = inlined_call_operand.hbm [shape: f32[3,8,256], index: 2, kind: output, shape index: {}]
  %s3 = sld [smem:[#allocation0]]
  $region30: #{tpu_custom_call.1} parent=0
    _
  %s5 = ssub.s32 1, %s3
  %s6 = scalar_select 0, %s5, %s3
  $region1: #{tpu_custom_call.1} parent=0
    #allocation2 [shape = 'u8[262144]{0}', space=vmem, size = 0x40000, scoped, tag = 'input window, operand 0, single buffered']
    #allocation3 [shape = 's32[1]{0}', space=sflag, size = 0x4, scoped, tag = 'scoped memory for tpu_custom_call.1']
    #allocation4 [shape = 's32[1]{0}', space=sflag, size = 0x4, scoped, tag = 'scoped memory for tpu_custom_call.1']
    #allocation5 [shape = 'u8[262144]{0}', space=vmem, size = 0x40000, scoped, tag = 'input window, operand 1, single buffered']
    #allocation6 [shape = 's32[1]{0}', space=sflag, size = 0x4, scoped, tag = 'scoped memory for tpu_custom_call.1']
    #allocation7 [shape = 'u8[24576]{0}', space=vmem, size = 0x6000, scoped, tag = 'output window, operand 0, single buffered']
    %7 = vsyncpa [#allocation3], 0
    %8 = vsyncpa [#allocation6], 0
    %9 = vsyncpa [#allocation4], 0
    // Predicated region
    $region2: #{tpu_custom_call.1} parent=1 // pred_check
      _
    $region3: #{tpu_custom_call.1} parent=1 // pred_check_branch
      %11 = sbr.rel (0) target = $region5
    $region4: #{tpu_custom_call.1} parent=1 // pred_region
      %s12 = sadd.s32 0, 0
      %s13 = smul.u32 32, %s12
      %s15 = ssub.s32 8192, 8192
      %16 = vsyncadd [#allocation3], %s15
      %s17 = smul.addr %s13, 2
      %s18 = smul.addr %s17, 64
      %s19 = scalar_lea.hbm %s0, %s18
      %s20 = sshll.u32 [#allocation2], 4
      %s21 = int_to_ptr.vmem [resolvable:$true] %s20
      %26 = dma.hbm_to_vmem [thread:$0]  %s19, 8192, %s21, [#allocation3], 128, 128, 8
    $region5: #{tpu_custom_call.1} parent=1 // pred_fallthru
      _
    // Predicated region
    $region6: #{tpu_custom_call.1} parent=1 // pred_check
      _
    $region7: #{tpu_custom_call.1} parent=1 // pred_check_branch
      %28 = sbr.rel (0) target = $region9
    $region8: #{tpu_custom_call.1} parent=1 // pred_region
      %s30 = ssub.s32 8192, 8192
      %31 = vsyncadd [#allocation6], %s30
      %s32 = sshll.u32 [#allocation5], 4
      %s33 = int_to_ptr.vmem [resolvable:$true] %s32
      %38 = dma.hbm_to_vmem [thread:$0]  %s1, 8192, %s33, [#allocation6], 256, 256, 16
    $region9: #{tpu_custom_call.1} parent=1 // pred_fallthru
      _
    // Predicated region
    $region10: #{tpu_custom_call.1} parent=1 // pred_check
      _
    $region11: #{tpu_custom_call.1} parent=1 // pred_check_branch
      %40 = sbr.rel (0) target = $region13
    $region12: #{tpu_custom_call.1} parent=1 // pred_region
      %41 = dma.done [#allocation3], 8192
    $region13: #{tpu_custom_call.1} parent=1 // pred_fallthru
      _
    // Predicated region
    $region14: #{tpu_custom_call.1} parent=1 // pred_check
      _
    $region15: #{tpu_custom_call.1} parent=1 // pred_check_branch
      %43 = sbr.rel (0) target = $region17
    $region16: #{tpu_custom_call.1} parent=1 // pred_region
      %44 = dma.done [#allocation6], 8192
    $region17: #{tpu_custom_call.1} parent=1 // pred_fallthru
      _
    %s45 = sadd.s32 0, 0
    %s46 = smul.u32 32, %s45
    %p47 = scmp.eq.s32.totalorder 0, 0
    // Predicated region
    $region18: #{tpu_custom_call.1} parent=1 // pred_check
      %p48 = pneg %p47
    $region19: #{tpu_custom_call.1} parent=1 // pred_check_branch
      %50 = sbr.rel (%p48) target = $region21
    $region20: #{tpu_custom_call.1} parent=1 // pred_region
      %51 = vst [vmem:[#allocation7] sm:$0xff] 0.0
      %52 = vst [vmem:[#allocation7 + $0x8] sm:$0xff] 0.0
      %53 = vst [vmem:[#allocation7 + $0x10] sm:$0xff] 0.0
      %54 = vst [vmem:[#allocation7 + $0x18] sm:$0xff] 0.0
      %55 = vst [vmem:[#allocation7 + $0x20] sm:$0xff] 0.0
      %56 = vst [vmem:[#allocation7 + $0x28] sm:$0xff] 0.0
    $region21: #{tpu_custom_call.1} parent=1 // pred_fallthru
      _
    %v57 = vld [vmem:[#allocation2] sm:$0xff]
    %v58 = vld [vmem:[#allocation2 + $0x8] sm:$0xff]
    %v59 = vld [vmem:[#allocation2 + $0x10] sm:$0xff]
    %v60 = vld [vmem:[#allocation2 + $0x18] sm:$0xff]
    %v61 = vld [vmem:[#allocation2 + $0x20] sm:$0xff]
    %v62 = vld [vmem:[#allocation2 + $0x28] sm:$0xff]
    %v63 = vld [vmem:[#allocation2 + $0x30] sm:$0xff]
    %v64 = vld [vmem:[#allocation2 + $0x38] sm:$0xff]
    %v65 = vld [vmem:[#allocation2 + $0x40] sm:$0xff]
    %v66 = vld [vmem:[#allocation2 + $0x48] sm:$0xff]
    %v67 = vld [vmem:[#allocation2 + $0x50] sm:$0xff]
    %v68 = vld [vmem:[#allocation2 + $0x58] sm:$0xff]
    %v69 = vld [vmem:[#allocation2 + $0x60] sm:$0xff]
    %v70 = vld [vmem:[#allocation2 + $0x68] sm:$0xff]
    %v71 = vld [vmem:[#allocation2 + $0x70] sm:$0xff]
    %v72 = vld [vmem:[#allocation2 + $0x78] sm:$0xff]
    %v73 = vld [vmem:[#allocation2 + $0x80] sm:$0xff]
    %v74 = vld [vmem:[#allocation2 + $0x88] sm:$0xff]
    %v75 = vld [vmem:[#allocation2 + $0x90] sm:$0xff]
    %v76 = vld [vmem:[#allocation2 + $0x98] sm:$0xff]
    %v77 = vld [vmem:[#allocation2 + $0xa0] sm:$0xff]
    %v78 = vld [vmem:[#allocation2 + $0xa8] sm:$0xff]
    %v79 = vld [vmem:[#allocation2 + $0xb0] sm:$0xff]
    %v80 = vld [vmem:[#allocation2 + $0xb8] sm:$0xff]
    %v81 = vld [vmem:[#allocation2 + $0xc0] sm:$0xff]
    %v82 = vld [vmem:[#allocation2 + $0xc8] sm:$0xff]
    %v83 = vld [vmem:[#allocation2 + $0xd0] sm:$0xff]
    %v84 = vld [vmem:[#allocation2 + $0xd8] sm:$0xff]
    %v85 = vld [vmem:[#allocation2 + $0xe0] sm:$0xff]
    %v86 = vld [vmem:[#allocation2 + $0xe8] sm:$0xff]
    %v87 = vld [vmem:[#allocation2 + $0xf0] sm:$0xff]
    %v88 = vld [vmem:[#allocation2 + $0xf8] sm:$0xff]
    %v89 = vld [vmem:[#allocation2 + $0x100] sm:$0xff]
    %v90 = vld [vmem:[#allocation2 + $0x108] sm:$0xff]
    %v91 = vld [vmem:[#allocation2 + $0x110] sm:$0xff]
    %v92 = vld [vmem:[#allocation2 + $0x118] sm:$0xff]
    %v93 = vld [vmem:[#allocation2 + $0x120] sm:$0xff]
    %v94 = vld [vmem:[#allocation2 + $0x128] sm:$0xff]
    %v95 = vld [vmem:[#allocation2 + $0x130] sm:$0xff]
    %v96 = vld [vmem:[#allocation2 + $0x138] sm:$0xff]
    %v97 = vld [vmem:[#allocation2 + $0x140] sm:$0xff]
    %v98 = vld [vmem:[#allocation2 + $0x148] sm:$0xff]
    %v99 = vld [vmem:[#allocation2 + $0x150] sm:$0xff]
    %v100 = vld [vmem:[#allocation2 + $0x158] sm:$0xff]
    %v101 = vld [vmem:[#allocation2 + $0x160] sm:$0xff]
    %v102 = vld [vmem:[#allocation2 + $0x168] sm:$0xff]
    %v103 = vld [vmem:[#allocation2 + $0x170] sm:$0xff]
    %v104 = vld [vmem:[#allocation2 + $0x178] sm:$0xff]
    %v105 = vld [vmem:[#allocation2 + $0x180] sm:$0xff]
    %v106 = vld [vmem:[#allocation2 + $0x188] sm:$0xff]
    %v107 = vld [vmem:[#allocation2 + $0x190] sm:$0xff]
    %v108 = vld [vmem:[#allocation2 + $0x198] sm:$0xff]
    %v109 = vld [vmem:[#allocation2 + $0x1a0] sm:$0xff]
    %v110 = vld [vmem:[#allocation2 + $0x1a8] sm:$0xff]
    %v111 = vld [vmem:[#allocation2 + $0x1b0] sm:$0xff]
    %v112 = vld [vmem:[#allocation2 + $0x1b8] sm:$0xff]
    %v113 = vld [vmem:[#allocation2 + $0x1c0] sm:$0xff]
    %v114 = vld [vmem:[#allocation2 + $0x1c8] sm:$0xff]
    %v115 = vld [vmem:[#allocation2 + $0x1d0] sm:$0xff]
    %v116 = vld [vmem:[#allocation2 + $0x1d8] sm:$0xff]
    %v117 = vld [vmem:[#allocation2 + $0x1e0] sm:$0xff]
    %v118 = vld [vmem:[#allocation2 + $0x1e8] sm:$0xff]
    %v119 = vld [vmem:[#allocation2 + $0x1f0] sm:$0xff]
    %v120 = vld [vmem:[#allocation2 + $0x1f8] sm:$0xff]
    %v121 = vld [vmem:[#allocation5] sm:$0xff]
    %v122 = vld [vmem:[#allocation5 + $0x8] sm:$0xff]
    %v123 = vld [vmem:[#allocation5 + $0x10] sm:$0xff]
    %v124 = vld [vmem:[#allocation5 + $0x18] sm:$0xff]
    %v125 = vld [vmem:[#allocation5 + $0x20] sm:$0xff]
    %v126 = vld [vmem:[#allocation5 + $0x28] sm:$0xff]
    %v127 = vld [vmem:[#allocation5 + $0x30] sm:$0xff]
    %v128 = vld [vmem:[#allocation5 + $0x38] sm:$0xff]
    %v129 = vld [vmem:[#allocation5 + $0x40] sm:$0xff]
    %v130 = vld [vmem:[#allocation5 + $0x48] sm:$0xff]
    %v131 = vld [vmem:[#allocation5 + $0x50] sm:$0xff]
    %v132 = vld [vmem:[#allocation5 + $0x58] sm:$0xff]
    %v133 = vld [vmem:[#allocation5 + $0x60] sm:$0xff]
    %v134 = vld [vmem:[#allocation5 + $0x68] sm:$0xff]
    %v135 = vld [vmem:[#allocation5 + $0x70] sm:$0xff]
    %v136 = vld [vmem:[#allocation5 + $0x78] sm:$0xff]
    %v137 = vld [vmem:[#allocation5 + $0x80] sm:$0xff]
    %v138 = vld [vmem:[#allocation5 + $0x88] sm:$0xff]
    %v139 = vld [vmem:[#allocation5 + $0x90] sm:$0xff]
    %v140 = vld [vmem:[#allocation5 + $0x98] sm:$0xff]
    %v141 = vld [vmem:[#allocation5 + $0xa0] sm:$0xff]
    %v142 = vld [vmem:[#allocation5 + $0xa8] sm:$0xff]
    %v143 = vld [vmem:[#allocation5 + $0xb0] sm:$0xff]
    %v144 = vld [vmem:[#allocation5 + $0xb8] sm:$0xff]
    %v145 = vld [vmem:[#allocation5 + $0xc0] sm:$0xff]
    %v146 = vld [vmem:[#allocation5 + $0xc8] sm:$0xff]
    %v147 = vld [vmem:[#allocation5 + $0xd0] sm:$0xff]
    %v148 = vld [vmem:[#allocation5 + $0xd8] sm:$0xff]
    %v149 = vld [vmem:[#allocation5 + $0xe0] sm:$0xff]
    %v150 = vld [vmem:[#allocation5 + $0xe8] sm:$0xff]
    %v151 = vld [vmem:[#allocation5 + $0xf0] sm:$0xff]
    %v152 = vld [vmem:[#allocation5 + $0xf8] sm:$0xff]
    %v153 = vld [vmem:[#allocation5 + $0x100] sm:$0xff]
    %v154 = vld [vmem:[#allocation5 + $0x108] sm:$0xff]
    %v155 = vld [vmem:[#allocation5 + $0x110] sm:$0xff]
    %v156 = vld [vmem:[#allocation5 + $0x118] sm:$0xff]
    %v157 = vld [vmem:[#allocation5 + $0x120] sm:$0xff]
    %v158 = vld [vmem:[#allocation5 + $0x128] sm:$0xff]
    %v159 = vld [vmem:[#allocation5 + $0x130] sm:$0xff]
    %v160 = vld [vmem:[#allocation5 + $0x138] sm:$0xff]
    %v161 = vld [vmem:[#allocation5 + $0x140] sm:$0xff]
    %v162 = vld [vmem:[#allocation5 + $0x148] sm:$0xff]
    %v163 = vld [vmem:[#allocation5 + $0x150] sm:$0xff]
    %v164 = vld [vmem:[#allocation5 + $0x158] sm:$0xff]
    %v165 = vld [vmem:[#allocation5 + $0x160] sm:$0xff]
    %v166 = vld [vmem:[#allocation5 + $0x168] sm:$0xff]
    %v167 = vld [vmem:[#allocation5 + $0x170] sm:$0xff]
    %v168 = vld [vmem:[#allocation5 + $0x178] sm:$0xff]
    %v169 = vld [vmem:[#allocation5 + $0x180] sm:$0xff]
    %v170 = vld [vmem:[#allocation5 + $0x188] sm:$0xff]
    %v171 = vld [vmem:[#allocation5 + $0x190] sm:$0xff]
    %v172 = vld [vmem:[#allocation5 + $0x198] sm:$0xff]
    %v173 = vld [vmem:[#allocation5 + $0x1a0] sm:$0xff]
    %v174 = vld [vmem:[#allocation5 + $0x1a8] sm:$0xff]
    %v175 = vld [vmem:[#allocation5 + $0x1b0] sm:$0xff]
    %v176 = vld [vmem:[#allocation5 + $0x1b8] sm:$0xff]
    %v177 = vld [vmem:[#allocation5 + $0x1c0] sm:$0xff]
    %v178 = vld [vmem:[#allocation5 + $0x1c8] sm:$0xff]
    %v179 = vld [vmem:[#allocation5 + $0x1d0] sm:$0xff]
    %v180 = vld [vmem:[#allocation5 + $0x1d8] sm:$0xff]
    %v181 = vld [vmem:[#allocation5 + $0x1e0] sm:$0xff]
    %v182 = vld [vmem:[#allocation5 + $0x1e8] sm:$0xff]
    %v183 = vld [vmem:[#allocation5 + $0x1f0] sm:$0xff]
    %v184 = vld [vmem:[#allocation5 + $0x1f8] sm:$0xff]
    %v249 = vunpack.c.l.b16 %v57
    %v250 = vunpack.c.h.b16 %v57
    %v251 = vunpack.c.l.b16 %v58
    %v252 = vunpack.c.h.b16 %v58
    %v253 = vunpack.c.l.b16 %v59
    %v254 = vunpack.c.h.b16 %v59
    %v255 = vunpack.c.l.b16 %v60
    %v256 = vunpack.c.h.b16 %v60
    %v257 = vunpack.c.l.b16 %v61
    %v258 = vunpack.c.h.b16 %v61
    %v259 = vunpack.c.l.b16 %v62
    %v260 = vunpack.c.h.b16 %v62
    %v261 = vunpack.c.l.b16 %v63
    %v262 = vunpack.c.h.b16 %v63
    %v263 = vunpack.c.l.b16 %v64
    %v264 = vunpack.c.h.b16 %v64
    %v265 = vunpack.c.l.b16 %v65
    %v266 = vunpack.c.h.b16 %v65
    %v267 = vunpack.c.l.b16 %v66
    %v268 = vunpack.c.h.b16 %v66
    %v269 = vunpack.c.l.b16 %v67
    %v270 = vunpack.c.h.b16 %v67
    %v271 = vunpack.c.l.b16 %v68
    %v272 = vunpack.c.h.b16 %v68
    %v273 = vunpack.c.l.b16 %v69
    %v274 = vunpack.c.h.b16 %v69
    %v275 = vunpack.c.l.b16 %v70
    %v276 = vunpack.c.h.b16 %v70
    %v277 = vunpack.c.l.b16 %v71
    %v278 = vunpack.c.h.b16 %v71
    %v279 = vunpack.c.l.b16 %v72
    %v280 = vunpack.c.h.b16 %v72
    %v281 = vunpack.c.l.b16 %v73
    %v282 = vunpack.c.h.b16 %v73
    %v283 = vunpack.c.l.b16 %v74
    %v284 = vunpack.c.h.b16 %v74
    %v285 = vunpack.c.l.b16 %v75
    %v286 = vunpack.c.h.b16 %v75
    %v287 = vunpack.c.l.b16 %v76
    %v288 = vunpack.c.h.b16 %v76
    %v289 = vunpack.c.l.b16 %v77
    %v290 = vunpack.c.h.b16 %v77
    %v291 = vunpack.c.l.b16 %v78
    %v292 = vunpack.c.h.b16 %v78
    %v293 = vunpack.c.l.b16 %v79
    %v294 = vunpack.c.h.b16 %v79
    %v295 = vunpack.c.l.b16 %v80
    %v296 = vunpack.c.h.b16 %v80
    %v297 = vunpack.c.l.b16 %v81
    %v298 = vunpack.c.h.b16 %v81
    %v299 = vunpack.c.l.b16 %v82
    %v300 = vunpack.c.h.b16 %v82
    %v301 = vunpack.c.l.b16 %v83
    %v302 = vunpack.c.h.b16 %v83
    %v303 = vunpack.c.l.b16 %v84
    %v304 = vunpack.c.h.b16 %v84
    %v305 = vunpack.c.l.b16 %v85
    %v306 = vunpack.c.h.b16 %v85
    %v307 = vunpack.c.l.b16 %v86
    %v308 = vunpack.c.h.b16 %v86
    %v309 = vunpack.c.l.b16 %v87
    %v310 = vunpack.c.h.b16 %v87
    %v311 = vunpack.c.l.b16 %v88
    %v312 = vunpack.c.h.b16 %v88
    %v313 = vunpack.c.l.b16 %v89
    %v314 = vunpack.c.h.b16 %v89
    %v315 = vunpack.c.l.b16 %v90
    %v316 = vunpack.c.h.b16 %v90
    %v317 = vunpack.c.l.b16 %v91
    %v318 = vunpack.c.h.b16 %v91
    %v319 = vunpack.c.l.b16 %v92
    %v320 = vunpack.c.h.b16 %v92
    %v321 = vunpack.c.l.b16 %v93
    %v322 = vunpack.c.h.b16 %v93
    %v323 = vunpack.c.l.b16 %v94
    %v324 = vunpack.c.h.b16 %v94
    %v325 = vunpack.c.l.b16 %v95
    %v326 = vunpack.c.h.b16 %v95
    %v327 = vunpack.c.l.b16 %v96
    %v328 = vunpack.c.h.b16 %v96
    %v329 = vunpack.c.l.b16 %v97
    %v330 = vunpack.c.h.b16 %v97
    %v331 = vunpack.c.l.b16 %v98
    %v332 = vunpack.c.h.b16 %v98
    %v333 = vunpack.c.l.b16 %v99
    %v334 = vunpack.c.h.b16 %v99
    %v335 = vunpack.c.l.b16 %v100
    %v336 = vunpack.c.h.b16 %v100
    %v337 = vunpack.c.l.b16 %v101
    %v338 = vunpack.c.h.b16 %v101
    %v339 = vunpack.c.l.b16 %v102
    %v340 = vunpack.c.h.b16 %v102
    %v341 = vunpack.c.l.b16 %v103
    %v342 = vunpack.c.h.b16 %v103
    %v343 = vunpack.c.l.b16 %v104
    %v344 = vunpack.c.h.b16 %v104
    %v345 = vunpack.c.l.b16 %v105
    %v346 = vunpack.c.h.b16 %v105
    %v347 = vunpack.c.l.b16 %v106
    %v348 = vunpack.c.h.b16 %v106
    %v349 = vunpack.c.l.b16 %v107
    %v350 = vunpack.c.h.b16 %v107
    %v351 = vunpack.c.l.b16 %v108
    %v352 = vunpack.c.h.b16 %v108
    %v353 = vunpack.c.l.b16 %v109
    %v354 = vunpack.c.h.b16 %v109
    %v355 = vunpack.c.l.b16 %v110
    %v356 = vunpack.c.h.b16 %v110
    %v357 = vunpack.c.l.b16 %v111
    %v358 = vunpack.c.h.b16 %v111
    %v359 = vunpack.c.l.b16 %v112
    %v360 = vunpack.c.h.b16 %v112
    %v361 = vunpack.c.l.b16 %v113
    %v362 = vunpack.c.h.b16 %v113
    %v363 = vunpack.c.l.b16 %v114
    %v364 = vunpack.c.h.b16 %v114
    %v365 = vunpack.c.l.b16 %v115
    %v366 = vunpack.c.h.b16 %v115
    %v367 = vunpack.c.l.b16 %v116
    %v368 = vunpack.c.h.b16 %v116
    %v369 = vunpack.c.l.b16 %v117
    %v370 = vunpack.c.h.b16 %v117
    %v371 = vunpack.c.l.b16 %v118
    %v372 = vunpack.c.h.b16 %v118
    %v373 = vunpack.c.l.b16 %v119
    %v374 = vunpack.c.h.b16 %v119
    %v375 = vunpack.c.l.b16 %v120
    %v376 = vunpack.c.h.b16 %v120
    %v377 = vpack.c.b16 %v251, %v249
    %v378 = vpack.c.b16 %v252, %v250
    %v379 = vpack.c.b16 %v255, %v253
    %v380 = vpack.c.b16 %v256, %v254
    %v381 = vpack.c.b16 %v259, %v257
    %v382 = vpack.c.b16 %v260, %v258
    %v383 = vpack.c.b16 %v263, %v261
    %v384 = vpack.c.b16 %v264, %v262
    %v385 = vpack.c.b16 %v267, %v265
    %v386 = vpack.c.b16 %v268, %v266
    %v387 = vpack.c.b16 %v271, %v269
    %v388 = vpack.c.b16 %v272, %v270
    %v389 = vpack.c.b16 %v275, %v273
    %v390 = vpack.c.b16 %v276, %v274
    %v391 = vpack.c.b16 %v279, %v277
    %v392 = vpack.c.b16 %v280, %v278
    %v393 = vpack.c.b16 %v283, %v281
    %v394 = vpack.c.b16 %v284, %v282
    %v395 = vpack.c.b16 %v287, %v285
    %v396 = vpack.c.b16 %v288, %v286
    %v397 = vpack.c.b16 %v291, %v289
    %v398 = vpack.c.b16 %v292, %v290
    %v399 = vpack.c.b16 %v295, %v293
    %v400 = vpack.c.b16 %v296, %v294
    %v401 = vpack.c.b16 %v299, %v297
    %v402 = vpack.c.b16 %v300, %v298
    %v403 = vpack.c.b16 %v303, %v301
    %v404 = vpack.c.b16 %v304, %v302
    %v405 = vpack.c.b16 %v307, %v305
    %v406 = vpack.c.b16 %v308, %v306
    %v407 = vpack.c.b16 %v311, %v309
    %v408 = vpack.c.b16 %v312, %v310
    %v409 = vpack.c.b16 %v315, %v313
    %v410 = vpack.c.b16 %v316, %v314
    %v411 = vpack.c.b16 %v319, %v317
    %v412 = vpack.c.b16 %v320, %v318
    %v413 = vpack.c.b16 %v323, %v321
    %v414 = vpack.c.b16 %v324, %v322
    %v415 = vpack.c.b16 %v327, %v325
    %v416 = vpack.c.b16 %v328, %v326
    %v417 = vpack.c.b16 %v331, %v329
    %v418 = vpack.c.b16 %v332, %v330
    %v419 = vpack.c.b16 %v335, %v333
    %v420 = vpack.c.b16 %v336, %v334
    %v421 = vpack.c.b16 %v339, %v337
    %v422 = vpack.c.b16 %v340, %v338
    %v423 = vpack.c.b16 %v343, %v341
    %v424 = vpack.c.b16 %v344, %v342
    %v425 = vpack.c.b16 %v347, %v345
    %v426 = vpack.c.b16 %v348, %v346
    %v427 = vpack.c.b16 %v351, %v349
    %v428 = vpack.c.b16 %v352, %v350
    %v429 = vpack.c.b16 %v355, %v353
    %v430 = vpack.c.b16 %v356, %v354
    %v431 = vpack.c.b16 %v359, %v357
    %v432 = vpack.c.b16 %v360, %v358
    %v433 = vpack.c.b16 %v363, %v361
    %v434 = vpack.c.b16 %v364, %v362
    %v435 = vpack.c.b16 %v367, %v365
    %v436 = vpack.c.b16 %v368, %v366
    %v437 = vpack.c.b16 %v371, %v369
    %v438 = vpack.c.b16 %v372, %v370
    %v439 = vpack.c.b16 %v375, %v373
    %v440 = vpack.c.b16 %v376, %v374
    %v569 = vunpack.c.l.b16 %v121
    %v570 = vunpack.c.h.b16 %v121
    %v571 = vunpack.c.l.b16 %v122
    %v572 = vunpack.c.h.b16 %v122
    %v573 = vunpack.c.l.b16 %v123
    %v574 = vunpack.c.h.b16 %v123
    %v575 = vunpack.c.l.b16 %v124
    %v576 = vunpack.c.h.b16 %v124
    %v577 = vunpack.c.l.b16 %v125
    %v578 = vunpack.c.h.b16 %v125
    %v579 = vunpack.c.l.b16 %v126
    %v580 = vunpack.c.h.b16 %v126
    %v581 = vunpack.c.l.b16 %v127
    %v582 = vunpack.c.h.b16 %v127
    %v583 = vunpack.c.l.b16 %v128
    %v584 = vunpack.c.h.b16 %v128
    %v585 = vunpack.c.l.b16 %v129
    %v586 = vunpack.c.h.b16 %v129
    %v587 = vunpack.c.l.b16 %v130
    %v588 = vunpack.c.h.b16 %v130
    %v589 = vunpack.c.l.b16 %v131
    %v590 = vunpack.c.h.b16 %v131
    %v591 = vunpack.c.l.b16 %v132
    %v592 = vunpack.c.h.b16 %v132
    %v593 = vunpack.c.l.b16 %v133
    %v594 = vunpack.c.h.b16 %v133
    %v595 = vunpack.c.l.b16 %v134
    %v596 = vunpack.c.h.b16 %v134
    %v597 = vunpack.c.l.b16 %v135
    %v598 = vunpack.c.h.b16 %v135
    %v599 = vunpack.c.l.b16 %v136
    %v600 = vunpack.c.h.b16 %v136
    %v601 = vunpack.c.l.b16 %v137
    %v602 = vunpack.c.h.b16 %v137
    %v603 = vunpack.c.l.b16 %v138
    %v604 = vunpack.c.h.b16 %v138
    %v605 = vunpack.c.l.b16 %v139
    %v606 = vunpack.c.h.b16 %v139
    %v607 = vunpack.c.l.b16 %v140
    %v608 = vunpack.c.h.b16 %v140
    %v609 = vunpack.c.l.b16 %v141
    %v610 = vunpack.c.h.b16 %v141
    %v611 = vunpack.c.l.b16 %v142
    %v612 = vunpack.c.h.b16 %v142
    %v613 = vunpack.c.l.b16 %v143
    %v614 = vunpack.c.h.b16 %v143
    %v615 = vunpack.c.l.b16 %v144
    %v616 = vunpack.c.h.b16 %v144
    %v617 = vunpack.c.l.b16 %v145
    %v618 = vunpack.c.h.b16 %v145
    %v619 = vunpack.c.l.b16 %v146
    %v620 = vunpack.c.h.b16 %v146
    %v621 = vunpack.c.l.b16 %v147
    %v622 = vunpack.c.h.b16 %v147
    %v623 = vunpack.c.l.b16 %v148
    %v624 = vunpack.c.h.b16 %v148
    %v625 = vunpack.c.l.b16 %v149
    %v626 = vunpack.c.h.b16 %v149
    %v627 = vunpack.c.l.b16 %v150
    %v628 = vunpack.c.h.b16 %v150
    %v629 = vunpack.c.l.b16 %v151
    %v630 = vunpack.c.h.b16 %v151
    %v631 = vunpack.c.l.b16 %v152
    %v632 = vunpack.c.h.b16 %v152
    %v633 = vunpack.c.l.b16 %v153
    %v634 = vunpack.c.h.b16 %v153
    %v635 = vunpack.c.l.b16 %v154
    %v636 = vunpack.c.h.b16 %v154
    %v637 = vunpack.c.l.b16 %v155
    %v638 = vunpack.c.h.b16 %v155
    %v639 = vunpack.c.l.b16 %v156
    %v640 = vunpack.c.h.b16 %v156
    %v641 = vunpack.c.l.b16 %v157
    %v642 = vunpack.c.h.b16 %v157
    %v643 = vunpack.c.l.b16 %v158
    %v644 = vunpack.c.h.b16 %v158
    %v645 = vunpack.c.l.b16 %v159
    %v646 = vunpack.c.h.b16 %v159
    %v647 = vunpack.c.l.b16 %v160
    %v648 = vunpack.c.h.b16 %v160
    %v649 = vunpack.c.l.b16 %v161
    %v650 = vunpack.c.h.b16 %v161
    %v651 = vunpack.c.l.b16 %v162
    %v652 = vunpack.c.h.b16 %v162
    %v653 = vunpack.c.l.b16 %v163
    %v654 = vunpack.c.h.b16 %v163
    %v655 = vunpack.c.l.b16 %v164
    %v656 = vunpack.c.h.b16 %v164
    %v657 = vunpack.c.l.b16 %v165
    %v658 = vunpack.c.h.b16 %v165
    %v659 = vunpack.c.l.b16 %v166
    %v660 = vunpack.c.h.b16 %v166
    %v661 = vunpack.c.l.b16 %v167
    %v662 = vunpack.c.h.b16 %v167
    %v663 = vunpack.c.l.b16 %v168
    %v664 = vunpack.c.h.b16 %v168
    %v665 = vunpack.c.l.b16 %v169
    %v666 = vunpack.c.h.b16 %v169
    %v667 = vunpack.c.l.b16 %v170
    %v668 = vunpack.c.h.b16 %v170
    %v669 = vunpack.c.l.b16 %v171
    %v670 = vunpack.c.h.b16 %v171
    %v671 = vunpack.c.l.b16 %v172
    %v672 = vunpack.c.h.b16 %v172
    %v673 = vunpack.c.l.b16 %v173
    %v674 = vunpack.c.h.b16 %v173
    %v675 = vunpack.c.l.b16 %v174
    %v676 = vunpack.c.h.b16 %v174
    %v677 = vunpack.c.l.b16 %v175
    %v678 = vunpack.c.h.b16 %v175
    %v679 = vunpack.c.l.b16 %v176
    %v680 = vunpack.c.h.b16 %v176
    %v681 = vunpack.c.l.b16 %v177
    %v682 = vunpack.c.h.b16 %v177
    %v683 = vunpack.c.l.b16 %v178
    %v684 = vunpack.c.h.b16 %v178
    %v685 = vunpack.c.l.b16 %v179
    %v686 = vunpack.c.h.b16 %v179
    %v687 = vunpack.c.l.b16 %v180
    %v688 = vunpack.c.h.b16 %v180
    %v689 = vunpack.c.l.b16 %v181
    %v690 = vunpack.c.h.b16 %v181
    %v691 = vunpack.c.l.b16 %v182
    %v692 = vunpack.c.h.b16 %v182
    %v693 = vunpack.c.l.b16 %v183
    %v694 = vunpack.c.h.b16 %v183
    %v695 = vunpack.c.l.b16 %v184
    %v696 = vunpack.c.h.b16 %v184
    %v697 = vpack.c.b16 %v573, %v569
    %v698 = vpack.c.b16 %v574, %v570
    %v699 = vpack.c.b16 %v575, %v571
    %v700 = vpack.c.b16 %v576, %v572
    %v701 = vpack.c.b16 %v581, %v577
    %v702 = vpack.c.b16 %v582, %v578
    %v703 = vpack.c.b16 %v583, %v579
    %v704 = vpack.c.b16 %v584, %v580
    %v705 = vpack.c.b16 %v589, %v585
    %v706 = vpack.c.b16 %v590, %v586
    %v707 = vpack.c.b16 %v591, %v587
    %v708 = vpack.c.b16 %v592, %v588
    %v709 = vpack.c.b16 %v597, %v593
    %v710 = vpack.c.b16 %v598, %v594
    %v711 = vpack.c.b16 %v599, %v595
    %v712 = vpack.c.b16 %v600, %v596
    %v713 = vpack.c.b16 %v605, %v601
    %v714 = vpack.c.b16 %v606, %v602
    %v715 = vpack.c.b16 %v607, %v603
    %v716 = vpack.c.b16 %v608, %v604
    %v717 = vpack.c.b16 %v613, %v609
    %v718 = vpack.c.b16 %v614, %v610
    %v719 = vpack.c.b16 %v615, %v611
    %v720 = vpack.c.b16 %v616, %v612
    %v721 = vpack.c.b16 %v621, %v617
    %v722 = vpack.c.b16 %v622, %v618
    %v723 = vpack.c.b16 %v623, %v619
    %v724 = vpack.c.b16 %v624, %v620
    %v725 = vpack.c.b16 %v629, %v625
    %v726 = vpack.c.b16 %v630, %v626
    %v727 = vpack.c.b16 %v631, %v627
    %v728 = vpack.c.b16 %v632, %v628
    %v729 = vpack.c.b16 %v637, %v633
    %v730 = vpack.c.b16 %v638, %v634
    %v731 = vpack.c.b16 %v639, %v635
    %v732 = vpack.c.b16 %v640, %v636
    %v733 = vpack.c.b16 %v645, %v641
    %v734 = vpack.c.b16 %v646, %v642
    %v735 = vpack.c.b16 %v647, %v643
    %v736 = vpack.c.b16 %v648, %v644
    %v737 = vpack.c.b16 %v653, %v649
    %v738 = vpack.c.b16 %v654, %v650
    %v739 = vpack.c.b16 %v655, %v651
    %v740 = vpack.c.b16 %v656, %v652
    %v741 = vpack.c.b16 %v661, %v657
    %v742 = vpack.c.b16 %v662, %v658
    %v743 = vpack.c.b16 %v663, %v659
    %v744 = vpack.c.b16 %v664, %v660
    %v745 = vpack.c.b16 %v669, %v665
    %v746 = vpack.c.b16 %v670, %v666
    %v747 = vpack.c.b16 %v671, %v667
    %v748 = vpack.c.b16 %v672, %v668
    %v749 = vpack.c.b16 %v677, %v673
    %v750 = vpack.c.b16 %v678, %v674
    %v751 = vpack.c.b16 %v679, %v675
    %v752 = vpack.c.b16 %v680, %v676
    %v753 = vpack.c.b16 %v685, %v681
    %v754 = vpack.c.b16 %v686, %v682
    %v755 = vpack.c.b16 %v687, %v683
    %v756 = vpack.c.b16 %v688, %v684
    %v757 = vpack.c.b16 %v693, %v689
    %v758 = vpack.c.b16 %v694, %v690
    %v759 = vpack.c.b16 %v695, %v691
    %v760 = vpack.c.b16 %v696, %v692
    %825 = vmatprep.subr.bf16.mxu0 %v726
    %826 = vmatpush1.bf16.msra.mxu0 %v725
    %827 = vmatprep.subr.bf16.mxu0 %v722
    %828 = vmatpush1.bf16.msra.mxu0 %v721
    %829 = vmatprep.subr.bf16.mxu0 %v718
    %830 = vmatpush1.bf16.msra.mxu0 %v717
    %831 = vmatprep.subr.bf16.mxu0 %v714
    %832 = vmatpush1.bf16.msra.mxu0 %v713
    %833 = vmatprep.subr.bf16.mxu0 %v710
    %834 = vmatpush1.bf16.msra.mxu0 %v709
    %835 = vmatprep.subr.bf16.mxu0 %v706
    %836 = vmatpush1.bf16.msra.mxu0 %v705
    %837 = vmatprep.subr.bf16.mxu0 %v702
    %838 = vmatpush1.bf16.msra.mxu0 %v701
    %839 = vmatprep.subr.bf16.mxu0 %v698
    %840 = vmatpush1.bf16.msra.mxu0 %v697
    %841 = vmatprep.subr.bf16.mxu0 %v758
    %842 = vmatpush2.bf16.msra.mxu0 %v757
    %843 = vmatprep.subr.bf16.mxu0 %v754
    %844 = vmatpush2.bf16.msra.mxu0 %v753
    %845 = vmatprep.subr.bf16.mxu0 %v750
    %846 = vmatpush2.bf16.msra.mxu0 %v749
    %847 = vmatprep.subr.bf16.mxu0 %v746
    %848 = vmatpush2.bf16.msra.mxu0 %v745
    %849 = vmatprep.subr.bf16.mxu0 %v742
    %850 = vmatpush2.bf16.msra.mxu0 %v741
    %851 = vmatprep.subr.bf16.mxu0 %v738
    %852 = vmatpush2.bf16.msra.mxu0 %v737
    %853 = vmatprep.subr.bf16.mxu0 %v734
    %854 = vmatpush2.bf16.msra.mxu0 %v733
    %855 = vmatprep.subr.bf16.mxu0 %v730
    %856 = vmatpush2.bf16.msra.mxu0 %v729
    %857 = vmatprep.mubr.bf16.mxu0 %v378
    %858 = vmatmul.mubr.bf16.gmra.mxu0 %v377
    %v859 = vpop.f32.mrf.mxu0
    %v860 = vadd.f32 0.0, %v859
    %v861 = vpop.f32.mrf.mxu0
    %v862 = vadd.f32 0.0, %v861
    %v863 = vpop.f32.mrf.mxu0
    %v864 = vadd.f32 0.0, %v863
    %v865 = vpop.f32.mrf.mxu0
    %v866 = vadd.f32 0.0, %v865
    %867 = vmatprep.mubr.bf16.mxu0 %v380
    %868 = vmatmul.mubr.bf16.gmra.mxu0 %v379
    %v869 = vpop.f32.mrf.mxu0
    %v870 = vadd.f32 0.0, %v869
    %v871 = vpop.f32.mrf.mxu0
    %v872 = vadd.f32 0.0, %v871
    %v873 = vpop.f32.mrf.mxu0
    %v874 = vadd.f32 0.0, %v873
    %v875 = vpop.f32.mrf.mxu0
    %v876 = vadd.f32 0.0, %v875
    %877 = vmatprep.mubr.bf16.mxu0 %v382
    %878 = vmatmul.mubr.bf16.gmra.mxu0 %v381
    %v879 = vpop.f32.mrf.mxu0
    %v880 = vadd.f32 0.0, %v879
    %v881 = vpop.f32.mrf.mxu0
    %v882 = vadd.f32 0.0, %v881
    %v883 = vpop.f32.mrf.mxu0
    %v884 = vadd.f32 0.0, %v883
    %v885 = vpop.f32.mrf.mxu0
    %v886 = vadd.f32 0.0, %v885
    %887 = vmatprep.mubr.bf16.mxu0 %v384
    %888 = vmatmul.mubr.bf16.gmra.mxu0 %v383
    %v889 = vpop.f32.mrf.mxu0
    %v890 = vadd.f32 0.0, %v889
    %v891 = vpop.f32.mrf.mxu0
    %v892 = vadd.f32 0.0, %v891
    %v893 = vpop.f32.mrf.mxu0
    %v894 = vadd.f32 0.0, %v893
    %v895 = vpop.f32.mrf.mxu0
    %v896 = vadd.f32 0.0, %v895
    %897 = vmatprep.mubr.bf16.mxu0 %v386
    %898 = vmatmul.mubr.bf16.gmra.mxu0 %v385
    %v899 = vpop.f32.mrf.mxu0
    %v900 = vadd.f32 0.0, %v899
    %v901 = vpop.f32.mrf.mxu0
    %v902 = vadd.f32 0.0, %v901
    %v903 = vpop.f32.mrf.mxu0
    %v904 = vadd.f32 0.0, %v903
    %v905 = vpop.f32.mrf.mxu0
    %v906 = vadd.f32 0.0, %v905
    %907 = vmatprep.mubr.bf16.mxu0 %v388
    %908 = vmatmul.mubr.bf16.gmra.mxu0 %v387
    %v909 = vpop.f32.mrf.mxu0
    %v910 = vadd.f32 0.0, %v909
    %v911 = vpop.f32.mrf.mxu0
    %v912 = vadd.f32 0.0, %v911
    %v913 = vpop.f32.mrf.mxu0
    %v914 = vadd.f32 0.0, %v913
    %v915 = vpop.f32.mrf.mxu0
    %v916 = vadd.f32 0.0, %v915
    %917 = vmatprep.mubr.bf16.mxu0 %v390
    %918 = vmatmul.mubr.bf16.gmra.mxu0 %v389
    %v919 = vpop.f32.mrf.mxu0
    %v920 = vadd.f32 0.0, %v919
    %v921 = vpop.f32.mrf.mxu0
    %v922 = vadd.f32 0.0, %v921
    %v923 = vpop.f32.mrf.mxu0
    %v924 = vadd.f32 0.0, %v923
    %v925 = vpop.f32.mrf.mxu0
    %v926 = vadd.f32 0.0, %v925
    %927 = vmatprep.mubr.bf16.mxu0 %v392
    %928 = vmatmul.mubr.bf16.gmra.mxu0 %v391
    %v929 = vpop.f32.mrf.mxu0
    %v930 = vadd.f32 0.0, %v929
    %v931 = vpop.f32.mrf.mxu0
    %v932 = vadd.f32 0.0, %v931
    %v933 = vpop.f32.mrf.mxu0
    %v934 = vadd.f32 0.0, %v933
    %v935 = vpop.f32.mrf.mxu0
    %v936 = vadd.f32 0.0, %v935
    %937 = vmatprep.mubr.bf16.mxu0 %v394
    %938 = vmatmul.mubr.bf16.gmra.mxu0 %v393
    %v939 = vpop.f32.mrf.mxu0
    %v940 = vadd.f32 0.0, %v939
    %v941 = vpop.f32.mrf.mxu0
    %v942 = vadd.f32 0.0, %v941
    %v943 = vpop.f32.mrf.mxu0
    %v944 = vadd.f32 0.0, %v943
    %v945 = vpop.f32.mrf.mxu0
    %v946 = vadd.f32 0.0, %v945
    %947 = vmatprep.mubr.bf16.mxu0 %v396
    %948 = vmatmul.mubr.bf16.gmra.mxu0 %v395
    %v949 = vpop.f32.mrf.mxu0
    %v950 = vadd.f32 0.0, %v949
    %v951 = vpop.f32.mrf.mxu0
    %v952 = vadd.f32 0.0, %v951
    %v953 = vpop.f32.mrf.mxu0
    %v954 = vadd.f32 0.0, %v953
    %v955 = vpop.f32.mrf.mxu0
    %v956 = vadd.f32 0.0, %v955
    %957 = vmatprep.mubr.bf16.mxu0 %v398
    %958 = vmatmul.mubr.bf16.gmra.mxu0 %v397
    %v959 = vpop.f32.mrf.mxu0
    %v960 = vadd.f32 0.0, %v959
    %v961 = vpop.f32.mrf.mxu0
    %v962 = vadd.f32 0.0, %v961
    %v963 = vpop.f32.mrf.mxu0
    %v964 = vadd.f32 0.0, %v963
    %v965 = vpop.f32.mrf.mxu0
    %v966 = vadd.f32 0.0, %v965
    %967 = vmatprep.mubr.bf16.mxu0 %v400
    %968 = vmatmul.mubr.bf16.gmra.mxu0 %v399
    %v969 = vpop.f32.mrf.mxu0
    %v970 = vadd.f32 0.0, %v969
    %v971 = vpop.f32.mrf.mxu0
    %v972 = vadd.f32 0.0, %v971
    %v973 = vpop.f32.mrf.mxu0
    %v974 = vadd.f32 0.0, %v973
    %v975 = vpop.f32.mrf.mxu0
    %v976 = vadd.f32 0.0, %v975
    %977 = vmatprep.mubr.bf16.mxu0 %v402
    %978 = vmatmul.mubr.bf16.gmra.mxu0 %v401
    %v979 = vpop.f32.mrf.mxu0
    %v980 = vadd.f32 0.0, %v979
    %v981 = vpop.f32.mrf.mxu0
    %v982 = vadd.f32 0.0, %v981
    %v983 = vpop.f32.mrf.mxu0
    %v984 = vadd.f32 0.0, %v983
    %v985 = vpop.f32.mrf.mxu0
    %v986 = vadd.f32 0.0, %v985
    %987 = vmatprep.mubr.bf16.mxu0 %v404
    %988 = vmatmul.mubr.bf16.gmra.mxu0 %v403
    %v989 = vpop.f32.mrf.mxu0
    %v990 = vadd.f32 0.0, %v989
    %v991 = vpop.f32.mrf.mxu0
    %v992 = vadd.f32 0.0, %v991
    %v993 = vpop.f32.mrf.mxu0
    %v994 = vadd.f32 0.0, %v993
    %v995 = vpop.f32.mrf.mxu0
    %v996 = vadd.f32 0.0, %v995
    %997 = vmatprep.mubr.bf16.mxu0 %v406
    %998 = vmatmul.mubr.bf16.gmra.mxu0 %v405
    %v999 = vpop.f32.mrf.mxu0
    %v1000 = vadd.f32 0.0, %v999
    %v1001 = vpop.f32.mrf.mxu0
    %v1002 = vadd.f32 0.0, %v1001
    %v1003 = vpop.f32.mrf.mxu0
    %v1004 = vadd.f32 0.0, %v1003
    %v1005 = vpop.f32.mrf.mxu0
    %v1006 = vadd.f32 0.0, %v1005
    %1007 = vmatprep.mubr.bf16.mxu0 %v408
    %1008 = vmatmul.mubr.bf16.gmra.mxu0 %v407
    %v1009 = vpop.f32.mrf.mxu0
    %v1010 = vadd.f32 0.0, %v1009
    %v1011 = vpop.f32.mrf.mxu0
    %v1012 = vadd.f32 0.0, %v1011
    %v1013 = vpop.f32.mrf.mxu0
    %v1014 = vadd.f32 0.0, %v1013
    %v1015 = vpop.f32.mrf.mxu0
    %v1016 = vadd.f32 0.0, %v1015
    %1017 = vmatprep.mubr.bf16.mxu0 %v410
    %1018 = vmatmul.mubr.bf16.gmra.mxu0 %v409
    %v1019 = vpop.f32.mrf.mxu0
    %v1020 = vadd.f32 0.0, %v1019
    %v1021 = vpop.f32.mrf.mxu0
    %v1022 = vadd.f32 0.0, %v1021
    %v1023 = vpop.f32.mrf.mxu0
    %v1024 = vadd.f32 0.0, %v1023
    %v1025 = vpop.f32.mrf.mxu0
    %v1026 = vadd.f32 0.0, %v1025
    %1027 = vmatprep.mubr.bf16.mxu0 %v412
    %1028 = vmatmul.mubr.bf16.gmra.mxu0 %v411
    %v1029 = vpop.f32.mrf.mxu0
    %v1030 = vadd.f32 0.0, %v1029
    %v1031 = vpop.f32.mrf.mxu0
    %v1032 = vadd.f32 0.0, %v1031
    %v1033 = vpop.f32.mrf.mxu0
    %v1034 = vadd.f32 0.0, %v1033
    %v1035 = vpop.f32.mrf.mxu0
    %v1036 = vadd.f32 0.0, %v1035
    %1037 = vmatprep.mubr.bf16.mxu0 %v414
    %1038 = vmatmul.mubr.bf16.gmra.mxu0 %v413
    %v1039 = vpop.f32.mrf.mxu0
    %v1040 = vadd.f32 0.0, %v1039
    %v1041 = vpop.f32.mrf.mxu0
    %v1042 = vadd.f32 0.0, %v1041
    %v1043 = vpop.f32.mrf.mxu0
    %v1044 = vadd.f32 0.0, %v1043
    %v1045 = vpop.f32.mrf.mxu0
    %v1046 = vadd.f32 0.0, %v1045
    %1047 = vmatprep.mubr.bf16.mxu0 %v416
    %1048 = vmatmul.mubr.bf16.gmra.mxu0 %v415
    %v1049 = vpop.f32.mrf.mxu0
    %v1050 = vadd.f32 0.0, %v1049
    %v1051 = vpop.f32.mrf.mxu0
    %v1052 = vadd.f32 0.0, %v1051
    %v1053 = vpop.f32.mrf.mxu0
    %v1054 = vadd.f32 0.0, %v1053
    %v1055 = vpop.f32.mrf.mxu0
    %v1056 = vadd.f32 0.0, %v1055
    %1057 = vmatprep.mubr.bf16.mxu0 %v418
    %1058 = vmatmul.mubr.bf16.gmra.mxu0 %v417
    %v1059 = vpop.f32.mrf.mxu0
    %v1060 = vadd.f32 0.0, %v1059
    %v1061 = vpop.f32.mrf.mxu0
    %v1062 = vadd.f32 0.0, %v1061
    %v1063 = vpop.f32.mrf.mxu0
    %v1064 = vadd.f32 0.0, %v1063
    %v1065 = vpop.f32.mrf.mxu0
    %v1066 = vadd.f32 0.0, %v1065
    %1067 = vmatprep.mubr.bf16.mxu0 %v420
    %1068 = vmatmul.mubr.bf16.gmra.mxu0 %v419
    %v1069 = vpop.f32.mrf.mxu0
    %v1070 = vadd.f32 0.0, %v1069
    %v1071 = vpop.f32.mrf.mxu0
    %v1072 = vadd.f32 0.0, %v1071
    %v1073 = vpop.f32.mrf.mxu0
    %v1074 = vadd.f32 0.0, %v1073
    %v1075 = vpop.f32.mrf.mxu0
    %v1076 = vadd.f32 0.0, %v1075
    %1077 = vmatprep.mubr.bf16.mxu0 %v422
    %1078 = vmatmul.mubr.bf16.gmra.mxu0 %v421
    %v1079 = vpop.f32.mrf.mxu0
    %v1080 = vadd.f32 0.0, %v1079
    %v1081 = vpop.f32.mrf.mxu0
    %v1082 = vadd.f32 0.0, %v1081
    %v1083 = vpop.f32.mrf.mxu0
    %v1084 = vadd.f32 0.0, %v1083
    %v1085 = vpop.f32.mrf.mxu0
    %v1086 = vadd.f32 0.0, %v1085
    %1087 = vmatprep.mubr.bf16.mxu0 %v424
    %1088 = vmatmul.mubr.bf16.gmra.mxu0 %v423
    %v1089 = vpop.f32.mrf.mxu0
    %v1090 = vadd.f32 0.0, %v1089
    %v1091 = vpop.f32.mrf.mxu0
    %v1092 = vadd.f32 0.0, %v1091
    %v1093 = vpop.f32.mrf.mxu0
    %v1094 = vadd.f32 0.0, %v1093
    %v1095 = vpop.f32.mrf.mxu0
    %v1096 = vadd.f32 0.0, %v1095
    %1097 = vmatprep.mubr.bf16.mxu0 %v426
    %1098 = vmatmul.mubr.bf16.gmra.mxu0 %v425
    %v1099 = vpop.f32.mrf.mxu0
    %v1100 = vadd.f32 0.0, %v1099
    %v1101 = vpop.f32.mrf.mxu0
    %v1102 = vadd.f32 0.0, %v1101
    %v1103 = vpop.f32.mrf.mxu0
    %v1104 = vadd.f32 0.0, %v1103
    %v1105 = vpop.f32.mrf.mxu0
    %v1106 = vadd.f32 0.0, %v1105
    %1107 = vmatprep.mubr.bf16.mxu0 %v428
    %1108 = vmatmul.mubr.bf16.gmra.mxu0 %v427
    %v1109 = vpop.f32.mrf.mxu0
    %v1110 = vadd.f32 0.0, %v1109
    %v1111 = vpop.f32.mrf.mxu0
    %v1112 = vadd.f32 0.0, %v1111
    %v1113 = vpop.f32.mrf.mxu0
    %v1114 = vadd.f32 0.0, %v1113
    %v1115 = vpop.f32.mrf.mxu0
    %v1116 = vadd.f32 0.0, %v1115
    %1117 = vmatprep.mubr.bf16.mxu0 %v430
    %1118 = vmatmul.mubr.bf16.gmra.mxu0 %v429
    %v1119 = vpop.f32.mrf.mxu0
    %v1120 = vadd.f32 0.0, %v1119
    %v1121 = vpop.f32.mrf.mxu0
    %v1122 = vadd.f32 0.0, %v1121
    %v1123 = vpop.f32.mrf.mxu0
    %v1124 = vadd.f32 0.0, %v1123
    %v1125 = vpop.f32.mrf.mxu0
    %v1126 = vadd.f32 0.0, %v1125
    %1127 = vmatprep.mubr.bf16.mxu0 %v432
    %1128 = vmatmul.mubr.bf16.gmra.mxu0 %v431
    %v1129 = vpop.f32.mrf.mxu0
    %v1130 = vadd.f32 0.0, %v1129
    %v1131 = vpop.f32.mrf.mxu0
    %v1132 = vadd.f32 0.0, %v1131
    %v1133 = vpop.f32.mrf.mxu0
    %v1134 = vadd.f32 0.0, %v1133
    %v1135 = vpop.f32.mrf.mxu0
    %v1136 = vadd.f32 0.0, %v1135
    %1137 = vmatprep.mubr.bf16.mxu0 %v434
    %1138 = vmatmul.mubr.bf16.gmra.mxu0 %v433
    %v1139 = vpop.f32.mrf.mxu0
    %v1140 = vadd.f32 0.0, %v1139
    %v1141 = vpop.f32.mrf.mxu0
    %v1142 = vadd.f32 0.0, %v1141
    %v1143 = vpop.f32.mrf.mxu0
    %v1144 = vadd.f32 0.0, %v1143
    %v1145 = vpop.f32.mrf.mxu0
    %v1146 = vadd.f32 0.0, %v1145
    %1147 = vmatprep.mubr.bf16.mxu0 %v436
    %1148 = vmatmul.mubr.bf16.gmra.mxu0 %v435
    %v1149 = vpop.f32.mrf.mxu0
    %v1150 = vadd.f32 0.0, %v1149
    %v1151 = vpop.f32.mrf.mxu0
    %v1152 = vadd.f32 0.0, %v1151
    %v1153 = vpop.f32.mrf.mxu0
    %v1154 = vadd.f32 0.0, %v1153
    %v1155 = vpop.f32.mrf.mxu0
    %v1156 = vadd.f32 0.0, %v1155
    %1157 = vmatprep.mubr.bf16.mxu0 %v438
    %1158 = vmatmul.mubr.bf16.gmra.mxu0 %v437
    %v1159 = vpop.f32.mrf.mxu0
    %v1160 = vadd.f32 0.0, %v1159
    %v1161 = vpop.f32.mrf.mxu0
    %v1162 = vadd.f32 0.0, %v1161
    %v1163 = vpop.f32.mrf.mxu0
    %v1164 = vadd.f32 0.0, %v1163
    %v1165 = vpop.f32.mrf.mxu0
    %v1166 = vadd.f32 0.0, %v1165
    %1167 = vmatprep.mubr.bf16.mxu0 %v440
    %1168 = vmatmul.mubr.bf16.gmra.mxu0 %v439
    %v1169 = vpop.f32.mrf.mxu0
    %v1170 = vadd.f32 0.0, %v1169
    %v1171 = vpop.f32.mrf.mxu0
    %v1172 = vadd.f32 0.0, %v1171
    %v1173 = vpop.f32.mrf.mxu0
    %v1174 = vadd.f32 0.0, %v1173
    %v1175 = vpop.f32.mrf.mxu0
    %v1176 = vadd.f32 0.0, %v1175
    %1177 = vdwg.mxu0
    %1178 = vmatprep.subr.bf16.mxu0 %v728
    %1179 = vmatpush1.bf16.msra.mxu0 %v727
    %1180 = vmatprep.subr.bf16.mxu0 %v724
    %1181 = vmatpush1.bf16.msra.mxu0 %v723
    %1182 = vmatprep.subr.bf16.mxu0 %v720
    %1183 = vmatpush1.bf16.msra.mxu0 %v719
    %1184 = vmatprep.subr.bf16.mxu0 %v716
    %1185 = vmatpush1.bf16.msra.mxu0 %v715
    %1186 = vmatprep.subr.bf16.mxu0 %v712
    %1187 = vmatpush1.bf16.msra.mxu0 %v711
    %1188 = vmatprep.subr.bf16.mxu0 %v708
    %1189 = vmatpush1.bf16.msra.mxu0 %v707
    %1190 = vmatprep.subr.bf16.mxu0 %v704
    %1191 = vmatpush1.bf16.msra.mxu0 %v703
    %1192 = vmatprep.subr.bf16.mxu0 %v700
    %1193 = vmatpush1.bf16.msra.mxu0 %v699
    %1194 = vmatprep.subr.bf16.mxu0 %v760
    %1195 = vmatpush2.bf16.msra.mxu0 %v759
    %1196 = vmatprep.subr.bf16.mxu0 %v756
    %1197 = vmatpush2.bf16.msra.mxu0 %v755
    %1198 = vmatprep.subr.bf16.mxu0 %v752
    %1199 = vmatpush2.bf16.msra.mxu0 %v751
    %1200 = vmatprep.subr.bf16.mxu0 %v748
    %1201 = vmatpush2.bf16.msra.mxu0 %v747
    %1202 = vmatprep.subr.bf16.mxu0 %v744
    %1203 = vmatpush2.bf16.msra.mxu0 %v743
    %1204 = vmatprep.subr.bf16.mxu0 %v740
    %1205 = vmatpush2.bf16.msra.mxu0 %v739
    %1206 = vmatprep.subr.bf16.mxu0 %v736
    %1207 = vmatpush2.bf16.msra.mxu0 %v735
    %1208 = vmatprep.subr.bf16.mxu0 %v732
    %1209 = vmatpush2.bf16.msra.mxu0 %v731
    %1210 = vmatprep.mubr.bf16.mxu0 %v378
    %1211 = vmatmul.mubr.bf16.gmra.mxu0 %v377
    %v1212 = vpop.f32.mrf.mxu0
    %v1213 = vadd.f32 0.0, %v1212
    %v1214 = vpop.f32.mrf.mxu0
    %v1215 = vadd.f32 0.0, %v1214
    %v1216 = vpop.f32.mrf.mxu0
    %v1217 = vadd.f32 0.0, %v1216
    %v1218 = vpop.f32.mrf.mxu0
    %v1219 = vadd.f32 0.0, %v1218
    %1220 = vmatprep.mubr.bf16.mxu0 %v380
    %1221 = vmatmul.mubr.bf16.gmra.mxu0 %v379
    %v1222 = vpop.f32.mrf.mxu0
    %v1223 = vadd.f32 0.0, %v1222
    %v1224 = vpop.f32.mrf.mxu0
    %v1225 = vadd.f32 0.0, %v1224
    %v1226 = vpop.f32.mrf.mxu0
    %v1227 = vadd.f32 0.0, %v1226
    %v1228 = vpop.f32.mrf.mxu0
    %v1229 = vadd.f32 0.0, %v1228
    %1230 = vmatprep.mubr.bf16.mxu0 %v382
    %1231 = vmatmul.mubr.bf16.gmra.mxu0 %v381
    %v1232 = vpop.f32.mrf.mxu0
    %v1233 = vadd.f32 0.0, %v1232
    %v1234 = vpop.f32.mrf.mxu0
    %v1235 = vadd.f32 0.0, %v1234
    %v1236 = vpop.f32.mrf.mxu0
    %v1237 = vadd.f32 0.0, %v1236
    %v1238 = vpop.f32.mrf.mxu0
    %v1239 = vadd.f32 0.0, %v1238
    %1240 = vmatprep.mubr.bf16.mxu0 %v384
    %1241 = vmatmul.mubr.bf16.gmra.mxu0 %v383
    %v1242 = vpop.f32.mrf.mxu0
    %v1243 = vadd.f32 0.0, %v1242
    %v1244 = vpop.f32.mrf.mxu0
    %v1245 = vadd.f32 0.0, %v1244
    %v1246 = vpop.f32.mrf.mxu0
    %v1247 = vadd.f32 0.0, %v1246
    %v1248 = vpop.f32.mrf.mxu0
    %v1249 = vadd.f32 0.0, %v1248
    %1250 = vmatprep.mubr.bf16.mxu0 %v386
    %1251 = vmatmul.mubr.bf16.gmra.mxu0 %v385
    %v1252 = vpop.f32.mrf.mxu0
    %v1253 = vadd.f32 0.0, %v1252
    %v1254 = vpop.f32.mrf.mxu0
    %v1255 = vadd.f32 0.0, %v1254
    %v1256 = vpop.f32.mrf.mxu0
    %v1257 = vadd.f32 0.0, %v1256
    %v1258 = vpop.f32.mrf.mxu0
    %v1259 = vadd.f32 0.0, %v1258
    %1260 = vmatprep.mubr.bf16.mxu0 %v388
    %1261 = vmatmul.mubr.bf16.gmra.mxu0 %v387
    %v1262 = vpop.f32.mrf.mxu0
    %v1263 = vadd.f32 0.0, %v1262
    %v1264 = vpop.f32.mrf.mxu0
    %v1265 = vadd.f32 0.0, %v1264
    %v1266 = vpop.f32.mrf.mxu0
    %v1267 = vadd.f32 0.0, %v1266
    %v1268 = vpop.f32.mrf.mxu0
    %v1269 = vadd.f32 0.0, %v1268
    %1270 = vmatprep.mubr.bf16.mxu0 %v390
    %1271 = vmatmul.mubr.bf16.gmra.mxu0 %v389
    %v1272 = vpop.f32.mrf.mxu0
    %v1273 = vadd.f32 0.0, %v1272
    %v1274 = vpop.f32.mrf.mxu0
    %v1275 = vadd.f32 0.0, %v1274
    %v1276 = vpop.f32.mrf.mxu0
    %v1277 = vadd.f32 0.0, %v1276
    %v1278 = vpop.f32.mrf.mxu0
    %v1279 = vadd.f32 0.0, %v1278
    %1280 = vmatprep.mubr.bf16.mxu0 %v392
    %1281 = vmatmul.mubr.bf16.gmra.mxu0 %v391
    %v1282 = vpop.f32.mrf.mxu0
    %v1283 = vadd.f32 0.0, %v1282
    %v1284 = vpop.f32.mrf.mxu0
    %v1285 = vadd.f32 0.0, %v1284
    %v1286 = vpop.f32.mrf.mxu0
    %v1287 = vadd.f32 0.0, %v1286
    %v1288 = vpop.f32.mrf.mxu0
    %v1289 = vadd.f32 0.0, %v1288
    %1290 = vmatprep.mubr.bf16.mxu0 %v394
    %1291 = vmatmul.mubr.bf16.gmra.mxu0 %v393
    %v1292 = vpop.f32.mrf.mxu0
    %v1293 = vadd.f32 0.0, %v1292
    %v1294 = vpop.f32.mrf.mxu0
    %v1295 = vadd.f32 0.0, %v1294
    %v1296 = vpop.f32.mrf.mxu0
    %v1297 = vadd.f32 0.0, %v1296
    %v1298 = vpop.f32.mrf.mxu0
    %v1299 = vadd.f32 0.0, %v1298
    %1300 = vmatprep.mubr.bf16.mxu0 %v396
    %1301 = vmatmul.mubr.bf16.gmra.mxu0 %v395
    %v1302 = vpop.f32.mrf.mxu0
    %v1303 = vadd.f32 0.0, %v1302
    %v1304 = vpop.f32.mrf.mxu0
    %v1305 = vadd.f32 0.0, %v1304
    %v1306 = vpop.f32.mrf.mxu0
    %v1307 = vadd.f32 0.0, %v1306
    %v1308 = vpop.f32.mrf.mxu0
    %v1309 = vadd.f32 0.0, %v1308
    %1310 = vmatprep.mubr.bf16.mxu0 %v398
    %1311 = vmatmul.mubr.bf16.gmra.mxu0 %v397
    %v1312 = vpop.f32.mrf.mxu0
    %v1313 = vadd.f32 0.0, %v1312
    %v1314 = vpop.f32.mrf.mxu0
    %v1315 = vadd.f32 0.0, %v1314
    %v1316 = vpop.f32.mrf.mxu0
    %v1317 = vadd.f32 0.0, %v1316
    %v1318 = vpop.f32.mrf.mxu0
    %v1319 = vadd.f32 0.0, %v1318
    %1320 = vmatprep.mubr.bf16.mxu0 %v400
    %1321 = vmatmul.mubr.bf16.gmra.mxu0 %v399
    %v1322 = vpop.f32.mrf.mxu0
    %v1323 = vadd.f32 0.0, %v1322
    %v1324 = vpop.f32.mrf.mxu0
    %v1325 = vadd.f32 0.0, %v1324
    %v1326 = vpop.f32.mrf.mxu0
    %v1327 = vadd.f32 0.0, %v1326
    %v1328 = vpop.f32.mrf.mxu0
    %v1329 = vadd.f32 0.0, %v1328
    %1330 = vmatprep.mubr.bf16.mxu0 %v402
    %1331 = vmatmul.mubr.bf16.gmra.mxu0 %v401
    %v1332 = vpop.f32.mrf.mxu0
    %v1333 = vadd.f32 0.0, %v1332
    %v1334 = vpop.f32.mrf.mxu0
    %v1335 = vadd.f32 0.0, %v1334
    %v1336 = vpop.f32.mrf.mxu0
    %v1337 = vadd.f32 0.0, %v1336
    %v1338 = vpop.f32.mrf.mxu0
    %v1339 = vadd.f32 0.0, %v1338
    %1340 = vmatprep.mubr.bf16.mxu0 %v404
    %1341 = vmatmul.mubr.bf16.gmra.mxu0 %v403
    %v1342 = vpop.f32.mrf.mxu0
    %v1343 = vadd.f32 0.0, %v1342
    %v1344 = vpop.f32.mrf.mxu0
    %v1345 = vadd.f32 0.0, %v1344
    %v1346 = vpop.f32.mrf.mxu0
    %v1347 = vadd.f32 0.0, %v1346
    %v1348 = vpop.f32.mrf.mxu0
    %v1349 = vadd.f32 0.0, %v1348
    %1350 = vmatprep.mubr.bf16.mxu0 %v406
    %1351 = vmatmul.mubr.bf16.gmra.mxu0 %v405
    %v1352 = vpop.f32.mrf.mxu0
    %v1353 = vadd.f32 0.0, %v1352
    %v1354 = vpop.f32.mrf.mxu0
    %v1355 = vadd.f32 0.0, %v1354
    %v1356 = vpop.f32.mrf.mxu0
    %v1357 = vadd.f32 0.0, %v1356
    %v1358 = vpop.f32.mrf.mxu0
    %v1359 = vadd.f32 0.0, %v1358
    %1360 = vmatprep.mubr.bf16.mxu0 %v408
    %1361 = vmatmul.mubr.bf16.gmra.mxu0 %v407
    %v1362 = vpop.f32.mrf.mxu0
    %v1363 = vadd.f32 0.0, %v1362
    %v1364 = vpop.f32.mrf.mxu0
    %v1365 = vadd.f32 0.0, %v1364
    %v1366 = vpop.f32.mrf.mxu0
    %v1367 = vadd.f32 0.0, %v1366
    %v1368 = vpop.f32.mrf.mxu0
    %v1369 = vadd.f32 0.0, %v1368
    %1370 = vmatprep.mubr.bf16.mxu0 %v410
    %1371 = vmatmul.mubr.bf16.gmra.mxu0 %v409
    %v1372 = vpop.f32.mrf.mxu0
    %v1373 = vadd.f32 0.0, %v1372
    %v1374 = vpop.f32.mrf.mxu0
    %v1375 = vadd.f32 0.0, %v1374
    %v1376 = vpop.f32.mrf.mxu0
    %v1377 = vadd.f32 0.0, %v1376
    %v1378 = vpop.f32.mrf.mxu0
    %v1379 = vadd.f32 0.0, %v1378
    %1380 = vmatprep.mubr.bf16.mxu0 %v412
    %1381 = vmatmul.mubr.bf16.gmra.mxu0 %v411
    %v1382 = vpop.f32.mrf.mxu0
    %v1383 = vadd.f32 0.0, %v1382
    %v1384 = vpop.f32.mrf.mxu0
    %v1385 = vadd.f32 0.0, %v1384
    %v1386 = vpop.f32.mrf.mxu0
    %v1387 = vadd.f32 0.0, %v1386
    %v1388 = vpop.f32.mrf.mxu0
    %v1389 = vadd.f32 0.0, %v1388
    %1390 = vmatprep.mubr.bf16.mxu0 %v414
    %1391 = vmatmul.mubr.bf16.gmra.mxu0 %v413
    %v1392 = vpop.f32.mrf.mxu0
    %v1393 = vadd.f32 0.0, %v1392
    %v1394 = vpop.f32.mrf.mxu0
    %v1395 = vadd.f32 0.0, %v1394
    %v1396 = vpop.f32.mrf.mxu0
    %v1397 = vadd.f32 0.0, %v1396
    %v1398 = vpop.f32.mrf.mxu0
    %v1399 = vadd.f32 0.0, %v1398
    %1400 = vmatprep.mubr.bf16.mxu0 %v416
    %1401 = vmatmul.mubr.bf16.gmra.mxu0 %v415
    %v1402 = vpop.f32.mrf.mxu0
    %v1403 = vadd.f32 0.0, %v1402
    %v1404 = vpop.f32.mrf.mxu0
    %v1405 = vadd.f32 0.0, %v1404
    %v1406 = vpop.f32.mrf.mxu0
    %v1407 = vadd.f32 0.0, %v1406
    %v1408 = vpop.f32.mrf.mxu0
    %v1409 = vadd.f32 0.0, %v1408
    %1410 = vmatprep.mubr.bf16.mxu0 %v418
    %1411 = vmatmul.mubr.bf16.gmra.mxu0 %v417
    %v1412 = vpop.f32.mrf.mxu0
    %v1413 = vadd.f32 0.0, %v1412
    %v1414 = vpop.f32.mrf.mxu0
    %v1415 = vadd.f32 0.0, %v1414
    %v1416 = vpop.f32.mrf.mxu0
    %v1417 = vadd.f32 0.0, %v1416
    %v1418 = vpop.f32.mrf.mxu0
    %v1419 = vadd.f32 0.0, %v1418
    %1420 = vmatprep.mubr.bf16.mxu0 %v420
    %1421 = vmatmul.mubr.bf16.gmra.mxu0 %v419
    %v1422 = vpop.f32.mrf.mxu0
    %v1423 = vadd.f32 0.0, %v1422
    %v1424 = vpop.f32.mrf.mxu0
    %v1425 = vadd.f32 0.0, %v1424
    %v1426 = vpop.f32.mrf.mxu0
    %v1427 = vadd.f32 0.0, %v1426
    %v1428 = vpop.f32.mrf.mxu0
    %v1429 = vadd.f32 0.0, %v1428
    %1430 = vmatprep.mubr.bf16.mxu0 %v422
    %1431 = vmatmul.mubr.bf16.gmra.mxu0 %v421
    %v1432 = vpop.f32.mrf.mxu0
    %v1433 = vadd.f32 0.0, %v1432
    %v1434 = vpop.f32.mrf.mxu0
    %v1435 = vadd.f32 0.0, %v1434
    %v1436 = vpop.f32.mrf.mxu0
    %v1437 = vadd.f32 0.0, %v1436
    %v1438 = vpop.f32.mrf.mxu0
    %v1439 = vadd.f32 0.0, %v1438
    %1440 = vmatprep.mubr.bf16.mxu0 %v424
    %1441 = vmatmul.mubr.bf16.gmra.mxu0 %v423
    %v1442 = vpop.f32.mrf.mxu0
    %v1443 = vadd.f32 0.0, %v1442
    %v1444 = vpop.f32.mrf.mxu0
    %v1445 = vadd.f32 0.0, %v1444
    %v1446 = vpop.f32.mrf.mxu0
    %v1447 = vadd.f32 0.0, %v1446
    %v1448 = vpop.f32.mrf.mxu0
    %v1449 = vadd.f32 0.0, %v1448
    %1450 = vmatprep.mubr.bf16.mxu0 %v426
    %1451 = vmatmul.mubr.bf16.gmra.mxu0 %v425
    %v1452 = vpop.f32.mrf.mxu0
    %v1453 = vadd.f32 0.0, %v1452
    %v1454 = vpop.f32.mrf.mxu0
    %v1455 = vadd.f32 0.0, %v1454
    %v1456 = vpop.f32.mrf.mxu0
    %v1457 = vadd.f32 0.0, %v1456
    %v1458 = vpop.f32.mrf.mxu0
    %v1459 = vadd.f32 0.0, %v1458
    %1460 = vmatprep.mubr.bf16.mxu0 %v428
    %1461 = vmatmul.mubr.bf16.gmra.mxu0 %v427
    %v1462 = vpop.f32.mrf.mxu0
    %v1463 = vadd.f32 0.0, %v1462
    %v1464 = vpop.f32.mrf.mxu0
    %v1465 = vadd.f32 0.0, %v1464
    %v1466 = vpop.f32.mrf.mxu0
    %v1467 = vadd.f32 0.0, %v1466
    %v1468 = vpop.f32.mrf.mxu0
    %v1469 = vadd.f32 0.0, %v1468
    %1470 = vmatprep.mubr.bf16.mxu0 %v430
    %1471 = vmatmul.mubr.bf16.gmra.mxu0 %v429
    %v1472 = vpop.f32.mrf.mxu0
    %v1473 = vadd.f32 0.0, %v1472
    %v1474 = vpop.f32.mrf.mxu0
    %v1475 = vadd.f32 0.0, %v1474
    %v1476 = vpop.f32.mrf.mxu0
    %v1477 = vadd.f32 0.0, %v1476
    %v1478 = vpop.f32.mrf.mxu0
    %v1479 = vadd.f32 0.0, %v1478
    %1480 = vmatprep.mubr.bf16.mxu0 %v432
    %1481 = vmatmul.mubr.bf16.gmra.mxu0 %v431
    %v1482 = vpop.f32.mrf.mxu0
    %v1483 = vadd.f32 0.0, %v1482
    %v1484 = vpop.f32.mrf.mxu0
    %v1485 = vadd.f32 0.0, %v1484
    %v1486 = vpop.f32.mrf.mxu0
    %v1487 = vadd.f32 0.0, %v1486
    %v1488 = vpop.f32.mrf.mxu0
    %v1489 = vadd.f32 0.0, %v1488
    %1490 = vmatprep.mubr.bf16.mxu0 %v434
    %1491 = vmatmul.mubr.bf16.gmra.mxu0 %v433
    %v1492 = vpop.f32.mrf.mxu0
    %v1493 = vadd.f32 0.0, %v1492
    %v1494 = vpop.f32.mrf.mxu0
    %v1495 = vadd.f32 0.0, %v1494
    %v1496 = vpop.f32.mrf.mxu0
    %v1497 = vadd.f32 0.0, %v1496
    %v1498 = vpop.f32.mrf.mxu0
    %v1499 = vadd.f32 0.0, %v1498
    %1500 = vmatprep.mubr.bf16.mxu0 %v436
    %1501 = vmatmul.mubr.bf16.gmra.mxu0 %v435
    %v1502 = vpop.f32.mrf.mxu0
    %v1503 = vadd.f32 0.0, %v1502
    %v1504 = vpop.f32.mrf.mxu0
    %v1505 = vadd.f32 0.0, %v1504
    %v1506 = vpop.f32.mrf.mxu0
    %v1507 = vadd.f32 0.0, %v1506
    %v1508 = vpop.f32.mrf.mxu0
    %v1509 = vadd.f32 0.0, %v1508
    %1510 = vmatprep.mubr.bf16.mxu0 %v438
    %1511 = vmatmul.mubr.bf16.gmra.mxu0 %v437
    %v1512 = vpop.f32.mrf.mxu0
    %v1513 = vadd.f32 0.0, %v1512
    %v1514 = vpop.f32.mrf.mxu0
    %v1515 = vadd.f32 0.0, %v1514
    %v1516 = vpop.f32.mrf.mxu0
    %v1517 = vadd.f32 0.0, %v1516
    %v1518 = vpop.f32.mrf.mxu0
    %v1519 = vadd.f32 0.0, %v1518
    %1520 = vmatprep.mubr.bf16.mxu0 %v440
    %1521 = vmatmul.mubr.bf16.gmra.mxu0 %v439
    %v1522 = vpop.f32.mrf.mxu0
    %v1523 = vadd.f32 0.0, %v1522
    %v1524 = vpop.f32.mrf.mxu0
    %v1525 = vadd.f32 0.0, %v1524
    %v1526 = vpop.f32.mrf.mxu0
    %v1527 = vadd.f32 0.0, %v1526
    %v1528 = vpop.f32.mrf.mxu0
    %v1529 = vadd.f32 0.0, %v1528
    %1530 = vdwg.mxu0
    %v1531 = vmul.f32 %v860, %v860
    %v1532 = vmul.f32 %v862, %v862
    %v1533 = vmul.f32 %v864, %v864
    %v1534 = vmul.f32 %v866, %v866
    %v1535 = vmul.f32 %v870, %v870
    %v1536 = vmul.f32 %v872, %v872
    %v1537 = vmul.f32 %v874, %v874
    %v1538 = vmul.f32 %v876, %v876
    %v1539 = vmul.f32 %v880, %v880
    %v1540 = vmul.f32 %v882, %v882
    %v1541 = vmul.f32 %v884, %v884
    %v1542 = vmul.f32 %v886, %v886
    %v1543 = vmul.f32 %v890, %v890
    %v1544 = vmul.f32 %v892, %v892
    %v1545 = vmul.f32 %v894, %v894
    %v1546 = vmul.f32 %v896, %v896
    %v1547 = vmul.f32 %v900, %v900
    %v1548 = vmul.f32 %v902, %v902
    %v1549 = vmul.f32 %v904, %v904
    %v1550 = vmul.f32 %v906, %v906
    %v1551 = vmul.f32 %v910, %v910
    %v1552 = vmul.f32 %v912, %v912
    %v1553 = vmul.f32 %v914, %v914
    %v1554 = vmul.f32 %v916, %v916
    %v1555 = vmul.f32 %v920, %v920
    %v1556 = vmul.f32 %v922, %v922
    %v1557 = vmul.f32 %v924, %v924
    %v1558 = vmul.f32 %v926, %v926
    %v1559 = vmul.f32 %v930, %v930
    %v1560 = vmul.f32 %v932, %v932
    %v1561 = vmul.f32 %v934, %v934
    %v1562 = vmul.f32 %v936, %v936
    %v1563 = vmul.f32 %v940, %v940
    %v1564 = vmul.f32 %v942, %v942
    %v1565 = vmul.f32 %v944, %v944
    %v1566 = vmul.f32 %v946, %v946
    %v1567 = vmul.f32 %v950, %v950
    %v1568 = vmul.f32 %v952, %v952
    %v1569 = vmul.f32 %v954, %v954
    %v1570 = vmul.f32 %v956, %v956
    %v1571 = vmul.f32 %v960, %v960
    %v1572 = vmul.f32 %v962, %v962
    %v1573 = vmul.f32 %v964, %v964
    %v1574 = vmul.f32 %v966, %v966
    %v1575 = vmul.f32 %v970, %v970
    %v1576 = vmul.f32 %v972, %v972
    %v1577 = vmul.f32 %v974, %v974
    %v1578 = vmul.f32 %v976, %v976
    %v1579 = vmul.f32 %v980, %v980
    %v1580 = vmul.f32 %v982, %v982
    %v1581 = vmul.f32 %v984, %v984
    %v1582 = vmul.f32 %v986, %v986
    %v1583 = vmul.f32 %v990, %v990
    %v1584 = vmul.f32 %v992, %v992
    %v1585 = vmul.f32 %v994, %v994
    %v1586 = vmul.f32 %v996, %v996
    %v1587 = vmul.f32 %v1000, %v1000
    %v1588 = vmul.f32 %v1002, %v1002
    %v1589 = vmul.f32 %v1004, %v1004
    %v1590 = vmul.f32 %v1006, %v1006
    %v1591 = vmul.f32 %v1010, %v1010
    %v1592 = vmul.f32 %v1012, %v1012
    %v1593 = vmul.f32 %v1014, %v1014
    %v1594 = vmul.f32 %v1016, %v1016
    %v1595 = vmul.f32 %v1213, %v1213
    %v1596 = vmul.f32 %v1215, %v1215
    %v1597 = vmul.f32 %v1217, %v1217
    %v1598 = vmul.f32 %v1219, %v1219
    %v1599 = vmul.f32 %v1223, %v1223
    %v1600 = vmul.f32 %v1225, %v1225
    %v1601 = vmul.f32 %v1227, %v1227
    %v1602 = vmul.f32 %v1229, %v1229
    %v1603 = vmul.f32 %v1233, %v1233
    %v1604 = vmul.f32 %v1235, %v1235
    %v1605 = vmul.f32 %v1237, %v1237
    %v1606 = vmul.f32 %v1239, %v1239
    %v1607 = vmul.f32 %v1243, %v1243
    %v1608 = vmul.f32 %v1245, %v1245
    %v1609 = vmul.f32 %v1247, %v1247
    %v1610 = vmul.f32 %v1249, %v1249
    %v1611 = vmul.f32 %v1253, %v1253
    %v1612 = vmul.f32 %v1255, %v1255
    %v1613 = vmul.f32 %v1257, %v1257
    %v1614 = vmul.f32 %v1259, %v1259
    %v1615 = vmul.f32 %v1263, %v1263
    %v1616 = vmul.f32 %v1265, %v1265
    %v1617 = vmul.f32 %v1267, %v1267
    %v1618 = vmul.f32 %v1269, %v1269
    %v1619 = vmul.f32 %v1273, %v1273
    %v1620 = vmul.f32 %v1275, %v1275
    %v1621 = vmul.f32 %v1277, %v1277
    %v1622 = vmul.f32 %v1279, %v1279
    %v1623 = vmul.f32 %v1283, %v1283
    %v1624 = vmul.f32 %v1285, %v1285
    %v1625 = vmul.f32 %v1287, %v1287
    %v1626 = vmul.f32 %v1289, %v1289
    %v1627 = vmul.f32 %v1293, %v1293
    %v1628 = vmul.f32 %v1295, %v1295
    %v1629 = vmul.f32 %v1297, %v1297
    %v1630 = vmul.f32 %v1299, %v1299
    %v1631 = vmul.f32 %v1303, %v1303
    %v1632 = vmul.f32 %v1305, %v1305
    %v1633 = vmul.f32 %v1307, %v1307
    %v1634 = vmul.f32 %v1309, %v1309
    %v1635 = vmul.f32 %v1313, %v1313
    %v1636 = vmul.f32 %v1315, %v1315
    %v1637 = vmul.f32 %v1317, %v1317
    %v1638 = vmul.f32 %v1319, %v1319
    %v1639 = vmul.f32 %v1323, %v1323
    %v1640 = vmul.f32 %v1325, %v1325
    %v1641 = vmul.f32 %v1327, %v1327
    %v1642 = vmul.f32 %v1329, %v1329
    %v1643 = vmul.f32 %v1333, %v1333
    %v1644 = vmul.f32 %v1335, %v1335
    %v1645 = vmul.f32 %v1337, %v1337
    %v1646 = vmul.f32 %v1339, %v1339
    %v1647 = vmul.f32 %v1343, %v1343
    %v1648 = vmul.f32 %v1345, %v1345
    %v1649 = vmul.f32 %v1347, %v1347
    %v1650 = vmul.f32 %v1349, %v1349
    %v1651 = vmul.f32 %v1353, %v1353
    %v1652 = vmul.f32 %v1355, %v1355
    %v1653 = vmul.f32 %v1357, %v1357
    %v1654 = vmul.f32 %v1359, %v1359
    %v1655 = vmul.f32 %v1363, %v1363
    %v1656 = vmul.f32 %v1365, %v1365
    %v1657 = vmul.f32 %v1367, %v1367
    %v1658 = vmul.f32 %v1369, %v1369
    %v1659 = vadd.f32 %v1531, %v1595
    %v1660 = vadd.f32 %v1532, %v1596
    %v1661 = vadd.f32 %v1533, %v1597
    %v1662 = vadd.f32 %v1534, %v1598
    %v1663 = vadd.f32 %v1535, %v1599
    %v1664 = vadd.f32 %v1536, %v1600
    %v1665 = vadd.f32 %v1537, %v1601
    %v1666 = vadd.f32 %v1538, %v1602
    %v1667 = vadd.f32 %v1539, %v1603
    %v1668 = vadd.f32 %v1540, %v1604
    %v1669 = vadd.f32 %v1541, %v1605
    %v1670 = vadd.f32 %v1542, %v1606
    %v1671 = vadd.f32 %v1543, %v1607
    %v1672 = vadd.f32 %v1544, %v1608
    %v1673 = vadd.f32 %v1545, %v1609
    %v1674 = vadd.f32 %v1546, %v1610
    %v1675 = vadd.f32 %v1547, %v1611
    %v1676 = vadd.f32 %v1548, %v1612
    %v1677 = vadd.f32 %v1549, %v1613
    %v1678 = vadd.f32 %v1550, %v1614
    %v1679 = vadd.f32 %v1551, %v1615
    %v1680 = vadd.f32 %v1552, %v1616
    %v1681 = vadd.f32 %v1553, %v1617
    %v1682 = vadd.f32 %v1554, %v1618
    %v1683 = vadd.f32 %v1555, %v1619
    %v1684 = vadd.f32 %v1556, %v1620
    %v1685 = vadd.f32 %v1557, %v1621
    %v1686 = vadd.f32 %v1558, %v1622
    %v1687 = vadd.f32 %v1559, %v1623
    %v1688 = vadd.f32 %v1560, %v1624
    %v1689 = vadd.f32 %v1561, %v1625
    %v1690 = vadd.f32 %v1562, %v1626
    %v1691 = vadd.f32 %v1563, %v1627
    %v1692 = vadd.f32 %v1564, %v1628
    %v1693 = vadd.f32 %v1565, %v1629
    %v1694 = vadd.f32 %v1566, %v1630
    %v1695 = vadd.f32 %v1567, %v1631
    %v1696 = vadd.f32 %v1568, %v1632
    %v1697 = vadd.f32 %v1569, %v1633
    %v1698 = vadd.f32 %v1570, %v1634
    %v1699 = vadd.f32 %v1571, %v1635
    %v1700 = vadd.f32 %v1572, %v1636
    %v1701 = vadd.f32 %v1573, %v1637
    %v1702 = vadd.f32 %v1574, %v1638
    %v1703 = vadd.f32 %v1575, %v1639
    %v1704 = vadd.f32 %v1576, %v1640
    %v1705 = vadd.f32 %v1577, %v1641
    %v1706 = vadd.f32 %v1578, %v1642
    %v1707 = vadd.f32 %v1579, %v1643
    %v1708 = vadd.f32 %v1580, %v1644
    %v1709 = vadd.f32 %v1581, %v1645
    %v1710 = vadd.f32 %v1582, %v1646
    %v1711 = vadd.f32 %v1583, %v1647
    %v1712 = vadd.f32 %v1584, %v1648
    %v1713 = vadd.f32 %v1585, %v1649
    %v1714 = vadd.f32 %v1586, %v1650
    %v1715 = vadd.f32 %v1587, %v1651
    %v1716 = vadd.f32 %v1588, %v1652
    %v1717 = vadd.f32 %v1589, %v1653
    %v1718 = vadd.f32 %v1590, %v1654
    %v1719 = vadd.f32 %v1591, %v1655
    %v1720 = vadd.f32 %v1592, %v1656
    %v1721 = vadd.f32 %v1593, %v1657
    %v1722 = vadd.f32 %v1594, %v1658
    %v1723 = vmax.f32 %v1659, 1e-08
    %v1724 = vmax.f32 %v1660, 1e-08
    %v1725 = vmax.f32 %v1661, 1e-08
    %v1726 = vmax.f32 %v1662, 1e-08
    %v1727 = vmax.f32 %v1663, 1e-08
    %v1728 = vmax.f32 %v1664, 1e-08
    %v1729 = vmax.f32 %v1665, 1e-08
    %v1730 = vmax.f32 %v1666, 1e-08
    %v1731 = vmax.f32 %v1667, 1e-08
    %v1732 = vmax.f32 %v1668, 1e-08
    %v1733 = vmax.f32 %v1669, 1e-08
    %v1734 = vmax.f32 %v1670, 1e-08
    %v1735 = vmax.f32 %v1671, 1e-08
    %v1736 = vmax.f32 %v1672, 1e-08
    %v1737 = vmax.f32 %v1673, 1e-08
    %v1738 = vmax.f32 %v1674, 1e-08
    %v1739 = vmax.f32 %v1675, 1e-08
    %v1740 = vmax.f32 %v1676, 1e-08
    %v1741 = vmax.f32 %v1677, 1e-08
    %v1742 = vmax.f32 %v1678, 1e-08
    %v1743 = vmax.f32 %v1679, 1e-08
    %v1744 = vmax.f32 %v1680, 1e-08
    %v1745 = vmax.f32 %v1681, 1e-08
    %v1746 = vmax.f32 %v1682, 1e-08
    %v1747 = vmax.f32 %v1683, 1e-08
    %v1748 = vmax.f32 %v1684, 1e-08
    %v1749 = vmax.f32 %v1685, 1e-08
    %v1750 = vmax.f32 %v1686, 1e-08
    %v1751 = vmax.f32 %v1687, 1e-08
    %v1752 = vmax.f32 %v1688, 1e-08
    %v1753 = vmax.f32 %v1689, 1e-08
    %v1754 = vmax.f32 %v1690, 1e-08
    %v1755 = vmax.f32 %v1691, 1e-08
    %v1756 = vmax.f32 %v1692, 1e-08
    %v1757 = vmax.f32 %v1693, 1e-08
    %v1758 = vmax.f32 %v1694, 1e-08
    %v1759 = vmax.f32 %v1695, 1e-08
    %v1760 = vmax.f32 %v1696, 1e-08
    %v1761 = vmax.f32 %v1697, 1e-08
    %v1762 = vmax.f32 %v1698, 1e-08
    %v1763 = vmax.f32 %v1699, 1e-08
    %v1764 = vmax.f32 %v1700, 1e-08
    %v1765 = vmax.f32 %v1701, 1e-08
    %v1766 = vmax.f32 %v1702, 1e-08
    %v1767 = vmax.f32 %v1703, 1e-08
    %v1768 = vmax.f32 %v1704, 1e-08
    %v1769 = vmax.f32 %v1705, 1e-08
    %v1770 = vmax.f32 %v1706, 1e-08
    %v1771 = vmax.f32 %v1707, 1e-08
    %v1772 = vmax.f32 %v1708, 1e-08
    %v1773 = vmax.f32 %v1709, 1e-08
    %v1774 = vmax.f32 %v1710, 1e-08
    %v1775 = vmax.f32 %v1711, 1e-08
    %v1776 = vmax.f32 %v1712, 1e-08
    %v1777 = vmax.f32 %v1713, 1e-08
    %v1778 = vmax.f32 %v1714, 1e-08
    %v1779 = vmax.f32 %v1715, 1e-08
    %v1780 = vmax.f32 %v1716, 1e-08
    %v1781 = vmax.f32 %v1717, 1e-08
    %v1782 = vmax.f32 %v1718, 1e-08
    %v1783 = vmax.f32 %v1719, 1e-08
    %v1784 = vmax.f32 %v1720, 1e-08
    %v1785 = vmax.f32 %v1721, 1e-08
    %v1786 = vmax.f32 %v1722, 1e-08
    %v1787 = vmul.f32 %v1020, %v1020
    %v1788 = vmul.f32 %v1022, %v1022
    %v1789 = vmul.f32 %v1024, %v1024
    %v1790 = vmul.f32 %v1026, %v1026
    %v1791 = vmul.f32 %v1030, %v1030
    %v1792 = vmul.f32 %v1032, %v1032
    %v1793 = vmul.f32 %v1034, %v1034
    %v1794 = vmul.f32 %v1036, %v1036
    %v1795 = vmul.f32 %v1040, %v1040
    %v1796 = vmul.f32 %v1042, %v1042
    %v1797 = vmul.f32 %v1044, %v1044
    %v1798 = vmul.f32 %v1046, %v1046
    %v1799 = vmul.f32 %v1050, %v1050
    %v1800 = vmul.f32 %v1052, %v1052
    %v1801 = vmul.f32 %v1054, %v1054
    %v1802 = vmul.f32 %v1056, %v1056
    %v1803 = vmul.f32 %v1060, %v1060
    %v1804 = vmul.f32 %v1062, %v1062
    %v1805 = vmul.f32 %v1064, %v1064
    %v1806 = vmul.f32 %v1066, %v1066
    %v1807 = vmul.f32 %v1070, %v1070
    %v1808 = vmul.f32 %v1072, %v1072
    %v1809 = vmul.f32 %v1074, %v1074
    %v1810 = vmul.f32 %v1076, %v1076
    %v1811 = vmul.f32 %v1080, %v1080
    %v1812 = vmul.f32 %v1082, %v1082
    %v1813 = vmul.f32 %v1084, %v1084
    %v1814 = vmul.f32 %v1086, %v1086
    %v1815 = vmul.f32 %v1090, %v1090
    %v1816 = vmul.f32 %v1092, %v1092
    %v1817 = vmul.f32 %v1094, %v1094
    %v1818 = vmul.f32 %v1096, %v1096
    %v1819 = vmul.f32 %v1100, %v1100
    %v1820 = vmul.f32 %v1102, %v1102
    %v1821 = vmul.f32 %v1104, %v1104
    %v1822 = vmul.f32 %v1106, %v1106
    %v1823 = vmul.f32 %v1110, %v1110
    %v1824 = vmul.f32 %v1112, %v1112
    %v1825 = vmul.f32 %v1114, %v1114
    %v1826 = vmul.f32 %v1116, %v1116
    %v1827 = vmul.f32 %v1120, %v1120
    %v1828 = vmul.f32 %v1122, %v1122
    %v1829 = vmul.f32 %v1124, %v1124
    %v1830 = vmul.f32 %v1126, %v1126
    %v1831 = vmul.f32 %v1130, %v1130
    %v1832 = vmul.f32 %v1132, %v1132
    %v1833 = vmul.f32 %v1134, %v1134
    %v1834 = vmul.f32 %v1136, %v1136
    %v1835 = vmul.f32 %v1140, %v1140
    %v1836 = vmul.f32 %v1142, %v1142
    %v1837 = vmul.f32 %v1144, %v1144
    %v1838 = vmul.f32 %v1146, %v1146
    %v1839 = vmul.f32 %v1150, %v1150
    %v1840 = vmul.f32 %v1152, %v1152
    %v1841 = vmul.f32 %v1154, %v1154
    %v1842 = vmul.f32 %v1156, %v1156
    %v1843 = vmul.f32 %v1160, %v1160
    %v1844 = vmul.f32 %v1162, %v1162
    %v1845 = vmul.f32 %v1164, %v1164
    %v1846 = vmul.f32 %v1166, %v1166
    %v1847 = vmul.f32 %v1170, %v1170
    %v1848 = vmul.f32 %v1172, %v1172
    %v1849 = vmul.f32 %v1174, %v1174
    %v1850 = vmul.f32 %v1176, %v1176
    %v1851 = vmul.f32 %v1373, %v1373
    %v1852 = vmul.f32 %v1375, %v1375
    %v1853 = vmul.f32 %v1377, %v1377
    %v1854 = vmul.f32 %v1379, %v1379
    %v1855 = vmul.f32 %v1383, %v1383
    %v1856 = vmul.f32 %v1385, %v1385
    %v1857 = vmul.f32 %v1387, %v1387
    %v1858 = vmul.f32 %v1389, %v1389
    %v1859 = vmul.f32 %v1393, %v1393
    %v1860 = vmul.f32 %v1395, %v1395
    %v1861 = vmul.f32 %v1397, %v1397
    %v1862 = vmul.f32 %v1399, %v1399
    %v1863 = vmul.f32 %v1403, %v1403
    %v1864 = vmul.f32 %v1405, %v1405
    %v1865 = vmul.f32 %v1407, %v1407
    %v1866 = vmul.f32 %v1409, %v1409
    %v1867 = vmul.f32 %v1413, %v1413
    %v1868 = vmul.f32 %v1415, %v1415
    %v1869 = vmul.f32 %v1417, %v1417
    %v1870 = vmul.f32 %v1419, %v1419
    %v1871 = vmul.f32 %v1423, %v1423
    %v1872 = vmul.f32 %v1425, %v1425
    %v1873 = vmul.f32 %v1427, %v1427
    %v1874 = vmul.f32 %v1429, %v1429
    %v1875 = vmul.f32 %v1433, %v1433
    %v1876 = vmul.f32 %v1435, %v1435
    %v1877 = vmul.f32 %v1437, %v1437
    %v1878 = vmul.f32 %v1439, %v1439
    %v1879 = vmul.f32 %v1443, %v1443
    %v1880 = vmul.f32 %v1445, %v1445
    %v1881 = vmul.f32 %v1447, %v1447
    %v1882 = vmul.f32 %v1449, %v1449
    %v1883 = vmul.f32 %v1453, %v1453
    %v1884 = vmul.f32 %v1455, %v1455
    %v1885 = vmul.f32 %v1457, %v1457
    %v1886 = vmul.f32 %v1459, %v1459
    %v1887 = vmul.f32 %v1463, %v1463
    %v1888 = vmul.f32 %v1465, %v1465
    %v1889 = vmul.f32 %v1467, %v1467
    %v1890 = vmul.f32 %v1469, %v1469
    %v1891 = vmul.f32 %v1473, %v1473
    %v1892 = vmul.f32 %v1475, %v1475
    %v1893 = vmul.f32 %v1477, %v1477
    %v1894 = vmul.f32 %v1479, %v1479
    %v1895 = vmul.f32 %v1483, %v1483
    %v1896 = vmul.f32 %v1485, %v1485
    %v1897 = vmul.f32 %v1487, %v1487
    %v1898 = vmul.f32 %v1489, %v1489
    %v1899 = vmul.f32 %v1493, %v1493
    %v1900 = vmul.f32 %v1495, %v1495
    %v1901 = vmul.f32 %v1497, %v1497
    %v1902 = vmul.f32 %v1499, %v1499
    %v1903 = vmul.f32 %v1503, %v1503
    %v1904 = vmul.f32 %v1505, %v1505
    %v1905 = vmul.f32 %v1507, %v1507
    %v1906 = vmul.f32 %v1509, %v1509
    %v1907 = vmul.f32 %v1513, %v1513
    %v1908 = vmul.f32 %v1515, %v1515
    %v1909 = vmul.f32 %v1517, %v1517
    %v1910 = vmul.f32 %v1519, %v1519
    %v1911 = vmul.f32 %v1523, %v1523
    %v1912 = vmul.f32 %v1525, %v1525
    %v1913 = vmul.f32 %v1527, %v1527
    %v1914 = vmul.f32 %v1529, %v1529
    %v1915 = vadd.f32 %v1787, %v1851
    %v1916 = vadd.f32 %v1788, %v1852
    %v1917 = vadd.f32 %v1789, %v1853
    %v1918 = vadd.f32 %v1790, %v1854
    %v1919 = vadd.f32 %v1791, %v1855
    %v1920 = vadd.f32 %v1792, %v1856
    %v1921 = vadd.f32 %v1793, %v1857
    %v1922 = vadd.f32 %v1794, %v1858
    %v1923 = vadd.f32 %v1795, %v1859
    %v1924 = vadd.f32 %v1796, %v1860
    %v1925 = vadd.f32 %v1797, %v1861
    %v1926 = vadd.f32 %v1798, %v1862
    %v1927 = vadd.f32 %v1799, %v1863
    %v1928 = vadd.f32 %v1800, %v1864
    %v1929 = vadd.f32 %v1801, %v1865
    %v1930 = vadd.f32 %v1802, %v1866
    %v1931 = vadd.f32 %v1803, %v1867
    %v1932 = vadd.f32 %v1804, %v1868
    %v1933 = vadd.f32 %v1805, %v1869
    %v1934 = vadd.f32 %v1806, %v1870
    %v1935 = vadd.f32 %v1807, %v1871
    %v1936 = vadd.f32 %v1808, %v1872
    %v1937 = vadd.f32 %v1809, %v1873
    %v1938 = vadd.f32 %v1810, %v1874
    %v1939 = vadd.f32 %v1811, %v1875
    %v1940 = vadd.f32 %v1812, %v1876
    %v1941 = vadd.f32 %v1813, %v1877
    %v1942 = vadd.f32 %v1814, %v1878
    %v1943 = vadd.f32 %v1815, %v1879
    %v1944 = vadd.f32 %v1816, %v1880
    %v1945 = vadd.f32 %v1817, %v1881
    %v1946 = vadd.f32 %v1818, %v1882
    %v1947 = vadd.f32 %v1819, %v1883
    %v1948 = vadd.f32 %v1820, %v1884
    %v1949 = vadd.f32 %v1821, %v1885
    %v1950 = vadd.f32 %v1822, %v1886
    %v1951 = vadd.f32 %v1823, %v1887
    %v1952 = vadd.f32 %v1824, %v1888
    %v1953 = vadd.f32 %v1825, %v1889
    %v1954 = vadd.f32 %v1826, %v1890
    %v1955 = vadd.f32 %v1827, %v1891
    %v1956 = vadd.f32 %v1828, %v1892
    %v1957 = vadd.f32 %v1829, %v1893
    %v1958 = vadd.f32 %v1830, %v1894
    %v1959 = vadd.f32 %v1831, %v1895
    %v1960 = vadd.f32 %v1832, %v1896
    %v1961 = vadd.f32 %v1833, %v1897
    %v1962 = vadd.f32 %v1834, %v1898
    %v1963 = vadd.f32 %v1835, %v1899
    %v1964 = vadd.f32 %v1836, %v1900
    %v1965 = vadd.f32 %v1837, %v1901
    %v1966 = vadd.f32 %v1838, %v1902
    %v1967 = vadd.f32 %v1839, %v1903
    %v1968 = vadd.f32 %v1840, %v1904
    %v1969 = vadd.f32 %v1841, %v1905
    %v1970 = vadd.f32 %v1842, %v1906
    %v1971 = vadd.f32 %v1843, %v1907
    %v1972 = vadd.f32 %v1844, %v1908
    %v1973 = vadd.f32 %v1845, %v1909
    %v1974 = vadd.f32 %v1846, %v1910
    %v1975 = vadd.f32 %v1847, %v1911
    %v1976 = vadd.f32 %v1848, %v1912
    %v1977 = vadd.f32 %v1849, %v1913
    %v1978 = vadd.f32 %v1850, %v1914
    %v1979 = vmax.f32 %v1915, 1e-08
    %v1980 = vmax.f32 %v1916, 1e-08
    %v1981 = vmax.f32 %v1917, 1e-08
    %v1982 = vmax.f32 %v1918, 1e-08
    %v1983 = vmax.f32 %v1919, 1e-08
    %v1984 = vmax.f32 %v1920, 1e-08
    %v1985 = vmax.f32 %v1921, 1e-08
    %v1986 = vmax.f32 %v1922, 1e-08
    %v1987 = vmax.f32 %v1923, 1e-08
    %v1988 = vmax.f32 %v1924, 1e-08
    %v1989 = vmax.f32 %v1925, 1e-08
    %v1990 = vmax.f32 %v1926, 1e-08
    %v1991 = vmax.f32 %v1927, 1e-08
    %v1992 = vmax.f32 %v1928, 1e-08
    %v1993 = vmax.f32 %v1929, 1e-08
    %v1994 = vmax.f32 %v1930, 1e-08
    %v1995 = vmax.f32 %v1931, 1e-08
    %v1996 = vmax.f32 %v1932, 1e-08
    %v1997 = vmax.f32 %v1933, 1e-08
    %v1998 = vmax.f32 %v1934, 1e-08
    %v1999 = vmax.f32 %v1935, 1e-08
    %v2000 = vmax.f32 %v1936, 1e-08
    %v2001 = vmax.f32 %v1937, 1e-08
    %v2002 = vmax.f32 %v1938, 1e-08
    %v2003 = vmax.f32 %v1939, 1e-08
    %v2004 = vmax.f32 %v1940, 1e-08
    %v2005 = vmax.f32 %v1941, 1e-08
    %v2006 = vmax.f32 %v1942, 1e-08
    %v2007 = vmax.f32 %v1943, 1e-08
    %v2008 = vmax.f32 %v1944, 1e-08
    %v2009 = vmax.f32 %v1945, 1e-08
    %v2010 = vmax.f32 %v1946, 1e-08
    %v2011 = vmax.f32 %v1947, 1e-08
    %v2012 = vmax.f32 %v1948, 1e-08
    %v2013 = vmax.f32 %v1949, 1e-08
    %v2014 = vmax.f32 %v1950, 1e-08
    %v2015 = vmax.f32 %v1951, 1e-08
    %v2016 = vmax.f32 %v1952, 1e-08
    %v2017 = vmax.f32 %v1953, 1e-08
    %v2018 = vmax.f32 %v1954, 1e-08
    %v2019 = vmax.f32 %v1955, 1e-08
    %v2020 = vmax.f32 %v1956, 1e-08
    %v2021 = vmax.f32 %v1957, 1e-08
    %v2022 = vmax.f32 %v1958, 1e-08
    %v2023 = vmax.f32 %v1959, 1e-08
    %v2024 = vmax.f32 %v1960, 1e-08
    %v2025 = vmax.f32 %v1961, 1e-08
    %v2026 = vmax.f32 %v1962, 1e-08
    %v2027 = vmax.f32 %v1963, 1e-08
    %v2028 = vmax.f32 %v1964, 1e-08
    %v2029 = vmax.f32 %v1965, 1e-08
    %v2030 = vmax.f32 %v1966, 1e-08
    %v2031 = vmax.f32 %v1967, 1e-08
    %v2032 = vmax.f32 %v1968, 1e-08
    %v2033 = vmax.f32 %v1969, 1e-08
    %v2034 = vmax.f32 %v1970, 1e-08
    %v2035 = vmax.f32 %v1971, 1e-08
    %v2036 = vmax.f32 %v1972, 1e-08
    %v2037 = vmax.f32 %v1973, 1e-08
    %v2038 = vmax.f32 %v1974, 1e-08
    %v2039 = vmax.f32 %v1975, 1e-08
    %v2040 = vmax.f32 %v1976, 1e-08
    %v2041 = vmax.f32 %v1977, 1e-08
    %v2042 = vmax.f32 %v1978, 1e-08
    %v2043 = vrcp.pop %v1723
    %v2044 = vmul.f32 %v1979, %v2043
    %v2045 = vrcp.pop %v1724
    %v2046 = vmul.f32 %v1980, %v2045
    %v2047 = vrcp.pop %v1725
    %v2048 = vmul.f32 %v1981, %v2047
    %v2049 = vrcp.pop %v1726
    %v2050 = vmul.f32 %v1982, %v2049
    %v2051 = vrcp.pop %v1727
    %v2052 = vmul.f32 %v1983, %v2051
    %v2053 = vrcp.pop %v1728
    %v2054 = vmul.f32 %v1984, %v2053
    %v2055 = vrcp.pop %v1729
    %v2056 = vmul.f32 %v1985, %v2055
    %v2057 = vrcp.pop %v1730
    %v2058 = vmul.f32 %v1986, %v2057
    %v2059 = vrcp.pop %v1731
    %v2060 = vmul.f32 %v1987, %v2059
    %v2061 = vrcp.pop %v1732
    %v2062 = vmul.f32 %v1988, %v2061
    %v2063 = vrcp.pop %v1733
    %v2064 = vmul.f32 %v1989, %v2063
    %v2065 = vrcp.pop %v1734
    %v2066 = vmul.f32 %v1990, %v2065
    %v2067 = vrcp.pop %v1735
    %v2068 = vmul.f32 %v1991, %v2067
    %v2069 = vrcp.pop %v1736
    %v2070 = vmul.f32 %v1992, %v2069
    %v2071 = vrcp.pop %v1737
    %v2072 = vmul.f32 %v1993, %v2071
    %v2073 = vrcp.pop %v1738
    %v2074 = vmul.f32 %v1994, %v2073
    %v2075 = vrcp.pop %v1739
    %v2076 = vmul.f32 %v1995, %v2075
    %v2077 = vrcp.pop %v1740
    %v2078 = vmul.f32 %v1996, %v2077
    %v2079 = vrcp.pop %v1741
    %v2080 = vmul.f32 %v1997, %v2079
    %v2081 = vrcp.pop %v1742
    %v2082 = vmul.f32 %v1998, %v2081
    %v2083 = vrcp.pop %v1743
    %v2084 = vmul.f32 %v1999, %v2083
    %v2085 = vrcp.pop %v1744
    %v2086 = vmul.f32 %v2000, %v2085
    %v2087 = vrcp.pop %v1745
    %v2088 = vmul.f32 %v2001, %v2087
    %v2089 = vrcp.pop %v1746
    %v2090 = vmul.f32 %v2002, %v2089
    %v2091 = vrcp.pop %v1747
    %v2092 = vmul.f32 %v2003, %v2091
    %v2093 = vrcp.pop %v1748
    %v2094 = vmul.f32 %v2004, %v2093
    %v2095 = vrcp.pop %v1749
    %v2096 = vmul.f32 %v2005, %v2095
    %v2097 = vrcp.pop %v1750
    %v2098 = vmul.f32 %v2006, %v2097
    %v2099 = vrcp.pop %v1751
    %v2100 = vmul.f32 %v2007, %v2099
    %v2101 = vrcp.pop %v1752
    %v2102 = vmul.f32 %v2008, %v2101
    %v2103 = vrcp.pop %v1753
    %v2104 = vmul.f32 %v2009, %v2103
    %v2105 = vrcp.pop %v1754
    %v2106 = vmul.f32 %v2010, %v2105
    %v2107 = vrcp.pop %v1755
    %v2108 = vmul.f32 %v2011, %v2107
    %v2109 = vrcp.pop %v1756
    %v2110 = vmul.f32 %v2012, %v2109
    %v2111 = vrcp.pop %v1757
    %v2112 = vmul.f32 %v2013, %v2111
    %v2113 = vrcp.pop %v1758
    %v2114 = vmul.f32 %v2014, %v2113
    %v2115 = vrcp.pop %v1759
    %v2116 = vmul.f32 %v2015, %v2115
    %v2117 = vrcp.pop %v1760
    %v2118 = vmul.f32 %v2016, %v2117
    %v2119 = vrcp.pop %v1761
    %v2120 = vmul.f32 %v2017, %v2119
    %v2121 = vrcp.pop %v1762
    %v2122 = vmul.f32 %v2018, %v2121
    %v2123 = vrcp.pop %v1763
    %v2124 = vmul.f32 %v2019, %v2123
    %v2125 = vrcp.pop %v1764
    %v2126 = vmul.f32 %v2020, %v2125
    %v2127 = vrcp.pop %v1765
    %v2128 = vmul.f32 %v2021, %v2127
    %v2129 = vrcp.pop %v1766
    %v2130 = vmul.f32 %v2022, %v2129
    %v2131 = vrcp.pop %v1767
    %v2132 = vmul.f32 %v2023, %v2131
    %v2133 = vrcp.pop %v1768
    %v2134 = vmul.f32 %v2024, %v2133
    %v2135 = vrcp.pop %v1769
    %v2136 = vmul.f32 %v2025, %v2135
    %v2137 = vrcp.pop %v1770
    %v2138 = vmul.f32 %v2026, %v2137
    %v2139 = vrcp.pop %v1771
    %v2140 = vmul.f32 %v2027, %v2139
    %v2141 = vrcp.pop %v1772
    %v2142 = vmul.f32 %v2028, %v2141
    %v2143 = vrcp.pop %v1773
    %v2144 = vmul.f32 %v2029, %v2143
    %v2145 = vrcp.pop %v1774
    %v2146 = vmul.f32 %v2030, %v2145
    %v2147 = vrcp.pop %v1775
    %v2148 = vmul.f32 %v2031, %v2147
    %v2149 = vrcp.pop %v1776
    %v2150 = vmul.f32 %v2032, %v2149
    %v2151 = vrcp.pop %v1777
    %v2152 = vmul.f32 %v2033, %v2151
    %v2153 = vrcp.pop %v1778
    %v2154 = vmul.f32 %v2034, %v2153
    %v2155 = vrcp.pop %v1779
    %v2156 = vmul.f32 %v2035, %v2155
    %v2157 = vrcp.pop %v1780
    %v2158 = vmul.f32 %v2036, %v2157
    %v2159 = vrcp.pop %v1781
    %v2160 = vmul.f32 %v2037, %v2159
    %v2161 = vrcp.pop %v1782
    %v2162 = vmul.f32 %v2038, %v2161
    %v2163 = vrcp.pop %v1783
    %v2164 = vmul.f32 %v2039, %v2163
    %v2165 = vrcp.pop %v1784
    %v2166 = vmul.f32 %v2040, %v2165
    %v2167 = vrcp.pop %v1785
    %v2168 = vmul.f32 %v2041, %v2167
    %v2169 = vrcp.pop %v1786
    %v2170 = vmul.f32 %v2042, %v2169
    %v2171 = vlog2.pop %v2044
    %v2172 = vmul.f32 %v2171, 0.6931472
    %v2173 = vlog2.pop %v2046
    %v2174 = vmul.f32 %v2173, 0.6931472
    %v2175 = vlog2.pop %v2048
    %v2176 = vmul.f32 %v2175, 0.6931472
    %v2177 = vlog2.pop %v2050
    %v2178 = vmul.f32 %v2177, 0.6931472
    %v2179 = vlog2.pop %v2052
    %v2180 = vmul.f32 %v2179, 0.6931472
    %v2181 = vlog2.pop %v2054
    %v2182 = vmul.f32 %v2181, 0.6931472
    %v2183 = vlog2.pop %v2056
    %v2184 = vmul.f32 %v2183, 0.6931472
    %v2185 = vlog2.pop %v2058
    %v2186 = vmul.f32 %v2185, 0.6931472
    %v2187 = vlog2.pop %v2060
    %v2188 = vmul.f32 %v2187, 0.6931472
    %v2189 = vlog2.pop %v2062
    %v2190 = vmul.f32 %v2189, 0.6931472
    %v2191 = vlog2.pop %v2064
    %v2192 = vmul.f32 %v2191, 0.6931472
    %v2193 = vlog2.pop %v2066
    %v2194 = vmul.f32 %v2193, 0.6931472
    %v2195 = vlog2.pop %v2068
    %v2196 = vmul.f32 %v2195, 0.6931472
    %v2197 = vlog2.pop %v2070
    %v2198 = vmul.f32 %v2197, 0.6931472
    %v2199 = vlog2.pop %v2072
    %v2200 = vmul.f32 %v2199, 0.6931472
    %v2201 = vlog2.pop %v2074
    %v2202 = vmul.f32 %v2201, 0.6931472
    %v2203 = vlog2.pop %v2076
    %v2204 = vmul.f32 %v2203, 0.6931472
    %v2205 = vlog2.pop %v2078
    %v2206 = vmul.f32 %v2205, 0.6931472
    %v2207 = vlog2.pop %v2080
    %v2208 = vmul.f32 %v2207, 0.6931472
    %v2209 = vlog2.pop %v2082
    %v2210 = vmul.f32 %v2209, 0.6931472
    %v2211 = vlog2.pop %v2084
    %v2212 = vmul.f32 %v2211, 0.6931472
    %v2213 = vlog2.pop %v2086
    %v2214 = vmul.f32 %v2213, 0.6931472
    %v2215 = vlog2.pop %v2088
    %v2216 = vmul.f32 %v2215, 0.6931472
    %v2217 = vlog2.pop %v2090
    %v2218 = vmul.f32 %v2217, 0.6931472
    %v2219 = vlog2.pop %v2092
    %v2220 = vmul.f32 %v2219, 0.6931472
    %v2221 = vlog2.pop %v2094
    %v2222 = vmul.f32 %v2221, 0.6931472
    %v2223 = vlog2.pop %v2096
    %v2224 = vmul.f32 %v2223, 0.6931472
    %v2225 = vlog2.pop %v2098
    %v2226 = vmul.f32 %v2225, 0.6931472
    %v2227 = vlog2.pop %v2100
    %v2228 = vmul.f32 %v2227, 0.6931472
    %v2229 = vlog2.pop %v2102
    %v2230 = vmul.f32 %v2229, 0.6931472
    %v2231 = vlog2.pop %v2104
    %v2232 = vmul.f32 %v2231, 0.6931472
    %v2233 = vlog2.pop %v2106
    %v2234 = vmul.f32 %v2233, 0.6931472
    %v2235 = vlog2.pop %v2108
    %v2236 = vmul.f32 %v2235, 0.6931472
    %v2237 = vlog2.pop %v2110
    %v2238 = vmul.f32 %v2237, 0.6931472
    %v2239 = vlog2.pop %v2112
    %v2240 = vmul.f32 %v2239, 0.6931472
    %v2241 = vlog2.pop %v2114
    %v2242 = vmul.f32 %v2241, 0.6931472
    %v2243 = vlog2.pop %v2116
    %v2244 = vmul.f32 %v2243, 0.6931472
    %v2245 = vlog2.pop %v2118
    %v2246 = vmul.f32 %v2245, 0.6931472
    %v2247 = vlog2.pop %v2120
    %v2248 = vmul.f32 %v2247, 0.6931472
    %v2249 = vlog2.pop %v2122
    %v2250 = vmul.f32 %v2249, 0.6931472
    %v2251 = vlog2.pop %v2124
    %v2252 = vmul.f32 %v2251, 0.6931472
    %v2253 = vlog2.pop %v2126
    %v2254 = vmul.f32 %v2253, 0.6931472
    %v2255 = vlog2.pop %v2128
    %v2256 = vmul.f32 %v2255, 0.6931472
    %v2257 = vlog2.pop %v2130
    %v2258 = vmul.f32 %v2257, 0.6931472
    %v2259 = vlog2.pop %v2132
    %v2260 = vmul.f32 %v2259, 0.6931472
    %v2261 = vlog2.pop %v2134
    %v2262 = vmul.f32 %v2261, 0.6931472
    %v2263 = vlog2.pop %v2136
    %v2264 = vmul.f32 %v2263, 0.6931472
    %v2265 = vlog2.pop %v2138
    %v2266 = vmul.f32 %v2265, 0.6931472
    %v2267 = vlog2.pop %v2140
    %v2268 = vmul.f32 %v2267, 0.6931472
    %v2269 = vlog2.pop %v2142
    %v2270 = vmul.f32 %v2269, 0.6931472
    %v2271 = vlog2.pop %v2144
    %v2272 = vmul.f32 %v2271, 0.6931472
    %v2273 = vlog2.pop %v2146
    %v2274 = vmul.f32 %v2273, 0.6931472
    %v2275 = vlog2.pop %v2148
    %v2276 = vmul.f32 %v2275, 0.6931472
    %v2277 = vlog2.pop %v2150
    %v2278 = vmul.f32 %v2277, 0.6931472
    %v2279 = vlog2.pop %v2152
    %v2280 = vmul.f32 %v2279, 0.6931472
    %v2281 = vlog2.pop %v2154
    %v2282 = vmul.f32 %v2281, 0.6931472
    %v2283 = vlog2.pop %v2156
    %v2284 = vmul.f32 %v2283, 0.6931472
    %v2285 = vlog2.pop %v2158
    %v2286 = vmul.f32 %v2285, 0.6931472
    %v2287 = vlog2.pop %v2160
    %v2288 = vmul.f32 %v2287, 0.6931472
    %v2289 = vlog2.pop %v2162
    %v2290 = vmul.f32 %v2289, 0.6931472
    %v2291 = vlog2.pop %v2164
    %v2292 = vmul.f32 %v2291, 0.6931472
    %v2293 = vlog2.pop %v2166
    %v2294 = vmul.f32 %v2293, 0.6931472
    %v2295 = vlog2.pop %v2168
    %v2296 = vmul.f32 %v2295, 0.6931472
    %v2297 = vlog2.pop %v2170
    %v2298 = vmul.f32 %v2297, 0.6931472
    %v2299 = vand.u32 2147483647, %v2172
    %v2300 = vand.u32 2147483647, %v2174
    %v2301 = vand.u32 2147483647, %v2176
    %v2302 = vand.u32 2147483647, %v2178
    %v2303 = vand.u32 2147483647, %v2180
    %v2304 = vand.u32 2147483647, %v2182
    %v2305 = vand.u32 2147483647, %v2184
    %v2306 = vand.u32 2147483647, %v2186
    %v2307 = vand.u32 2147483647, %v2188
    %v2308 = vand.u32 2147483647, %v2190
    %v2309 = vand.u32 2147483647, %v2192
    %v2310 = vand.u32 2147483647, %v2194
    %v2311 = vand.u32 2147483647, %v2196
    %v2312 = vand.u32 2147483647, %v2198
    %v2313 = vand.u32 2147483647, %v2200
    %v2314 = vand.u32 2147483647, %v2202
    %v2315 = vand.u32 2147483647, %v2204
    %v2316 = vand.u32 2147483647, %v2206
    %v2317 = vand.u32 2147483647, %v2208
    %v2318 = vand.u32 2147483647, %v2210
    %v2319 = vand.u32 2147483647, %v2212
    %v2320 = vand.u32 2147483647, %v2214
    %v2321 = vand.u32 2147483647, %v2216
    %v2322 = vand.u32 2147483647, %v2218
    %v2323 = vand.u32 2147483647, %v2220
    %v2324 = vand.u32 2147483647, %v2222
    %v2325 = vand.u32 2147483647, %v2224
    %v2326 = vand.u32 2147483647, %v2226
    %v2327 = vand.u32 2147483647, %v2228
    %v2328 = vand.u32 2147483647, %v2230
    %v2329 = vand.u32 2147483647, %v2232
    %v2330 = vand.u32 2147483647, %v2234
    %v2331 = vand.u32 2147483647, %v2236
    %v2332 = vand.u32 2147483647, %v2238
    %v2333 = vand.u32 2147483647, %v2240
    %v2334 = vand.u32 2147483647, %v2242
    %v2335 = vand.u32 2147483647, %v2244
    %v2336 = vand.u32 2147483647, %v2246
    %v2337 = vand.u32 2147483647, %v2248
    %v2338 = vand.u32 2147483647, %v2250
    %v2339 = vand.u32 2147483647, %v2252
    %v2340 = vand.u32 2147483647, %v2254
    %v2341 = vand.u32 2147483647, %v2256
    %v2342 = vand.u32 2147483647, %v2258
    %v2343 = vand.u32 2147483647, %v2260
    %v2344 = vand.u32 2147483647, %v2262
    %v2345 = vand.u32 2147483647, %v2264
    %v2346 = vand.u32 2147483647, %v2266
    %v2347 = vand.u32 2147483647, %v2268
    %v2348 = vand.u32 2147483647, %v2270
    %v2349 = vand.u32 2147483647, %v2272
    %v2350 = vand.u32 2147483647, %v2274
    %v2351 = vand.u32 2147483647, %v2276
    %v2352 = vand.u32 2147483647, %v2278
    %v2353 = vand.u32 2147483647, %v2280
    %v2354 = vand.u32 2147483647, %v2282
    %v2355 = vand.u32 2147483647, %v2284
    %v2356 = vand.u32 2147483647, %v2286
    %v2357 = vand.u32 2147483647, %v2288
    %v2358 = vand.u32 2147483647, %v2290
    %v2359 = vand.u32 2147483647, %v2292
    %v2360 = vand.u32 2147483647, %v2294
    %v2361 = vand.u32 2147483647, %v2296
    %v2362 = vand.u32 2147483647, %v2298
    %v2363 = vmul.f32 %v2299, 0.5
    %v2364 = vmul.f32 %v2300, 0.5
    %v2365 = vmul.f32 %v2301, 0.5
    %v2366 = vmul.f32 %v2302, 0.5
    %v2367 = vmul.f32 %v2303, 0.5
    %v2368 = vmul.f32 %v2304, 0.5
    %v2369 = vmul.f32 %v2305, 0.5
    %v2370 = vmul.f32 %v2306, 0.5
    %v2371 = vmul.f32 %v2307, 0.5
    %v2372 = vmul.f32 %v2308, 0.5
    %v2373 = vmul.f32 %v2309, 0.5
    %v2374 = vmul.f32 %v2310, 0.5
    %v2375 = vmul.f32 %v2311, 0.5
    %v2376 = vmul.f32 %v2312, 0.5
    %v2377 = vmul.f32 %v2313, 0.5
    %v2378 = vmul.f32 %v2314, 0.5
    %v2379 = vmul.f32 %v2315, 0.5
    %v2380 = vmul.f32 %v2316, 0.5
    %v2381 = vmul.f32 %v2317, 0.5
    %v2382 = vmul.f32 %v2318, 0.5
    %v2383 = vmul.f32 %v2319, 0.5
    %v2384 = vmul.f32 %v2320, 0.5
    %v2385 = vmul.f32 %v2321, 0.5
    %v2386 = vmul.f32 %v2322, 0.5
    %v2387 = vmul.f32 %v2323, 0.5
    %v2388 = vmul.f32 %v2324, 0.5
    %v2389 = vmul.f32 %v2325, 0.5
    %v2390 = vmul.f32 %v2326, 0.5
    %v2391 = vmul.f32 %v2327, 0.5
    %v2392 = vmul.f32 %v2328, 0.5
    %v2393 = vmul.f32 %v2329, 0.5
    %v2394 = vmul.f32 %v2330, 0.5
    %v2395 = vmul.f32 %v2331, 0.5
    %v2396 = vmul.f32 %v2332, 0.5
    %v2397 = vmul.f32 %v2333, 0.5
    %v2398 = vmul.f32 %v2334, 0.5
    %v2399 = vmul.f32 %v2335, 0.5
    %v2400 = vmul.f32 %v2336, 0.5
    %v2401 = vmul.f32 %v2337, 0.5
    %v2402 = vmul.f32 %v2338, 0.5
    %v2403 = vmul.f32 %v2339, 0.5
    %v2404 = vmul.f32 %v2340, 0.5
    %v2405 = vmul.f32 %v2341, 0.5
    %v2406 = vmul.f32 %v2342, 0.5
    %v2407 = vmul.f32 %v2343, 0.5
    %v2408 = vmul.f32 %v2344, 0.5
    %v2409 = vmul.f32 %v2345, 0.5
    %v2410 = vmul.f32 %v2346, 0.5
    %v2411 = vmul.f32 %v2347, 0.5
    %v2412 = vmul.f32 %v2348, 0.5
    %v2413 = vmul.f32 %v2349, 0.5
    %v2414 = vmul.f32 %v2350, 0.5
    %v2415 = vmul.f32 %v2351, 0.5
    %v2416 = vmul.f32 %v2352, 0.5
    %v2417 = vmul.f32 %v2353, 0.5
    %v2418 = vmul.f32 %v2354, 0.5
    %v2419 = vmul.f32 %v2355, 0.5
    %v2420 = vmul.f32 %v2356, 0.5
    %v2421 = vmul.f32 %v2357, 0.5
    %v2422 = vmul.f32 %v2358, 0.5
    %v2423 = vmul.f32 %v2359, 0.5
    %v2424 = vmul.f32 %v2360, 0.5
    %v2425 = vmul.f32 %v2361, 0.5
    %v2426 = vmul.f32 %v2362, 0.5
    %v2427 = vadd.f32 %v1979, %v1723
    %v2428 = vadd.f32 %v1980, %v1724
    %v2429 = vadd.f32 %v1981, %v1725
    %v2430 = vadd.f32 %v1982, %v1726
    %v2431 = vadd.f32 %v1983, %v1727
    %v2432 = vadd.f32 %v1984, %v1728
    %v2433 = vadd.f32 %v1985, %v1729
    %v2434 = vadd.f32 %v1986, %v1730
    %v2435 = vadd.f32 %v1987, %v1731
    %v2436 = vadd.f32 %v1988, %v1732
    %v2437 = vadd.f32 %v1989, %v1733
    %v2438 = vadd.f32 %v1990, %v1734
    %v2439 = vadd.f32 %v1991, %v1735
    %v2440 = vadd.f32 %v1992, %v1736
    %v2441 = vadd.f32 %v1993, %v1737
    %v2442 = vadd.f32 %v1994, %v1738
    %v2443 = vadd.f32 %v1995, %v1739
    %v2444 = vadd.f32 %v1996, %v1740
    %v2445 = vadd.f32 %v1997, %v1741
    %v2446 = vadd.f32 %v1998, %v1742
    %v2447 = vadd.f32 %v1999, %v1743
    %v2448 = vadd.f32 %v2000, %v1744
    %v2449 = vadd.f32 %v2001, %v1745
    %v2450 = vadd.f32 %v2002, %v1746
    %v2451 = vadd.f32 %v2003, %v1747
    %v2452 = vadd.f32 %v2004, %v1748
    %v2453 = vadd.f32 %v2005, %v1749
    %v2454 = vadd.f32 %v2006, %v1750
    %v2455 = vadd.f32 %v2007, %v1751
    %v2456 = vadd.f32 %v2008, %v1752
    %v2457 = vadd.f32 %v2009, %v1753
    %v2458 = vadd.f32 %v2010, %v1754
    %v2459 = vadd.f32 %v2011, %v1755
    %v2460 = vadd.f32 %v2012, %v1756
    %v2461 = vadd.f32 %v2013, %v1757
    %v2462 = vadd.f32 %v2014, %v1758
    %v2463 = vadd.f32 %v2015, %v1759
    %v2464 = vadd.f32 %v2016, %v1760
    %v2465 = vadd.f32 %v2017, %v1761
    %v2466 = vadd.f32 %v2018, %v1762
    %v2467 = vadd.f32 %v2019, %v1763
    %v2468 = vadd.f32 %v2020, %v1764
    %v2469 = vadd.f32 %v2021, %v1765
    %v2470 = vadd.f32 %v2022, %v1766
    %v2471 = vadd.f32 %v2023, %v1767
    %v2472 = vadd.f32 %v2024, %v1768
    %v2473 = vadd.f32 %v2025, %v1769
    %v2474 = vadd.f32 %v2026, %v1770
    %v2475 = vadd.f32 %v2027, %v1771
    %v2476 = vadd.f32 %v2028, %v1772
    %v2477 = vadd.f32 %v2029, %v1773
    %v2478 = vadd.f32 %v2030, %v1774
    %v2479 = vadd.f32 %v2031, %v1775
    %v2480 = vadd.f32 %v2032, %v1776
    %v2481 = vadd.f32 %v2033, %v1777
    %v2482 = vadd.f32 %v2034, %v1778
    %v2483 = vadd.f32 %v2035, %v1779
    %v2484 = vadd.f32 %v2036, %v1780
    %v2485 = vadd.f32 %v2037, %v1781
    %v2486 = vadd.f32 %v2038, %v1782
    %v2487 = vadd.f32 %v2039, %v1783
    %v2488 = vadd.f32 %v2040, %v1784
    %v2489 = vadd.f32 %v2041, %v1785
    %v2490 = vadd.f32 %v2042, %v1786
    %v2491 = vmul.f32 %v1979, %v1723
    %v2492 = vmul.f32 %v1980, %v1724
    %v2493 = vmul.f32 %v1981, %v1725
    %v2494 = vmul.f32 %v1982, %v1726
    %v2495 = vmul.f32 %v1983, %v1727
    %v2496 = vmul.f32 %v1984, %v1728
    %v2497 = vmul.f32 %v1985, %v1729
    %v2498 = vmul.f32 %v1986, %v1730
    %v2499 = vmul.f32 %v1987, %v1731
    %v2500 = vmul.f32 %v1988, %v1732
    %v2501 = vmul.f32 %v1989, %v1733
    %v2502 = vmul.f32 %v1990, %v1734
    %v2503 = vmul.f32 %v1991, %v1735
    %v2504 = vmul.f32 %v1992, %v1736
    %v2505 = vmul.f32 %v1993, %v1737
    %v2506 = vmul.f32 %v1994, %v1738
    %v2507 = vmul.f32 %v1995, %v1739
    %v2508 = vmul.f32 %v1996, %v1740
    %v2509 = vmul.f32 %v1997, %v1741
    %v2510 = vmul.f32 %v1998, %v1742
    %v2511 = vmul.f32 %v1999, %v1743
    %v2512 = vmul.f32 %v2000, %v1744
    %v2513 = vmul.f32 %v2001, %v1745
    %v2514 = vmul.f32 %v2002, %v1746
    %v2515 = vmul.f32 %v2003, %v1747
    %v2516 = vmul.f32 %v2004, %v1748
    %v2517 = vmul.f32 %v2005, %v1749
    %v2518 = vmul.f32 %v2006, %v1750
    %v2519 = vmul.f32 %v2007, %v1751
    %v2520 = vmul.f32 %v2008, %v1752
    %v2521 = vmul.f32 %v2009, %v1753
    %v2522 = vmul.f32 %v2010, %v1754
    %v2523 = vmul.f32 %v2011, %v1755
    %v2524 = vmul.f32 %v2012, %v1756
    %v2525 = vmul.f32 %v2013, %v1757
    %v2526 = vmul.f32 %v2014, %v1758
    %v2527 = vmul.f32 %v2015, %v1759
    %v2528 = vmul.f32 %v2016, %v1760
    %v2529 = vmul.f32 %v2017, %v1761
    %v2530 = vmul.f32 %v2018, %v1762
    %v2531 = vmul.f32 %v2019, %v1763
    %v2532 = vmul.f32 %v2020, %v1764
    %v2533 = vmul.f32 %v2021, %v1765
    %v2534 = vmul.f32 %v2022, %v1766
    %v2535 = vmul.f32 %v2023, %v1767
    %v2536 = vmul.f32 %v2024, %v1768
    %v2537 = vmul.f32 %v2025, %v1769
    %v2538 = vmul.f32 %v2026, %v1770
    %v2539 = vmul.f32 %v2027, %v1771
    %v2540 = vmul.f32 %v2028, %v1772
    %v2541 = vmul.f32 %v2029, %v1773
    %v2542 = vmul.f32 %v2030, %v1774
    %v2543 = vmul.f32 %v2031, %v1775
    %v2544 = vmul.f32 %v2032, %v1776
    %v2545 = vmul.f32 %v2033, %v1777
    %v2546 = vmul.f32 %v2034, %v1778
    %v2547 = vmul.f32 %v2035, %v1779
    %v2548 = vmul.f32 %v2036, %v1780
    %v2549 = vmul.f32 %v2037, %v1781
    %v2550 = vmul.f32 %v2038, %v1782
    %v2551 = vmul.f32 %v2039, %v1783
    %v2552 = vmul.f32 %v2040, %v1784
    %v2553 = vmul.f32 %v2041, %v1785
    %v2554 = vmul.f32 %v2042, %v1786
    %v2555 = vrsqrt.pop %v2491
    %v2556 = vmul.f32 %v2491, %v2555
    %vm2557 = vcmp.eq.f32.partialorder %v2491, inf
    %v2558 = vsel %vm2557, %v2491, %v2556
    %vm2559 = vcmp.eq.f32.partialorder %v2491, 0.0
    %v2560 = vand.u32 %v2491, 2147483648
    %v2561 = vsel %vm2559, %v2560, %v2558
    %v2562 = vrsqrt.pop %v2492
    %v2563 = vmul.f32 %v2492, %v2562
    %vm2564 = vcmp.eq.f32.partialorder %v2492, inf
    %v2565 = vsel %vm2564, %v2492, %v2563
    %vm2566 = vcmp.eq.f32.partialorder %v2492, 0.0
    %v2567 = vand.u32 %v2492, 2147483648
    %v2568 = vsel %vm2566, %v2567, %v2565
    %v2569 = vrsqrt.pop %v2493
    %v2570 = vmul.f32 %v2493, %v2569
    %vm2571 = vcmp.eq.f32.partialorder %v2493, inf
    %v2572 = vsel %vm2571, %v2493, %v2570
    %vm2573 = vcmp.eq.f32.partialorder %v2493, 0.0
    %v2574 = vand.u32 %v2493, 2147483648
    %v2575 = vsel %vm2573, %v2574, %v2572
    %v2576 = vrsqrt.pop %v2494
    %v2577 = vmul.f32 %v2494, %v2576
    %vm2578 = vcmp.eq.f32.partialorder %v2494, inf
    %v2579 = vsel %vm2578, %v2494, %v2577
    %vm2580 = vcmp.eq.f32.partialorder %v2494, 0.0
    %v2581 = vand.u32 %v2494, 2147483648
    %v2582 = vsel %vm2580, %v2581, %v2579
    %v2583 = vrsqrt.pop %v2495
    %v2584 = vmul.f32 %v2495, %v2583
    %vm2585 = vcmp.eq.f32.partialorder %v2495, inf
    %v2586 = vsel %vm2585, %v2495, %v2584
    %vm2587 = vcmp.eq.f32.partialorder %v2495, 0.0
    %v2588 = vand.u32 %v2495, 2147483648
    %v2589 = vsel %vm2587, %v2588, %v2586
    %v2590 = vrsqrt.pop %v2496
    %v2591 = vmul.f32 %v2496, %v2590
    %vm2592 = vcmp.eq.f32.partialorder %v2496, inf
    %v2593 = vsel %vm2592, %v2496, %v2591
    %vm2594 = vcmp.eq.f32.partialorder %v2496, 0.0
    %v2595 = vand.u32 %v2496, 2147483648
    %v2596 = vsel %vm2594, %v2595, %v2593
    %v2597 = vrsqrt.pop %v2497
    %v2598 = vmul.f32 %v2497, %v2597
    %vm2599 = vcmp.eq.f32.partialorder %v2497, inf
    %v2600 = vsel %vm2599, %v2497, %v2598
    %vm2601 = vcmp.eq.f32.partialorder %v2497, 0.0
    %v2602 = vand.u32 %v2497, 2147483648
    %v2603 = vsel %vm2601, %v2602, %v2600
    %v2604 = vrsqrt.pop %v2498
    %v2605 = vmul.f32 %v2498, %v2604
    %vm2606 = vcmp.eq.f32.partialorder %v2498, inf
    %v2607 = vsel %vm2606, %v2498, %v2605
    %vm2608 = vcmp.eq.f32.partialorder %v2498, 0.0
    %v2609 = vand.u32 %v2498, 2147483648
    %v2610 = vsel %vm2608, %v2609, %v2607
    %v2611 = vrsqrt.pop %v2499
    %v2612 = vmul.f32 %v2499, %v2611
    %vm2613 = vcmp.eq.f32.partialorder %v2499, inf
    %v2614 = vsel %vm2613, %v2499, %v2612
    %vm2615 = vcmp.eq.f32.partialorder %v2499, 0.0
    %v2616 = vand.u32 %v2499, 2147483648
    %v2617 = vsel %vm2615, %v2616, %v2614
    %v2618 = vrsqrt.pop %v2500
    %v2619 = vmul.f32 %v2500, %v2618
    %vm2620 = vcmp.eq.f32.partialorder %v2500, inf
    %v2621 = vsel %vm2620, %v2500, %v2619
    %vm2622 = vcmp.eq.f32.partialorder %v2500, 0.0
    %v2623 = vand.u32 %v2500, 2147483648
    %v2624 = vsel %vm2622, %v2623, %v2621
    %v2625 = vrsqrt.pop %v2501
    %v2626 = vmul.f32 %v2501, %v2625
    %vm2627 = vcmp.eq.f32.partialorder %v2501, inf
    %v2628 = vsel %vm2627, %v2501, %v2626
    %vm2629 = vcmp.eq.f32.partialorder %v2501, 0.0
    %v2630 = vand.u32 %v2501, 2147483648
    %v2631 = vsel %vm2629, %v2630, %v2628
    %v2632 = vrsqrt.pop %v2502
    %v2633 = vmul.f32 %v2502, %v2632
    %vm2634 = vcmp.eq.f32.partialorder %v2502, inf
    %v2635 = vsel %vm2634, %v2502, %v2633
    %vm2636 = vcmp.eq.f32.partialorder %v2502, 0.0
    %v2637 = vand.u32 %v2502, 2147483648
    %v2638 = vsel %vm2636, %v2637, %v2635
    %v2639 = vrsqrt.pop %v2503
    %v2640 = vmul.f32 %v2503, %v2639
    %vm2641 = vcmp.eq.f32.partialorder %v2503, inf
    %v2642 = vsel %vm2641, %v2503, %v2640
    %vm2643 = vcmp.eq.f32.partialorder %v2503, 0.0
    %v2644 = vand.u32 %v2503, 2147483648
    %v2645 = vsel %vm2643, %v2644, %v2642
    %v2646 = vrsqrt.pop %v2504
    %v2647 = vmul.f32 %v2504, %v2646
    %vm2648 = vcmp.eq.f32.partialorder %v2504, inf
    %v2649 = vsel %vm2648, %v2504, %v2647
    %vm2650 = vcmp.eq.f32.partialorder %v2504, 0.0
    %v2651 = vand.u32 %v2504, 2147483648
    %v2652 = vsel %vm2650, %v2651, %v2649
    %v2653 = vrsqrt.pop %v2505
    %v2654 = vmul.f32 %v2505, %v2653
    %vm2655 = vcmp.eq.f32.partialorder %v2505, inf
    %v2656 = vsel %vm2655, %v2505, %v2654
    %vm2657 = vcmp.eq.f32.partialorder %v2505, 0.0
    %v2658 = vand.u32 %v2505, 2147483648
    %v2659 = vsel %vm2657, %v2658, %v2656
    %v2660 = vrsqrt.pop %v2506
    %v2661 = vmul.f32 %v2506, %v2660
    %vm2662 = vcmp.eq.f32.partialorder %v2506, inf
    %v2663 = vsel %vm2662, %v2506, %v2661
    %vm2664 = vcmp.eq.f32.partialorder %v2506, 0.0
    %v2665 = vand.u32 %v2506, 2147483648
    %v2666 = vsel %vm2664, %v2665, %v2663
    %v2667 = vrsqrt.pop %v2507
    %v2668 = vmul.f32 %v2507, %v2667
    %vm2669 = vcmp.eq.f32.partialorder %v2507, inf
    %v2670 = vsel %vm2669, %v2507, %v2668
    %vm2671 = vcmp.eq.f32.partialorder %v2507, 0.0
    %v2672 = vand.u32 %v2507, 2147483648
    %v2673 = vsel %vm2671, %v2672, %v2670
    %v2674 = vrsqrt.pop %v2508
    %v2675 = vmul.f32 %v2508, %v2674
    %vm2676 = vcmp.eq.f32.partialorder %v2508, inf
    %v2677 = vsel %vm2676, %v2508, %v2675
    %vm2678 = vcmp.eq.f32.partialorder %v2508, 0.0
    %v2679 = vand.u32 %v2508, 2147483648
    %v2680 = vsel %vm2678, %v2679, %v2677
    %v2681 = vrsqrt.pop %v2509
    %v2682 = vmul.f32 %v2509, %v2681
    %vm2683 = vcmp.eq.f32.partialorder %v2509, inf
    %v2684 = vsel %vm2683, %v2509, %v2682
    %vm2685 = vcmp.eq.f32.partialorder %v2509, 0.0
    %v2686 = vand.u32 %v2509, 2147483648
    %v2687 = vsel %vm2685, %v2686, %v2684
    %v2688 = vrsqrt.pop %v2510
    %v2689 = vmul.f32 %v2510, %v2688
    %vm2690 = vcmp.eq.f32.partialorder %v2510, inf
    %v2691 = vsel %vm2690, %v2510, %v2689
    %vm2692 = vcmp.eq.f32.partialorder %v2510, 0.0
    %v2693 = vand.u32 %v2510, 2147483648
    %v2694 = vsel %vm2692, %v2693, %v2691
    %v2695 = vrsqrt.pop %v2511
    %v2696 = vmul.f32 %v2511, %v2695
    %vm2697 = vcmp.eq.f32.partialorder %v2511, inf
    %v2698 = vsel %vm2697, %v2511, %v2696
    %vm2699 = vcmp.eq.f32.partialorder %v2511, 0.0
    %v2700 = vand.u32 %v2511, 2147483648
    %v2701 = vsel %vm2699, %v2700, %v2698
    %v2702 = vrsqrt.pop %v2512
    %v2703 = vmul.f32 %v2512, %v2702
    %vm2704 = vcmp.eq.f32.partialorder %v2512, inf
    %v2705 = vsel %vm2704, %v2512, %v2703
    %vm2706 = vcmp.eq.f32.partialorder %v2512, 0.0
    %v2707 = vand.u32 %v2512, 2147483648
    %v2708 = vsel %vm2706, %v2707, %v2705
    %v2709 = vrsqrt.pop %v2513
    %v2710 = vmul.f32 %v2513, %v2709
    %vm2711 = vcmp.eq.f32.partialorder %v2513, inf
    %v2712 = vsel %vm2711, %v2513, %v2710
    %vm2713 = vcmp.eq.f32.partialorder %v2513, 0.0
    %v2714 = vand.u32 %v2513, 2147483648
    %v2715 = vsel %vm2713, %v2714, %v2712
    %v2716 = vrsqrt.pop %v2514
    %v2717 = vmul.f32 %v2514, %v2716
    %vm2718 = vcmp.eq.f32.partialorder %v2514, inf
    %v2719 = vsel %vm2718, %v2514, %v2717
    %vm2720 = vcmp.eq.f32.partialorder %v2514, 0.0
    %v2721 = vand.u32 %v2514, 2147483648
    %v2722 = vsel %vm2720, %v2721, %v2719
    %v2723 = vrsqrt.pop %v2515
    %v2724 = vmul.f32 %v2515, %v2723
    %vm2725 = vcmp.eq.f32.partialorder %v2515, inf
    %v2726 = vsel %vm2725, %v2515, %v2724
    %vm2727 = vcmp.eq.f32.partialorder %v2515, 0.0
    %v2728 = vand.u32 %v2515, 2147483648
    %v2729 = vsel %vm2727, %v2728, %v2726
    %v2730 = vrsqrt.pop %v2516
    %v2731 = vmul.f32 %v2516, %v2730
    %vm2732 = vcmp.eq.f32.partialorder %v2516, inf
    %v2733 = vsel %vm2732, %v2516, %v2731
    %vm2734 = vcmp.eq.f32.partialorder %v2516, 0.0
    %v2735 = vand.u32 %v2516, 2147483648
    %v2736 = vsel %vm2734, %v2735, %v2733
    %v2737 = vrsqrt.pop %v2517
    %v2738 = vmul.f32 %v2517, %v2737
    %vm2739 = vcmp.eq.f32.partialorder %v2517, inf
    %v2740 = vsel %vm2739, %v2517, %v2738
    %vm2741 = vcmp.eq.f32.partialorder %v2517, 0.0
    %v2742 = vand.u32 %v2517, 2147483648
    %v2743 = vsel %vm2741, %v2742, %v2740
    %v2744 = vrsqrt.pop %v2518
    %v2745 = vmul.f32 %v2518, %v2744
    %vm2746 = vcmp.eq.f32.partialorder %v2518, inf
    %v2747 = vsel %vm2746, %v2518, %v2745
    %vm2748 = vcmp.eq.f32.partialorder %v2518, 0.0
    %v2749 = vand.u32 %v2518, 2147483648
    %v2750 = vsel %vm2748, %v2749, %v2747
    %v2751 = vrsqrt.pop %v2519
    %v2752 = vmul.f32 %v2519, %v2751
    %vm2753 = vcmp.eq.f32.partialorder %v2519, inf
    %v2754 = vsel %vm2753, %v2519, %v2752
    %vm2755 = vcmp.eq.f32.partialorder %v2519, 0.0
    %v2756 = vand.u32 %v2519, 2147483648
    %v2757 = vsel %vm2755, %v2756, %v2754
    %v2758 = vrsqrt.pop %v2520
    %v2759 = vmul.f32 %v2520, %v2758
    %vm2760 = vcmp.eq.f32.partialorder %v2520, inf
    %v2761 = vsel %vm2760, %v2520, %v2759
    %vm2762 = vcmp.eq.f32.partialorder %v2520, 0.0
    %v2763 = vand.u32 %v2520, 2147483648
    %v2764 = vsel %vm2762, %v2763, %v2761
    %v2765 = vrsqrt.pop %v2521
    %v2766 = vmul.f32 %v2521, %v2765
    %vm2767 = vcmp.eq.f32.partialorder %v2521, inf
    %v2768 = vsel %vm2767, %v2521, %v2766
    %vm2769 = vcmp.eq.f32.partialorder %v2521, 0.0
    %v2770 = vand.u32 %v2521, 2147483648
    %v2771 = vsel %vm2769, %v2770, %v2768
    %v2772 = vrsqrt.pop %v2522
    %v2773 = vmul.f32 %v2522, %v2772
    %vm2774 = vcmp.eq.f32.partialorder %v2522, inf
    %v2775 = vsel %vm2774, %v2522, %v2773
    %vm2776 = vcmp.eq.f32.partialorder %v2522, 0.0
    %v2777 = vand.u32 %v2522, 2147483648
    %v2778 = vsel %vm2776, %v2777, %v2775
    %v2779 = vrsqrt.pop %v2523
    %v2780 = vmul.f32 %v2523, %v2779
    %vm2781 = vcmp.eq.f32.partialorder %v2523, inf
    %v2782 = vsel %vm2781, %v2523, %v2780
    %vm2783 = vcmp.eq.f32.partialorder %v2523, 0.0
    %v2784 = vand.u32 %v2523, 2147483648
    %v2785 = vsel %vm2783, %v2784, %v2782
    %v2786 = vrsqrt.pop %v2524
    %v2787 = vmul.f32 %v2524, %v2786
    %vm2788 = vcmp.eq.f32.partialorder %v2524, inf
    %v2789 = vsel %vm2788, %v2524, %v2787
    %vm2790 = vcmp.eq.f32.partialorder %v2524, 0.0
    %v2791 = vand.u32 %v2524, 2147483648
    %v2792 = vsel %vm2790, %v2791, %v2789
    %v2793 = vrsqrt.pop %v2525
    %v2794 = vmul.f32 %v2525, %v2793
    %vm2795 = vcmp.eq.f32.partialorder %v2525, inf
    %v2796 = vsel %vm2795, %v2525, %v2794
    %vm2797 = vcmp.eq.f32.partialorder %v2525, 0.0
    %v2798 = vand.u32 %v2525, 2147483648
    %v2799 = vsel %vm2797, %v2798, %v2796
    %v2800 = vrsqrt.pop %v2526
    %v2801 = vmul.f32 %v2526, %v2800
    %vm2802 = vcmp.eq.f32.partialorder %v2526, inf
    %v2803 = vsel %vm2802, %v2526, %v2801
    %vm2804 = vcmp.eq.f32.partialorder %v2526, 0.0
    %v2805 = vand.u32 %v2526, 2147483648
    %v2806 = vsel %vm2804, %v2805, %v2803
    %v2807 = vrsqrt.pop %v2527
    %v2808 = vmul.f32 %v2527, %v2807
    %vm2809 = vcmp.eq.f32.partialorder %v2527, inf
    %v2810 = vsel %vm2809, %v2527, %v2808
    %vm2811 = vcmp.eq.f32.partialorder %v2527, 0.0
    %v2812 = vand.u32 %v2527, 2147483648
    %v2813 = vsel %vm2811, %v2812, %v2810
    %v2814 = vrsqrt.pop %v2528
    %v2815 = vmul.f32 %v2528, %v2814
    %vm2816 = vcmp.eq.f32.partialorder %v2528, inf
    %v2817 = vsel %vm2816, %v2528, %v2815
    %vm2818 = vcmp.eq.f32.partialorder %v2528, 0.0
    %v2819 = vand.u32 %v2528, 2147483648
    %v2820 = vsel %vm2818, %v2819, %v2817
    %v2821 = vrsqrt.pop %v2529
    %v2822 = vmul.f32 %v2529, %v2821
    %vm2823 = vcmp.eq.f32.partialorder %v2529, inf
    %v2824 = vsel %vm2823, %v2529, %v2822
    %vm2825 = vcmp.eq.f32.partialorder %v2529, 0.0
    %v2826 = vand.u32 %v2529, 2147483648
    %v2827 = vsel %vm2825, %v2826, %v2824
    %v2828 = vrsqrt.pop %v2530
    %v2829 = vmul.f32 %v2530, %v2828
    %vm2830 = vcmp.eq.f32.partialorder %v2530, inf
    %v2831 = vsel %vm2830, %v2530, %v2829
    %vm2832 = vcmp.eq.f32.partialorder %v2530, 0.0
    %v2833 = vand.u32 %v2530, 2147483648
    %v2834 = vsel %vm2832, %v2833, %v2831
    %v2835 = vrsqrt.pop %v2531
    %v2836 = vmul.f32 %v2531, %v2835
    %vm2837 = vcmp.eq.f32.partialorder %v2531, inf
    %v2838 = vsel %vm2837, %v2531, %v2836
    %vm2839 = vcmp.eq.f32.partialorder %v2531, 0.0
    %v2840 = vand.u32 %v2531, 2147483648
    %v2841 = vsel %vm2839, %v2840, %v2838
    %v2842 = vrsqrt.pop %v2532
    %v2843 = vmul.f32 %v2532, %v2842
    %vm2844 = vcmp.eq.f32.partialorder %v2532, inf
    %v2845 = vsel %vm2844, %v2532, %v2843
    %vm2846 = vcmp.eq.f32.partialorder %v2532, 0.0
    %v2847 = vand.u32 %v2532, 2147483648
    %v2848 = vsel %vm2846, %v2847, %v2845
    %v2849 = vrsqrt.pop %v2533
    %v2850 = vmul.f32 %v2533, %v2849
    %vm2851 = vcmp.eq.f32.partialorder %v2533, inf
    %v2852 = vsel %vm2851, %v2533, %v2850
    %vm2853 = vcmp.eq.f32.partialorder %v2533, 0.0
    %v2854 = vand.u32 %v2533, 2147483648
    %v2855 = vsel %vm2853, %v2854, %v2852
    %v2856 = vrsqrt.pop %v2534
    %v2857 = vmul.f32 %v2534, %v2856
    %vm2858 = vcmp.eq.f32.partialorder %v2534, inf
    %v2859 = vsel %vm2858, %v2534, %v2857
    %vm2860 = vcmp.eq.f32.partialorder %v2534, 0.0
    %v2861 = vand.u32 %v2534, 2147483648
    %v2862 = vsel %vm2860, %v2861, %v2859
    %v2863 = vrsqrt.pop %v2535
    %v2864 = vmul.f32 %v2535, %v2863
    %vm2865 = vcmp.eq.f32.partialorder %v2535, inf
    %v2866 = vsel %vm2865, %v2535, %v2864
    %vm2867 = vcmp.eq.f32.partialorder %v2535, 0.0
    %v2868 = vand.u32 %v2535, 2147483648
    %v2869 = vsel %vm2867, %v2868, %v2866
    %v2870 = vrsqrt.pop %v2536
    %v2871 = vmul.f32 %v2536, %v2870
    %vm2872 = vcmp.eq.f32.partialorder %v2536, inf
    %v2873 = vsel %vm2872, %v2536, %v2871
    %vm2874 = vcmp.eq.f32.partialorder %v2536, 0.0
    %v2875 = vand.u32 %v2536, 2147483648
    %v2876 = vsel %vm2874, %v2875, %v2873
    %v2877 = vrsqrt.pop %v2537
    %v2878 = vmul.f32 %v2537, %v2877
    %vm2879 = vcmp.eq.f32.partialorder %v2537, inf
    %v2880 = vsel %vm2879, %v2537, %v2878
    %vm2881 = vcmp.eq.f32.partialorder %v2537, 0.0
    %v2882 = vand.u32 %v2537, 2147483648
    %v2883 = vsel %vm2881, %v2882, %v2880
    %v2884 = vrsqrt.pop %v2538
    %v2885 = vmul.f32 %v2538, %v2884
    %vm2886 = vcmp.eq.f32.partialorder %v2538, inf
    %v2887 = vsel %vm2886, %v2538, %v2885
    %vm2888 = vcmp.eq.f32.partialorder %v2538, 0.0
    %v2889 = vand.u32 %v2538, 2147483648
    %v2890 = vsel %vm2888, %v2889, %v2887
    %v2891 = vrsqrt.pop %v2539
    %v2892 = vmul.f32 %v2539, %v2891
    %vm2893 = vcmp.eq.f32.partialorder %v2539, inf
    %v2894 = vsel %vm2893, %v2539, %v2892
    %vm2895 = vcmp.eq.f32.partialorder %v2539, 0.0
    %v2896 = vand.u32 %v2539, 2147483648
    %v2897 = vsel %vm2895, %v2896, %v2894
    %v2898 = vrsqrt.pop %v2540
    %v2899 = vmul.f32 %v2540, %v2898
    %vm2900 = vcmp.eq.f32.partialorder %v2540, inf
    %v2901 = vsel %vm2900, %v2540, %v2899
    %vm2902 = vcmp.eq.f32.partialorder %v2540, 0.0
    %v2903 = vand.u32 %v2540, 2147483648
    %v2904 = vsel %vm2902, %v2903, %v2901
    %v2905 = vrsqrt.pop %v2541
    %v2906 = vmul.f32 %v2541, %v2905
    %vm2907 = vcmp.eq.f32.partialorder %v2541, inf
    %v2908 = vsel %vm2907, %v2541, %v2906
    %vm2909 = vcmp.eq.f32.partialorder %v2541, 0.0
    %v2910 = vand.u32 %v2541, 2147483648
    %v2911 = vsel %vm2909, %v2910, %v2908
    %v2912 = vrsqrt.pop %v2542
    %v2913 = vmul.f32 %v2542, %v2912
    %vm2914 = vcmp.eq.f32.partialorder %v2542, inf
    %v2915 = vsel %vm2914, %v2542, %v2913
    %vm2916 = vcmp.eq.f32.partialorder %v2542, 0.0
    %v2917 = vand.u32 %v2542, 2147483648
    %v2918 = vsel %vm2916, %v2917, %v2915
    %v2919 = vrsqrt.pop %v2543
    %v2920 = vmul.f32 %v2543, %v2919
    %vm2921 = vcmp.eq.f32.partialorder %v2543, inf
    %v2922 = vsel %vm2921, %v2543, %v2920
    %vm2923 = vcmp.eq.f32.partialorder %v2543, 0.0
    %v2924 = vand.u32 %v2543, 2147483648
    %v2925 = vsel %vm2923, %v2924, %v2922
    %v2926 = vrsqrt.pop %v2544
    %v2927 = vmul.f32 %v2544, %v2926
    %vm2928 = vcmp.eq.f32.partialorder %v2544, inf
    %v2929 = vsel %vm2928, %v2544, %v2927
    %vm2930 = vcmp.eq.f32.partialorder %v2544, 0.0
    %v2931 = vand.u32 %v2544, 2147483648
    %v2932 = vsel %vm2930, %v2931, %v2929
    %v2933 = vrsqrt.pop %v2545
    %v2934 = vmul.f32 %v2545, %v2933
    %vm2935 = vcmp.eq.f32.partialorder %v2545, inf
    %v2936 = vsel %vm2935, %v2545, %v2934
    %vm2937 = vcmp.eq.f32.partialorder %v2545, 0.0
    %v2938 = vand.u32 %v2545, 2147483648
    %v2939 = vsel %vm2937, %v2938, %v2936
    %v2940 = vrsqrt.pop %v2546
    %v2941 = vmul.f32 %v2546, %v2940
    %vm2942 = vcmp.eq.f32.partialorder %v2546, inf
    %v2943 = vsel %vm2942, %v2546, %v2941
    %vm2944 = vcmp.eq.f32.partialorder %v2546, 0.0
    %v2945 = vand.u32 %v2546, 2147483648
    %v2946 = vsel %vm2944, %v2945, %v2943
    %v2947 = vrsqrt.pop %v2547
    %v2948 = vmul.f32 %v2547, %v2947
    %vm2949 = vcmp.eq.f32.partialorder %v2547, inf
    %v2950 = vsel %vm2949, %v2547, %v2948
    %vm2951 = vcmp.eq.f32.partialorder %v2547, 0.0
    %v2952 = vand.u32 %v2547, 2147483648
    %v2953 = vsel %vm2951, %v2952, %v2950
    %v2954 = vrsqrt.pop %v2548
    %v2955 = vmul.f32 %v2548, %v2954
    %vm2956 = vcmp.eq.f32.partialorder %v2548, inf
    %v2957 = vsel %vm2956, %v2548, %v2955
    %vm2958 = vcmp.eq.f32.partialorder %v2548, 0.0
    %v2959 = vand.u32 %v2548, 2147483648
    %v2960 = vsel %vm2958, %v2959, %v2957
    %v2961 = vrsqrt.pop %v2549
    %v2962 = vmul.f32 %v2549, %v2961
    %vm2963 = vcmp.eq.f32.partialorder %v2549, inf
    %v2964 = vsel %vm2963, %v2549, %v2962
    %vm2965 = vcmp.eq.f32.partialorder %v2549, 0.0
    %v2966 = vand.u32 %v2549, 2147483648
    %v2967 = vsel %vm2965, %v2966, %v2964
    %v2968 = vrsqrt.pop %v2550
    %v2969 = vmul.f32 %v2550, %v2968
    %vm2970 = vcmp.eq.f32.partialorder %v2550, inf
    %v2971 = vsel %vm2970, %v2550, %v2969
    %vm2972 = vcmp.eq.f32.partialorder %v2550, 0.0
    %v2973 = vand.u32 %v2550, 2147483648
    %v2974 = vsel %vm2972, %v2973, %v2971
    %v2975 = vrsqrt.pop %v2551
    %v2976 = vmul.f32 %v2551, %v2975
    %vm2977 = vcmp.eq.f32.partialorder %v2551, inf
    %v2978 = vsel %vm2977, %v2551, %v2976
    %vm2979 = vcmp.eq.f32.partialorder %v2551, 0.0
    %v2980 = vand.u32 %v2551, 2147483648
    %v2981 = vsel %vm2979, %v2980, %v2978
    %v2982 = vrsqrt.pop %v2552
    %v2983 = vmul.f32 %v2552, %v2982
    %vm2984 = vcmp.eq.f32.partialorder %v2552, inf
    %v2985 = vsel %vm2984, %v2552, %v2983
    %vm2986 = vcmp.eq.f32.partialorder %v2552, 0.0
    %v2987 = vand.u32 %v2552, 2147483648
    %v2988 = vsel %vm2986, %v2987, %v2985
    %v2989 = vrsqrt.pop %v2553
    %v2990 = vmul.f32 %v2553, %v2989
    %vm2991 = vcmp.eq.f32.partialorder %v2553, inf
    %v2992 = vsel %vm2991, %v2553, %v2990
    %vm2993 = vcmp.eq.f32.partialorder %v2553, 0.0
    %v2994 = vand.u32 %v2553, 2147483648
    %v2995 = vsel %vm2993, %v2994, %v2992
    %v2996 = vrsqrt.pop %v2554
    %v2997 = vmul.f32 %v2554, %v2996
    %vm2998 = vcmp.eq.f32.partialorder %v2554, inf
    %v2999 = vsel %vm2998, %v2554, %v2997
    %vm3000 = vcmp.eq.f32.partialorder %v2554, 0.0
    %v3001 = vand.u32 %v2554, 2147483648
    %v3002 = vsel %vm3000, %v3001, %v2999
    %v3003 = vmul.f32 %v2561, 2.0
    %v3004 = vmul.f32 %v2568, 2.0
    %v3005 = vmul.f32 %v2575, 2.0
    %v3006 = vmul.f32 %v2582, 2.0
    %v3007 = vmul.f32 %v2589, 2.0
    %v3008 = vmul.f32 %v2596, 2.0
    %v3009 = vmul.f32 %v2603, 2.0
    %v3010 = vmul.f32 %v2610, 2.0
    %v3011 = vmul.f32 %v2617, 2.0
    %v3012 = vmul.f32 %v2624, 2.0
    %v3013 = vmul.f32 %v2631, 2.0
    %v3014 = vmul.f32 %v2638, 2.0
    %v3015 = vmul.f32 %v2645, 2.0
    %v3016 = vmul.f32 %v2652, 2.0
    %v3017 = vmul.f32 %v2659, 2.0
    %v3018 = vmul.f32 %v2666, 2.0
    %v3019 = vmul.f32 %v2673, 2.0
    %v3020 = vmul.f32 %v2680, 2.0
    %v3021 = vmul.f32 %v2687, 2.0
    %v3022 = vmul.f32 %v2694, 2.0
    %v3023 = vmul.f32 %v2701, 2.0
    %v3024 = vmul.f32 %v2708, 2.0
    %v3025 = vmul.f32 %v2715, 2.0
    %v3026 = vmul.f32 %v2722, 2.0
    %v3027 = vmul.f32 %v2729, 2.0
    %v3028 = vmul.f32 %v2736, 2.0
    %v3029 = vmul.f32 %v2743, 2.0
    %v3030 = vmul.f32 %v2750, 2.0
    %v3031 = vmul.f32 %v2757, 2.0
    %v3032 = vmul.f32 %v2764, 2.0
    %v3033 = vmul.f32 %v2771, 2.0
    %v3034 = vmul.f32 %v2778, 2.0
    %v3035 = vmul.f32 %v2785, 2.0
    %v3036 = vmul.f32 %v2792, 2.0
    %v3037 = vmul.f32 %v2799, 2.0
    %v3038 = vmul.f32 %v2806, 2.0
    %v3039 = vmul.f32 %v2813, 2.0
    %v3040 = vmul.f32 %v2820, 2.0
    %v3041 = vmul.f32 %v2827, 2.0
    %v3042 = vmul.f32 %v2834, 2.0
    %v3043 = vmul.f32 %v2841, 2.0
    %v3044 = vmul.f32 %v2848, 2.0
    %v3045 = vmul.f32 %v2855, 2.0
    %v3046 = vmul.f32 %v2862, 2.0
    %v3047 = vmul.f32 %v2869, 2.0
    %v3048 = vmul.f32 %v2876, 2.0
    %v3049 = vmul.f32 %v2883, 2.0
    %v3050 = vmul.f32 %v2890, 2.0
    %v3051 = vmul.f32 %v2897, 2.0
    %v3052 = vmul.f32 %v2904, 2.0
    %v3053 = vmul.f32 %v2911, 2.0
    %v3054 = vmul.f32 %v2918, 2.0
    %v3055 = vmul.f32 %v2925, 2.0
    %v3056 = vmul.f32 %v2932, 2.0
    %v3057 = vmul.f32 %v2939, 2.0
    %v3058 = vmul.f32 %v2946, 2.0
    %v3059 = vmul.f32 %v2953, 2.0
    %v3060 = vmul.f32 %v2960, 2.0
    %v3061 = vmul.f32 %v2967, 2.0
    %v3062 = vmul.f32 %v2974, 2.0
    %v3063 = vmul.f32 %v2981, 2.0
    %v3064 = vmul.f32 %v2988, 2.0
    %v3065 = vmul.f32 %v2995, 2.0
    %v3066 = vmul.f32 %v3002, 2.0
    %v3067 = vsub.f32 %v2427, %v3003
    %v3068 = vsub.f32 %v2428, %v3004
    %v3069 = vsub.f32 %v2429, %v3005
    %v3070 = vsub.f32 %v2430, %v3006
    %v3071 = vsub.f32 %v2431, %v3007
    %v3072 = vsub.f32 %v2432, %v3008
    %v3073 = vsub.f32 %v2433, %v3009
    %v3074 = vsub.f32 %v2434, %v3010
    %v3075 = vsub.f32 %v2435, %v3011
    %v3076 = vsub.f32 %v2436, %v3012
    %v3077 = vsub.f32 %v2437, %v3013
    %v3078 = vsub.f32 %v2438, %v3014
    %v3079 = vsub.f32 %v2439, %v3015
    %v3080 = vsub.f32 %v2440, %v3016
    %v3081 = vsub.f32 %v2441, %v3017
    %v3082 = vsub.f32 %v2442, %v3018
    %v3083 = vsub.f32 %v2443, %v3019
    %v3084 = vsub.f32 %v2444, %v3020
    %v3085 = vsub.f32 %v2445, %v3021
    %v3086 = vsub.f32 %v2446, %v3022
    %v3087 = vsub.f32 %v2447, %v3023
    %v3088 = vsub.f32 %v2448, %v3024
    %v3089 = vsub.f32 %v2449, %v3025
    %v3090 = vsub.f32 %v2450, %v3026
    %v3091 = vsub.f32 %v2451, %v3027
    %v3092 = vsub.f32 %v2452, %v3028
    %v3093 = vsub.f32 %v2453, %v3029
    %v3094 = vsub.f32 %v2454, %v3030
    %v3095 = vsub.f32 %v2455, %v3031
    %v3096 = vsub.f32 %v2456, %v3032
    %v3097 = vsub.f32 %v2457, %v3033
    %v3098 = vsub.f32 %v2458, %v3034
    %v3099 = vsub.f32 %v2459, %v3035
    %v3100 = vsub.f32 %v2460, %v3036
    %v3101 = vsub.f32 %v2461, %v3037
    %v3102 = vsub.f32 %v2462, %v3038
    %v3103 = vsub.f32 %v2463, %v3039
    %v3104 = vsub.f32 %v2464, %v3040
    %v3105 = vsub.f32 %v2465, %v3041
    %v3106 = vsub.f32 %v2466, %v3042
    %v3107 = vsub.f32 %v2467, %v3043
    %v3108 = vsub.f32 %v2468, %v3044
    %v3109 = vsub.f32 %v2469, %v3045
    %v3110 = vsub.f32 %v2470, %v3046
    %v3111 = vsub.f32 %v2471, %v3047
    %v3112 = vsub.f32 %v2472, %v3048
    %v3113 = vsub.f32 %v2473, %v3049
    %v3114 = vsub.f32 %v2474, %v3050
    %v3115 = vsub.f32 %v2475, %v3051
    %v3116 = vsub.f32 %v2476, %v3052
    %v3117 = vsub.f32 %v2477, %v3053
    %v3118 = vsub.f32 %v2478, %v3054
    %v3119 = vsub.f32 %v2479, %v3055
    %v3120 = vsub.f32 %v2480, %v3056
    %v3121 = vsub.f32 %v2481, %v3057
    %v3122 = vsub.f32 %v2482, %v3058
    %v3123 = vsub.f32 %v2483, %v3059
    %v3124 = vsub.f32 %v2484, %v3060
    %v3125 = vsub.f32 %v2485, %v3061
    %v3126 = vsub.f32 %v2486, %v3062
    %v3127 = vsub.f32 %v2487, %v3063
    %v3128 = vsub.f32 %v2488, %v3064
    %v3129 = vsub.f32 %v2489, %v3065
    %v3130 = vsub.f32 %v2490, %v3066
    %v3131 = vld [vmem:[#allocation7] sm:$0xff]
    %v3132 = vld [vmem:[#allocation7 + $0x8] sm:$0xff]
    %v3133 = vadd.f32 %v2363, %v2365
    %v3134 = vadd.f32 %v3133, %v2367
    %v3135 = vadd.f32 %v3134, %v2369
    %v3136 = vadd.f32 %v3135, %v2371
    %v3137 = vadd.f32 %v3136, %v2373
    %v3138 = vadd.f32 %v3137, %v2375
    %v3139 = vadd.f32 %v3138, %v2377
    %v3140 = vadd.f32 %v3139, %v2379
    %v3141 = vadd.f32 %v3140, %v2381
    %v3142 = vadd.f32 %v3141, %v2383
    %v3143 = vadd.f32 %v3142, %v2385
    %v3144 = vadd.f32 %v3143, %v2387
    %v3145 = vadd.f32 %v3144, %v2389
    %v3146 = vadd.f32 %v3145, %v2391
    %v3147 = vadd.f32 %v3146, %v2393
    %v3148 = vadd.f32 %v3147, %v2395
    %v3149 = vadd.f32 %v3148, %v2397
    %v3150 = vadd.f32 %v3149, %v2399
    %v3151 = vadd.f32 %v3150, %v2401
    %v3152 = vadd.f32 %v3151, %v2403
    %v3153 = vadd.f32 %v3152, %v2405
    %v3154 = vadd.f32 %v3153, %v2407
    %v3155 = vadd.f32 %v3154, %v2409
    %v3156 = vadd.f32 %v3155, %v2411
    %v3157 = vadd.f32 %v3156, %v2413
    %v3158 = vadd.f32 %v3157, %v2415
    %v3159 = vadd.f32 %v3158, %v2417
    %v3160 = vadd.f32 %v3159, %v2419
    %v3161 = vadd.f32 %v3160, %v2421
    %v3162 = vadd.f32 %v3161, %v2423
    %v3163 = vadd.f32 %v3162, %v2425
    %v3164 = vadd.f32 %v2364, %v2366
    %v3165 = vadd.f32 %v3164, %v2368
    %v3166 = vadd.f32 %v3165, %v2370
    %v3167 = vadd.f32 %v3166, %v2372
    %v3168 = vadd.f32 %v3167, %v2374
    %v3169 = vadd.f32 %v3168, %v2376
    %v3170 = vadd.f32 %v3169, %v2378
    %v3171 = vadd.f32 %v3170, %v2380
    %v3172 = vadd.f32 %v3171, %v2382
    %v3173 = vadd.f32 %v3172, %v2384
    %v3174 = vadd.f32 %v3173, %v2386
    %v3175 = vadd.f32 %v3174, %v2388
    %v3176 = vadd.f32 %v3175, %v2390
    %v3177 = vadd.f32 %v3176, %v2392
    %v3178 = vadd.f32 %v3177, %v2394
    %v3179 = vadd.f32 %v3178, %v2396
    %v3180 = vadd.f32 %v3179, %v2398
    %v3181 = vadd.f32 %v3180, %v2400
    %v3182 = vadd.f32 %v3181, %v2402
    %v3183 = vadd.f32 %v3182, %v2404
    %v3184 = vadd.f32 %v3183, %v2406
    %v3185 = vadd.f32 %v3184, %v2408
    %v3186 = vadd.f32 %v3185, %v2410
    %v3187 = vadd.f32 %v3186, %v2412
    %v3188 = vadd.f32 %v3187, %v2414
    %v3189 = vadd.f32 %v3188, %v2416
    %v3190 = vadd.f32 %v3189, %v2418
    %v3191 = vadd.f32 %v3190, %v2420
    %v3192 = vadd.f32 %v3191, %v2422
    %v3193 = vadd.f32 %v3192, %v2424
    %v3194 = vadd.f32 %v3193, %v2426
    %v3195 = vadd.f32 %v3131, %v3163
    %v3196 = vadd.f32 %v3132, %v3194
    %3197 = vst [vmem:[#allocation7] sm:$0xff] %v3195
    %3198 = vst [vmem:[#allocation7 + $0x8] sm:$0xff] %v3196
    %s3199 = scalar_lea.vmem [#allocation7], 16
    %v3200 = vld [vmem:[%s3199] sm:$0xff]
    %v3201 = vld [vmem:[%s3199 + $0x8] sm:$0xff]
    %v3202 = vadd.f32 %v3067, %v3069
    %v3203 = vadd.f32 %v3202, %v3071
    %v3204 = vadd.f32 %v3203, %v3073
    %v3205 = vadd.f32 %v3204, %v3075
    %v3206 = vadd.f32 %v3205, %v3077
    %v3207 = vadd.f32 %v3206, %v3079
    %v3208 = vadd.f32 %v3207, %v3081
    %v3209 = vadd.f32 %v3208, %v3083
    %v3210 = vadd.f32 %v3209, %v3085
    %v3211 = vadd.f32 %v3210, %v3087
    %v3212 = vadd.f32 %v3211, %v3089
    %v3213 = vadd.f32 %v3212, %v3091
    %v3214 = vadd.f32 %v3213, %v3093
    %v3215 = vadd.f32 %v3214, %v3095
    %v3216 = vadd.f32 %v3215, %v3097
    %v3217 = vadd.f32 %v3216, %v3099
    %v3218 = vadd.f32 %v3217, %v3101
    %v3219 = vadd.f32 %v3218, %v3103
    %v3220 = vadd.f32 %v3219, %v3105
    %v3221 = vadd.f32 %v3220, %v3107
    %v3222 = vadd.f32 %v3221, %v3109
    %v3223 = vadd.f32 %v3222, %v3111
    %v3224 = vadd.f32 %v3223, %v3113
    %v3225 = vadd.f32 %v3224, %v3115
    %v3226 = vadd.f32 %v3225, %v3117
    %v3227 = vadd.f32 %v3226, %v3119
    %v3228 = vadd.f32 %v3227, %v3121
    %v3229 = vadd.f32 %v3228, %v3123
    %v3230 = vadd.f32 %v3229, %v3125
    %v3231 = vadd.f32 %v3230, %v3127
    %v3232 = vadd.f32 %v3231, %v3129
    %v3233 = vadd.f32 %v3068, %v3070
    %v3234 = vadd.f32 %v3233, %v3072
    %v3235 = vadd.f32 %v3234, %v3074
    %v3236 = vadd.f32 %v3235, %v3076
    %v3237 = vadd.f32 %v3236, %v3078
    %v3238 = vadd.f32 %v3237, %v3080
    %v3239 = vadd.f32 %v3238, %v3082
    %v3240 = vadd.f32 %v3239, %v3084
    %v3241 = vadd.f32 %v3240, %v3086
    %v3242 = vadd.f32 %v3241, %v3088
    %v3243 = vadd.f32 %v3242, %v3090
    %v3244 = vadd.f32 %v3243, %v3092
    %v3245 = vadd.f32 %v3244, %v3094
    %v3246 = vadd.f32 %v3245, %v3096
    %v3247 = vadd.f32 %v3246, %v3098
    %v3248 = vadd.f32 %v3247, %v3100
    %v3249 = vadd.f32 %v3248, %v3102
    %v3250 = vadd.f32 %v3249, %v3104
    %v3251 = vadd.f32 %v3250, %v3106
    %v3252 = vadd.f32 %v3251, %v3108
    %v3253 = vadd.f32 %v3252, %v3110
    %v3254 = vadd.f32 %v3253, %v3112
    %v3255 = vadd.f32 %v3254, %v3114
    %v3256 = vadd.f32 %v3255, %v3116
    %v3257 = vadd.f32 %v3256, %v3118
    %v3258 = vadd.f32 %v3257, %v3120
    %v3259 = vadd.f32 %v3258, %v3122
    %v3260 = vadd.f32 %v3259, %v3124
    %v3261 = vadd.f32 %v3260, %v3126
    %v3262 = vadd.f32 %v3261, %v3128
    %v3263 = vadd.f32 %v3262, %v3130
    %v3264 = vadd.f32 %v3200, %v3232
    %v3265 = vadd.f32 %v3201, %v3263
    %3266 = vst [vmem:[%s3199] sm:$0xff] %v3264
    %3267 = vst [vmem:[%s3199 + $0x8] sm:$0xff] %v3265
    %s3268 = scalar_lea.vmem [#allocation7], 32
    %v3269 = vld [vmem:[%s3268] sm:$0xff]
    %v3270 = vld [vmem:[%s3268 + $0x8] sm:$0xff]
    %v3271 = vadd.f32 %v1979, %v1981
    %v3272 = vadd.f32 %v3271, %v1983
    %v3273 = vadd.f32 %v3272, %v1985
    %v3274 = vadd.f32 %v3273, %v1987
    %v3275 = vadd.f32 %v3274, %v1989
    %v3276 = vadd.f32 %v3275, %v1991
    %v3277 = vadd.f32 %v3276, %v1993
    %v3278 = vadd.f32 %v3277, %v1995
    %v3279 = vadd.f32 %v3278, %v1997
    %v3280 = vadd.f32 %v3279, %v1999
    %v3281 = vadd.f32 %v3280, %v2001
    %v3282 = vadd.f32 %v3281, %v2003
    %v3283 = vadd.f32 %v3282, %v2005
    %v3284 = vadd.f32 %v3283, %v2007
    %v3285 = vadd.f32 %v3284, %v2009
    %v3286 = vadd.f32 %v3285, %v2011
    %v3287 = vadd.f32 %v3286, %v2013
    %v3288 = vadd.f32 %v3287, %v2015
    %v3289 = vadd.f32 %v3288, %v2017
    %v3290 = vadd.f32 %v3289, %v2019
    %v3291 = vadd.f32 %v3290, %v2021
    %v3292 = vadd.f32 %v3291, %v2023
    %v3293 = vadd.f32 %v3292, %v2025
    %v3294 = vadd.f32 %v3293, %v2027
    %v3295 = vadd.f32 %v3294, %v2029
    %v3296 = vadd.f32 %v3295, %v2031
    %v3297 = vadd.f32 %v3296, %v2033
    %v3298 = vadd.f32 %v3297, %v2035
    %v3299 = vadd.f32 %v3298, %v2037
    %v3300 = vadd.f32 %v3299, %v2039
    %v3301 = vadd.f32 %v3300, %v2041
    %v3302 = vadd.f32 %v1980, %v1982
    %v3303 = vadd.f32 %v3302, %v1984
    %v3304 = vadd.f32 %v3303, %v1986
    %v3305 = vadd.f32 %v3304, %v1988
    %v3306 = vadd.f32 %v3305, %v1990
    %v3307 = vadd.f32 %v3306, %v1992
    %v3308 = vadd.f32 %v3307, %v1994
    %v3309 = vadd.f32 %v3308, %v1996
    %v3310 = vadd.f32 %v3309, %v1998
    %v3311 = vadd.f32 %v3310, %v2000
    %v3312 = vadd.f32 %v3311, %v2002
    %v3313 = vadd.f32 %v3312, %v2004
    %v3314 = vadd.f32 %v3313, %v2006
    %v3315 = vadd.f32 %v3314, %v2008
    %v3316 = vadd.f32 %v3315, %v2010
    %v3317 = vadd.f32 %v3316, %v2012
    %v3318 = vadd.f32 %v3317, %v2014
    %v3319 = vadd.f32 %v3318, %v2016
    %v3320 = vadd.f32 %v3319, %v2018
    %v3321 = vadd.f32 %v3320, %v2020
    %v3322 = vadd.f32 %v3321, %v2022
    %v3323 = vadd.f32 %v3322, %v2024
    %v3324 = vadd.f32 %v3323, %v2026
    %v3325 = vadd.f32 %v3324, %v2028
    %v3326 = vadd.f32 %v3325, %v2030
    %v3327 = vadd.f32 %v3326, %v2032
    %v3328 = vadd.f32 %v3327, %v2034
    %v3329 = vadd.f32 %v3328, %v2036
    %v3330 = vadd.f32 %v3329, %v2038
    %v3331 = vadd.f32 %v3330, %v2040
    %v3332 = vadd.f32 %v3331, %v2042
    %v3333 = vadd.f32 %v3269, %v3301
    %v3334 = vadd.f32 %v3270, %v3332
    %3335 = vst [vmem:[%s3268] sm:$0xff] %v3333
    %3336 = vst [vmem:[%s3268 + $0x8] sm:$0xff] %v3334
    // Predicated region
    $region22: #{tpu_custom_call.1} parent=1 // pred_check
      _
    $region23: #{tpu_custom_call.1} parent=1 // pred_check_branch
      %3338 = sbr.rel (0) target = $region25
    $region24: #{tpu_custom_call.1} parent=1 // pred_region
      %s3340 = ssub.s32 768, 768
      %3341 = vsyncadd [#allocation4], %s3340
      %s3342 = sshll.u32 [#allocation7], 4
      %s3343 = int_to_ptr.vmem [resolvable:$true] %s3342
      %3348 = dma.vmem_to_hbm [thread:$0]  %s3343, 768, %s2, [#allocation4], 256, 256, 16
    $region25: #{tpu_custom_call.1} parent=1 // pred_fallthru
      _
    // Predicated region
    $region26: #{tpu_custom_call.1} parent=1 // pred_check
      _
    $region27: #{tpu_custom_call.1} parent=1 // pred_check_branch
      %3350 = sbr.rel (0) target = $region29
    $region28: #{tpu_custom_call.1} parent=1 // pred_region
      %3351 = dma.done [#allocation4], 768
    $region29: #{tpu_custom_call.1} parent=1 // pred_fallthru
      _
    %3352 = vsyncpa [#allocation3], 1
    %3353 = vsyncpa [#allocation6], 1
    %3354 = vsyncpa [#allocation4], 1

</llo_original>
